<compile_context>
chip_gen: v7x
topology: tpu7x:2x2x1
jax: 0.10.0
libtpu: 0.0.40
codegen_flags: <defaults>
</compile_context>

<pallas_src>
import functools

import numpy as np
import jax
import jax.numpy as jnp
from jax.experimental import pallas as pl
from jax.experimental.pallas import tpu as pltpu


def _elementwise_dtype():
    """bf16 GELU only on chips with bf16 VPU/EUP (v6e / v7x+); f32 otherwise."""
    try:
        kind = jax.devices()[0].device_kind.lower()
    except Exception:
        return jnp.float32
    if ("v6" in kind) or ("v7" in kind) or ("7x" in kind):
        return jnp.bfloat16
    return jnp.float32  # v5e and older have no bf16 VPU/EUP; casts would regress


def _encode_pc_kernel(pc_ref, w1t_ref, out_ref, acc_ref, *, elt_dtype):
    """One (cloud b, point-tile n) grid step.

    pc_ref  : (1, 8, TILE_N) bf16 VMEM  channels-major tile (xyz + rgb + 1.0 + 0)
    w1t_ref : (H, 8)         bf16 VMEM  fused first-layer weight^T, b1 in row 6
    out_ref : (1, H, 1)      f32  VMEM  per-cloud SUM of gelu(hidden) (written at
                                        the last n step; mean/w2 in the wrapper)
    acc_ref : (H, 128)       f32  VMEM  lane-blocked running sum over points
    """
    n = pl.program_id(1)

    @pl.when(n == 0)
    def _init():
        acc_ref[...] = jnp.zeros_like(acc_ref)

    x = pc_ref[0]                                       # (8, TILE_N) bf16, N on lanes
    # Bias rides for free through the MXU f32 accumulate: channel 6 of x is 1.0
    # and row 6 of w1t is b1, so no broadcast-add is needed on the VPU path.
    h = jnp.dot(w1t_ref[...], x,
                preferred_element_type=jnp.float32)     # (H, TILE_N) f32
    g = jax.nn.gelu(h.astype(elt_dtype), approximate=True)   # bf16 on v6e/v7x
    hdim, tn = g.shape
    # Lane-blocked partial sums: per-step work is pure VPU vreg adds, no XLU.
    acc_ref[...] += g.astype(jnp.float32).reshape(hdim, tn // 128, 128).sum(axis=1)

    @pl.when(n == pl.num_programs(1) - 1)
    def _finalize():
        # Single cross-lane reduce per cloud; the (tiny, lane-sparse) store
        # happens once per cloud, not per point tile.
        out_ref[0] = jnp.sum(acc_ref[...], axis=1, keepdims=True)


def encode_pc(pc, params, *, tile_n=2048):
    """pc: (B, N, 6) float32 in the PyTorch (batch, points, xyz+color) layout."""
    B, N, C = pc.shape
    assert C == 6, "pc must carry xyz (3) + color (3) channels"
    H = params["w_xyz"].shape[1]

    # v7x megacore guard: a single cloud would leave one TensorCore idle on the
    # batch-"parallel" axis, so split its points into two equal pseudo-clouds
    # (mean over all N points is recovered exactly in the wrapper).
    split = 1
    if B == 1 and N % 2 == 0 and (N // 2) % 128 == 0:
        split = 2
        pc = pc.reshape(2, N // 2, 6)
    Bk, Nk = pc.shape[0], pc.shape[1]

    tile_n = min(tile_n, Nk)
    assert Nk % tile_n == 0, "n_points must be a multiple of the point tile"
    assert tile_n % 128 == 0, "point tile must be lane-aligned (multiple of 128)"
    # TODO(synk): ragged / zero-padded point clouds need a per-cloud valid count
    # or mask before the mean pool; the synthetic encoder assumes dense N.

    # --- layout plumbing (wrapper-side XLA ops) ------------------------------
    # xyz @ w_xyz + color @ w_col + b1 == pc_aug @ concat(w_xyz, w_col, b1, 0)
    # with pc_aug carrying a constant 1.0 channel: fused first layer + bias.
    w1_aug = jnp.concatenate(
        [params["w_xyz"], params["w_col"],
         params["b1"][None, :].astype(jnp.float32),
         jnp.zeros((1, H), jnp.float32)], axis=0)                      # (8, H)
    w1t = w1_aug.T.astype(jnp.bfloat16)                                # (H, 8)

    # Channels-major bf16 point cloud; channel 6 = 1.0 (bias), channel 7 = 0.
    # TODO(synk): this transpose+pad+cast is a full extra HBM pass over the
    # cloud; ingest pc channels-major bf16 from the data pipeline when possible.
    pc_t = jnp.transpose(pc, (0, 2, 1))                                # (Bk, 6, Nk)
    ones = jnp.ones((Bk, 1, Nk), pc.dtype)
    zeros = jnp.zeros((Bk, 1, Nk), pc.dtype)
    pc_cm = jnp.concatenate([pc_t, ones, zeros], axis=1).astype(jnp.bfloat16)

    grid = (Bk, Nk // tile_n)
    kernel = functools.partial(_encode_pc_kernel, elt_dtype=_elementwise_dtype())

    cost = pl.CostEstimate(
        flops=2 * Bk * Nk * 8 * H,
        transcendentals=Bk * Nk * H,
        bytes_accessed=pc_cm.size * 2 + w1t.size * 2 + Bk * H * 4,
    )

    sums = pl.pallas_call(
        kernel,
        out_shape=jax.ShapeDtypeStruct((Bk, H, 1), jnp.float32),
        grid=grid,
        in_specs=[
            pl.BlockSpec((1, 8, tile_n), lambda b, n: (b, 0, n)),   # streaming pc
            pl.BlockSpec((H, 8), lambda b, n: (0, 0)),              # resident w1t
        ],
        out_specs=pl.BlockSpec((1, H, 1), lambda b, n: (b, 0, 0)),
        scratch_shapes=[pltpu.VMEM((H, 128), jnp.float32)],
        compiler_params=pltpu.CompilerParams(
            dimension_semantics=("parallel", "arbitrary"),
            vmem_limit_bytes=32 * 1024 * 1024,
        ),
        cost_estimate=cost,
    )(pc_cm, w1t)

    # Mean over the full cloud (recombining pseudo-batches when split), then the
    # second projection as one batched XLA GEMM (hoisted out of the kernel).
    pooled = sums[:, :, 0].reshape(B, split, H).sum(axis=1) * (1.0 / N)   # (B, H)
    return pooled @ params["w2"] + params["b2"][None, :]                  # (B, D)


def uni3d_forward(pc, text, image, params, *, cache_type="global"):
    """Mirrors Uni3D.forward: dict of text/pc/image embeds + exp(logit_scale)."""
    if cache_type != "global":
        # TODO(synk): 'local'/'hierarchical' cache types return patch-level
        # outputs of the external point_encoder; only 'global' is implemented.
        raise NotImplementedError("only cache_type='global' is implemented")
    pc_embed = encode_pc(pc, params)
    return {
        "text_embed": text,                             # passed through unchanged
        "pc_embed": pc_embed,
        "image_embed": image,                           # passed through unchanged
        "logit_scale": jnp.exp(params["logit_scale"]),  # scalar, done in wrapper
    }


def init_params(key, hidden=128, embed_dim=128):
    k1, k2, k3, k4, k5 = jax.random.split(key, 5)
    return {
        "w_xyz": 0.1 * jax.random.normal(k1, (3, hidden), jnp.float32),
        "w_col": 0.1 * jax.random.normal(k2, (3, hidden), jnp.float32),
        "b1": 0.1 * jax.random.normal(k4, (hidden,), jnp.float32),
        "w2": 0.1 * jax.random.normal(k3, (hidden, embed_dim), jnp.float32),
        "b2": 0.1 * jax.random.normal(k5, (embed_dim,), jnp.float32),
        # nn.Parameter(torch.ones([]) * np.log(1/0.07))
        "logit_scale": jnp.asarray(np.log(1.0 / 0.07), jnp.float32),
    }


def _encode_pc_reference(pc, params):
    """Pure-JAX f32 reference mirroring the module semantics."""
    xyz = pc[:, :, :3]
    color = pc[:, :, 3:]
    h = (jnp.einsum("bnc,ch->bnh", xyz, params["w_xyz"])
         + jnp.einsum("bnc,ch->bnh", color, params["w_col"])
         + params["b1"][None, None, :])
    h = jax.nn.gelu(h, approximate=True)
    y = jnp.einsum("bnh,hd->bnd", h, params["w2"]) + params["b2"][None, None, :]
    return jnp.mean(y, axis=1)


if __name__ == "__main__":
    B, N = 2, 4096          # batch, points per cloud (2 point tiles at tile_n=2048)
    H, D = 128, 128         # hidden width, embedding dim (lane-width multiples)

    key = jax.random.PRNGKey(0)
    k_pc, k_txt, k_img, k_par = jax.random.split(key, 4)

    pc = jax.random.normal(k_pc, (B, N, 6), jnp.float32)      # xyz + rgb
    text = jax.random.normal(k_txt, (B, D), jnp.float32)      # precomputed text embed
    image = jax.random.normal(k_img, (B, D), jnp.float32)     # precomputed image embed
    params = init_params(k_par, hidden=H, embed_dim=D)

    out = uni3d_forward(pc, text, image, params)
    out = jax.block_until_ready(out)

    # sanity checks
    assert out["pc_embed"].shape == (B, D)
    assert out["text_embed"].shape == (B, D)
    assert out["image_embed"].shape == (B, D)
    assert np.isclose(float(out["logit_scale"]), 1.0 / 0.07, rtol=1e-4)

    ref = _encode_pc_reference(pc, params)
    np.testing.assert_allclose(np.asarray(out["pc_embed"]), np.asarray(ref),
                               rtol=5e-2, atol=2.5e-2)

    # exercise the B == 1 megacore-split path (2 pseudo-clouds of N/2 points)
    pc1 = pc[:1]
    emb1 = jax.block_until_ready(encode_pc(pc1, params))
    ref1 = _encode_pc_reference(pc1, params)
    assert emb1.shape == (1, D)
    np.testing.assert_allclose(np.asarray(emb1), np.asarray(ref1),
                               rtol=5e-2, atol=2.5e-2)

    print("KERNEL_OK")
</pallas_src>

<mosaic_0001>
module attributes {stable_mosaic.version = 11 : i64} {
  func.func @_encode_pc_kernel(%arg0: i32, %arg1: i32, %arg2: memref<1x8x2048xbf16, #tpu.memory_space<vmem>>, %arg3: memref<128x8xbf16, #tpu.memory_space<vmem>>, %arg4: memref<1x128x1xf32, #tpu.memory_space<vmem>>, %arg5: memref<128x128xf32, #tpu.memory_space<vmem>>) attributes {dimension_semantics = [#tpu.dimension_semantics<parallel>, #tpu.dimension_semantics<arbitrary>], iteration_bounds = array<i64: 2, 2>, scalar_prefetch = 0 : i64, scratch_operands = 1 : i64, tpu.core_type = #tpu.core_type<tc>, window_params = [{transform_indices = @transform_0, window_bounds = array<i64: 1, 8, 2048>}, {pipeline_mode = #tpu.pipeline_mode<synchronous>, transform_indices = @transform_1, window_bounds = array<i64: 128, 8>}, {transform_indices = @transform_2, window_bounds = array<i64: 1, 128, 1>}]} {
    %c0_i32 = arith.constant 0 : i32
    %0 = arith.cmpi eq, %arg1, %c0_i32 : i32
    %1 = arith.extui %0 : i1 to i32
    %c0_i32_0 = arith.constant 0 : i32
    %2 = arith.cmpi ne, %1, %c0_i32_0 : i32
    scf.if %2 {
      %cst_15 = arith.constant 0.000000e+00 : f32
      %28 = vector.broadcast %cst_15 : f32 to vector<128x128xf32>
      %c0_16 = arith.constant 0 : index
      %c0_17 = arith.constant 0 : index
      %29 = vector.load %arg5[%c0_16, %c0_17] : memref<128x128xf32, #tpu.memory_space<vmem>>, vector<128x128xf32>
      tpu.vector_store %arg5[%c0_16, %c0_17], %28 {strides = array<i32>} : memref<128x128xf32, #tpu.memory_space<vmem>>, vector<128x128xf32>,
    } else {
    }
    %c0 = arith.constant 0 : index
    %c0_1 = arith.constant 0 : index
    %c0_2 = arith.constant 0 : index
    %3 = vector.load %arg2[%c0, %c0_1, %c0_2] : memref<1x8x2048xbf16, #tpu.memory_space<vmem>>, vector<1x8x2048xbf16>
    %4 = vector.shape_cast %3 : vector<1x8x2048xbf16> to vector<8x2048xbf16>
    %c0_3 = arith.constant 0 : index
    %c0_4 = arith.constant 0 : index
    %5 = vector.load %arg3[%c0_3, %c0_4] : memref<128x8xbf16, #tpu.memory_space<vmem>>, vector<128x8xbf16>
    %cst = arith.constant dense<0.000000e+00> : vector<128x2048xf32>
    %6 = tpu.matmul %5, %4, %cst {dimension_numbers = #tpu.dot_dimension_numbers<[1], [0], [0], [1], [0, 0, 1, 1], [], []>} : vector<128x8xbf16>, vector<8x2048xbf16>, vector<128x2048xf32> -> vector<128x2048xf32>
    %7 = arith.mulf %6, %6 : vector<128x2048xf32>
    %8 = arith.mulf %6, %7 : vector<128x2048xf32>
    %cst_5 = arith.constant 4.471500e-02 : f32
    %9 = vector.broadcast %cst_5 : f32 to vector<128x2048xf32>
    %10 = arith.mulf %9, %8 : vector<128x2048xf32>
    %11 = arith.addf %6, %10 : vector<128x2048xf32>
    %cst_6 = arith.constant 0.797884583 : f32
    %12 = vector.broadcast %cst_6 : f32 to vector<128x2048xf32>
    %13 = arith.mulf %12, %11 : vector<128x2048xf32>
    %14 = math.tanh %13 : vector<128x2048xf32>
    %cst_7 = arith.constant 1.000000e+00 : f32
    %15 = vector.broadcast %cst_7 : f32 to vector<128x2048xf32>
    %16 = arith.addf %15, %14 : vector<128x2048xf32>
    %cst_8 = arith.constant 5.000000e-01 : f32
    %17 = vector.broadcast %cst_8 : f32 to vector<128x2048xf32>
    %18 = arith.mulf %17, %16 : vector<128x2048xf32>
    %19 = arith.mulf %6, %18 : vector<128x2048xf32>
    %c0_9 = arith.constant 0 : index
    %c0_10 = arith.constant 0 : index
    %20 = vector.load %arg5[%c0_9, %c0_10] : memref<128x128xf32, #tpu.memory_space<vmem>>, vector<128x128xf32>
    %21 = vector.shape_cast %19 : vector<128x2048xf32> to vector<128x16x128xf32>
    %cst_11 = arith.constant dense<0.000000e+00> : vector<128x128xf32>
    %22 = vector.multi_reduction <add>, %21, %cst_11 [1] : vector<128x16x128xf32> to vector<128x128xf32>
    %23 = arith.addf %20, %22 : vector<128x128xf32>
    %c0_12 = arith.constant 0 : index
    %c0_13 = arith.constant 0 : index
    %24 = vector.load %arg5[%c0_12, %c0_13] : memref<128x128xf32, #tpu.memory_space<vmem>>, vector<128x128xf32>
    tpu.vector_store %arg5[%c0_12, %c0_13], %23 {strides = array<i32>} : memref<128x128xf32, #tpu.memory_space<vmem>>, vector<128x128xf32>,
    %c1_i32 = arith.constant 1 : i32
    %25 = arith.cmpi eq, %arg1, %c1_i32 : i32
    %26 = arith.extui %25 : i1 to i32
    %c0_i32_14 = arith.constant 0 : i32
    %27 = arith.cmpi ne, %26, %c0_i32_14 : i32
    scf.if %27 {
      %c0_15 = arith.constant 0 : index
      %c0_16 = arith.constant 0 : index
      %28 = vector.load %arg5[%c0_15, %c0_16] : memref<128x128xf32, #tpu.memory_space<vmem>>, vector<128x128xf32>
      %cst_17 = arith.constant dense<0.000000e+00> : vector<128xf32>
      %29 = vector.multi_reduction <add>, %28, %cst_17 [1] : vector<128x128xf32> to vector<128xf32>
      %30 = vector.shape_cast %29 : vector<128xf32> to vector<128x1xf32>
      %c0_18 = arith.constant 0 : index
      %c0_19 = arith.constant 0 : index
      %c0_20 = arith.constant 0 : index
      %31 = vector.load %arg4[%c0_18, %c0_19, %c0_20] : memref<1x128x1xf32, #tpu.memory_space<vmem>>, vector<1x128x1xf32>
      %32 = vector.shape_cast %31 : vector<1x128x1xf32> to vector<128x1xf32>
      %33 = vector.shape_cast %30 : vector<128x1xf32> to vector<1x128x1xf32>
      tpu.vector_store %arg4[%c0_18, %c0_19, %c0_20], %33 {strides = array<i32>} : memref<1x128x1xf32, #tpu.memory_space<vmem>>, vector<1x128x1xf32>,
    } else {
    }
    return
  }
  func.func @transform_0(%arg0: i32, %arg1: i32) -> (i32, i32, i32) {
    %c0_i32 = arith.constant 0 : i32
    %c0_i32_0 = arith.constant 0 : i32
    return %arg0, %c0_i32, %arg1 : i32, i32, i32
  }
  func.func @transform_1(%arg0: i32, %arg1: i32) -> (i32, i32) {
    %c0_i32 = arith.constant 0 : i32
    %c0_i32_0 = arith.constant 0 : i32
    %c0_i32_1 = arith.constant 0 : i32
    return %c0_i32, %c0_i32_0 : i32, i32
  }
  func.func @transform_2(%arg0: i32, %arg1: i32) -> (i32, i32, i32) {
    %c0_i32 = arith.constant 0 : i32
    %c0_i32_0 = arith.constant 0 : i32
    %c0_i32_1 = arith.constant 0 : i32
    return %arg0, %c0_i32, %c0_i32_0 : i32, i32, i32
  }
}

</mosaic_0001>

<llo_original>
// kernel: tpu_custom_call.1
$region0: #{tpu_custom_call.1}
  #allocation0 [shape = 'u32[]', space=smem, size = 0x4, offset = 0x4, fixed_abs, tag = 'smem constant byte address 0x4 - core index']
  #allocation1 [shape = 'u32[144,128]{1,0:T(1,128)}', space=vmem, size = 0x12000, scoped, tag = 'internal scratch']
  #allocation2 [shape = 'f32[128,128]{1,0:T(8,128)}', space=vmem, size = 0x10000, scoped, tag = 'scratch operand']
  %s0 = inlined_call_operand.hbm [shape: bf16[2,8,4096], index: 0, kind: input, shape index: {}]
  %s1 = inlined_call_operand.vmem [shape: bf16[128,8], index: 1, kind: input, shape index: {}]
  %s2 = inlined_call_operand.vmem [shape: f32[2,128,1], index: 2, kind: output, shape index: {}]
  %s3 = sld [smem:[#allocation0]]
  $region53: #{tpu_custom_call.1} parent=0
    _
  %s5 = ssub.s32 1, %s3
  %s6 = scalar_select 0, %s5, %s3
  $region1: #{tpu_custom_call.1} parent=0
    #allocation3 [shape = 'u8[65536]{0}', space=vmem, size = 0x10000, scoped, tag = 'input window, operand 0']
    #allocation4 [shape = 's32[2]{0}', space=sflag, size = 0x8, scoped, tag = 'scoped memory for tpu_custom_call.1']
    %7 = vsyncpa [#allocation4], 0
    %s8 = scalar_lea.sflag [#allocation4], 1
    %9 = vsyncpa %s8, 0
    loop: start=0, step=1, limit=6
    $region2: #{tpu_custom_call.1} parent=1 // loop_pre_header
      _
    $region3: #{tpu_custom_call.1} parent=1 // loop_header
      %s11 = sphi 0, %s15
      %p12 = scmp.ge.s32.totalorder %s11, 6
      %s18 = sphi 0, %s30
      %s19 = sphi 0, %s26
      %s20 = sphi 0, %s18
      %s21 = sphi 0, %s19
      %s22 = sphi 0, %s20
      %s23 = sphi 0, %s21
      %s35 = sphi 0, %s37
      %s38 = sphi 0, %s35
      %s39 = sphi 0, %s38
      %s55 = sphi 0, %s39
      %s59 = sphi 0, %s59
      %s61 = sphi 0, %s59
      %s62 = sphi 0, %s61
      %s76 = sphi 0, %s62
      %s82 = sphi 0, %s84
      %s85 = sphi 0, %s82
      %s86 = sphi 0, %s85
      %s102 = sphi 0, %s86
    $region4: #{tpu_custom_call.1} parent=1 // loop_header_branch
      %14 = sbr.rel (%p12) target = $region8
    $region5: #{tpu_custom_call.1} parent=1 // loop_body
      %s16 = ssub.s32 %s11, 1
      %s17 = ssub.s32 %s11, 2
      %s24 = sadd.s32 1, %s19
      %p25 = scmp.ge.s32.totalorder %s24, 2
      %s26 = scalar_select %p25, 0, %s24
      %s27 = sadd.s32 1, %s18
      %s28 = scalar_select %p25, %s27, %s18
      %p29 = scmp.ge.s32.totalorder %s28, 2
      %s30 = scalar_select %p29, 0, %s28
      %s31 = ssub.s32 %s18, %s30
      %s32 = ssub.s32 %s19, %s26
      %s33 = sor.u32 %s31, %s32
      %p34 = scmp.eq.s32.totalorder %s33, 0
      %s36 = sadd.s32 %s35, 1
      %s37 = scalar_select %p34, %s35, %s36
      %p40 = pneg %p34
      %p41 = scmp.eq.s32.totalorder %s11, 3
      %p42 = por %p40, %p41
      %p43 = scmp.ne.s32.totalorder %s35, %s38
      %p44 = scmp.eq.s32.totalorder %s11, 0
      %p45 = por %p43, %p44
      %p46 = scmp.ne.s32.totalorder %s35, %s38
      %p47 = scmp.eq.s32.totalorder %s16, 3
      %p48 = por %p46, %p47
      %p49 = scmp.ne.s32.totalorder %s38, %s39
      %p50 = scmp.eq.s32.totalorder %s16, 0
      %p51 = por %p49, %p50
      %p52 = scmp.ne.s32.totalorder %s38, %s39
      %p53 = scmp.eq.s32.totalorder %s17, 3
      %p54 = por %p52, %p53
      %p56 = scmp.ne.s32.totalorder %s39, %s55
      %p57 = scmp.eq.s32.totalorder %s17, 0
      %p58 = por %p56, %p57
      %s60 = sadd.s32 %s59, 1
      %p63 = scmp.eq.s32.totalorder %s11, 3
      %p64 = scmp.ne.s32.totalorder %s59, %s61
      %p65 = scmp.eq.s32.totalorder %s11, 0
      %p66 = por %p64, %p65
      %p67 = scmp.ne.s32.totalorder %s59, %s61
      %p68 = scmp.eq.s32.totalorder %s16, 3
      %p69 = por %p67, %p68
      %p70 = scmp.ne.s32.totalorder %s61, %s62
      %p71 = scmp.eq.s32.totalorder %s16, 0
      %p72 = por %p70, %p71
      %p73 = scmp.ne.s32.totalorder %s61, %s62
      %p74 = scmp.eq.s32.totalorder %s17, 3
      %p75 = por %p73, %p74
      %p77 = scmp.ne.s32.totalorder %s62, %s76
      %p78 = scmp.eq.s32.totalorder %s17, 0
      %p79 = por %p77, %p78
      %s80 = ssub.s32 %s18, %s30
      %p81 = scmp.eq.s32.totalorder %s80, 0
      %s83 = sadd.s32 %s82, 1
      %s84 = scalar_select %p81, %s82, %s83
      %p87 = pneg %p81
      %p88 = scmp.eq.s32.totalorder %s11, 3
      %p89 = por %p87, %p88
      %p90 = scmp.ne.s32.totalorder %s82, %s85
      %p91 = scmp.eq.s32.totalorder %s11, 0
      %p92 = por %p90, %p91
      %p93 = scmp.ne.s32.totalorder %s82, %s85
      %p94 = scmp.eq.s32.totalorder %s16, 3
      %p95 = por %p93, %p94
      %p96 = scmp.ne.s32.totalorder %s85, %s86
      %p97 = scmp.eq.s32.totalorder %s16, 0
      %p98 = por %p96, %p97
      %p99 = scmp.ne.s32.totalorder %s85, %s86
      %p100 = scmp.eq.s32.totalorder %s17, 3
      %p101 = por %p99, %p100
      %p103 = scmp.ne.s32.totalorder %s86, %s102
      %p104 = scmp.eq.s32.totalorder %s17, 0
      %p105 = por %p103, %p104
      %p106 = scmp.le.s32.totalorder 1, %s11
      %p107 = scmp.lt.s32.totalorder %s11, 5
      %p108 = pnand %p106, %p107
      %p109 = pneg %p108
      // Predicated region
      $region9: #{tpu_custom_call.1} parent=5 // pred_check
        _
      $region10: #{tpu_custom_call.1} parent=5 // pred_check_branch
        %111 = sbr.rel (%p108) target = $region12
      $region11: #{tpu_custom_call.1} parent=5 // pred_region
        %s112 = ssub.s32 %s11, 1
        // Predicated region
        $region13: #{tpu_custom_call.1} parent=11 // pred_check
          %p113 = pneg %p72
        $region14: #{tpu_custom_call.1} parent=11 // pred_check_branch
          %115 = sbr.rel (%p113) target = $region16
        $region15: #{tpu_custom_call.1} parent=11 // pred_region
          _
        $region16: #{tpu_custom_call.1} parent=11 // pred_fallthru
          _
      $region12: #{tpu_custom_call.1} parent=5 // pred_fallthru
        _
      %p116 = scmp.lt.s32.totalorder %s11, 4
      // Predicated region
      $region17: #{tpu_custom_call.1} parent=5 // pred_check
        %p117 = pneg %p116
      $region18: #{tpu_custom_call.1} parent=5 // pred_check_branch
        %119 = sbr.rel (%p117) target = $region20
      $region19: #{tpu_custom_call.1} parent=5 // pred_region
        // Predicated region
        $region21: #{tpu_custom_call.1} parent=19 // pred_check
          %p120 = pneg %p45
        $region22: #{tpu_custom_call.1} parent=19 // pred_check_branch
          %122 = sbr.rel (%p120) target = $region24
        $region23: #{tpu_custom_call.1} parent=19 // pred_region
          %s123 = sand.u32 %s35, 1
          %s124 = scalar_lea.sflag [#allocation4], %s123
          %s125 = sand.u32 %s35, 1
          %s126 = smul.addr %s125, 64
          %s127 = scalar_lea.vmem [#allocation3], %s126
          %s128 = smul.u32 16, %s19
          %s130 = ssub.s32 1024, 1024
          %131 = vsyncadd %s124, %s130
          %s132 = smul.addr %s18, 32
          %s133 = sadd.s32 %s128, %s132
          %s134 = smul.addr %s133, 64
          %s135 = scalar_lea.hbm %s0, %s134
          %s137 = sshll.u32 %s127, 4
          %s138 = int_to_ptr.vmem [resolvable:$true] %s137
          %140 = dma.hbm_to_vmem [thread:$0]  %s135, 1024, %s138, %s124
        $region24: #{tpu_custom_call.1} parent=19 // pred_fallthru
          _
      $region20: #{tpu_custom_call.1} parent=5 // pred_fallthru
        _
      %p141 = scmp.le.s32.totalorder 1, %s11
      %p142 = scmp.lt.s32.totalorder %s11, 5
      %p143 = pnand %p141, %p142
      %p144 = pneg %p143
      // Predicated region
      $region25: #{tpu_custom_call.1} parent=5 // pred_check
        _
      $region26: #{tpu_custom_call.1} parent=5 // pred_check_branch
        %146 = sbr.rel (%p143) target = $region28
      $region27: #{tpu_custom_call.1} parent=5 // pred_region
        %s147 = ssub.s32 %s11, 1
        %s148 = sand.u32 %s38, 1
        %s149 = scalar_lea.sflag [#allocation4], %s148
        %s150 = sand.u32 %s38, 1
        %s151 = smul.addr %s150, 64
        %s152 = scalar_lea.vmem [#allocation3], %s151
        // Predicated region
        $region29: #{tpu_custom_call.1} parent=27 // pred_check
          %p153 = pneg %p51
        $region30: #{tpu_custom_call.1} parent=27 // pred_check_branch
          %155 = sbr.rel (%p153) target = $region32
        $region31: #{tpu_custom_call.1} parent=27 // pred_region
          %156 = dma.done %s149, 1024
        $region32: #{tpu_custom_call.1} parent=27 // pred_fallthru
          _
        %s157 = sand.u32 %s38, 1
        %s158 = scalar_lea.sflag [#allocation4], %s157
        %s159 = sand.u32 %s38, 1
        %s160 = smul.addr %s159, 64
        %s161 = scalar_lea.vmem [#allocation3], %s160
        %p162 = pneg %p51
        %p163 = pneg %p48
        %p164 = pneg %p72
        %p165 = pneg %p69
        %p166 = pneg %p98
        %p167 = pneg %p95
        %p168 = scmp.lt.s32.totalorder %s20, 1
        %s169 = scalar_select %p168, %s20, 1
        %s170 = smul.addr %s169, 16
        %s171 = smul.addr %s170, 8
        %s172 = scalar_lea.vmem %s2, %s171
        %s173 = smul.u32 16, %s21
        %p174 = scmp.lt.s32.totalorder %s20, 1
        %s175 = scalar_select %p174, %s20, 1
        %s176 = smul.addr %s175, 16
        %s177 = smul.addr %s176, 8
        %s178 = scalar_lea.vmem %s2, %s177
        %p180 = scmp.eq.s32.totalorder %s21, 0
        // Predicated region
        $region33: #{tpu_custom_call.1} parent=27 // pred_check
          %p181 = pneg %p180
        $region34: #{tpu_custom_call.1} parent=27 // pred_check_branch
          %183 = sbr.rel (%p181) target = $region36
        $region35: #{tpu_custom_call.1} parent=27 // pred_region
          %184 = vst [vmem:[#allocation2] sm:$0xff] 0.0
          %185 = vst [vmem:[#allocation2 + $0x8] sm:$0xff] 0.0
          %186 = vst [vmem:[#allocation2 + $0x10] sm:$0xff] 0.0
          %187 = vst [vmem:[#allocation2 + $0x18] sm:$0xff] 0.0
          %188 = vst [vmem:[#allocation2 + $0x20] sm:$0xff] 0.0
          %189 = vst [vmem:[#allocation2 + $0x28] sm:$0xff] 0.0
          %190 = vst [vmem:[#allocation2 + $0x30] sm:$0xff] 0.0
          %191 = vst [vmem:[#allocation2 + $0x38] sm:$0xff] 0.0
          %192 = vst [vmem:[#allocation2 + $0x40] sm:$0xff] 0.0
          %193 = vst [vmem:[#allocation2 + $0x48] sm:$0xff] 0.0
          %194 = vst [vmem:[#allocation2 + $0x50] sm:$0xff] 0.0
          %195 = vst [vmem:[#allocation2 + $0x58] sm:$0xff] 0.0
          %196 = vst [vmem:[#allocation2 + $0x60] sm:$0xff] 0.0
          %197 = vst [vmem:[#allocation2 + $0x68] sm:$0xff] 0.0
          %198 = vst [vmem:[#allocation2 + $0x70] sm:$0xff] 0.0
          %199 = vst [vmem:[#allocation2 + $0x78] sm:$0xff] 0.0
        $region36: #{tpu_custom_call.1} parent=27 // pred_fallthru
          _
        %v200 = vld [vmem:[%s152] sm:$0xff]
        %v201 = vld [vmem:[%s152 + $0x8] sm:$0xff]
        %v202 = vld [vmem:[%s152 + $0x10] sm:$0xff]
        %v203 = vld [vmem:[%s152 + $0x18] sm:$0xff]
        %v204 = vld [vmem:[%s152 + $0x20] sm:$0xff]
        %v205 = vld [vmem:[%s152 + $0x28] sm:$0xff]
        %v206 = vld [vmem:[%s152 + $0x30] sm:$0xff]
        %v207 = vld [vmem:[%s152 + $0x38] sm:$0xff]
        %v208 = vld [vmem:[%s1] sm:$0xf]
        %v209 = vld [vmem:[%s1 + $0x4] sm:$0xf]
        %v210 = vld [vmem:[%s1 + $0x8] sm:$0xf]
        %v211 = vld [vmem:[%s1 + $0xc] sm:$0xf]
        %v212 = vld [vmem:[%s1 + $0x10] sm:$0xf]
        %v213 = vld [vmem:[%s1 + $0x14] sm:$0xf]
        %v214 = vld [vmem:[%s1 + $0x18] sm:$0xf]
        %v215 = vld [vmem:[%s1 + $0x1c] sm:$0xf]
        %v216 = vld [vmem:[%s1 + $0x20] sm:$0xf]
        %v217 = vld [vmem:[%s1 + $0x24] sm:$0xf]
        %v218 = vld [vmem:[%s1 + $0x28] sm:$0xf]
        %v219 = vld [vmem:[%s1 + $0x2c] sm:$0xf]
        %v220 = vld [vmem:[%s1 + $0x30] sm:$0xf]
        %v221 = vld [vmem:[%s1 + $0x34] sm:$0xf]
        %v222 = vld [vmem:[%s1 + $0x38] sm:$0xf]
        %v223 = vld [vmem:[%s1 + $0x3c] sm:$0xf]
        %v240 = vunpack.c.l.b16 %v208
        %v241 = vunpack.c.l.b16 %v209
        %v242 = vunpack.c.l.b16 %v210
        %v243 = vunpack.c.l.b16 %v211
        %v244 = vunpack.c.l.b16 %v212
        %v245 = vunpack.c.l.b16 %v213
        %v246 = vunpack.c.l.b16 %v214
        %v247 = vunpack.c.l.b16 %v215
        %v248 = vunpack.c.l.b16 %v216
        %v249 = vunpack.c.l.b16 %v217
        %v250 = vunpack.c.l.b16 %v218
        %v251 = vunpack.c.l.b16 %v219
        %v252 = vunpack.c.l.b16 %v220
        %v253 = vunpack.c.l.b16 %v221
        %v254 = vunpack.c.l.b16 %v222
        %v255 = vunpack.c.l.b16 %v223
        %v256 = vpack.c.b16 %v241, %v240
        %v257 = vpack.c.b16 %v243, %v242
        %v258 = vpack.c.b16 %v245, %v244
        %v259 = vpack.c.b16 %v247, %v246
        %v260 = vpack.c.b16 %v249, %v248
        %v261 = vpack.c.b16 %v251, %v250
        %v262 = vpack.c.b16 %v253, %v252
        %v263 = vpack.c.b16 %v255, %v254
        %v272 = vunpack.c.l.b16 %v200
        %v273 = vunpack.c.h.b16 %v200
        %v274 = vunpack.c.l.b16 %v201
        %v275 = vunpack.c.h.b16 %v201
        %v276 = vunpack.c.l.b16 %v202
        %v277 = vunpack.c.h.b16 %v202
        %v278 = vunpack.c.l.b16 %v203
        %v279 = vunpack.c.h.b16 %v203
        %v280 = vunpack.c.l.b16 %v204
        %v281 = vunpack.c.h.b16 %v204
        %v282 = vunpack.c.l.b16 %v205
        %v283 = vunpack.c.h.b16 %v205
        %v284 = vunpack.c.l.b16 %v206
        %v285 = vunpack.c.h.b16 %v206
        %v286 = vunpack.c.l.b16 %v207
        %v287 = vunpack.c.h.b16 %v207
        %v288 = vpack.c.b16 %v272, %v272
        %v289 = vpack.c.b16 %v273, %v273
        %v290 = vpack.c.b16 %v274, %v274
        %v291 = vpack.c.b16 %v275, %v275
        %v292 = vpack.c.b16 %v276, %v276
        %v293 = vpack.c.b16 %v277, %v277
        %v294 = vpack.c.b16 %v278, %v278
        %v295 = vpack.c.b16 %v279, %v279
        %v296 = vpack.c.b16 %v280, %v280
        %v297 = vpack.c.b16 %v281, %v281
        %v298 = vpack.c.b16 %v282, %v282
        %v299 = vpack.c.b16 %v283, %v283
        %v300 = vpack.c.b16 %v284, %v284
        %v301 = vpack.c.b16 %v285, %v285
        %v302 = vpack.c.b16 %v286, %v286
        %v303 = vpack.c.b16 %v287, %v287
        %vm304 = vcmask 64512
        %v306 = vsel %vm304, %v256, 0
        %v309 = vsel %vm304, %v257, 0
        %v312 = vsel %vm304, %v258, 0
        %v315 = vsel %vm304, %v259, 0
        %v318 = vsel %vm304, %v260, 0
        %v321 = vsel %vm304, %v261, 0
        %v324 = vsel %vm304, %v262, 0
        %v327 = vsel %vm304, %v263, 0
        %vm329 = vcmask 1043456
        %v331 = vsel %vm329, %v288, 0
        %v334 = vsel %vm329, %v289, 0
        %v337 = vsel %vm329, %v290, 0
        %v340 = vsel %vm329, %v291, 0
        %v343 = vsel %vm329, %v292, 0
        %v346 = vsel %vm329, %v293, 0
        %v349 = vsel %vm329, %v294, 0
        %v352 = vsel %vm329, %v295, 0
        %v355 = vsel %vm329, %v296, 0
        %v358 = vsel %vm329, %v297, 0
        %v361 = vsel %vm329, %v298, 0
        %v364 = vsel %vm329, %v299, 0
        %v367 = vsel %vm329, %v300, 0
        %v370 = vsel %vm329, %v301, 0
        %v373 = vsel %vm329, %v302, 0
        %v376 = vsel %vm329, %v303, 0
        %378 = vmatprep.subr.bf16.mxu0 %v334
        %379 = vmatpush1.bf16.msra.mxu0 %v331
        %380 = vmatprep.subr.bf16.mxu0 0
        %381 = vmatpush1.bf16.msra.mxu0 0
        %382 = vmatprep.subr.bf16.mxu0 0
        %383 = vmatpush1.bf16.msra.mxu0 0
        %384 = vmatprep.subr.bf16.mxu0 0
        %385 = vmatpush1.bf16.msra.mxu0 0
        %386 = vmatprep.subr.bf16.mxu0 0
        %387 = vmatpush1.bf16.msra.mxu0 0
        %388 = vmatprep.subr.bf16.mxu0 0
        %389 = vmatpush1.bf16.msra.mxu0 0
        %390 = vmatprep.subr.bf16.mxu0 0
        %391 = vmatpush1.bf16.msra.mxu0 0
        %392 = vmatprep.subr.bf16.mxu0 0
        %393 = vmatpush1.bf16.msra.mxu0 0
        %394 = vmatprep.subr.bf16.mxu0 0
        %395 = vmatpush1.bf16.msra.mxu0 0
        %396 = vmatprep.subr.bf16.mxu0 0
        %397 = vmatpush1.bf16.msra.mxu0 0
        %398 = vmatprep.subr.bf16.mxu0 0
        %399 = vmatpush1.bf16.msra.mxu0 0
        %400 = vmatprep.subr.bf16.mxu0 0
        %401 = vmatpush1.bf16.msra.mxu0 0
        %402 = vmatprep.subr.bf16.mxu0 0
        %403 = vmatpush1.bf16.msra.mxu0 0
        %404 = vmatprep.subr.bf16.mxu0 0
        %405 = vmatpush1.bf16.msra.mxu0 0
        %406 = vmatprep.subr.bf16.mxu0 0
        %407 = vmatpush1.bf16.msra.mxu0 0
        %408 = vmatprep.subr.bf16.mxu0 0
        %409 = vmatpush1.bf16.msra.mxu0 0
        %410 = vmatprep.mubr.bf16.mxu0 0
        %411 = vmatmul.mubr.bf16.gmra.mrb[0].mxu0 %v306
        %v412 = vpop.f32.mrb[0].mxu0
        %v413 = vadd.f32 0.0, %v412
        %v414 = vpop.f32.mrb[0].mxu0
        %v415 = vadd.f32 0.0, %v414
        %v416 = vpop.f32.mrb[0].mxu0
        %v417 = vadd.f32 0.0, %v416
        %v418 = vpop.f32.mrb[0].mxu0
        %v419 = vadd.f32 0.0, %v418
        %420 = vmatprep.mubr.bf16.mxu0 0
        %421 = vmatmul.mubr.bf16.gmra.mrb[0].mxu0 %v309
        %v422 = vpop.f32.mrb[0].mxu0
        %v423 = vadd.f32 0.0, %v422
        %v424 = vpop.f32.mrb[0].mxu0
        %v425 = vadd.f32 0.0, %v424
        %v426 = vpop.f32.mrb[0].mxu0
        %v427 = vadd.f32 0.0, %v426
        %v428 = vpop.f32.mrb[0].mxu0
        %v429 = vadd.f32 0.0, %v428
        %430 = vmatprep.mubr.bf16.mxu0 0
        %431 = vmatmul.mubr.bf16.gmra.mrb[0].mxu0 %v312
        %v432 = vpop.f32.mrb[0].mxu0
        %v433 = vadd.f32 0.0, %v432
        %v434 = vpop.f32.mrb[0].mxu0
        %v435 = vadd.f32 0.0, %v434
        %v436 = vpop.f32.mrb[0].mxu0
        %v437 = vadd.f32 0.0, %v436
        %v438 = vpop.f32.mrb[0].mxu0
        %v439 = vadd.f32 0.0, %v438
        %440 = vmatprep.mubr.bf16.mxu0 0
        %441 = vmatmul.mubr.bf16.gmra.mrb[0].mxu0 %v315
        %v442 = vpop.f32.mrb[0].mxu0
        %v443 = vadd.f32 0.0, %v442
        %v444 = vpop.f32.mrb[0].mxu0
        %v445 = vadd.f32 0.0, %v444
        %v446 = vpop.f32.mrb[0].mxu0
        %v447 = vadd.f32 0.0, %v446
        %v448 = vpop.f32.mrb[0].mxu0
        %v449 = vadd.f32 0.0, %v448
        %450 = vmatprep.mubr.bf16.mxu0 0
        %451 = vmatmul.mubr.bf16.gmra.mrb[0].mxu0 %v318
        %v452 = vpop.f32.mrb[0].mxu0
        %v453 = vadd.f32 0.0, %v452
        %v454 = vpop.f32.mrb[0].mxu0
        %v455 = vadd.f32 0.0, %v454
        %v456 = vpop.f32.mrb[0].mxu0
        %v457 = vadd.f32 0.0, %v456
        %v458 = vpop.f32.mrb[0].mxu0
        %v459 = vadd.f32 0.0, %v458
        %460 = vmatprep.mubr.bf16.mxu0 0
        %461 = vmatmul.mubr.bf16.gmra.mrb[0].mxu0 %v321
        %v462 = vpop.f32.mrb[0].mxu0
        %v463 = vadd.f32 0.0, %v462
        %v464 = vpop.f32.mrb[0].mxu0
        %v465 = vadd.f32 0.0, %v464
        %v466 = vpop.f32.mrb[0].mxu0
        %v467 = vadd.f32 0.0, %v466
        %v468 = vpop.f32.mrb[0].mxu0
        %v469 = vadd.f32 0.0, %v468
        %470 = vmatprep.mubr.bf16.mxu0 0
        %471 = vmatmul.mubr.bf16.gmra.mrb[0].mxu0 %v324
        %v472 = vpop.f32.mrb[0].mxu0
        %v473 = vadd.f32 0.0, %v472
        %v474 = vpop.f32.mrb[0].mxu0
        %v475 = vadd.f32 0.0, %v474
        %v476 = vpop.f32.mrb[0].mxu0
        %v477 = vadd.f32 0.0, %v476
        %v478 = vpop.f32.mrb[0].mxu0
        %v479 = vadd.f32 0.0, %v478
        %480 = vmatprep.mubr.bf16.mxu0 0
        %481 = vmatmul.mubr.bf16.gmra.mrb[0].mxu0 %v327
        %v482 = vpop.f32.mrb[0].mxu0
        %v483 = vadd.f32 0.0, %v482
        %v484 = vpop.f32.mrb[0].mxu0
        %v485 = vadd.f32 0.0, %v484
        %v486 = vpop.f32.mrb[0].mxu0
        %v487 = vadd.f32 0.0, %v486
        %v488 = vpop.f32.mrb[0].mxu0
        %v489 = vadd.f32 0.0, %v488
        %490 = vdwg.mxu0
        %491 = vmatprep.subr.bf16.mxu0 %v340
        %492 = vmatpush1.bf16.msra.mxu0 %v337
        %493 = vmatprep.subr.bf16.mxu0 0
        %494 = vmatpush1.bf16.msra.mxu0 0
        %495 = vmatprep.subr.bf16.mxu0 0
        %496 = vmatpush1.bf16.msra.mxu0 0
        %497 = vmatprep.subr.bf16.mxu0 0
        %498 = vmatpush1.bf16.msra.mxu0 0
        %499 = vmatprep.subr.bf16.mxu0 0
        %500 = vmatpush1.bf16.msra.mxu0 0
        %501 = vmatprep.subr.bf16.mxu0 0
        %502 = vmatpush1.bf16.msra.mxu0 0
        %503 = vmatprep.subr.bf16.mxu0 0
        %504 = vmatpush1.bf16.msra.mxu0 0
        %505 = vmatprep.subr.bf16.mxu0 0
        %506 = vmatpush1.bf16.msra.mxu0 0
        %507 = vmatprep.subr.bf16.mxu0 0
        %508 = vmatpush1.bf16.msra.mxu0 0
        %509 = vmatprep.subr.bf16.mxu0 0
        %510 = vmatpush1.bf16.msra.mxu0 0
        %511 = vmatprep.subr.bf16.mxu0 0
        %512 = vmatpush1.bf16.msra.mxu0 0
        %513 = vmatprep.subr.bf16.mxu0 0
        %514 = vmatpush1.bf16.msra.mxu0 0
        %515 = vmatprep.subr.bf16.mxu0 0
        %516 = vmatpush1.bf16.msra.mxu0 0
        %517 = vmatprep.subr.bf16.mxu0 0
        %518 = vmatpush1.bf16.msra.mxu0 0
        %519 = vmatprep.subr.bf16.mxu0 0
        %520 = vmatpush1.bf16.msra.mxu0 0
        %521 = vmatprep.subr.bf16.mxu0 0
        %522 = vmatpush1.bf16.msra.mxu0 0
        %523 = vmatprep.mubr.bf16.mxu0 0
        %524 = vmatmul.mubr.bf16.gmra.mrb[0].mxu0 %v306
        %v525 = vpop.f32.mrb[0].mxu0
        %v526 = vadd.f32 0.0, %v525
        %v527 = vpop.f32.mrb[0].mxu0
        %v528 = vadd.f32 0.0, %v527
        %v529 = vpop.f32.mrb[0].mxu0
        %v530 = vadd.f32 0.0, %v529
        %v531 = vpop.f32.mrb[0].mxu0
        %v532 = vadd.f32 0.0, %v531
        %533 = vmatprep.mubr.bf16.mxu0 0
        %534 = vmatmul.mubr.bf16.gmra.mrb[0].mxu0 %v309
        %v535 = vpop.f32.mrb[0].mxu0
        %v536 = vadd.f32 0.0, %v535
        %v537 = vpop.f32.mrb[0].mxu0
        %v538 = vadd.f32 0.0, %v537
        %v539 = vpop.f32.mrb[0].mxu0
        %v540 = vadd.f32 0.0, %v539
        %v541 = vpop.f32.mrb[0].mxu0
        %v542 = vadd.f32 0.0, %v541
        %543 = vmatprep.mubr.bf16.mxu0 0
        %544 = vmatmul.mubr.bf16.gmra.mrb[0].mxu0 %v312
        %v545 = vpop.f32.mrb[0].mxu0
        %v546 = vadd.f32 0.0, %v545
        %v547 = vpop.f32.mrb[0].mxu0
        %v548 = vadd.f32 0.0, %v547
        %v549 = vpop.f32.mrb[0].mxu0
        %v550 = vadd.f32 0.0, %v549
        %v551 = vpop.f32.mrb[0].mxu0
        %v552 = vadd.f32 0.0, %v551
        %553 = vmatprep.mubr.bf16.mxu0 0
        %554 = vmatmul.mubr.bf16.gmra.mrb[0].mxu0 %v315
        %v555 = vpop.f32.mrb[0].mxu0
        %v556 = vadd.f32 0.0, %v555
        %v557 = vpop.f32.mrb[0].mxu0
        %v558 = vadd.f32 0.0, %v557
        %v559 = vpop.f32.mrb[0].mxu0
        %v560 = vadd.f32 0.0, %v559
        %v561 = vpop.f32.mrb[0].mxu0
        %v562 = vadd.f32 0.0, %v561
        %563 = vmatprep.mubr.bf16.mxu0 0
        %564 = vmatmul.mubr.bf16.gmra.mrb[0].mxu0 %v318
        %v565 = vpop.f32.mrb[0].mxu0
        %v566 = vadd.f32 0.0, %v565
        %v567 = vpop.f32.mrb[0].mxu0
        %v568 = vadd.f32 0.0, %v567
        %v569 = vpop.f32.mrb[0].mxu0
        %v570 = vadd.f32 0.0, %v569
        %v571 = vpop.f32.mrb[0].mxu0
        %v572 = vadd.f32 0.0, %v571
        %573 = vmatprep.mubr.bf16.mxu0 0
        %574 = vmatmul.mubr.bf16.gmra.mrb[0].mxu0 %v321
        %v575 = vpop.f32.mrb[0].mxu0
        %v576 = vadd.f32 0.0, %v575
        %v577 = vpop.f32.mrb[0].mxu0
        %v578 = vadd.f32 0.0, %v577
        %v579 = vpop.f32.mrb[0].mxu0
        %v580 = vadd.f32 0.0, %v579
        %v581 = vpop.f32.mrb[0].mxu0
        %v582 = vadd.f32 0.0, %v581
        %583 = vmatprep.mubr.bf16.mxu0 0
        %584 = vmatmul.mubr.bf16.gmra.mrb[0].mxu0 %v324
        %v585 = vpop.f32.mrb[0].mxu0
        %v586 = vadd.f32 0.0, %v585
        %v587 = vpop.f32.mrb[0].mxu0
        %v588 = vadd.f32 0.0, %v587
        %v589 = vpop.f32.mrb[0].mxu0
        %v590 = vadd.f32 0.0, %v589
        %v591 = vpop.f32.mrb[0].mxu0
        %v592 = vadd.f32 0.0, %v591
        %593 = vmatprep.mubr.bf16.mxu0 0
        %594 = vmatmul.mubr.bf16.gmra.mrb[0].mxu0 %v327
        %v595 = vpop.f32.mrb[0].mxu0
        %v596 = vadd.f32 0.0, %v595
        %v597 = vpop.f32.mrb[0].mxu0
        %v598 = vadd.f32 0.0, %v597
        %v599 = vpop.f32.mrb[0].mxu0
        %v600 = vadd.f32 0.0, %v599
        %v601 = vpop.f32.mrb[0].mxu0
        %v602 = vadd.f32 0.0, %v601
        %603 = vdwg.mxu0
        %604 = vmatprep.subr.bf16.mxu0 %v346
        %605 = vmatpush1.bf16.msra.mxu0 %v343
        %606 = vmatprep.subr.bf16.mxu0 0
        %607 = vmatpush1.bf16.msra.mxu0 0
        %608 = vmatprep.subr.bf16.mxu0 0
        %609 = vmatpush1.bf16.msra.mxu0 0
        %610 = vmatprep.subr.bf16.mxu0 0
        %611 = vmatpush1.bf16.msra.mxu0 0
        %612 = vmatprep.subr.bf16.mxu0 0
        %613 = vmatpush1.bf16.msra.mxu0 0
        %614 = vmatprep.subr.bf16.mxu0 0
        %615 = vmatpush1.bf16.msra.mxu0 0
        %616 = vmatprep.subr.bf16.mxu0 0
        %617 = vmatpush1.bf16.msra.mxu0 0
        %618 = vmatprep.subr.bf16.mxu0 0
        %619 = vmatpush1.bf16.msra.mxu0 0
        %620 = vmatprep.subr.bf16.mxu0 0
        %621 = vmatpush1.bf16.msra.mxu0 0
        %622 = vmatprep.subr.bf16.mxu0 0
        %623 = vmatpush1.bf16.msra.mxu0 0
        %624 = vmatprep.subr.bf16.mxu0 0
        %625 = vmatpush1.bf16.msra.mxu0 0
        %626 = vmatprep.subr.bf16.mxu0 0
        %627 = vmatpush1.bf16.msra.mxu0 0
        %628 = vmatprep.subr.bf16.mxu0 0
        %629 = vmatpush1.bf16.msra.mxu0 0
        %630 = vmatprep.subr.bf16.mxu0 0
        %631 = vmatpush1.bf16.msra.mxu0 0
        %632 = vmatprep.subr.bf16.mxu0 0
        %633 = vmatpush1.bf16.msra.mxu0 0
        %634 = vmatprep.subr.bf16.mxu0 0
        %635 = vmatpush1.bf16.msra.mxu0 0
        %636 = vmatprep.mubr.bf16.mxu0 0
        %637 = vmatmul.mubr.bf16.gmra.mrb[0].mxu0 %v306
        %v638 = vpop.f32.mrb[0].mxu0
        %v639 = vadd.f32 0.0, %v638
        %v640 = vpop.f32.mrb[0].mxu0
        %v641 = vadd.f32 0.0, %v640
        %v642 = vpop.f32.mrb[0].mxu0
        %v643 = vadd.f32 0.0, %v642
        %v644 = vpop.f32.mrb[0].mxu0
        %v645 = vadd.f32 0.0, %v644
        %646 = vmatprep.mubr.bf16.mxu0 0
        %647 = vmatmul.mubr.bf16.gmra.mrb[0].mxu0 %v309
        %v648 = vpop.f32.mrb[0].mxu0
        %v649 = vadd.f32 0.0, %v648
        %v650 = vpop.f32.mrb[0].mxu0
        %v651 = vadd.f32 0.0, %v650
        %v652 = vpop.f32.mrb[0].mxu0
        %v653 = vadd.f32 0.0, %v652
        %v654 = vpop.f32.mrb[0].mxu0
        %v655 = vadd.f32 0.0, %v654
        %656 = vmatprep.mubr.bf16.mxu0 0
        %657 = vmatmul.mubr.bf16.gmra.mrb[0].mxu0 %v312
        %v658 = vpop.f32.mrb[0].mxu0
        %v659 = vadd.f32 0.0, %v658
        %v660 = vpop.f32.mrb[0].mxu0
        %v661 = vadd.f32 0.0, %v660
        %v662 = vpop.f32.mrb[0].mxu0
        %v663 = vadd.f32 0.0, %v662
        %v664 = vpop.f32.mrb[0].mxu0
        %v665 = vadd.f32 0.0, %v664
        %666 = vmatprep.mubr.bf16.mxu0 0
        %667 = vmatmul.mubr.bf16.gmra.mrb[0].mxu0 %v315
        %v668 = vpop.f32.mrb[0].mxu0
        %v669 = vadd.f32 0.0, %v668
        %v670 = vpop.f32.mrb[0].mxu0
        %v671 = vadd.f32 0.0, %v670
        %v672 = vpop.f32.mrb[0].mxu0
        %v673 = vadd.f32 0.0, %v672
        %v674 = vpop.f32.mrb[0].mxu0
        %v675 = vadd.f32 0.0, %v674
        %676 = vmatprep.mubr.bf16.mxu0 0
        %677 = vmatmul.mubr.bf16.gmra.mrb[0].mxu0 %v318
        %v678 = vpop.f32.mrb[0].mxu0
        %v679 = vadd.f32 0.0, %v678
        %v680 = vpop.f32.mrb[0].mxu0
        %v681 = vadd.f32 0.0, %v680
        %v682 = vpop.f32.mrb[0].mxu0
        %v683 = vadd.f32 0.0, %v682
        %v684 = vpop.f32.mrb[0].mxu0
        %v685 = vadd.f32 0.0, %v684
        %686 = vmatprep.mubr.bf16.mxu0 0
        %687 = vmatmul.mubr.bf16.gmra.mrb[0].mxu0 %v321
        %v688 = vpop.f32.mrb[0].mxu0
        %v689 = vadd.f32 0.0, %v688
        %v690 = vpop.f32.mrb[0].mxu0
        %v691 = vadd.f32 0.0, %v690
        %v692 = vpop.f32.mrb[0].mxu0
        %v693 = vadd.f32 0.0, %v692
        %v694 = vpop.f32.mrb[0].mxu0
        %v695 = vadd.f32 0.0, %v694
        %696 = vmatprep.mubr.bf16.mxu0 0
        %697 = vmatmul.mubr.bf16.gmra.mrb[0].mxu0 %v324
        %v698 = vpop.f32.mrb[0].mxu0
        %v699 = vadd.f32 0.0, %v698
        %v700 = vpop.f32.mrb[0].mxu0
        %v701 = vadd.f32 0.0, %v700
        %v702 = vpop.f32.mrb[0].mxu0
        %v703 = vadd.f32 0.0, %v702
        %v704 = vpop.f32.mrb[0].mxu0
        %v705 = vadd.f32 0.0, %v704
        %706 = vmatprep.mubr.bf16.mxu0 0
        %707 = vmatmul.mubr.bf16.gmra.mrb[0].mxu0 %v327
        %v708 = vpop.f32.mrb[0].mxu0
        %v709 = vadd.f32 0.0, %v708
        %v710 = vpop.f32.mrb[0].mxu0
        %v711 = vadd.f32 0.0, %v710
        %v712 = vpop.f32.mrb[0].mxu0
        %v713 = vadd.f32 0.0, %v712
        %v714 = vpop.f32.mrb[0].mxu0
        %v715 = vadd.f32 0.0, %v714
        %716 = vdwg.mxu0
        %717 = vmatprep.subr.bf16.mxu0 %v352
        %718 = vmatpush1.bf16.msra.mxu0 %v349
        %719 = vmatprep.subr.bf16.mxu0 0
        %720 = vmatpush1.bf16.msra.mxu0 0
        %721 = vmatprep.subr.bf16.mxu0 0
        %722 = vmatpush1.bf16.msra.mxu0 0
        %723 = vmatprep.subr.bf16.mxu0 0
        %724 = vmatpush1.bf16.msra.mxu0 0
        %725 = vmatprep.subr.bf16.mxu0 0
        %726 = vmatpush1.bf16.msra.mxu0 0
        %727 = vmatprep.subr.bf16.mxu0 0
        %728 = vmatpush1.bf16.msra.mxu0 0
        %729 = vmatprep.subr.bf16.mxu0 0
        %730 = vmatpush1.bf16.msra.mxu0 0
        %731 = vmatprep.subr.bf16.mxu0 0
        %732 = vmatpush1.bf16.msra.mxu0 0
        %733 = vmatprep.subr.bf16.mxu0 0
        %734 = vmatpush1.bf16.msra.mxu0 0
        %735 = vmatprep.subr.bf16.mxu0 0
        %736 = vmatpush1.bf16.msra.mxu0 0
        %737 = vmatprep.subr.bf16.mxu0 0
        %738 = vmatpush1.bf16.msra.mxu0 0
        %739 = vmatprep.subr.bf16.mxu0 0
        %740 = vmatpush1.bf16.msra.mxu0 0
        %741 = vmatprep.subr.bf16.mxu0 0
        %742 = vmatpush1.bf16.msra.mxu0 0
        %743 = vmatprep.subr.bf16.mxu0 0
        %744 = vmatpush1.bf16.msra.mxu0 0
        %745 = vmatprep.subr.bf16.mxu0 0
        %746 = vmatpush1.bf16.msra.mxu0 0
        %747 = vmatprep.subr.bf16.mxu0 0
        %748 = vmatpush1.bf16.msra.mxu0 0
        %749 = vmatprep.mubr.bf16.mxu0 0
        %750 = vmatmul.mubr.bf16.gmra.mrb[0].mxu0 %v306
        %v751 = vpop.f32.mrb[0].mxu0
        %v752 = vadd.f32 0.0, %v751
        %v753 = vpop.f32.mrb[0].mxu0
        %v754 = vadd.f32 0.0, %v753
        %v755 = vpop.f32.mrb[0].mxu0
        %v756 = vadd.f32 0.0, %v755
        %v757 = vpop.f32.mrb[0].mxu0
        %v758 = vadd.f32 0.0, %v757
        %759 = vmatprep.mubr.bf16.mxu0 0
        %760 = vmatmul.mubr.bf16.gmra.mrb[0].mxu0 %v309
        %v761 = vpop.f32.mrb[0].mxu0
        %v762 = vadd.f32 0.0, %v761
        %v763 = vpop.f32.mrb[0].mxu0
        %v764 = vadd.f32 0.0, %v763
        %v765 = vpop.f32.mrb[0].mxu0
        %v766 = vadd.f32 0.0, %v765
        %v767 = vpop.f32.mrb[0].mxu0
        %v768 = vadd.f32 0.0, %v767
        %769 = vmatprep.mubr.bf16.mxu0 0
        %770 = vmatmul.mubr.bf16.gmra.mrb[0].mxu0 %v312
        %v771 = vpop.f32.mrb[0].mxu0
        %v772 = vadd.f32 0.0, %v771
        %v773 = vpop.f32.mrb[0].mxu0
        %v774 = vadd.f32 0.0, %v773
        %v775 = vpop.f32.mrb[0].mxu0
        %v776 = vadd.f32 0.0, %v775
        %v777 = vpop.f32.mrb[0].mxu0
        %v778 = vadd.f32 0.0, %v777
        %779 = vmatprep.mubr.bf16.mxu0 0
        %780 = vmatmul.mubr.bf16.gmra.mrb[0].mxu0 %v315
        %v781 = vpop.f32.mrb[0].mxu0
        %v782 = vadd.f32 0.0, %v781
        %v783 = vpop.f32.mrb[0].mxu0
        %v784 = vadd.f32 0.0, %v783
        %v785 = vpop.f32.mrb[0].mxu0
        %v786 = vadd.f32 0.0, %v785
        %v787 = vpop.f32.mrb[0].mxu0
        %v788 = vadd.f32 0.0, %v787
        %789 = vmatprep.mubr.bf16.mxu0 0
        %790 = vmatmul.mubr.bf16.gmra.mrb[0].mxu0 %v318
        %v791 = vpop.f32.mrb[0].mxu0
        %v792 = vadd.f32 0.0, %v791
        %v793 = vpop.f32.mrb[0].mxu0
        %v794 = vadd.f32 0.0, %v793
        %v795 = vpop.f32.mrb[0].mxu0
        %v796 = vadd.f32 0.0, %v795
        %v797 = vpop.f32.mrb[0].mxu0
        %v798 = vadd.f32 0.0, %v797
        %799 = vmatprep.mubr.bf16.mxu0 0
        %800 = vmatmul.mubr.bf16.gmra.mrb[0].mxu0 %v321
        %v801 = vpop.f32.mrb[0].mxu0
        %v802 = vadd.f32 0.0, %v801
        %v803 = vpop.f32.mrb[0].mxu0
        %v804 = vadd.f32 0.0, %v803
        %v805 = vpop.f32.mrb[0].mxu0
        %v806 = vadd.f32 0.0, %v805
        %v807 = vpop.f32.mrb[0].mxu0
        %v808 = vadd.f32 0.0, %v807
        %809 = vmatprep.mubr.bf16.mxu0 0
        %810 = vmatmul.mubr.bf16.gmra.mrb[0].mxu0 %v324
        %v811 = vpop.f32.mrb[0].mxu0
        %v812 = vadd.f32 0.0, %v811
        %v813 = vpop.f32.mrb[0].mxu0
        %v814 = vadd.f32 0.0, %v813
        %v815 = vpop.f32.mrb[0].mxu0
        %v816 = vadd.f32 0.0, %v815
        %v817 = vpop.f32.mrb[0].mxu0
        %v818 = vadd.f32 0.0, %v817
        %819 = vmatprep.mubr.bf16.mxu0 0
        %820 = vmatmul.mubr.bf16.gmra.mrb[0].mxu0 %v327
        %v821 = vpop.f32.mrb[0].mxu0
        %v822 = vadd.f32 0.0, %v821
        %v823 = vpop.f32.mrb[0].mxu0
        %v824 = vadd.f32 0.0, %v823
        %v825 = vpop.f32.mrb[0].mxu0
        %v826 = vadd.f32 0.0, %v825
        %v827 = vpop.f32.mrb[0].mxu0
        %v828 = vadd.f32 0.0, %v827
        %829 = vdwg.mxu0
        %830 = vmatprep.subr.bf16.mxu0 %v358
        %831 = vmatpush1.bf16.msra.mxu0 %v355
        %832 = vmatprep.subr.bf16.mxu0 0
        %833 = vmatpush1.bf16.msra.mxu0 0
        %834 = vmatprep.subr.bf16.mxu0 0
        %835 = vmatpush1.bf16.msra.mxu0 0
        %836 = vmatprep.subr.bf16.mxu0 0
        %837 = vmatpush1.bf16.msra.mxu0 0
        %838 = vmatprep.subr.bf16.mxu0 0
        %839 = vmatpush1.bf16.msra.mxu0 0
        %840 = vmatprep.subr.bf16.mxu0 0
        %841 = vmatpush1.bf16.msra.mxu0 0
        %842 = vmatprep.subr.bf16.mxu0 0
        %843 = vmatpush1.bf16.msra.mxu0 0
        %844 = vmatprep.subr.bf16.mxu0 0
        %845 = vmatpush1.bf16.msra.mxu0 0
        %846 = vmatprep.subr.bf16.mxu0 0
        %847 = vmatpush1.bf16.msra.mxu0 0
        %848 = vmatprep.subr.bf16.mxu0 0
        %849 = vmatpush1.bf16.msra.mxu0 0
        %850 = vmatprep.subr.bf16.mxu0 0
        %851 = vmatpush1.bf16.msra.mxu0 0
        %852 = vmatprep.subr.bf16.mxu0 0
        %853 = vmatpush1.bf16.msra.mxu0 0
        %854 = vmatprep.subr.bf16.mxu0 0
        %855 = vmatpush1.bf16.msra.mxu0 0
        %856 = vmatprep.subr.bf16.mxu0 0
        %857 = vmatpush1.bf16.msra.mxu0 0
        %858 = vmatprep.subr.bf16.mxu0 0
        %859 = vmatpush1.bf16.msra.mxu0 0
        %860 = vmatprep.subr.bf16.mxu0 0
        %861 = vmatpush1.bf16.msra.mxu0 0
        %862 = vmatprep.mubr.bf16.mxu0 0
        %863 = vmatmul.mubr.bf16.gmra.mrb[0].mxu0 %v306
        %v864 = vpop.f32.mrb[0].mxu0
        %v865 = vadd.f32 0.0, %v864
        %v866 = vpop.f32.mrb[0].mxu0
        %v867 = vadd.f32 0.0, %v866
        %v868 = vpop.f32.mrb[0].mxu0
        %v869 = vadd.f32 0.0, %v868
        %v870 = vpop.f32.mrb[0].mxu0
        %v871 = vadd.f32 0.0, %v870
        %872 = vmatprep.mubr.bf16.mxu0 0
        %873 = vmatmul.mubr.bf16.gmra.mrb[0].mxu0 %v309
        %v874 = vpop.f32.mrb[0].mxu0
        %v875 = vadd.f32 0.0, %v874
        %v876 = vpop.f32.mrb[0].mxu0
        %v877 = vadd.f32 0.0, %v876
        %v878 = vpop.f32.mrb[0].mxu0
        %v879 = vadd.f32 0.0, %v878
        %v880 = vpop.f32.mrb[0].mxu0
        %v881 = vadd.f32 0.0, %v880
        %882 = vmatprep.mubr.bf16.mxu0 0
        %883 = vmatmul.mubr.bf16.gmra.mrb[0].mxu0 %v312
        %v884 = vpop.f32.mrb[0].mxu0
        %v885 = vadd.f32 0.0, %v884
        %v886 = vpop.f32.mrb[0].mxu0
        %v887 = vadd.f32 0.0, %v886
        %v888 = vpop.f32.mrb[0].mxu0
        %v889 = vadd.f32 0.0, %v888
        %v890 = vpop.f32.mrb[0].mxu0
        %v891 = vadd.f32 0.0, %v890
        %892 = vmatprep.mubr.bf16.mxu0 0
        %893 = vmatmul.mubr.bf16.gmra.mrb[0].mxu0 %v315
        %v894 = vpop.f32.mrb[0].mxu0
        %v895 = vadd.f32 0.0, %v894
        %v896 = vpop.f32.mrb[0].mxu0
        %v897 = vadd.f32 0.0, %v896
        %v898 = vpop.f32.mrb[0].mxu0
        %v899 = vadd.f32 0.0, %v898
        %v900 = vpop.f32.mrb[0].mxu0
        %v901 = vadd.f32 0.0, %v900
        %902 = vmatprep.mubr.bf16.mxu0 0
        %903 = vmatmul.mubr.bf16.gmra.mrb[0].mxu0 %v318
        %v904 = vpop.f32.mrb[0].mxu0
        %v905 = vadd.f32 0.0, %v904
        %v906 = vpop.f32.mrb[0].mxu0
        %v907 = vadd.f32 0.0, %v906
        %v908 = vpop.f32.mrb[0].mxu0
        %v909 = vadd.f32 0.0, %v908
        %v910 = vpop.f32.mrb[0].mxu0
        %v911 = vadd.f32 0.0, %v910
        %912 = vmatprep.mubr.bf16.mxu0 0
        %913 = vmatmul.mubr.bf16.gmra.mrb[0].mxu0 %v321
        %v914 = vpop.f32.mrb[0].mxu0
        %v915 = vadd.f32 0.0, %v914
        %v916 = vpop.f32.mrb[0].mxu0
        %v917 = vadd.f32 0.0, %v916
        %v918 = vpop.f32.mrb[0].mxu0
        %v919 = vadd.f32 0.0, %v918
        %v920 = vpop.f32.mrb[0].mxu0
        %v921 = vadd.f32 0.0, %v920
        %922 = vmatprep.mubr.bf16.mxu0 0
        %923 = vmatmul.mubr.bf16.gmra.mrb[0].mxu0 %v324
        %v924 = vpop.f32.mrb[0].mxu0
        %v925 = vadd.f32 0.0, %v924
        %v926 = vpop.f32.mrb[0].mxu0
        %v927 = vadd.f32 0.0, %v926
        %v928 = vpop.f32.mrb[0].mxu0
        %v929 = vadd.f32 0.0, %v928
        %v930 = vpop.f32.mrb[0].mxu0
        %v931 = vadd.f32 0.0, %v930
        %932 = vmatprep.mubr.bf16.mxu0 0
        %933 = vmatmul.mubr.bf16.gmra.mrb[0].mxu0 %v327
        %v934 = vpop.f32.mrb[0].mxu0
        %v935 = vadd.f32 0.0, %v934
        %v936 = vpop.f32.mrb[0].mxu0
        %v937 = vadd.f32 0.0, %v936
        %v938 = vpop.f32.mrb[0].mxu0
        %v939 = vadd.f32 0.0, %v938
        %v940 = vpop.f32.mrb[0].mxu0
        %v941 = vadd.f32 0.0, %v940
        %942 = vdwg.mxu0
        %943 = vmatprep.subr.bf16.mxu0 %v364
        %944 = vmatpush1.bf16.msra.mxu0 %v361
        %945 = vmatprep.subr.bf16.mxu0 0
        %946 = vmatpush1.bf16.msra.mxu0 0
        %947 = vmatprep.subr.bf16.mxu0 0
        %948 = vmatpush1.bf16.msra.mxu0 0
        %949 = vmatprep.subr.bf16.mxu0 0
        %950 = vmatpush1.bf16.msra.mxu0 0
        %951 = vmatprep.subr.bf16.mxu0 0
        %952 = vmatpush1.bf16.msra.mxu0 0
        %953 = vmatprep.subr.bf16.mxu0 0
        %954 = vmatpush1.bf16.msra.mxu0 0
        %955 = vmatprep.subr.bf16.mxu0 0
        %956 = vmatpush1.bf16.msra.mxu0 0
        %957 = vmatprep.subr.bf16.mxu0 0
        %958 = vmatpush1.bf16.msra.mxu0 0
        %959 = vmatprep.subr.bf16.mxu0 0
        %960 = vmatpush1.bf16.msra.mxu0 0
        %961 = vmatprep.subr.bf16.mxu0 0
        %962 = vmatpush1.bf16.msra.mxu0 0
        %963 = vmatprep.subr.bf16.mxu0 0
        %964 = vmatpush1.bf16.msra.mxu0 0
        %965 = vmatprep.subr.bf16.mxu0 0
        %966 = vmatpush1.bf16.msra.mxu0 0
        %967 = vmatprep.subr.bf16.mxu0 0
        %968 = vmatpush1.bf16.msra.mxu0 0
        %969 = vmatprep.subr.bf16.mxu0 0
        %970 = vmatpush1.bf16.msra.mxu0 0
        %971 = vmatprep.subr.bf16.mxu0 0
        %972 = vmatpush1.bf16.msra.mxu0 0
        %973 = vmatprep.subr.bf16.mxu0 0
        %974 = vmatpush1.bf16.msra.mxu0 0
        %975 = vmatprep.mubr.bf16.mxu0 0
        %976 = vmatmul.mubr.bf16.gmra.mrb[0].mxu0 %v306
        %v977 = vpop.f32.mrb[0].mxu0
        %v978 = vadd.f32 0.0, %v977
        %v979 = vpop.f32.mrb[0].mxu0
        %v980 = vadd.f32 0.0, %v979
        %v981 = vpop.f32.mrb[0].mxu0
        %v982 = vadd.f32 0.0, %v981
        %v983 = vpop.f32.mrb[0].mxu0
        %v984 = vadd.f32 0.0, %v983
        %985 = vmatprep.mubr.bf16.mxu0 0
        %986 = vmatmul.mubr.bf16.gmra.mrb[0].mxu0 %v309
        %v987 = vpop.f32.mrb[0].mxu0
        %v988 = vadd.f32 0.0, %v987
        %v989 = vpop.f32.mrb[0].mxu0
        %v990 = vadd.f32 0.0, %v989
        %v991 = vpop.f32.mrb[0].mxu0
        %v992 = vadd.f32 0.0, %v991
        %v993 = vpop.f32.mrb[0].mxu0
        %v994 = vadd.f32 0.0, %v993
        %995 = vmatprep.mubr.bf16.mxu0 0
        %996 = vmatmul.mubr.bf16.gmra.mrb[0].mxu0 %v312
        %v997 = vpop.f32.mrb[0].mxu0
        %v998 = vadd.f32 0.0, %v997
        %v999 = vpop.f32.mrb[0].mxu0
        %v1000 = vadd.f32 0.0, %v999
        %v1001 = vpop.f32.mrb[0].mxu0
        %v1002 = vadd.f32 0.0, %v1001
        %v1003 = vpop.f32.mrb[0].mxu0
        %v1004 = vadd.f32 0.0, %v1003
        %1005 = vmatprep.mubr.bf16.mxu0 0
        %1006 = vmatmul.mubr.bf16.gmra.mrb[0].mxu0 %v315
        %v1007 = vpop.f32.mrb[0].mxu0
        %v1008 = vadd.f32 0.0, %v1007
        %v1009 = vpop.f32.mrb[0].mxu0
        %v1010 = vadd.f32 0.0, %v1009
        %v1011 = vpop.f32.mrb[0].mxu0
        %v1012 = vadd.f32 0.0, %v1011
        %v1013 = vpop.f32.mrb[0].mxu0
        %v1014 = vadd.f32 0.0, %v1013
        %1015 = vmatprep.mubr.bf16.mxu0 0
        %1016 = vmatmul.mubr.bf16.gmra.mrb[0].mxu0 %v318
        %v1017 = vpop.f32.mrb[0].mxu0
        %v1018 = vadd.f32 0.0, %v1017
        %v1019 = vpop.f32.mrb[0].mxu0
        %v1020 = vadd.f32 0.0, %v1019
        %v1021 = vpop.f32.mrb[0].mxu0
        %v1022 = vadd.f32 0.0, %v1021
        %v1023 = vpop.f32.mrb[0].mxu0
        %v1024 = vadd.f32 0.0, %v1023
        %1025 = vmatprep.mubr.bf16.mxu0 0
        %1026 = vmatmul.mubr.bf16.gmra.mrb[0].mxu0 %v321
        %v1027 = vpop.f32.mrb[0].mxu0
        %v1028 = vadd.f32 0.0, %v1027
        %v1029 = vpop.f32.mrb[0].mxu0
        %v1030 = vadd.f32 0.0, %v1029
        %v1031 = vpop.f32.mrb[0].mxu0
        %v1032 = vadd.f32 0.0, %v1031
        %v1033 = vpop.f32.mrb[0].mxu0
        %v1034 = vadd.f32 0.0, %v1033
        %1035 = vmatprep.mubr.bf16.mxu0 0
        %1036 = vmatmul.mubr.bf16.gmra.mrb[0].mxu0 %v324
        %v1037 = vpop.f32.mrb[0].mxu0
        %v1038 = vadd.f32 0.0, %v1037
        %v1039 = vpop.f32.mrb[0].mxu0
        %v1040 = vadd.f32 0.0, %v1039
        %v1041 = vpop.f32.mrb[0].mxu0
        %v1042 = vadd.f32 0.0, %v1041
        %v1043 = vpop.f32.mrb[0].mxu0
        %v1044 = vadd.f32 0.0, %v1043
        %1045 = vmatprep.mubr.bf16.mxu0 0
        %1046 = vmatmul.mubr.bf16.gmra.mrb[0].mxu0 %v327
        %v1047 = vpop.f32.mrb[0].mxu0
        %v1048 = vadd.f32 0.0, %v1047
        %v1049 = vpop.f32.mrb[0].mxu0
        %v1050 = vadd.f32 0.0, %v1049
        %v1051 = vpop.f32.mrb[0].mxu0
        %v1052 = vadd.f32 0.0, %v1051
        %v1053 = vpop.f32.mrb[0].mxu0
        %v1054 = vadd.f32 0.0, %v1053
        %1055 = vdwg.mxu0
        %1056 = vmatprep.subr.bf16.mxu0 %v370
        %1057 = vmatpush1.bf16.msra.mxu0 %v367
        %1058 = vmatprep.subr.bf16.mxu0 0
        %1059 = vmatpush1.bf16.msra.mxu0 0
        %1060 = vmatprep.subr.bf16.mxu0 0
        %1061 = vmatpush1.bf16.msra.mxu0 0
        %1062 = vmatprep.subr.bf16.mxu0 0
        %1063 = vmatpush1.bf16.msra.mxu0 0
        %1064 = vmatprep.subr.bf16.mxu0 0
        %1065 = vmatpush1.bf16.msra.mxu0 0
        %1066 = vmatprep.subr.bf16.mxu0 0
        %1067 = vmatpush1.bf16.msra.mxu0 0
        %1068 = vmatprep.subr.bf16.mxu0 0
        %1069 = vmatpush1.bf16.msra.mxu0 0
        %1070 = vmatprep.subr.bf16.mxu0 0
        %1071 = vmatpush1.bf16.msra.mxu0 0
        %1072 = vmatprep.subr.bf16.mxu0 0
        %1073 = vmatpush1.bf16.msra.mxu0 0
        %1074 = vmatprep.subr.bf16.mxu0 0
        %1075 = vmatpush1.bf16.msra.mxu0 0
        %1076 = vmatprep.subr.bf16.mxu0 0
        %1077 = vmatpush1.bf16.msra.mxu0 0
        %1078 = vmatprep.subr.bf16.mxu0 0
        %1079 = vmatpush1.bf16.msra.mxu0 0
        %1080 = vmatprep.subr.bf16.mxu0 0
        %1081 = vmatpush1.bf16.msra.mxu0 0
        %1082 = vmatprep.subr.bf16.mxu0 0
        %1083 = vmatpush1.bf16.msra.mxu0 0
        %1084 = vmatprep.subr.bf16.mxu0 0
        %1085 = vmatpush1.bf16.msra.mxu0 0
        %1086 = vmatprep.subr.bf16.mxu0 0
        %1087 = vmatpush1.bf16.msra.mxu0 0
        %1088 = vmatprep.mubr.bf16.mxu0 0
        %1089 = vmatmul.mubr.bf16.gmra.mrb[0].mxu0 %v306
        %v1090 = vpop.f32.mrb[0].mxu0
        %v1091 = vadd.f32 0.0, %v1090
        %v1092 = vpop.f32.mrb[0].mxu0
        %v1093 = vadd.f32 0.0, %v1092
        %v1094 = vpop.f32.mrb[0].mxu0
        %v1095 = vadd.f32 0.0, %v1094
        %v1096 = vpop.f32.mrb[0].mxu0
        %v1097 = vadd.f32 0.0, %v1096
        %1098 = vmatprep.mubr.bf16.mxu0 0
        %1099 = vmatmul.mubr.bf16.gmra.mrb[0].mxu0 %v309
        %v1100 = vpop.f32.mrb[0].mxu0
        %v1101 = vadd.f32 0.0, %v1100
        %v1102 = vpop.f32.mrb[0].mxu0
        %v1103 = vadd.f32 0.0, %v1102
        %v1104 = vpop.f32.mrb[0].mxu0
        %v1105 = vadd.f32 0.0, %v1104
        %v1106 = vpop.f32.mrb[0].mxu0
        %v1107 = vadd.f32 0.0, %v1106
        %1108 = vmatprep.mubr.bf16.mxu0 0
        %1109 = vmatmul.mubr.bf16.gmra.mrb[0].mxu0 %v312
        %v1110 = vpop.f32.mrb[0].mxu0
        %v1111 = vadd.f32 0.0, %v1110
        %v1112 = vpop.f32.mrb[0].mxu0
        %v1113 = vadd.f32 0.0, %v1112
        %v1114 = vpop.f32.mrb[0].mxu0
        %v1115 = vadd.f32 0.0, %v1114
        %v1116 = vpop.f32.mrb[0].mxu0
        %v1117 = vadd.f32 0.0, %v1116
        %1118 = vmatprep.mubr.bf16.mxu0 0
        %1119 = vmatmul.mubr.bf16.gmra.mrb[0].mxu0 %v315
        %v1120 = vpop.f32.mrb[0].mxu0
        %v1121 = vadd.f32 0.0, %v1120
        %v1122 = vpop.f32.mrb[0].mxu0
        %v1123 = vadd.f32 0.0, %v1122
        %v1124 = vpop.f32.mrb[0].mxu0
        %v1125 = vadd.f32 0.0, %v1124
        %v1126 = vpop.f32.mrb[0].mxu0
        %v1127 = vadd.f32 0.0, %v1126
        %1128 = vmatprep.mubr.bf16.mxu0 0
        %1129 = vmatmul.mubr.bf16.gmra.mrb[0].mxu0 %v318
        %v1130 = vpop.f32.mrb[0].mxu0
        %v1131 = vadd.f32 0.0, %v1130
        %v1132 = vpop.f32.mrb[0].mxu0
        %v1133 = vadd.f32 0.0, %v1132
        %v1134 = vpop.f32.mrb[0].mxu0
        %v1135 = vadd.f32 0.0, %v1134
        %v1136 = vpop.f32.mrb[0].mxu0
        %v1137 = vadd.f32 0.0, %v1136
        %1138 = vmatprep.mubr.bf16.mxu0 0
        %1139 = vmatmul.mubr.bf16.gmra.mrb[0].mxu0 %v321
        %v1140 = vpop.f32.mrb[0].mxu0
        %v1141 = vadd.f32 0.0, %v1140
        %v1142 = vpop.f32.mrb[0].mxu0
        %v1143 = vadd.f32 0.0, %v1142
        %v1144 = vpop.f32.mrb[0].mxu0
        %v1145 = vadd.f32 0.0, %v1144
        %v1146 = vpop.f32.mrb[0].mxu0
        %v1147 = vadd.f32 0.0, %v1146
        %1148 = vmatprep.mubr.bf16.mxu0 0
        %1149 = vmatmul.mubr.bf16.gmra.mrb[0].mxu0 %v324
        %v1150 = vpop.f32.mrb[0].mxu0
        %v1151 = vadd.f32 0.0, %v1150
        %v1152 = vpop.f32.mrb[0].mxu0
        %v1153 = vadd.f32 0.0, %v1152
        %v1154 = vpop.f32.mrb[0].mxu0
        %v1155 = vadd.f32 0.0, %v1154
        %v1156 = vpop.f32.mrb[0].mxu0
        %v1157 = vadd.f32 0.0, %v1156
        %1158 = vmatprep.mubr.bf16.mxu0 0
        %1159 = vmatmul.mubr.bf16.gmra.mrb[0].mxu0 %v327
        %v1160 = vpop.f32.mrb[0].mxu0
        %v1161 = vadd.f32 0.0, %v1160
        %v1162 = vpop.f32.mrb[0].mxu0
        %v1163 = vadd.f32 0.0, %v1162
        %v1164 = vpop.f32.mrb[0].mxu0
        %v1165 = vadd.f32 0.0, %v1164
        %v1166 = vpop.f32.mrb[0].mxu0
        %v1167 = vadd.f32 0.0, %v1166
        %1168 = vdwg.mxu0
        %1169 = vmatprep.subr.bf16.mxu0 %v376
        %1170 = vmatpush1.bf16.msra.mxu0 %v373
        %1171 = vmatprep.subr.bf16.mxu0 0
        %1172 = vmatpush1.bf16.msra.mxu0 0
        %1173 = vmatprep.subr.bf16.mxu0 0
        %1174 = vmatpush1.bf16.msra.mxu0 0
        %1175 = vmatprep.subr.bf16.mxu0 0
        %1176 = vmatpush1.bf16.msra.mxu0 0
        %1177 = vmatprep.subr.bf16.mxu0 0
        %1178 = vmatpush1.bf16.msra.mxu0 0
        %1179 = vmatprep.subr.bf16.mxu0 0
        %1180 = vmatpush1.bf16.msra.mxu0 0
        %1181 = vmatprep.subr.bf16.mxu0 0
        %1182 = vmatpush1.bf16.msra.mxu0 0
        %1183 = vmatprep.subr.bf16.mxu0 0
        %1184 = vmatpush1.bf16.msra.mxu0 0
        %1185 = vmatprep.subr.bf16.mxu0 0
        %1186 = vmatpush1.bf16.msra.mxu0 0
        %1187 = vmatprep.subr.bf16.mxu0 0
        %1188 = vmatpush1.bf16.msra.mxu0 0
        %1189 = vmatprep.subr.bf16.mxu0 0
        %1190 = vmatpush1.bf16.msra.mxu0 0
        %1191 = vmatprep.subr.bf16.mxu0 0
        %1192 = vmatpush1.bf16.msra.mxu0 0
        %1193 = vmatprep.subr.bf16.mxu0 0
        %1194 = vmatpush1.bf16.msra.mxu0 0
        %1195 = vmatprep.subr.bf16.mxu0 0
        %1196 = vmatpush1.bf16.msra.mxu0 0
        %1197 = vmatprep.subr.bf16.mxu0 0
        %1198 = vmatpush1.bf16.msra.mxu0 0
        %1199 = vmatprep.subr.bf16.mxu0 0
        %1200 = vmatpush1.bf16.msra.mxu0 0
        %1201 = vmatprep.mubr.bf16.mxu0 0
        %1202 = vmatmul.mubr.bf16.gmra.mrb[0].mxu0 %v306
        %v1203 = vpop.f32.mrb[0].mxu0
        %v1204 = vadd.f32 0.0, %v1203
        %v1205 = vpop.f32.mrb[0].mxu0
        %v1206 = vadd.f32 0.0, %v1205
        %v1207 = vpop.f32.mrb[0].mxu0
        %v1208 = vadd.f32 0.0, %v1207
        %v1209 = vpop.f32.mrb[0].mxu0
        %v1210 = vadd.f32 0.0, %v1209
        %1211 = vmatprep.mubr.bf16.mxu0 0
        %1212 = vmatmul.mubr.bf16.gmra.mrb[0].mxu0 %v309
        %v1213 = vpop.f32.mrb[0].mxu0
        %v1214 = vadd.f32 0.0, %v1213
        %v1215 = vpop.f32.mrb[0].mxu0
        %v1216 = vadd.f32 0.0, %v1215
        %v1217 = vpop.f32.mrb[0].mxu0
        %v1218 = vadd.f32 0.0, %v1217
        %v1219 = vpop.f32.mrb[0].mxu0
        %v1220 = vadd.f32 0.0, %v1219
        %1221 = vmatprep.mubr.bf16.mxu0 0
        %1222 = vmatmul.mubr.bf16.gmra.mrb[0].mxu0 %v312
        %v1223 = vpop.f32.mrb[0].mxu0
        %v1224 = vadd.f32 0.0, %v1223
        %v1225 = vpop.f32.mrb[0].mxu0
        %v1226 = vadd.f32 0.0, %v1225
        %v1227 = vpop.f32.mrb[0].mxu0
        %v1228 = vadd.f32 0.0, %v1227
        %v1229 = vpop.f32.mrb[0].mxu0
        %v1230 = vadd.f32 0.0, %v1229
        %1231 = vmatprep.mubr.bf16.mxu0 0
        %1232 = vmatmul.mubr.bf16.gmra.mrb[0].mxu0 %v315
        %v1233 = vpop.f32.mrb[0].mxu0
        %v1234 = vadd.f32 0.0, %v1233
        %v1235 = vpop.f32.mrb[0].mxu0
        %v1236 = vadd.f32 0.0, %v1235
        %v1237 = vpop.f32.mrb[0].mxu0
        %v1238 = vadd.f32 0.0, %v1237
        %v1239 = vpop.f32.mrb[0].mxu0
        %v1240 = vadd.f32 0.0, %v1239
        %1241 = vmatprep.mubr.bf16.mxu0 0
        %1242 = vmatmul.mubr.bf16.gmra.mrb[0].mxu0 %v318
        %v1243 = vpop.f32.mrb[0].mxu0
        %v1244 = vadd.f32 0.0, %v1243
        %v1245 = vpop.f32.mrb[0].mxu0
        %v1246 = vadd.f32 0.0, %v1245
        %v1247 = vpop.f32.mrb[0].mxu0
        %v1248 = vadd.f32 0.0, %v1247
        %v1249 = vpop.f32.mrb[0].mxu0
        %v1250 = vadd.f32 0.0, %v1249
        %1251 = vmatprep.mubr.bf16.mxu0 0
        %1252 = vmatmul.mubr.bf16.gmra.mrb[0].mxu0 %v321
        %v1253 = vpop.f32.mrb[0].mxu0
        %v1254 = vadd.f32 0.0, %v1253
        %v1255 = vpop.f32.mrb[0].mxu0
        %v1256 = vadd.f32 0.0, %v1255
        %v1257 = vpop.f32.mrb[0].mxu0
        %v1258 = vadd.f32 0.0, %v1257
        %v1259 = vpop.f32.mrb[0].mxu0
        %v1260 = vadd.f32 0.0, %v1259
        %1261 = vmatprep.mubr.bf16.mxu0 0
        %1262 = vmatmul.mubr.bf16.gmra.mrb[0].mxu0 %v324
        %v1263 = vpop.f32.mrb[0].mxu0
        %v1264 = vadd.f32 0.0, %v1263
        %v1265 = vpop.f32.mrb[0].mxu0
        %v1266 = vadd.f32 0.0, %v1265
        %v1267 = vpop.f32.mrb[0].mxu0
        %v1268 = vadd.f32 0.0, %v1267
        %v1269 = vpop.f32.mrb[0].mxu0
        %v1270 = vadd.f32 0.0, %v1269
        %1271 = vmatprep.mubr.bf16.mxu0 0
        %1272 = vmatmul.mubr.bf16.gmra.mrb[0].mxu0 %v327
        %v1273 = vpop.f32.mrb[0].mxu0
        %v1274 = vadd.f32 0.0, %v1273
        %v1275 = vpop.f32.mrb[0].mxu0
        %v1276 = vadd.f32 0.0, %v1275
        %v1277 = vpop.f32.mrb[0].mxu0
        %v1278 = vadd.f32 0.0, %v1277
        %v1279 = vpop.f32.mrb[0].mxu0
        %v1280 = vadd.f32 0.0, %v1279
        %1281 = vdwg.mxu0
        %v1282 = vmul.f32 %v413, %v413
        %v1283 = vmul.f32 %v415, %v415
        %v1284 = vmul.f32 %v526, %v526
        %v1285 = vmul.f32 %v528, %v528
        %v1286 = vmul.f32 %v639, %v639
        %v1287 = vmul.f32 %v641, %v641
        %v1288 = vmul.f32 %v752, %v752
        %v1289 = vmul.f32 %v754, %v754
        %v1290 = vmul.f32 %v865, %v865
        %v1291 = vmul.f32 %v867, %v867
        %v1292 = vmul.f32 %v978, %v978
        %v1293 = vmul.f32 %v980, %v980
        %v1294 = vmul.f32 %v1091, %v1091
        %v1295 = vmul.f32 %v1093, %v1093
        %v1296 = vmul.f32 %v1204, %v1204
        %v1297 = vmul.f32 %v1206, %v1206
        %v1298 = vmul.f32 %v417, %v417
        %v1299 = vmul.f32 %v419, %v419
        %v1300 = vmul.f32 %v530, %v530
        %v1301 = vmul.f32 %v532, %v532
        %v1302 = vmul.f32 %v643, %v643
        %v1303 = vmul.f32 %v645, %v645
        %v1304 = vmul.f32 %v756, %v756
        %v1305 = vmul.f32 %v758, %v758
        %v1306 = vmul.f32 %v869, %v869
        %v1307 = vmul.f32 %v871, %v871
        %v1308 = vmul.f32 %v982, %v982
        %v1309 = vmul.f32 %v984, %v984
        %v1310 = vmul.f32 %v1095, %v1095
        %v1311 = vmul.f32 %v1097, %v1097
        %v1312 = vmul.f32 %v1208, %v1208
        %v1313 = vmul.f32 %v1210, %v1210
        %v1314 = vmul.f32 %v423, %v423
        %v1315 = vmul.f32 %v425, %v425
        %v1316 = vmul.f32 %v536, %v536
        %v1317 = vmul.f32 %v538, %v538
        %v1318 = vmul.f32 %v649, %v649
        %v1319 = vmul.f32 %v651, %v651
        %v1320 = vmul.f32 %v762, %v762
        %v1321 = vmul.f32 %v764, %v764
        %v1322 = vmul.f32 %v875, %v875
        %v1323 = vmul.f32 %v877, %v877
        %v1324 = vmul.f32 %v988, %v988
        %v1325 = vmul.f32 %v990, %v990
        %v1326 = vmul.f32 %v1101, %v1101
        %v1327 = vmul.f32 %v1103, %v1103
        %v1328 = vmul.f32 %v1214, %v1214
        %v1329 = vmul.f32 %v1216, %v1216
        %v1330 = vmul.f32 %v427, %v427
        %v1331 = vmul.f32 %v429, %v429
        %v1332 = vmul.f32 %v540, %v540
        %v1333 = vmul.f32 %v542, %v542
        %v1334 = vmul.f32 %v653, %v653
        %v1335 = vmul.f32 %v655, %v655
        %v1336 = vmul.f32 %v766, %v766
        %v1337 = vmul.f32 %v768, %v768
        %v1338 = vmul.f32 %v879, %v879
        %v1339 = vmul.f32 %v881, %v881
        %v1340 = vmul.f32 %v992, %v992
        %v1341 = vmul.f32 %v994, %v994
        %v1342 = vmul.f32 %v1105, %v1105
        %v1343 = vmul.f32 %v1107, %v1107
        %v1344 = vmul.f32 %v1218, %v1218
        %v1345 = vmul.f32 %v1220, %v1220
        %v1346 = vmul.f32 %v433, %v433
        %v1347 = vmul.f32 %v435, %v435
        %v1348 = vmul.f32 %v546, %v546
        %v1349 = vmul.f32 %v548, %v548
        %v1350 = vmul.f32 %v659, %v659
        %v1351 = vmul.f32 %v661, %v661
        %v1352 = vmul.f32 %v772, %v772
        %v1353 = vmul.f32 %v774, %v774
        %v1354 = vmul.f32 %v885, %v885
        %v1355 = vmul.f32 %v887, %v887
        %v1356 = vmul.f32 %v998, %v998
        %v1357 = vmul.f32 %v1000, %v1000
        %v1358 = vmul.f32 %v1111, %v1111
        %v1359 = vmul.f32 %v1113, %v1113
        %v1360 = vmul.f32 %v1224, %v1224
        %v1361 = vmul.f32 %v1226, %v1226
        %v1362 = vmul.f32 %v437, %v437
        %v1363 = vmul.f32 %v439, %v439
        %v1364 = vmul.f32 %v550, %v550
        %v1365 = vmul.f32 %v552, %v552
        %v1366 = vmul.f32 %v663, %v663
        %v1367 = vmul.f32 %v665, %v665
        %v1368 = vmul.f32 %v776, %v776
        %v1369 = vmul.f32 %v778, %v778
        %v1370 = vmul.f32 %v889, %v889
        %v1371 = vmul.f32 %v891, %v891
        %v1372 = vmul.f32 %v1002, %v1002
        %v1373 = vmul.f32 %v1004, %v1004
        %v1374 = vmul.f32 %v1115, %v1115
        %v1375 = vmul.f32 %v1117, %v1117
        %v1376 = vmul.f32 %v1228, %v1228
        %v1377 = vmul.f32 %v1230, %v1230
        %v1378 = vmul.f32 %v443, %v443
        %v1379 = vmul.f32 %v445, %v445
        %v1380 = vmul.f32 %v556, %v556
        %v1381 = vmul.f32 %v558, %v558
        %v1382 = vmul.f32 %v669, %v669
        %v1383 = vmul.f32 %v671, %v671
        %v1384 = vmul.f32 %v782, %v782
        %v1385 = vmul.f32 %v784, %v784
        %v1386 = vmul.f32 %v895, %v895
        %v1387 = vmul.f32 %v897, %v897
        %v1388 = vmul.f32 %v1008, %v1008
        %v1389 = vmul.f32 %v1010, %v1010
        %v1390 = vmul.f32 %v1121, %v1121
        %v1391 = vmul.f32 %v1123, %v1123
        %v1392 = vmul.f32 %v1234, %v1234
        %v1393 = vmul.f32 %v1236, %v1236
        %v1394 = vmul.f32 %v447, %v447
        %v1395 = vmul.f32 %v449, %v449
        %v1396 = vmul.f32 %v560, %v560
        %v1397 = vmul.f32 %v562, %v562
        %v1398 = vmul.f32 %v673, %v673
        %v1399 = vmul.f32 %v675, %v675
        %v1400 = vmul.f32 %v786, %v786
        %v1401 = vmul.f32 %v788, %v788
        %v1402 = vmul.f32 %v899, %v899
        %v1403 = vmul.f32 %v901, %v901
        %v1404 = vmul.f32 %v1012, %v1012
        %v1405 = vmul.f32 %v1014, %v1014
        %v1406 = vmul.f32 %v1125, %v1125
        %v1407 = vmul.f32 %v1127, %v1127
        %v1408 = vmul.f32 %v1238, %v1238
        %v1409 = vmul.f32 %v1240, %v1240
        %v1410 = vmul.f32 %v453, %v453
        %v1411 = vmul.f32 %v455, %v455
        %v1412 = vmul.f32 %v566, %v566
        %v1413 = vmul.f32 %v568, %v568
        %v1414 = vmul.f32 %v679, %v679
        %v1415 = vmul.f32 %v681, %v681
        %v1416 = vmul.f32 %v792, %v792
        %v1417 = vmul.f32 %v794, %v794
        %v1418 = vmul.f32 %v905, %v905
        %v1419 = vmul.f32 %v907, %v907
        %v1420 = vmul.f32 %v1018, %v1018
        %v1421 = vmul.f32 %v1020, %v1020
        %v1422 = vmul.f32 %v1131, %v1131
        %v1423 = vmul.f32 %v1133, %v1133
        %v1424 = vmul.f32 %v1244, %v1244
        %v1425 = vmul.f32 %v1246, %v1246
        %v1426 = vmul.f32 %v457, %v457
        %v1427 = vmul.f32 %v459, %v459
        %v1428 = vmul.f32 %v570, %v570
        %v1429 = vmul.f32 %v572, %v572
        %v1430 = vmul.f32 %v683, %v683
        %v1431 = vmul.f32 %v685, %v685
        %v1432 = vmul.f32 %v796, %v796
        %v1433 = vmul.f32 %v798, %v798
        %v1434 = vmul.f32 %v909, %v909
        %v1435 = vmul.f32 %v911, %v911
        %v1436 = vmul.f32 %v1022, %v1022
        %v1437 = vmul.f32 %v1024, %v1024
        %v1438 = vmul.f32 %v1135, %v1135
        %v1439 = vmul.f32 %v1137, %v1137
        %v1440 = vmul.f32 %v1248, %v1248
        %v1441 = vmul.f32 %v1250, %v1250
        %v1442 = vmul.f32 %v463, %v463
        %v1443 = vmul.f32 %v465, %v465
        %v1444 = vmul.f32 %v576, %v576
        %v1445 = vmul.f32 %v578, %v578
        %v1446 = vmul.f32 %v689, %v689
        %v1447 = vmul.f32 %v691, %v691
        %v1448 = vmul.f32 %v802, %v802
        %v1449 = vmul.f32 %v804, %v804
        %v1450 = vmul.f32 %v915, %v915
        %v1451 = vmul.f32 %v917, %v917
        %v1452 = vmul.f32 %v1028, %v1028
        %v1453 = vmul.f32 %v1030, %v1030
        %v1454 = vmul.f32 %v1141, %v1141
        %v1455 = vmul.f32 %v1143, %v1143
        %v1456 = vmul.f32 %v1254, %v1254
        %v1457 = vmul.f32 %v1256, %v1256
        %v1458 = vmul.f32 %v467, %v467
        %v1459 = vmul.f32 %v469, %v469
        %v1460 = vmul.f32 %v580, %v580
        %v1461 = vmul.f32 %v582, %v582
        %v1462 = vmul.f32 %v693, %v693
        %v1463 = vmul.f32 %v695, %v695
        %v1464 = vmul.f32 %v806, %v806
        %v1465 = vmul.f32 %v808, %v808
        %v1466 = vmul.f32 %v919, %v919
        %v1467 = vmul.f32 %v921, %v921
        %v1468 = vmul.f32 %v1032, %v1032
        %v1469 = vmul.f32 %v1034, %v1034
        %v1470 = vmul.f32 %v1145, %v1145
        %v1471 = vmul.f32 %v1147, %v1147
        %v1472 = vmul.f32 %v1258, %v1258
        %v1473 = vmul.f32 %v1260, %v1260
        %v1474 = vmul.f32 %v473, %v473
        %v1475 = vmul.f32 %v475, %v475
        %v1476 = vmul.f32 %v586, %v586
        %v1477 = vmul.f32 %v588, %v588
        %v1478 = vmul.f32 %v699, %v699
        %v1479 = vmul.f32 %v701, %v701
        %v1480 = vmul.f32 %v812, %v812
        %v1481 = vmul.f32 %v814, %v814
        %v1482 = vmul.f32 %v925, %v925
        %v1483 = vmul.f32 %v927, %v927
        %v1484 = vmul.f32 %v1038, %v1038
        %v1485 = vmul.f32 %v1040, %v1040
        %v1486 = vmul.f32 %v1151, %v1151
        %v1487 = vmul.f32 %v1153, %v1153
        %v1488 = vmul.f32 %v1264, %v1264
        %v1489 = vmul.f32 %v1266, %v1266
        %v1490 = vmul.f32 %v477, %v477
        %v1491 = vmul.f32 %v479, %v479
        %v1492 = vmul.f32 %v590, %v590
        %v1493 = vmul.f32 %v592, %v592
        %v1494 = vmul.f32 %v703, %v703
        %v1495 = vmul.f32 %v705, %v705
        %v1496 = vmul.f32 %v816, %v816
        %v1497 = vmul.f32 %v818, %v818
        %v1498 = vmul.f32 %v929, %v929
        %v1499 = vmul.f32 %v931, %v931
        %v1500 = vmul.f32 %v1042, %v1042
        %v1501 = vmul.f32 %v1044, %v1044
        %v1502 = vmul.f32 %v1155, %v1155
        %v1503 = vmul.f32 %v1157, %v1157
        %v1504 = vmul.f32 %v1268, %v1268
        %v1505 = vmul.f32 %v1270, %v1270
        %v1506 = vmul.f32 %v483, %v483
        %v1507 = vmul.f32 %v485, %v485
        %v1508 = vmul.f32 %v596, %v596
        %v1509 = vmul.f32 %v598, %v598
        %v1510 = vmul.f32 %v709, %v709
        %v1511 = vmul.f32 %v711, %v711
        %v1512 = vmul.f32 %v822, %v822
        %v1513 = vmul.f32 %v824, %v824
        %v1514 = vmul.f32 %v935, %v935
        %v1515 = vmul.f32 %v937, %v937
        %v1516 = vmul.f32 %v1048, %v1048
        %v1517 = vmul.f32 %v1050, %v1050
        %v1518 = vmul.f32 %v1161, %v1161
        %v1519 = vmul.f32 %v1163, %v1163
        %v1520 = vmul.f32 %v1274, %v1274
        %v1521 = vmul.f32 %v1276, %v1276
        %v1522 = vmul.f32 %v487, %v487
        %v1523 = vmul.f32 %v489, %v489
        %v1524 = vmul.f32 %v600, %v600
        %v1525 = vmul.f32 %v602, %v602
        %v1526 = vmul.f32 %v713, %v713
        %v1527 = vmul.f32 %v715, %v715
        %v1528 = vmul.f32 %v826, %v826
        %v1529 = vmul.f32 %v828, %v828
        %v1530 = vmul.f32 %v939, %v939
        %v1531 = vmul.f32 %v941, %v941
        %v1532 = vmul.f32 %v1052, %v1052
        %v1533 = vmul.f32 %v1054, %v1054
        %v1534 = vmul.f32 %v1165, %v1165
        %v1535 = vmul.f32 %v1167, %v1167
        %v1536 = vmul.f32 %v1278, %v1278
        %v1537 = vmul.f32 %v1280, %v1280
        %v1538 = vmul.f32 %v413, %v1282
        %v1539 = vmul.f32 %v415, %v1283
        %v1540 = vmul.f32 %v526, %v1284
        %v1541 = vmul.f32 %v528, %v1285
        %v1542 = vmul.f32 %v639, %v1286
        %v1543 = vmul.f32 %v641, %v1287
        %v1544 = vmul.f32 %v752, %v1288
        %v1545 = vmul.f32 %v754, %v1289
        %v1546 = vmul.f32 %v865, %v1290
        %v1547 = vmul.f32 %v867, %v1291
        %v1548 = vmul.f32 %v978, %v1292
        %v1549 = vmul.f32 %v980, %v1293
        %v1550 = vmul.f32 %v1091, %v1294
        %v1551 = vmul.f32 %v1093, %v1295
        %v1552 = vmul.f32 %v1204, %v1296
        %v1553 = vmul.f32 %v1206, %v1297
        %v1554 = vmul.f32 %v417, %v1298
        %v1555 = vmul.f32 %v419, %v1299
        %v1556 = vmul.f32 %v530, %v1300
        %v1557 = vmul.f32 %v532, %v1301
        %v1558 = vmul.f32 %v643, %v1302
        %v1559 = vmul.f32 %v645, %v1303
        %v1560 = vmul.f32 %v756, %v1304
        %v1561 = vmul.f32 %v758, %v1305
        %v1562 = vmul.f32 %v869, %v1306
        %v1563 = vmul.f32 %v871, %v1307
        %v1564 = vmul.f32 %v982, %v1308
        %v1565 = vmul.f32 %v984, %v1309
        %v1566 = vmul.f32 %v1095, %v1310
        %v1567 = vmul.f32 %v1097, %v1311
        %v1568 = vmul.f32 %v1208, %v1312
        %v1569 = vmul.f32 %v1210, %v1313
        %v1570 = vmul.f32 %v423, %v1314
        %v1571 = vmul.f32 %v425, %v1315
        %v1572 = vmul.f32 %v536, %v1316
        %v1573 = vmul.f32 %v538, %v1317
        %v1574 = vmul.f32 %v649, %v1318
        %v1575 = vmul.f32 %v651, %v1319
        %v1576 = vmul.f32 %v762, %v1320
        %v1577 = vmul.f32 %v764, %v1321
        %v1578 = vmul.f32 %v875, %v1322
        %v1579 = vmul.f32 %v877, %v1323
        %v1580 = vmul.f32 %v988, %v1324
        %v1581 = vmul.f32 %v990, %v1325
        %v1582 = vmul.f32 %v1101, %v1326
        %v1583 = vmul.f32 %v1103, %v1327
        %v1584 = vmul.f32 %v1214, %v1328
        %v1585 = vmul.f32 %v1216, %v1329
        %v1586 = vmul.f32 %v427, %v1330
        %v1587 = vmul.f32 %v429, %v1331
        %v1588 = vmul.f32 %v540, %v1332
        %v1589 = vmul.f32 %v542, %v1333
        %v1590 = vmul.f32 %v653, %v1334
        %v1591 = vmul.f32 %v655, %v1335
        %v1592 = vmul.f32 %v766, %v1336
        %v1593 = vmul.f32 %v768, %v1337
        %v1594 = vmul.f32 %v879, %v1338
        %v1595 = vmul.f32 %v881, %v1339
        %v1596 = vmul.f32 %v992, %v1340
        %v1597 = vmul.f32 %v994, %v1341
        %v1598 = vmul.f32 %v1105, %v1342
        %v1599 = vmul.f32 %v1107, %v1343
        %v1600 = vmul.f32 %v1218, %v1344
        %v1601 = vmul.f32 %v1220, %v1345
        %v1602 = vmul.f32 %v433, %v1346
        %v1603 = vmul.f32 %v435, %v1347
        %v1604 = vmul.f32 %v546, %v1348
        %v1605 = vmul.f32 %v548, %v1349
        %v1606 = vmul.f32 %v659, %v1350
        %v1607 = vmul.f32 %v661, %v1351
        %v1608 = vmul.f32 %v772, %v1352
        %v1609 = vmul.f32 %v774, %v1353
        %v1610 = vmul.f32 %v885, %v1354
        %v1611 = vmul.f32 %v887, %v1355
        %v1612 = vmul.f32 %v998, %v1356
        %v1613 = vmul.f32 %v1000, %v1357
        %v1614 = vmul.f32 %v1111, %v1358
        %v1615 = vmul.f32 %v1113, %v1359
        %v1616 = vmul.f32 %v1224, %v1360
        %v1617 = vmul.f32 %v1226, %v1361
        %v1618 = vmul.f32 %v437, %v1362
        %v1619 = vmul.f32 %v439, %v1363
        %v1620 = vmul.f32 %v550, %v1364
        %v1621 = vmul.f32 %v552, %v1365
        %v1622 = vmul.f32 %v663, %v1366
        %v1623 = vmul.f32 %v665, %v1367
        %v1624 = vmul.f32 %v776, %v1368
        %v1625 = vmul.f32 %v778, %v1369
        %v1626 = vmul.f32 %v889, %v1370
        %v1627 = vmul.f32 %v891, %v1371
        %v1628 = vmul.f32 %v1002, %v1372
        %v1629 = vmul.f32 %v1004, %v1373
        %v1630 = vmul.f32 %v1115, %v1374
        %v1631 = vmul.f32 %v1117, %v1375
        %v1632 = vmul.f32 %v1228, %v1376
        %v1633 = vmul.f32 %v1230, %v1377
        %v1634 = vmul.f32 %v443, %v1378
        %v1635 = vmul.f32 %v445, %v1379
        %v1636 = vmul.f32 %v556, %v1380
        %v1637 = vmul.f32 %v558, %v1381
        %v1638 = vmul.f32 %v669, %v1382
        %v1639 = vmul.f32 %v671, %v1383
        %v1640 = vmul.f32 %v782, %v1384
        %v1641 = vmul.f32 %v784, %v1385
        %v1642 = vmul.f32 %v895, %v1386
        %v1643 = vmul.f32 %v897, %v1387
        %v1644 = vmul.f32 %v1008, %v1388
        %v1645 = vmul.f32 %v1010, %v1389
        %v1646 = vmul.f32 %v1121, %v1390
        %v1647 = vmul.f32 %v1123, %v1391
        %v1648 = vmul.f32 %v1234, %v1392
        %v1649 = vmul.f32 %v1236, %v1393
        %v1650 = vmul.f32 %v447, %v1394
        %v1651 = vmul.f32 %v449, %v1395
        %v1652 = vmul.f32 %v560, %v1396
        %v1653 = vmul.f32 %v562, %v1397
        %v1654 = vmul.f32 %v673, %v1398
        %v1655 = vmul.f32 %v675, %v1399
        %v1656 = vmul.f32 %v786, %v1400
        %v1657 = vmul.f32 %v788, %v1401
        %v1658 = vmul.f32 %v899, %v1402
        %v1659 = vmul.f32 %v901, %v1403
        %v1660 = vmul.f32 %v1012, %v1404
        %v1661 = vmul.f32 %v1014, %v1405
        %v1662 = vmul.f32 %v1125, %v1406
        %v1663 = vmul.f32 %v1127, %v1407
        %v1664 = vmul.f32 %v1238, %v1408
        %v1665 = vmul.f32 %v1240, %v1409
        %v1666 = vmul.f32 %v453, %v1410
        %v1667 = vmul.f32 %v455, %v1411
        %v1668 = vmul.f32 %v566, %v1412
        %v1669 = vmul.f32 %v568, %v1413
        %v1670 = vmul.f32 %v679, %v1414
        %v1671 = vmul.f32 %v681, %v1415
        %v1672 = vmul.f32 %v792, %v1416
        %v1673 = vmul.f32 %v794, %v1417
        %v1674 = vmul.f32 %v905, %v1418
        %v1675 = vmul.f32 %v907, %v1419
        %v1676 = vmul.f32 %v1018, %v1420
        %v1677 = vmul.f32 %v1020, %v1421
        %v1678 = vmul.f32 %v1131, %v1422
        %v1679 = vmul.f32 %v1133, %v1423
        %v1680 = vmul.f32 %v1244, %v1424
        %v1681 = vmul.f32 %v1246, %v1425
        %v1682 = vmul.f32 %v457, %v1426
        %v1683 = vmul.f32 %v459, %v1427
        %v1684 = vmul.f32 %v570, %v1428
        %v1685 = vmul.f32 %v572, %v1429
        %v1686 = vmul.f32 %v683, %v1430
        %v1687 = vmul.f32 %v685, %v1431
        %v1688 = vmul.f32 %v796, %v1432
        %v1689 = vmul.f32 %v798, %v1433
        %v1690 = vmul.f32 %v909, %v1434
        %v1691 = vmul.f32 %v911, %v1435
        %v1692 = vmul.f32 %v1022, %v1436
        %v1693 = vmul.f32 %v1024, %v1437
        %v1694 = vmul.f32 %v1135, %v1438
        %v1695 = vmul.f32 %v1137, %v1439
        %v1696 = vmul.f32 %v1248, %v1440
        %v1697 = vmul.f32 %v1250, %v1441
        %v1698 = vmul.f32 %v463, %v1442
        %v1699 = vmul.f32 %v465, %v1443
        %v1700 = vmul.f32 %v576, %v1444
        %v1701 = vmul.f32 %v578, %v1445
        %v1702 = vmul.f32 %v689, %v1446
        %v1703 = vmul.f32 %v691, %v1447
        %v1704 = vmul.f32 %v802, %v1448
        %v1705 = vmul.f32 %v804, %v1449
        %v1706 = vmul.f32 %v915, %v1450
        %v1707 = vmul.f32 %v917, %v1451
        %v1708 = vmul.f32 %v1028, %v1452
        %v1709 = vmul.f32 %v1030, %v1453
        %v1710 = vmul.f32 %v1141, %v1454
        %v1711 = vmul.f32 %v1143, %v1455
        %v1712 = vmul.f32 %v1254, %v1456
        %v1713 = vmul.f32 %v1256, %v1457
        %v1714 = vmul.f32 %v467, %v1458
        %v1715 = vmul.f32 %v469, %v1459
        %v1716 = vmul.f32 %v580, %v1460
        %v1717 = vmul.f32 %v582, %v1461
        %v1718 = vmul.f32 %v693, %v1462
        %v1719 = vmul.f32 %v695, %v1463
        %v1720 = vmul.f32 %v806, %v1464
        %v1721 = vmul.f32 %v808, %v1465
        %v1722 = vmul.f32 %v919, %v1466
        %v1723 = vmul.f32 %v921, %v1467
        %v1724 = vmul.f32 %v1032, %v1468
        %v1725 = vmul.f32 %v1034, %v1469
        %v1726 = vmul.f32 %v1145, %v1470
        %v1727 = vmul.f32 %v1147, %v1471
        %v1728 = vmul.f32 %v1258, %v1472
        %v1729 = vmul.f32 %v1260, %v1473
        %v1730 = vmul.f32 %v473, %v1474
        %v1731 = vmul.f32 %v475, %v1475
        %v1732 = vmul.f32 %v586, %v1476
        %v1733 = vmul.f32 %v588, %v1477
        %v1734 = vmul.f32 %v699, %v1478
        %v1735 = vmul.f32 %v701, %v1479
        %v1736 = vmul.f32 %v812, %v1480
        %v1737 = vmul.f32 %v814, %v1481
        %v1738 = vmul.f32 %v925, %v1482
        %v1739 = vmul.f32 %v927, %v1483
        %v1740 = vmul.f32 %v1038, %v1484
        %v1741 = vmul.f32 %v1040, %v1485
        %v1742 = vmul.f32 %v1151, %v1486
        %v1743 = vmul.f32 %v1153, %v1487
        %v1744 = vmul.f32 %v1264, %v1488
        %v1745 = vmul.f32 %v1266, %v1489
        %v1746 = vmul.f32 %v477, %v1490
        %v1747 = vmul.f32 %v479, %v1491
        %v1748 = vmul.f32 %v590, %v1492
        %v1749 = vmul.f32 %v592, %v1493
        %v1750 = vmul.f32 %v703, %v1494
        %v1751 = vmul.f32 %v705, %v1495
        %v1752 = vmul.f32 %v816, %v1496
        %v1753 = vmul.f32 %v818, %v1497
        %v1754 = vmul.f32 %v929, %v1498
        %v1755 = vmul.f32 %v931, %v1499
        %v1756 = vmul.f32 %v1042, %v1500
        %v1757 = vmul.f32 %v1044, %v1501
        %v1758 = vmul.f32 %v1155, %v1502
        %v1759 = vmul.f32 %v1157, %v1503
        %v1760 = vmul.f32 %v1268, %v1504
        %v1761 = vmul.f32 %v1270, %v1505
        %v1762 = vmul.f32 %v483, %v1506
        %v1763 = vmul.f32 %v485, %v1507
        %v1764 = vmul.f32 %v596, %v1508
        %v1765 = vmul.f32 %v598, %v1509
        %v1766 = vmul.f32 %v709, %v1510
        %v1767 = vmul.f32 %v711, %v1511
        %v1768 = vmul.f32 %v822, %v1512
        %v1769 = vmul.f32 %v824, %v1513
        %v1770 = vmul.f32 %v935, %v1514
        %v1771 = vmul.f32 %v937, %v1515
        %v1772 = vmul.f32 %v1048, %v1516
        %v1773 = vmul.f32 %v1050, %v1517
        %v1774 = vmul.f32 %v1161, %v1518
        %v1775 = vmul.f32 %v1163, %v1519
        %v1776 = vmul.f32 %v1274, %v1520
        %v1777 = vmul.f32 %v1276, %v1521
        %v1778 = vmul.f32 %v487, %v1522
        %v1779 = vmul.f32 %v489, %v1523
        %v1780 = vmul.f32 %v600, %v1524
        %v1781 = vmul.f32 %v602, %v1525
        %v1782 = vmul.f32 %v713, %v1526
        %v1783 = vmul.f32 %v715, %v1527
        %v1784 = vmul.f32 %v826, %v1528
        %v1785 = vmul.f32 %v828, %v1529
        %v1786 = vmul.f32 %v939, %v1530
        %v1787 = vmul.f32 %v941, %v1531
        %v1788 = vmul.f32 %v1052, %v1532
        %v1789 = vmul.f32 %v1054, %v1533
        %v1790 = vmul.f32 %v1165, %v1534
        %v1791 = vmul.f32 %v1167, %v1535
        %v1792 = vmul.f32 %v1278, %v1536
        %v1793 = vmul.f32 %v1280, %v1537
        %v1794 = vmul.f32 %v1538, 0.044715
        %v1795 = vmul.f32 %v1539, 0.044715
        %v1796 = vmul.f32 %v1540, 0.044715
        %v1797 = vmul.f32 %v1541, 0.044715
        %v1798 = vmul.f32 %v1542, 0.044715
        %v1799 = vmul.f32 %v1543, 0.044715
        %v1800 = vmul.f32 %v1544, 0.044715
        %v1801 = vmul.f32 %v1545, 0.044715
        %v1802 = vmul.f32 %v1546, 0.044715
        %v1803 = vmul.f32 %v1547, 0.044715
        %v1804 = vmul.f32 %v1548, 0.044715
        %v1805 = vmul.f32 %v1549, 0.044715
        %v1806 = vmul.f32 %v1550, 0.044715
        %v1807 = vmul.f32 %v1551, 0.044715
        %v1808 = vmul.f32 %v1552, 0.044715
        %v1809 = vmul.f32 %v1553, 0.044715
        %v1810 = vmul.f32 %v1554, 0.044715
        %v1811 = vmul.f32 %v1555, 0.044715
        %v1812 = vmul.f32 %v1556, 0.044715
        %v1813 = vmul.f32 %v1557, 0.044715
        %v1814 = vmul.f32 %v1558, 0.044715
        %v1815 = vmul.f32 %v1559, 0.044715
        %v1816 = vmul.f32 %v1560, 0.044715
        %v1817 = vmul.f32 %v1561, 0.044715
        %v1818 = vmul.f32 %v1562, 0.044715
        %v1819 = vmul.f32 %v1563, 0.044715
        %v1820 = vmul.f32 %v1564, 0.044715
        %v1821 = vmul.f32 %v1565, 0.044715
        %v1822 = vmul.f32 %v1566, 0.044715
        %v1823 = vmul.f32 %v1567, 0.044715
        %v1824 = vmul.f32 %v1568, 0.044715
        %v1825 = vmul.f32 %v1569, 0.044715
        %v1826 = vmul.f32 %v1570, 0.044715
        %v1827 = vmul.f32 %v1571, 0.044715
        %v1828 = vmul.f32 %v1572, 0.044715
        %v1829 = vmul.f32 %v1573, 0.044715
        %v1830 = vmul.f32 %v1574, 0.044715
        %v1831 = vmul.f32 %v1575, 0.044715
        %v1832 = vmul.f32 %v1576, 0.044715
        %v1833 = vmul.f32 %v1577, 0.044715
        %v1834 = vmul.f32 %v1578, 0.044715
        %v1835 = vmul.f32 %v1579, 0.044715
        %v1836 = vmul.f32 %v1580, 0.044715
        %v1837 = vmul.f32 %v1581, 0.044715
        %v1838 = vmul.f32 %v1582, 0.044715
        %v1839 = vmul.f32 %v1583, 0.044715
        %v1840 = vmul.f32 %v1584, 0.044715
        %v1841 = vmul.f32 %v1585, 0.044715
        %v1842 = vmul.f32 %v1586, 0.044715
        %v1843 = vmul.f32 %v1587, 0.044715
        %v1844 = vmul.f32 %v1588, 0.044715
        %v1845 = vmul.f32 %v1589, 0.044715
        %v1846 = vmul.f32 %v1590, 0.044715
        %v1847 = vmul.f32 %v1591, 0.044715
        %v1848 = vmul.f32 %v1592, 0.044715
        %v1849 = vmul.f32 %v1593, 0.044715
        %v1850 = vmul.f32 %v1594, 0.044715
        %v1851 = vmul.f32 %v1595, 0.044715
        %v1852 = vmul.f32 %v1596, 0.044715
        %v1853 = vmul.f32 %v1597, 0.044715
        %v1854 = vmul.f32 %v1598, 0.044715
        %v1855 = vmul.f32 %v1599, 0.044715
        %v1856 = vmul.f32 %v1600, 0.044715
        %v1857 = vmul.f32 %v1601, 0.044715
        %v1858 = vmul.f32 %v1602, 0.044715
        %v1859 = vmul.f32 %v1603, 0.044715
        %v1860 = vmul.f32 %v1604, 0.044715
        %v1861 = vmul.f32 %v1605, 0.044715
        %v1862 = vmul.f32 %v1606, 0.044715
        %v1863 = vmul.f32 %v1607, 0.044715
        %v1864 = vmul.f32 %v1608, 0.044715
        %v1865 = vmul.f32 %v1609, 0.044715
        %v1866 = vmul.f32 %v1610, 0.044715
        %v1867 = vmul.f32 %v1611, 0.044715
        %v1868 = vmul.f32 %v1612, 0.044715
        %v1869 = vmul.f32 %v1613, 0.044715
        %v1870 = vmul.f32 %v1614, 0.044715
        %v1871 = vmul.f32 %v1615, 0.044715
        %v1872 = vmul.f32 %v1616, 0.044715
        %v1873 = vmul.f32 %v1617, 0.044715
        %v1874 = vmul.f32 %v1618, 0.044715
        %v1875 = vmul.f32 %v1619, 0.044715
        %v1876 = vmul.f32 %v1620, 0.044715
        %v1877 = vmul.f32 %v1621, 0.044715
        %v1878 = vmul.f32 %v1622, 0.044715
        %v1879 = vmul.f32 %v1623, 0.044715
        %v1880 = vmul.f32 %v1624, 0.044715
        %v1881 = vmul.f32 %v1625, 0.044715
        %v1882 = vmul.f32 %v1626, 0.044715
        %v1883 = vmul.f32 %v1627, 0.044715
        %v1884 = vmul.f32 %v1628, 0.044715
        %v1885 = vmul.f32 %v1629, 0.044715
        %v1886 = vmul.f32 %v1630, 0.044715
        %v1887 = vmul.f32 %v1631, 0.044715
        %v1888 = vmul.f32 %v1632, 0.044715
        %v1889 = vmul.f32 %v1633, 0.044715
        %v1890 = vmul.f32 %v1634, 0.044715
        %v1891 = vmul.f32 %v1635, 0.044715
        %v1892 = vmul.f32 %v1636, 0.044715
        %v1893 = vmul.f32 %v1637, 0.044715
        %v1894 = vmul.f32 %v1638, 0.044715
        %v1895 = vmul.f32 %v1639, 0.044715
        %v1896 = vmul.f32 %v1640, 0.044715
        %v1897 = vmul.f32 %v1641, 0.044715
        %v1898 = vmul.f32 %v1642, 0.044715
        %v1899 = vmul.f32 %v1643, 0.044715
        %v1900 = vmul.f32 %v1644, 0.044715
        %v1901 = vmul.f32 %v1645, 0.044715
        %v1902 = vmul.f32 %v1646, 0.044715
        %v1903 = vmul.f32 %v1647, 0.044715
        %v1904 = vmul.f32 %v1648, 0.044715
        %v1905 = vmul.f32 %v1649, 0.044715
        %v1906 = vmul.f32 %v1650, 0.044715
        %v1907 = vmul.f32 %v1651, 0.044715
        %v1908 = vmul.f32 %v1652, 0.044715
        %v1909 = vmul.f32 %v1653, 0.044715
        %v1910 = vmul.f32 %v1654, 0.044715
        %v1911 = vmul.f32 %v1655, 0.044715
        %v1912 = vmul.f32 %v1656, 0.044715
        %v1913 = vmul.f32 %v1657, 0.044715
        %v1914 = vmul.f32 %v1658, 0.044715
        %v1915 = vmul.f32 %v1659, 0.044715
        %v1916 = vmul.f32 %v1660, 0.044715
        %v1917 = vmul.f32 %v1661, 0.044715
        %v1918 = vmul.f32 %v1662, 0.044715
        %v1919 = vmul.f32 %v1663, 0.044715
        %v1920 = vmul.f32 %v1664, 0.044715
        %v1921 = vmul.f32 %v1665, 0.044715
        %v1922 = vmul.f32 %v1666, 0.044715
        %v1923 = vmul.f32 %v1667, 0.044715
        %v1924 = vmul.f32 %v1668, 0.044715
        %v1925 = vmul.f32 %v1669, 0.044715
        %v1926 = vmul.f32 %v1670, 0.044715
        %v1927 = vmul.f32 %v1671, 0.044715
        %v1928 = vmul.f32 %v1672, 0.044715
        %v1929 = vmul.f32 %v1673, 0.044715
        %v1930 = vmul.f32 %v1674, 0.044715
        %v1931 = vmul.f32 %v1675, 0.044715
        %v1932 = vmul.f32 %v1676, 0.044715
        %v1933 = vmul.f32 %v1677, 0.044715
        %v1934 = vmul.f32 %v1678, 0.044715
        %v1935 = vmul.f32 %v1679, 0.044715
        %v1936 = vmul.f32 %v1680, 0.044715
        %v1937 = vmul.f32 %v1681, 0.044715
        %v1938 = vmul.f32 %v1682, 0.044715
        %v1939 = vmul.f32 %v1683, 0.044715
        %v1940 = vmul.f32 %v1684, 0.044715
        %v1941 = vmul.f32 %v1685, 0.044715
        %v1942 = vmul.f32 %v1686, 0.044715
        %v1943 = vmul.f32 %v1687, 0.044715
        %v1944 = vmul.f32 %v1688, 0.044715
        %v1945 = vmul.f32 %v1689, 0.044715
        %v1946 = vmul.f32 %v1690, 0.044715
        %v1947 = vmul.f32 %v1691, 0.044715
        %v1948 = vmul.f32 %v1692, 0.044715
        %v1949 = vmul.f32 %v1693, 0.044715
        %v1950 = vmul.f32 %v1694, 0.044715
        %v1951 = vmul.f32 %v1695, 0.044715
        %v1952 = vmul.f32 %v1696, 0.044715
        %v1953 = vmul.f32 %v1697, 0.044715
        %v1954 = vmul.f32 %v1698, 0.044715
        %v1955 = vmul.f32 %v1699, 0.044715
        %v1956 = vmul.f32 %v1700, 0.044715
        %v1957 = vmul.f32 %v1701, 0.044715
        %v1958 = vmul.f32 %v1702, 0.044715
        %v1959 = vmul.f32 %v1703, 0.044715
        %v1960 = vmul.f32 %v1704, 0.044715
        %v1961 = vmul.f32 %v1705, 0.044715
        %v1962 = vmul.f32 %v1706, 0.044715
        %v1963 = vmul.f32 %v1707, 0.044715
        %v1964 = vmul.f32 %v1708, 0.044715
        %v1965 = vmul.f32 %v1709, 0.044715
        %v1966 = vmul.f32 %v1710, 0.044715
        %v1967 = vmul.f32 %v1711, 0.044715
        %v1968 = vmul.f32 %v1712, 0.044715
        %v1969 = vmul.f32 %v1713, 0.044715
        %v1970 = vmul.f32 %v1714, 0.044715
        %v1971 = vmul.f32 %v1715, 0.044715
        %v1972 = vmul.f32 %v1716, 0.044715
        %v1973 = vmul.f32 %v1717, 0.044715
        %v1974 = vmul.f32 %v1718, 0.044715
        %v1975 = vmul.f32 %v1719, 0.044715
        %v1976 = vmul.f32 %v1720, 0.044715
        %v1977 = vmul.f32 %v1721, 0.044715
        %v1978 = vmul.f32 %v1722, 0.044715
        %v1979 = vmul.f32 %v1723, 0.044715
        %v1980 = vmul.f32 %v1724, 0.044715
        %v1981 = vmul.f32 %v1725, 0.044715
        %v1982 = vmul.f32 %v1726, 0.044715
        %v1983 = vmul.f32 %v1727, 0.044715
        %v1984 = vmul.f32 %v1728, 0.044715
        %v1985 = vmul.f32 %v1729, 0.044715
        %v1986 = vmul.f32 %v1730, 0.044715
        %v1987 = vmul.f32 %v1731, 0.044715
        %v1988 = vmul.f32 %v1732, 0.044715
        %v1989 = vmul.f32 %v1733, 0.044715
        %v1990 = vmul.f32 %v1734, 0.044715
        %v1991 = vmul.f32 %v1735, 0.044715
        %v1992 = vmul.f32 %v1736, 0.044715
        %v1993 = vmul.f32 %v1737, 0.044715
        %v1994 = vmul.f32 %v1738, 0.044715
        %v1995 = vmul.f32 %v1739, 0.044715
        %v1996 = vmul.f32 %v1740, 0.044715
        %v1997 = vmul.f32 %v1741, 0.044715
        %v1998 = vmul.f32 %v1742, 0.044715
        %v1999 = vmul.f32 %v1743, 0.044715
        %v2000 = vmul.f32 %v1744, 0.044715
        %v2001 = vmul.f32 %v1745, 0.044715
        %v2002 = vmul.f32 %v1746, 0.044715
        %v2003 = vmul.f32 %v1747, 0.044715
        %v2004 = vmul.f32 %v1748, 0.044715
        %v2005 = vmul.f32 %v1749, 0.044715
        %v2006 = vmul.f32 %v1750, 0.044715
        %v2007 = vmul.f32 %v1751, 0.044715
        %v2008 = vmul.f32 %v1752, 0.044715
        %v2009 = vmul.f32 %v1753, 0.044715
        %v2010 = vmul.f32 %v1754, 0.044715
        %v2011 = vmul.f32 %v1755, 0.044715
        %v2012 = vmul.f32 %v1756, 0.044715
        %v2013 = vmul.f32 %v1757, 0.044715
        %v2014 = vmul.f32 %v1758, 0.044715
        %v2015 = vmul.f32 %v1759, 0.044715
        %v2016 = vmul.f32 %v1760, 0.044715
        %v2017 = vmul.f32 %v1761, 0.044715
        %v2018 = vmul.f32 %v1762, 0.044715
        %v2019 = vmul.f32 %v1763, 0.044715
        %v2020 = vmul.f32 %v1764, 0.044715
        %v2021 = vmul.f32 %v1765, 0.044715
        %v2022 = vmul.f32 %v1766, 0.044715
        %v2023 = vmul.f32 %v1767, 0.044715
        %v2024 = vmul.f32 %v1768, 0.044715
        %v2025 = vmul.f32 %v1769, 0.044715
        %v2026 = vmul.f32 %v1770, 0.044715
        %v2027 = vmul.f32 %v1771, 0.044715
        %v2028 = vmul.f32 %v1772, 0.044715
        %v2029 = vmul.f32 %v1773, 0.044715
        %v2030 = vmul.f32 %v1774, 0.044715
        %v2031 = vmul.f32 %v1775, 0.044715
        %v2032 = vmul.f32 %v1776, 0.044715
        %v2033 = vmul.f32 %v1777, 0.044715
        %v2034 = vmul.f32 %v1778, 0.044715
        %v2035 = vmul.f32 %v1779, 0.044715
        %v2036 = vmul.f32 %v1780, 0.044715
        %v2037 = vmul.f32 %v1781, 0.044715
        %v2038 = vmul.f32 %v1782, 0.044715
        %v2039 = vmul.f32 %v1783, 0.044715
        %v2040 = vmul.f32 %v1784, 0.044715
        %v2041 = vmul.f32 %v1785, 0.044715
        %v2042 = vmul.f32 %v1786, 0.044715
        %v2043 = vmul.f32 %v1787, 0.044715
        %v2044 = vmul.f32 %v1788, 0.044715
        %v2045 = vmul.f32 %v1789, 0.044715
        %v2046 = vmul.f32 %v1790, 0.044715
        %v2047 = vmul.f32 %v1791, 0.044715
        %v2048 = vmul.f32 %v1792, 0.044715
        %v2049 = vmul.f32 %v1793, 0.044715
        %v2050 = vadd.f32 %v413, %v1794
        %v2051 = vadd.f32 %v415, %v1795
        %v2052 = vadd.f32 %v526, %v1796
        %v2053 = vadd.f32 %v528, %v1797
        %v2054 = vadd.f32 %v639, %v1798
        %v2055 = vadd.f32 %v641, %v1799
        %v2056 = vadd.f32 %v752, %v1800
        %v2057 = vadd.f32 %v754, %v1801
        %v2058 = vadd.f32 %v865, %v1802
        %v2059 = vadd.f32 %v867, %v1803
        %v2060 = vadd.f32 %v978, %v1804
        %v2061 = vadd.f32 %v980, %v1805
        %v2062 = vadd.f32 %v1091, %v1806
        %v2063 = vadd.f32 %v1093, %v1807
        %v2064 = vadd.f32 %v1204, %v1808
        %v2065 = vadd.f32 %v1206, %v1809
        %v2066 = vadd.f32 %v417, %v1810
        %v2067 = vadd.f32 %v419, %v1811
        %v2068 = vadd.f32 %v530, %v1812
        %v2069 = vadd.f32 %v532, %v1813
        %v2070 = vadd.f32 %v643, %v1814
        %v2071 = vadd.f32 %v645, %v1815
        %v2072 = vadd.f32 %v756, %v1816
        %v2073 = vadd.f32 %v758, %v1817
        %v2074 = vadd.f32 %v869, %v1818
        %v2075 = vadd.f32 %v871, %v1819
        %v2076 = vadd.f32 %v982, %v1820
        %v2077 = vadd.f32 %v984, %v1821
        %v2078 = vadd.f32 %v1095, %v1822
        %v2079 = vadd.f32 %v1097, %v1823
        %v2080 = vadd.f32 %v1208, %v1824
        %v2081 = vadd.f32 %v1210, %v1825
        %v2082 = vadd.f32 %v423, %v1826
        %v2083 = vadd.f32 %v425, %v1827
        %v2084 = vadd.f32 %v536, %v1828
        %v2085 = vadd.f32 %v538, %v1829
        %v2086 = vadd.f32 %v649, %v1830
        %v2087 = vadd.f32 %v651, %v1831
        %v2088 = vadd.f32 %v762, %v1832
        %v2089 = vadd.f32 %v764, %v1833
        %v2090 = vadd.f32 %v875, %v1834
        %v2091 = vadd.f32 %v877, %v1835
        %v2092 = vadd.f32 %v988, %v1836
        %v2093 = vadd.f32 %v990, %v1837
        %v2094 = vadd.f32 %v1101, %v1838
        %v2095 = vadd.f32 %v1103, %v1839
        %v2096 = vadd.f32 %v1214, %v1840
        %v2097 = vadd.f32 %v1216, %v1841
        %v2098 = vadd.f32 %v427, %v1842
        %v2099 = vadd.f32 %v429, %v1843
        %v2100 = vadd.f32 %v540, %v1844
        %v2101 = vadd.f32 %v542, %v1845
        %v2102 = vadd.f32 %v653, %v1846
        %v2103 = vadd.f32 %v655, %v1847
        %v2104 = vadd.f32 %v766, %v1848
        %v2105 = vadd.f32 %v768, %v1849
        %v2106 = vadd.f32 %v879, %v1850
        %v2107 = vadd.f32 %v881, %v1851
        %v2108 = vadd.f32 %v992, %v1852
        %v2109 = vadd.f32 %v994, %v1853
        %v2110 = vadd.f32 %v1105, %v1854
        %v2111 = vadd.f32 %v1107, %v1855
        %v2112 = vadd.f32 %v1218, %v1856
        %v2113 = vadd.f32 %v1220, %v1857
        %v2114 = vadd.f32 %v433, %v1858
        %v2115 = vadd.f32 %v435, %v1859
        %v2116 = vadd.f32 %v546, %v1860
        %v2117 = vadd.f32 %v548, %v1861
        %v2118 = vadd.f32 %v659, %v1862
        %v2119 = vadd.f32 %v661, %v1863
        %v2120 = vadd.f32 %v772, %v1864
        %v2121 = vadd.f32 %v774, %v1865
        %v2122 = vadd.f32 %v885, %v1866
        %v2123 = vadd.f32 %v887, %v1867
        %v2124 = vadd.f32 %v998, %v1868
        %v2125 = vadd.f32 %v1000, %v1869
        %v2126 = vadd.f32 %v1111, %v1870
        %v2127 = vadd.f32 %v1113, %v1871
        %v2128 = vadd.f32 %v1224, %v1872
        %v2129 = vadd.f32 %v1226, %v1873
        %v2130 = vadd.f32 %v437, %v1874
        %v2131 = vadd.f32 %v439, %v1875
        %v2132 = vadd.f32 %v550, %v1876
        %v2133 = vadd.f32 %v552, %v1877
        %v2134 = vadd.f32 %v663, %v1878
        %v2135 = vadd.f32 %v665, %v1879
        %v2136 = vadd.f32 %v776, %v1880
        %v2137 = vadd.f32 %v778, %v1881
        %v2138 = vadd.f32 %v889, %v1882
        %v2139 = vadd.f32 %v891, %v1883
        %v2140 = vadd.f32 %v1002, %v1884
        %v2141 = vadd.f32 %v1004, %v1885
        %v2142 = vadd.f32 %v1115, %v1886
        %v2143 = vadd.f32 %v1117, %v1887
        %v2144 = vadd.f32 %v1228, %v1888
        %v2145 = vadd.f32 %v1230, %v1889
        %v2146 = vadd.f32 %v443, %v1890
        %v2147 = vadd.f32 %v445, %v1891
        %v2148 = vadd.f32 %v556, %v1892
        %v2149 = vadd.f32 %v558, %v1893
        %v2150 = vadd.f32 %v669, %v1894
        %v2151 = vadd.f32 %v671, %v1895
        %v2152 = vadd.f32 %v782, %v1896
        %v2153 = vadd.f32 %v784, %v1897
        %v2154 = vadd.f32 %v895, %v1898
        %v2155 = vadd.f32 %v897, %v1899
        %v2156 = vadd.f32 %v1008, %v1900
        %v2157 = vadd.f32 %v1010, %v1901
        %v2158 = vadd.f32 %v1121, %v1902
        %v2159 = vadd.f32 %v1123, %v1903
        %v2160 = vadd.f32 %v1234, %v1904
        %v2161 = vadd.f32 %v1236, %v1905
        %v2162 = vadd.f32 %v447, %v1906
        %v2163 = vadd.f32 %v449, %v1907
        %v2164 = vadd.f32 %v560, %v1908
        %v2165 = vadd.f32 %v562, %v1909
        %v2166 = vadd.f32 %v673, %v1910
        %v2167 = vadd.f32 %v675, %v1911
        %v2168 = vadd.f32 %v786, %v1912
        %v2169 = vadd.f32 %v788, %v1913
        %v2170 = vadd.f32 %v899, %v1914
        %v2171 = vadd.f32 %v901, %v1915
        %v2172 = vadd.f32 %v1012, %v1916
        %v2173 = vadd.f32 %v1014, %v1917
        %v2174 = vadd.f32 %v1125, %v1918
        %v2175 = vadd.f32 %v1127, %v1919
        %v2176 = vadd.f32 %v1238, %v1920
        %v2177 = vadd.f32 %v1240, %v1921
        %v2178 = vadd.f32 %v453, %v1922
        %v2179 = vadd.f32 %v455, %v1923
        %v2180 = vadd.f32 %v566, %v1924
        %v2181 = vadd.f32 %v568, %v1925
        %v2182 = vadd.f32 %v679, %v1926
        %v2183 = vadd.f32 %v681, %v1927
        %v2184 = vadd.f32 %v792, %v1928
        %v2185 = vadd.f32 %v794, %v1929
        %v2186 = vadd.f32 %v905, %v1930
        %v2187 = vadd.f32 %v907, %v1931
        %v2188 = vadd.f32 %v1018, %v1932
        %v2189 = vadd.f32 %v1020, %v1933
        %v2190 = vadd.f32 %v1131, %v1934
        %v2191 = vadd.f32 %v1133, %v1935
        %v2192 = vadd.f32 %v1244, %v1936
        %v2193 = vadd.f32 %v1246, %v1937
        %v2194 = vadd.f32 %v457, %v1938
        %v2195 = vadd.f32 %v459, %v1939
        %v2196 = vadd.f32 %v570, %v1940
        %v2197 = vadd.f32 %v572, %v1941
        %v2198 = vadd.f32 %v683, %v1942
        %v2199 = vadd.f32 %v685, %v1943
        %v2200 = vadd.f32 %v796, %v1944
        %v2201 = vadd.f32 %v798, %v1945
        %v2202 = vadd.f32 %v909, %v1946
        %v2203 = vadd.f32 %v911, %v1947
        %v2204 = vadd.f32 %v1022, %v1948
        %v2205 = vadd.f32 %v1024, %v1949
        %v2206 = vadd.f32 %v1135, %v1950
        %v2207 = vadd.f32 %v1137, %v1951
        %v2208 = vadd.f32 %v1248, %v1952
        %v2209 = vadd.f32 %v1250, %v1953
        %v2210 = vadd.f32 %v463, %v1954
        %v2211 = vadd.f32 %v465, %v1955
        %v2212 = vadd.f32 %v576, %v1956
        %v2213 = vadd.f32 %v578, %v1957
        %v2214 = vadd.f32 %v689, %v1958
        %v2215 = vadd.f32 %v691, %v1959
        %v2216 = vadd.f32 %v802, %v1960
        %v2217 = vadd.f32 %v804, %v1961
        %v2218 = vadd.f32 %v915, %v1962
        %v2219 = vadd.f32 %v917, %v1963
        %v2220 = vadd.f32 %v1028, %v1964
        %v2221 = vadd.f32 %v1030, %v1965
        %v2222 = vadd.f32 %v1141, %v1966
        %v2223 = vadd.f32 %v1143, %v1967
        %v2224 = vadd.f32 %v1254, %v1968
        %v2225 = vadd.f32 %v1256, %v1969
        %v2226 = vadd.f32 %v467, %v1970
        %v2227 = vadd.f32 %v469, %v1971
        %v2228 = vadd.f32 %v580, %v1972
        %v2229 = vadd.f32 %v582, %v1973
        %v2230 = vadd.f32 %v693, %v1974
        %v2231 = vadd.f32 %v695, %v1975
        %v2232 = vadd.f32 %v806, %v1976
        %v2233 = vadd.f32 %v808, %v1977
        %v2234 = vadd.f32 %v919, %v1978
        %v2235 = vadd.f32 %v921, %v1979
        %v2236 = vadd.f32 %v1032, %v1980
        %v2237 = vadd.f32 %v1034, %v1981
        %v2238 = vadd.f32 %v1145, %v1982
        %v2239 = vadd.f32 %v1147, %v1983
        %v2240 = vadd.f32 %v1258, %v1984
        %v2241 = vadd.f32 %v1260, %v1985
        %v2242 = vadd.f32 %v473, %v1986
        %v2243 = vadd.f32 %v475, %v1987
        %v2244 = vadd.f32 %v586, %v1988
        %v2245 = vadd.f32 %v588, %v1989
        %v2246 = vadd.f32 %v699, %v1990
        %v2247 = vadd.f32 %v701, %v1991
        %v2248 = vadd.f32 %v812, %v1992
        %v2249 = vadd.f32 %v814, %v1993
        %v2250 = vadd.f32 %v925, %v1994
        %v2251 = vadd.f32 %v927, %v1995
        %v2252 = vadd.f32 %v1038, %v1996
        %v2253 = vadd.f32 %v1040, %v1997
        %v2254 = vadd.f32 %v1151, %v1998
        %v2255 = vadd.f32 %v1153, %v1999
        %v2256 = vadd.f32 %v1264, %v2000
        %v2257 = vadd.f32 %v1266, %v2001
        %v2258 = vadd.f32 %v477, %v2002
        %v2259 = vadd.f32 %v479, %v2003
        %v2260 = vadd.f32 %v590, %v2004
        %v2261 = vadd.f32 %v592, %v2005
        %v2262 = vadd.f32 %v703, %v2006
        %v2263 = vadd.f32 %v705, %v2007
        %v2264 = vadd.f32 %v816, %v2008
        %v2265 = vadd.f32 %v818, %v2009
        %v2266 = vadd.f32 %v929, %v2010
        %v2267 = vadd.f32 %v931, %v2011
        %v2268 = vadd.f32 %v1042, %v2012
        %v2269 = vadd.f32 %v1044, %v2013
        %v2270 = vadd.f32 %v1155, %v2014
        %v2271 = vadd.f32 %v1157, %v2015
        %v2272 = vadd.f32 %v1268, %v2016
        %v2273 = vadd.f32 %v1270, %v2017
        %v2274 = vadd.f32 %v483, %v2018
        %v2275 = vadd.f32 %v485, %v2019
        %v2276 = vadd.f32 %v596, %v2020
        %v2277 = vadd.f32 %v598, %v2021
        %v2278 = vadd.f32 %v709, %v2022
        %v2279 = vadd.f32 %v711, %v2023
        %v2280 = vadd.f32 %v822, %v2024
        %v2281 = vadd.f32 %v824, %v2025
        %v2282 = vadd.f32 %v935, %v2026
        %v2283 = vadd.f32 %v937, %v2027
        %v2284 = vadd.f32 %v1048, %v2028
        %v2285 = vadd.f32 %v1050, %v2029
        %v2286 = vadd.f32 %v1161, %v2030
        %v2287 = vadd.f32 %v1163, %v2031
        %v2288 = vadd.f32 %v1274, %v2032
        %v2289 = vadd.f32 %v1276, %v2033
        %v2290 = vadd.f32 %v487, %v2034
        %v2291 = vadd.f32 %v489, %v2035
        %v2292 = vadd.f32 %v600, %v2036
        %v2293 = vadd.f32 %v602, %v2037
        %v2294 = vadd.f32 %v713, %v2038
        %v2295 = vadd.f32 %v715, %v2039
        %v2296 = vadd.f32 %v826, %v2040
        %v2297 = vadd.f32 %v828, %v2041
        %v2298 = vadd.f32 %v939, %v2042
        %v2299 = vadd.f32 %v941, %v2043
        %v2300 = vadd.f32 %v1052, %v2044
        %v2301 = vadd.f32 %v1054, %v2045
        %v2302 = vadd.f32 %v1165, %v2046
        %v2303 = vadd.f32 %v1167, %v2047
        %v2304 = vadd.f32 %v1278, %v2048
        %v2305 = vadd.f32 %v1280, %v2049
        %v2306 = vmul.f32 %v2050, 0.7978846
        %v2307 = vmul.f32 %v2051, 0.7978846
        %v2308 = vmul.f32 %v2052, 0.7978846
        %v2309 = vmul.f32 %v2053, 0.7978846
        %v2310 = vmul.f32 %v2054, 0.7978846
        %v2311 = vmul.f32 %v2055, 0.7978846
        %v2312 = vmul.f32 %v2056, 0.7978846
        %v2313 = vmul.f32 %v2057, 0.7978846
        %v2314 = vmul.f32 %v2058, 0.7978846
        %v2315 = vmul.f32 %v2059, 0.7978846
        %v2316 = vmul.f32 %v2060, 0.7978846
        %v2317 = vmul.f32 %v2061, 0.7978846
        %v2318 = vmul.f32 %v2062, 0.7978846
        %v2319 = vmul.f32 %v2063, 0.7978846
        %v2320 = vmul.f32 %v2064, 0.7978846
        %v2321 = vmul.f32 %v2065, 0.7978846
        %v2322 = vmul.f32 %v2066, 0.7978846
        %v2323 = vmul.f32 %v2067, 0.7978846
        %v2324 = vmul.f32 %v2068, 0.7978846
        %v2325 = vmul.f32 %v2069, 0.7978846
        %v2326 = vmul.f32 %v2070, 0.7978846
        %v2327 = vmul.f32 %v2071, 0.7978846
        %v2328 = vmul.f32 %v2072, 0.7978846
        %v2329 = vmul.f32 %v2073, 0.7978846
        %v2330 = vmul.f32 %v2074, 0.7978846
        %v2331 = vmul.f32 %v2075, 0.7978846
        %v2332 = vmul.f32 %v2076, 0.7978846
        %v2333 = vmul.f32 %v2077, 0.7978846
        %v2334 = vmul.f32 %v2078, 0.7978846
        %v2335 = vmul.f32 %v2079, 0.7978846
        %v2336 = vmul.f32 %v2080, 0.7978846
        %v2337 = vmul.f32 %v2081, 0.7978846
        %v2338 = vmul.f32 %v2082, 0.7978846
        %v2339 = vmul.f32 %v2083, 0.7978846
        %v2340 = vmul.f32 %v2084, 0.7978846
        %v2341 = vmul.f32 %v2085, 0.7978846
        %v2342 = vmul.f32 %v2086, 0.7978846
        %v2343 = vmul.f32 %v2087, 0.7978846
        %v2344 = vmul.f32 %v2088, 0.7978846
        %v2345 = vmul.f32 %v2089, 0.7978846
        %v2346 = vmul.f32 %v2090, 0.7978846
        %v2347 = vmul.f32 %v2091, 0.7978846
        %v2348 = vmul.f32 %v2092, 0.7978846
        %v2349 = vmul.f32 %v2093, 0.7978846
        %v2350 = vmul.f32 %v2094, 0.7978846
        %v2351 = vmul.f32 %v2095, 0.7978846
        %v2352 = vmul.f32 %v2096, 0.7978846
        %v2353 = vmul.f32 %v2097, 0.7978846
        %v2354 = vmul.f32 %v2098, 0.7978846
        %v2355 = vmul.f32 %v2099, 0.7978846
        %v2356 = vmul.f32 %v2100, 0.7978846
        %v2357 = vmul.f32 %v2101, 0.7978846
        %v2358 = vmul.f32 %v2102, 0.7978846
        %v2359 = vmul.f32 %v2103, 0.7978846
        %v2360 = vmul.f32 %v2104, 0.7978846
        %v2361 = vmul.f32 %v2105, 0.7978846
        %v2362 = vmul.f32 %v2106, 0.7978846
        %v2363 = vmul.f32 %v2107, 0.7978846
        %v2364 = vmul.f32 %v2108, 0.7978846
        %v2365 = vmul.f32 %v2109, 0.7978846
        %v2366 = vmul.f32 %v2110, 0.7978846
        %v2367 = vmul.f32 %v2111, 0.7978846
        %v2368 = vmul.f32 %v2112, 0.7978846
        %v2369 = vmul.f32 %v2113, 0.7978846
        %v2370 = vmul.f32 %v2114, 0.7978846
        %v2371 = vmul.f32 %v2115, 0.7978846
        %v2372 = vmul.f32 %v2116, 0.7978846
        %v2373 = vmul.f32 %v2117, 0.7978846
        %v2374 = vmul.f32 %v2118, 0.7978846
        %v2375 = vmul.f32 %v2119, 0.7978846
        %v2376 = vmul.f32 %v2120, 0.7978846
        %v2377 = vmul.f32 %v2121, 0.7978846
        %v2378 = vmul.f32 %v2122, 0.7978846
        %v2379 = vmul.f32 %v2123, 0.7978846
        %v2380 = vmul.f32 %v2124, 0.7978846
        %v2381 = vmul.f32 %v2125, 0.7978846
        %v2382 = vmul.f32 %v2126, 0.7978846
        %v2383 = vmul.f32 %v2127, 0.7978846
        %v2384 = vmul.f32 %v2128, 0.7978846
        %v2385 = vmul.f32 %v2129, 0.7978846
        %v2386 = vmul.f32 %v2130, 0.7978846
        %v2387 = vmul.f32 %v2131, 0.7978846
        %v2388 = vmul.f32 %v2132, 0.7978846
        %v2389 = vmul.f32 %v2133, 0.7978846
        %v2390 = vmul.f32 %v2134, 0.7978846
        %v2391 = vmul.f32 %v2135, 0.7978846
        %v2392 = vmul.f32 %v2136, 0.7978846
        %v2393 = vmul.f32 %v2137, 0.7978846
        %v2394 = vmul.f32 %v2138, 0.7978846
        %v2395 = vmul.f32 %v2139, 0.7978846
        %v2396 = vmul.f32 %v2140, 0.7978846
        %v2397 = vmul.f32 %v2141, 0.7978846
        %v2398 = vmul.f32 %v2142, 0.7978846
        %v2399 = vmul.f32 %v2143, 0.7978846
        %v2400 = vmul.f32 %v2144, 0.7978846
        %v2401 = vmul.f32 %v2145, 0.7978846
        %v2402 = vmul.f32 %v2146, 0.7978846
        %v2403 = vmul.f32 %v2147, 0.7978846
        %v2404 = vmul.f32 %v2148, 0.7978846
        %v2405 = vmul.f32 %v2149, 0.7978846
        %v2406 = vmul.f32 %v2150, 0.7978846
        %v2407 = vmul.f32 %v2151, 0.7978846
        %v2408 = vmul.f32 %v2152, 0.7978846
        %v2409 = vmul.f32 %v2153, 0.7978846
        %v2410 = vmul.f32 %v2154, 0.7978846
        %v2411 = vmul.f32 %v2155, 0.7978846
        %v2412 = vmul.f32 %v2156, 0.7978846
        %v2413 = vmul.f32 %v2157, 0.7978846
        %v2414 = vmul.f32 %v2158, 0.7978846
        %v2415 = vmul.f32 %v2159, 0.7978846
        %v2416 = vmul.f32 %v2160, 0.7978846
        %v2417 = vmul.f32 %v2161, 0.7978846
        %v2418 = vmul.f32 %v2162, 0.7978846
        %v2419 = vmul.f32 %v2163, 0.7978846
        %v2420 = vmul.f32 %v2164, 0.7978846
        %v2421 = vmul.f32 %v2165, 0.7978846
        %v2422 = vmul.f32 %v2166, 0.7978846
        %v2423 = vmul.f32 %v2167, 0.7978846
        %v2424 = vmul.f32 %v2168, 0.7978846
        %v2425 = vmul.f32 %v2169, 0.7978846
        %v2426 = vmul.f32 %v2170, 0.7978846
        %v2427 = vmul.f32 %v2171, 0.7978846
        %v2428 = vmul.f32 %v2172, 0.7978846
        %v2429 = vmul.f32 %v2173, 0.7978846
        %v2430 = vmul.f32 %v2174, 0.7978846
        %v2431 = vmul.f32 %v2175, 0.7978846
        %v2432 = vmul.f32 %v2176, 0.7978846
        %v2433 = vmul.f32 %v2177, 0.7978846
        %v2434 = vmul.f32 %v2178, 0.7978846
        %v2435 = vmul.f32 %v2179, 0.7978846
        %v2436 = vmul.f32 %v2180, 0.7978846
        %v2437 = vmul.f32 %v2181, 0.7978846
        %v2438 = vmul.f32 %v2182, 0.7978846
        %v2439 = vmul.f32 %v2183, 0.7978846
        %v2440 = vmul.f32 %v2184, 0.7978846
        %v2441 = vmul.f32 %v2185, 0.7978846
        %v2442 = vmul.f32 %v2186, 0.7978846
        %v2443 = vmul.f32 %v2187, 0.7978846
        %v2444 = vmul.f32 %v2188, 0.7978846
        %v2445 = vmul.f32 %v2189, 0.7978846
        %v2446 = vmul.f32 %v2190, 0.7978846
        %v2447 = vmul.f32 %v2191, 0.7978846
        %v2448 = vmul.f32 %v2192, 0.7978846
        %v2449 = vmul.f32 %v2193, 0.7978846
        %v2450 = vmul.f32 %v2194, 0.7978846
        %v2451 = vmul.f32 %v2195, 0.7978846
        %v2452 = vmul.f32 %v2196, 0.7978846
        %v2453 = vmul.f32 %v2197, 0.7978846
        %v2454 = vmul.f32 %v2198, 0.7978846
        %v2455 = vmul.f32 %v2199, 0.7978846
        %v2456 = vmul.f32 %v2200, 0.7978846
        %v2457 = vmul.f32 %v2201, 0.7978846
        %v2458 = vmul.f32 %v2202, 0.7978846
        %v2459 = vmul.f32 %v2203, 0.7978846
        %v2460 = vmul.f32 %v2204, 0.7978846
        %v2461 = vmul.f32 %v2205, 0.7978846
        %v2462 = vmul.f32 %v2206, 0.7978846
        %v2463 = vmul.f32 %v2207, 0.7978846
        %v2464 = vmul.f32 %v2208, 0.7978846
        %v2465 = vmul.f32 %v2209, 0.7978846
        %v2466 = vmul.f32 %v2210, 0.7978846
        %v2467 = vmul.f32 %v2211, 0.7978846
        %v2468 = vmul.f32 %v2212, 0.7978846
        %v2469 = vmul.f32 %v2213, 0.7978846
        %v2470 = vmul.f32 %v2214, 0.7978846
        %v2471 = vmul.f32 %v2215, 0.7978846
        %v2472 = vmul.f32 %v2216, 0.7978846
        %v2473 = vmul.f32 %v2217, 0.7978846
        %v2474 = vmul.f32 %v2218, 0.7978846
        %v2475 = vmul.f32 %v2219, 0.7978846
        %v2476 = vmul.f32 %v2220, 0.7978846
        %v2477 = vmul.f32 %v2221, 0.7978846
        %v2478 = vmul.f32 %v2222, 0.7978846
        %v2479 = vmul.f32 %v2223, 0.7978846
        %v2480 = vmul.f32 %v2224, 0.7978846
        %v2481 = vmul.f32 %v2225, 0.7978846
        %v2482 = vmul.f32 %v2226, 0.7978846
        %v2483 = vmul.f32 %v2227, 0.7978846
        %v2484 = vmul.f32 %v2228, 0.7978846
        %v2485 = vmul.f32 %v2229, 0.7978846
        %v2486 = vmul.f32 %v2230, 0.7978846
        %v2487 = vmul.f32 %v2231, 0.7978846
        %v2488 = vmul.f32 %v2232, 0.7978846
        %v2489 = vmul.f32 %v2233, 0.7978846
        %v2490 = vmul.f32 %v2234, 0.7978846
        %v2491 = vmul.f32 %v2235, 0.7978846
        %v2492 = vmul.f32 %v2236, 0.7978846
        %v2493 = vmul.f32 %v2237, 0.7978846
        %v2494 = vmul.f32 %v2238, 0.7978846
        %v2495 = vmul.f32 %v2239, 0.7978846
        %v2496 = vmul.f32 %v2240, 0.7978846
        %v2497 = vmul.f32 %v2241, 0.7978846
        %v2498 = vmul.f32 %v2242, 0.7978846
        %v2499 = vmul.f32 %v2243, 0.7978846
        %v2500 = vmul.f32 %v2244, 0.7978846
        %v2501 = vmul.f32 %v2245, 0.7978846
        %v2502 = vmul.f32 %v2246, 0.7978846
        %v2503 = vmul.f32 %v2247, 0.7978846
        %v2504 = vmul.f32 %v2248, 0.7978846
        %v2505 = vmul.f32 %v2249, 0.7978846
        %v2506 = vmul.f32 %v2250, 0.7978846
        %v2507 = vmul.f32 %v2251, 0.7978846
        %v2508 = vmul.f32 %v2252, 0.7978846
        %v2509 = vmul.f32 %v2253, 0.7978846
        %v2510 = vmul.f32 %v2254, 0.7978846
        %v2511 = vmul.f32 %v2255, 0.7978846
        %v2512 = vmul.f32 %v2256, 0.7978846
        %v2513 = vmul.f32 %v2257, 0.7978846
        %v2514 = vmul.f32 %v2258, 0.7978846
        %v2515 = vmul.f32 %v2259, 0.7978846
        %v2516 = vmul.f32 %v2260, 0.7978846
        %v2517 = vmul.f32 %v2261, 0.7978846
        %v2518 = vmul.f32 %v2262, 0.7978846
        %v2519 = vmul.f32 %v2263, 0.7978846
        %v2520 = vmul.f32 %v2264, 0.7978846
        %v2521 = vmul.f32 %v2265, 0.7978846
        %v2522 = vmul.f32 %v2266, 0.7978846
        %v2523 = vmul.f32 %v2267, 0.7978846
        %v2524 = vmul.f32 %v2268, 0.7978846
        %v2525 = vmul.f32 %v2269, 0.7978846
        %v2526 = vmul.f32 %v2270, 0.7978846
        %v2527 = vmul.f32 %v2271, 0.7978846
        %v2528 = vmul.f32 %v2272, 0.7978846
        %v2529 = vmul.f32 %v2273, 0.7978846
        %v2530 = vmul.f32 %v2274, 0.7978846
        %v2531 = vmul.f32 %v2275, 0.7978846
        %v2532 = vmul.f32 %v2276, 0.7978846
        %v2533 = vmul.f32 %v2277, 0.7978846
        %v2534 = vmul.f32 %v2278, 0.7978846
        %v2535 = vmul.f32 %v2279, 0.7978846
        %v2536 = vmul.f32 %v2280, 0.7978846
        %v2537 = vmul.f32 %v2281, 0.7978846
        %v2538 = vmul.f32 %v2282, 0.7978846
        %v2539 = vmul.f32 %v2283, 0.7978846
        %v2540 = vmul.f32 %v2284, 0.7978846
        %v2541 = vmul.f32 %v2285, 0.7978846
        %v2542 = vmul.f32 %v2286, 0.7978846
        %v2543 = vmul.f32 %v2287, 0.7978846
        %v2544 = vmul.f32 %v2288, 0.7978846
        %v2545 = vmul.f32 %v2289, 0.7978846
        %v2546 = vmul.f32 %v2290, 0.7978846
        %v2547 = vmul.f32 %v2291, 0.7978846
        %v2548 = vmul.f32 %v2292, 0.7978846
        %v2549 = vmul.f32 %v2293, 0.7978846
        %v2550 = vmul.f32 %v2294, 0.7978846
        %v2551 = vmul.f32 %v2295, 0.7978846
        %v2552 = vmul.f32 %v2296, 0.7978846
        %v2553 = vmul.f32 %v2297, 0.7978846
        %v2554 = vmul.f32 %v2298, 0.7978846
        %v2555 = vmul.f32 %v2299, 0.7978846
        %v2556 = vmul.f32 %v2300, 0.7978846
        %v2557 = vmul.f32 %v2301, 0.7978846
        %v2558 = vmul.f32 %v2302, 0.7978846
        %v2559 = vmul.f32 %v2303, 0.7978846
        %v2560 = vmul.f32 %v2304, 0.7978846
        %v2561 = vmul.f32 %v2305, 0.7978846
        %v2562 = vtanh.pop %v2306
        %v2563 = vtanh.pop %v2307
        %v2564 = vtanh.pop %v2308
        %v2565 = vtanh.pop %v2309
        %v2566 = vtanh.pop %v2310
        %v2567 = vtanh.pop %v2311
        %v2568 = vtanh.pop %v2312
        %v2569 = vtanh.pop %v2313
        %v2570 = vtanh.pop %v2314
        %v2571 = vtanh.pop %v2315
        %v2572 = vtanh.pop %v2316
        %v2573 = vtanh.pop %v2317
        %v2574 = vtanh.pop %v2318
        %v2575 = vtanh.pop %v2319
        %v2576 = vtanh.pop %v2320
        %v2577 = vtanh.pop %v2321
        %v2578 = vtanh.pop %v2322
        %v2579 = vtanh.pop %v2323
        %v2580 = vtanh.pop %v2324
        %v2581 = vtanh.pop %v2325
        %v2582 = vtanh.pop %v2326
        %v2583 = vtanh.pop %v2327
        %v2584 = vtanh.pop %v2328
        %v2585 = vtanh.pop %v2329
        %v2586 = vtanh.pop %v2330
        %v2587 = vtanh.pop %v2331
        %v2588 = vtanh.pop %v2332
        %v2589 = vtanh.pop %v2333
        %v2590 = vtanh.pop %v2334
        %v2591 = vtanh.pop %v2335
        %v2592 = vtanh.pop %v2336
        %v2593 = vtanh.pop %v2337
        %v2594 = vtanh.pop %v2338
        %v2595 = vtanh.pop %v2339
        %v2596 = vtanh.pop %v2340
        %v2597 = vtanh.pop %v2341
        %v2598 = vtanh.pop %v2342
        %v2599 = vtanh.pop %v2343
        %v2600 = vtanh.pop %v2344
        %v2601 = vtanh.pop %v2345
        %v2602 = vtanh.pop %v2346
        %v2603 = vtanh.pop %v2347
        %v2604 = vtanh.pop %v2348
        %v2605 = vtanh.pop %v2349
        %v2606 = vtanh.pop %v2350
        %v2607 = vtanh.pop %v2351
        %v2608 = vtanh.pop %v2352
        %v2609 = vtanh.pop %v2353
        %v2610 = vtanh.pop %v2354
        %v2611 = vtanh.pop %v2355
        %v2612 = vtanh.pop %v2356
        %v2613 = vtanh.pop %v2357
        %v2614 = vtanh.pop %v2358
        %v2615 = vtanh.pop %v2359
        %v2616 = vtanh.pop %v2360
        %v2617 = vtanh.pop %v2361
        %v2618 = vtanh.pop %v2362
        %v2619 = vtanh.pop %v2363
        %v2620 = vtanh.pop %v2364
        %v2621 = vtanh.pop %v2365
        %v2622 = vtanh.pop %v2366
        %v2623 = vtanh.pop %v2367
        %v2624 = vtanh.pop %v2368
        %v2625 = vtanh.pop %v2369
        %v2626 = vtanh.pop %v2370
        %v2627 = vtanh.pop %v2371
        %v2628 = vtanh.pop %v2372
        %v2629 = vtanh.pop %v2373
        %v2630 = vtanh.pop %v2374
        %v2631 = vtanh.pop %v2375
        %v2632 = vtanh.pop %v2376
        %v2633 = vtanh.pop %v2377
        %v2634 = vtanh.pop %v2378
        %v2635 = vtanh.pop %v2379
        %v2636 = vtanh.pop %v2380
        %v2637 = vtanh.pop %v2381
        %v2638 = vtanh.pop %v2382
        %v2639 = vtanh.pop %v2383
        %v2640 = vtanh.pop %v2384
        %v2641 = vtanh.pop %v2385
        %v2642 = vtanh.pop %v2386
        %v2643 = vtanh.pop %v2387
        %v2644 = vtanh.pop %v2388
        %v2645 = vtanh.pop %v2389
        %v2646 = vtanh.pop %v2390
        %v2647 = vtanh.pop %v2391
        %v2648 = vtanh.pop %v2392
        %v2649 = vtanh.pop %v2393
        %v2650 = vtanh.pop %v2394
        %v2651 = vtanh.pop %v2395
        %v2652 = vtanh.pop %v2396
        %v2653 = vtanh.pop %v2397
        %v2654 = vtanh.pop %v2398
        %v2655 = vtanh.pop %v2399
        %v2656 = vtanh.pop %v2400
        %v2657 = vtanh.pop %v2401
        %v2658 = vtanh.pop %v2402
        %v2659 = vtanh.pop %v2403
        %v2660 = vtanh.pop %v2404
        %v2661 = vtanh.pop %v2405
        %v2662 = vtanh.pop %v2406
        %v2663 = vtanh.pop %v2407
        %v2664 = vtanh.pop %v2408
        %v2665 = vtanh.pop %v2409
        %v2666 = vtanh.pop %v2410
        %v2667 = vtanh.pop %v2411
        %v2668 = vtanh.pop %v2412
        %v2669 = vtanh.pop %v2413
        %v2670 = vtanh.pop %v2414
        %v2671 = vtanh.pop %v2415
        %v2672 = vtanh.pop %v2416
        %v2673 = vtanh.pop %v2417
        %v2674 = vtanh.pop %v2418
        %v2675 = vtanh.pop %v2419
        %v2676 = vtanh.pop %v2420
        %v2677 = vtanh.pop %v2421
        %v2678 = vtanh.pop %v2422
        %v2679 = vtanh.pop %v2423
        %v2680 = vtanh.pop %v2424
        %v2681 = vtanh.pop %v2425
        %v2682 = vtanh.pop %v2426
        %v2683 = vtanh.pop %v2427
        %v2684 = vtanh.pop %v2428
        %v2685 = vtanh.pop %v2429
        %v2686 = vtanh.pop %v2430
        %v2687 = vtanh.pop %v2431
        %v2688 = vtanh.pop %v2432
        %v2689 = vtanh.pop %v2433
        %v2690 = vtanh.pop %v2434
        %v2691 = vtanh.pop %v2435
        %v2692 = vtanh.pop %v2436
        %v2693 = vtanh.pop %v2437
        %v2694 = vtanh.pop %v2438
        %v2695 = vtanh.pop %v2439
        %v2696 = vtanh.pop %v2440
        %v2697 = vtanh.pop %v2441
        %v2698 = vtanh.pop %v2442
        %v2699 = vtanh.pop %v2443
        %v2700 = vtanh.pop %v2444
        %v2701 = vtanh.pop %v2445
        %v2702 = vtanh.pop %v2446
        %v2703 = vtanh.pop %v2447
        %v2704 = vtanh.pop %v2448
        %v2705 = vtanh.pop %v2449
        %v2706 = vtanh.pop %v2450
        %v2707 = vtanh.pop %v2451
        %v2708 = vtanh.pop %v2452
        %v2709 = vtanh.pop %v2453
        %v2710 = vtanh.pop %v2454
        %v2711 = vtanh.pop %v2455
        %v2712 = vtanh.pop %v2456
        %v2713 = vtanh.pop %v2457
        %v2714 = vtanh.pop %v2458
        %v2715 = vtanh.pop %v2459
        %v2716 = vtanh.pop %v2460
        %v2717 = vtanh.pop %v2461
        %v2718 = vtanh.pop %v2462
        %v2719 = vtanh.pop %v2463
        %v2720 = vtanh.pop %v2464
        %v2721 = vtanh.pop %v2465
        %v2722 = vtanh.pop %v2466
        %v2723 = vtanh.pop %v2467
        %v2724 = vtanh.pop %v2468
        %v2725 = vtanh.pop %v2469
        %v2726 = vtanh.pop %v2470
        %v2727 = vtanh.pop %v2471
        %v2728 = vtanh.pop %v2472
        %v2729 = vtanh.pop %v2473
        %v2730 = vtanh.pop %v2474
        %v2731 = vtanh.pop %v2475
        %v2732 = vtanh.pop %v2476
        %v2733 = vtanh.pop %v2477
        %v2734 = vtanh.pop %v2478
        %v2735 = vtanh.pop %v2479
        %v2736 = vtanh.pop %v2480
        %v2737 = vtanh.pop %v2481
        %v2738 = vtanh.pop %v2482
        %v2739 = vtanh.pop %v2483
        %v2740 = vtanh.pop %v2484
        %v2741 = vtanh.pop %v2485
        %v2742 = vtanh.pop %v2486
        %v2743 = vtanh.pop %v2487
        %v2744 = vtanh.pop %v2488
        %v2745 = vtanh.pop %v2489
        %v2746 = vtanh.pop %v2490
        %v2747 = vtanh.pop %v2491
        %v2748 = vtanh.pop %v2492
        %v2749 = vtanh.pop %v2493
        %v2750 = vtanh.pop %v2494
        %v2751 = vtanh.pop %v2495
        %v2752 = vtanh.pop %v2496
        %v2753 = vtanh.pop %v2497
        %v2754 = vtanh.pop %v2498
        %v2755 = vtanh.pop %v2499
        %v2756 = vtanh.pop %v2500
        %v2757 = vtanh.pop %v2501
        %v2758 = vtanh.pop %v2502
        %v2759 = vtanh.pop %v2503
        %v2760 = vtanh.pop %v2504
        %v2761 = vtanh.pop %v2505
        %v2762 = vtanh.pop %v2506
        %v2763 = vtanh.pop %v2507
        %v2764 = vtanh.pop %v2508
        %v2765 = vtanh.pop %v2509
        %v2766 = vtanh.pop %v2510
        %v2767 = vtanh.pop %v2511
        %v2768 = vtanh.pop %v2512
        %v2769 = vtanh.pop %v2513
        %v2770 = vtanh.pop %v2514
        %v2771 = vtanh.pop %v2515
        %v2772 = vtanh.pop %v2516
        %v2773 = vtanh.pop %v2517
        %v2774 = vtanh.pop %v2518
        %v2775 = vtanh.pop %v2519
        %v2776 = vtanh.pop %v2520
        %v2777 = vtanh.pop %v2521
        %v2778 = vtanh.pop %v2522
        %v2779 = vtanh.pop %v2523
        %v2780 = vtanh.pop %v2524
        %v2781 = vtanh.pop %v2525
        %v2782 = vtanh.pop %v2526
        %v2783 = vtanh.pop %v2527
        %v2784 = vtanh.pop %v2528
        %v2785 = vtanh.pop %v2529
        %v2786 = vtanh.pop %v2530
        %v2787 = vtanh.pop %v2531
        %v2788 = vtanh.pop %v2532
        %v2789 = vtanh.pop %v2533
        %v2790 = vtanh.pop %v2534
        %v2791 = vtanh.pop %v2535
        %v2792 = vtanh.pop %v2536
        %v2793 = vtanh.pop %v2537
        %v2794 = vtanh.pop %v2538
        %v2795 = vtanh.pop %v2539
        %v2796 = vtanh.pop %v2540
        %v2797 = vtanh.pop %v2541
        %v2798 = vtanh.pop %v2542
        %v2799 = vtanh.pop %v2543
        %v2800 = vtanh.pop %v2544
        %v2801 = vtanh.pop %v2545
        %v2802 = vtanh.pop %v2546
        %v2803 = vtanh.pop %v2547
        %v2804 = vtanh.pop %v2548
        %v2805 = vtanh.pop %v2549
        %v2806 = vtanh.pop %v2550
        %v2807 = vtanh.pop %v2551
        %v2808 = vtanh.pop %v2552
        %v2809 = vtanh.pop %v2553
        %v2810 = vtanh.pop %v2554
        %v2811 = vtanh.pop %v2555
        %v2812 = vtanh.pop %v2556
        %v2813 = vtanh.pop %v2557
        %v2814 = vtanh.pop %v2558
        %v2815 = vtanh.pop %v2559
        %v2816 = vtanh.pop %v2560
        %v2817 = vtanh.pop %v2561
        %v2818 = vadd.f32 %v2562, 1.0
        %v2819 = vadd.f32 %v2563, 1.0
        %v2820 = vadd.f32 %v2564, 1.0
        %v2821 = vadd.f32 %v2565, 1.0
        %v2822 = vadd.f32 %v2566, 1.0
        %v2823 = vadd.f32 %v2567, 1.0
        %v2824 = vadd.f32 %v2568, 1.0
        %v2825 = vadd.f32 %v2569, 1.0
        %v2826 = vadd.f32 %v2570, 1.0
        %v2827 = vadd.f32 %v2571, 1.0
        %v2828 = vadd.f32 %v2572, 1.0
        %v2829 = vadd.f32 %v2573, 1.0
        %v2830 = vadd.f32 %v2574, 1.0
        %v2831 = vadd.f32 %v2575, 1.0
        %v2832 = vadd.f32 %v2576, 1.0
        %v2833 = vadd.f32 %v2577, 1.0
        %v2834 = vadd.f32 %v2578, 1.0
        %v2835 = vadd.f32 %v2579, 1.0
        %v2836 = vadd.f32 %v2580, 1.0
        %v2837 = vadd.f32 %v2581, 1.0
        %v2838 = vadd.f32 %v2582, 1.0
        %v2839 = vadd.f32 %v2583, 1.0
        %v2840 = vadd.f32 %v2584, 1.0
        %v2841 = vadd.f32 %v2585, 1.0
        %v2842 = vadd.f32 %v2586, 1.0
        %v2843 = vadd.f32 %v2587, 1.0
        %v2844 = vadd.f32 %v2588, 1.0
        %v2845 = vadd.f32 %v2589, 1.0
        %v2846 = vadd.f32 %v2590, 1.0
        %v2847 = vadd.f32 %v2591, 1.0
        %v2848 = vadd.f32 %v2592, 1.0
        %v2849 = vadd.f32 %v2593, 1.0
        %v2850 = vadd.f32 %v2594, 1.0
        %v2851 = vadd.f32 %v2595, 1.0
        %v2852 = vadd.f32 %v2596, 1.0
        %v2853 = vadd.f32 %v2597, 1.0
        %v2854 = vadd.f32 %v2598, 1.0
        %v2855 = vadd.f32 %v2599, 1.0
        %v2856 = vadd.f32 %v2600, 1.0
        %v2857 = vadd.f32 %v2601, 1.0
        %v2858 = vadd.f32 %v2602, 1.0
        %v2859 = vadd.f32 %v2603, 1.0
        %v2860 = vadd.f32 %v2604, 1.0
        %v2861 = vadd.f32 %v2605, 1.0
        %v2862 = vadd.f32 %v2606, 1.0
        %v2863 = vadd.f32 %v2607, 1.0
        %v2864 = vadd.f32 %v2608, 1.0
        %v2865 = vadd.f32 %v2609, 1.0
        %v2866 = vadd.f32 %v2610, 1.0
        %v2867 = vadd.f32 %v2611, 1.0
        %v2868 = vadd.f32 %v2612, 1.0
        %v2869 = vadd.f32 %v2613, 1.0
        %v2870 = vadd.f32 %v2614, 1.0
        %v2871 = vadd.f32 %v2615, 1.0
        %v2872 = vadd.f32 %v2616, 1.0
        %v2873 = vadd.f32 %v2617, 1.0
        %v2874 = vadd.f32 %v2618, 1.0
        %v2875 = vadd.f32 %v2619, 1.0
        %v2876 = vadd.f32 %v2620, 1.0
        %v2877 = vadd.f32 %v2621, 1.0
        %v2878 = vadd.f32 %v2622, 1.0
        %v2879 = vadd.f32 %v2623, 1.0
        %v2880 = vadd.f32 %v2624, 1.0
        %v2881 = vadd.f32 %v2625, 1.0
        %v2882 = vadd.f32 %v2626, 1.0
        %v2883 = vadd.f32 %v2627, 1.0
        %v2884 = vadd.f32 %v2628, 1.0
        %v2885 = vadd.f32 %v2629, 1.0
        %v2886 = vadd.f32 %v2630, 1.0
        %v2887 = vadd.f32 %v2631, 1.0
        %v2888 = vadd.f32 %v2632, 1.0
        %v2889 = vadd.f32 %v2633, 1.0
        %v2890 = vadd.f32 %v2634, 1.0
        %v2891 = vadd.f32 %v2635, 1.0
        %v2892 = vadd.f32 %v2636, 1.0
        %v2893 = vadd.f32 %v2637, 1.0
        %v2894 = vadd.f32 %v2638, 1.0
        %v2895 = vadd.f32 %v2639, 1.0
        %v2896 = vadd.f32 %v2640, 1.0
        %v2897 = vadd.f32 %v2641, 1.0
        %v2898 = vadd.f32 %v2642, 1.0
        %v2899 = vadd.f32 %v2643, 1.0
        %v2900 = vadd.f32 %v2644, 1.0
        %v2901 = vadd.f32 %v2645, 1.0
        %v2902 = vadd.f32 %v2646, 1.0
        %v2903 = vadd.f32 %v2647, 1.0
        %v2904 = vadd.f32 %v2648, 1.0
        %v2905 = vadd.f32 %v2649, 1.0
        %v2906 = vadd.f32 %v2650, 1.0
        %v2907 = vadd.f32 %v2651, 1.0
        %v2908 = vadd.f32 %v2652, 1.0
        %v2909 = vadd.f32 %v2653, 1.0
        %v2910 = vadd.f32 %v2654, 1.0
        %v2911 = vadd.f32 %v2655, 1.0
        %v2912 = vadd.f32 %v2656, 1.0
        %v2913 = vadd.f32 %v2657, 1.0
        %v2914 = vadd.f32 %v2658, 1.0
        %v2915 = vadd.f32 %v2659, 1.0
        %v2916 = vadd.f32 %v2660, 1.0
        %v2917 = vadd.f32 %v2661, 1.0
        %v2918 = vadd.f32 %v2662, 1.0
        %v2919 = vadd.f32 %v2663, 1.0
        %v2920 = vadd.f32 %v2664, 1.0
        %v2921 = vadd.f32 %v2665, 1.0
        %v2922 = vadd.f32 %v2666, 1.0
        %v2923 = vadd.f32 %v2667, 1.0
        %v2924 = vadd.f32 %v2668, 1.0
        %v2925 = vadd.f32 %v2669, 1.0
        %v2926 = vadd.f32 %v2670, 1.0
        %v2927 = vadd.f32 %v2671, 1.0
        %v2928 = vadd.f32 %v2672, 1.0
        %v2929 = vadd.f32 %v2673, 1.0
        %v2930 = vadd.f32 %v2674, 1.0
        %v2931 = vadd.f32 %v2675, 1.0
        %v2932 = vadd.f32 %v2676, 1.0
        %v2933 = vadd.f32 %v2677, 1.0
        %v2934 = vadd.f32 %v2678, 1.0
        %v2935 = vadd.f32 %v2679, 1.0
        %v2936 = vadd.f32 %v2680, 1.0
        %v2937 = vadd.f32 %v2681, 1.0
        %v2938 = vadd.f32 %v2682, 1.0
        %v2939 = vadd.f32 %v2683, 1.0
        %v2940 = vadd.f32 %v2684, 1.0
        %v2941 = vadd.f32 %v2685, 1.0
        %v2942 = vadd.f32 %v2686, 1.0
        %v2943 = vadd.f32 %v2687, 1.0
        %v2944 = vadd.f32 %v2688, 1.0
        %v2945 = vadd.f32 %v2689, 1.0
        %v2946 = vadd.f32 %v2690, 1.0
        %v2947 = vadd.f32 %v2691, 1.0
        %v2948 = vadd.f32 %v2692, 1.0
        %v2949 = vadd.f32 %v2693, 1.0
        %v2950 = vadd.f32 %v2694, 1.0
        %v2951 = vadd.f32 %v2695, 1.0
        %v2952 = vadd.f32 %v2696, 1.0
        %v2953 = vadd.f32 %v2697, 1.0
        %v2954 = vadd.f32 %v2698, 1.0
        %v2955 = vadd.f32 %v2699, 1.0
        %v2956 = vadd.f32 %v2700, 1.0
        %v2957 = vadd.f32 %v2701, 1.0
        %v2958 = vadd.f32 %v2702, 1.0
        %v2959 = vadd.f32 %v2703, 1.0
        %v2960 = vadd.f32 %v2704, 1.0
        %v2961 = vadd.f32 %v2705, 1.0
        %v2962 = vadd.f32 %v2706, 1.0
        %v2963 = vadd.f32 %v2707, 1.0
        %v2964 = vadd.f32 %v2708, 1.0
        %v2965 = vadd.f32 %v2709, 1.0
        %v2966 = vadd.f32 %v2710, 1.0
        %v2967 = vadd.f32 %v2711, 1.0
        %v2968 = vadd.f32 %v2712, 1.0
        %v2969 = vadd.f32 %v2713, 1.0
        %v2970 = vadd.f32 %v2714, 1.0
        %v2971 = vadd.f32 %v2715, 1.0
        %v2972 = vadd.f32 %v2716, 1.0
        %v2973 = vadd.f32 %v2717, 1.0
        %v2974 = vadd.f32 %v2718, 1.0
        %v2975 = vadd.f32 %v2719, 1.0
        %v2976 = vadd.f32 %v2720, 1.0
        %v2977 = vadd.f32 %v2721, 1.0
        %v2978 = vadd.f32 %v2722, 1.0
        %v2979 = vadd.f32 %v2723, 1.0
        %v2980 = vadd.f32 %v2724, 1.0
        %v2981 = vadd.f32 %v2725, 1.0
        %v2982 = vadd.f32 %v2726, 1.0
        %v2983 = vadd.f32 %v2727, 1.0
        %v2984 = vadd.f32 %v2728, 1.0
        %v2985 = vadd.f32 %v2729, 1.0
        %v2986 = vadd.f32 %v2730, 1.0
        %v2987 = vadd.f32 %v2731, 1.0
        %v2988 = vadd.f32 %v2732, 1.0
        %v2989 = vadd.f32 %v2733, 1.0
        %v2990 = vadd.f32 %v2734, 1.0
        %v2991 = vadd.f32 %v2735, 1.0
        %v2992 = vadd.f32 %v2736, 1.0
        %v2993 = vadd.f32 %v2737, 1.0
        %v2994 = vadd.f32 %v2738, 1.0
        %v2995 = vadd.f32 %v2739, 1.0
        %v2996 = vadd.f32 %v2740, 1.0
        %v2997 = vadd.f32 %v2741, 1.0
        %v2998 = vadd.f32 %v2742, 1.0
        %v2999 = vadd.f32 %v2743, 1.0
        %v3000 = vadd.f32 %v2744, 1.0
        %v3001 = vadd.f32 %v2745, 1.0
        %v3002 = vadd.f32 %v2746, 1.0
        %v3003 = vadd.f32 %v2747, 1.0
        %v3004 = vadd.f32 %v2748, 1.0
        %v3005 = vadd.f32 %v2749, 1.0
        %v3006 = vadd.f32 %v2750, 1.0
        %v3007 = vadd.f32 %v2751, 1.0
        %v3008 = vadd.f32 %v2752, 1.0
        %v3009 = vadd.f32 %v2753, 1.0
        %v3010 = vadd.f32 %v2754, 1.0
        %v3011 = vadd.f32 %v2755, 1.0
        %v3012 = vadd.f32 %v2756, 1.0
        %v3013 = vadd.f32 %v2757, 1.0
        %v3014 = vadd.f32 %v2758, 1.0
        %v3015 = vadd.f32 %v2759, 1.0
        %v3016 = vadd.f32 %v2760, 1.0
        %v3017 = vadd.f32 %v2761, 1.0
        %v3018 = vadd.f32 %v2762, 1.0
        %v3019 = vadd.f32 %v2763, 1.0
        %v3020 = vadd.f32 %v2764, 1.0
        %v3021 = vadd.f32 %v2765, 1.0
        %v3022 = vadd.f32 %v2766, 1.0
        %v3023 = vadd.f32 %v2767, 1.0
        %v3024 = vadd.f32 %v2768, 1.0
        %v3025 = vadd.f32 %v2769, 1.0
        %v3026 = vadd.f32 %v2770, 1.0
        %v3027 = vadd.f32 %v2771, 1.0
        %v3028 = vadd.f32 %v2772, 1.0
        %v3029 = vadd.f32 %v2773, 1.0
        %v3030 = vadd.f32 %v2774, 1.0
        %v3031 = vadd.f32 %v2775, 1.0
        %v3032 = vadd.f32 %v2776, 1.0
        %v3033 = vadd.f32 %v2777, 1.0
        %v3034 = vadd.f32 %v2778, 1.0
        %v3035 = vadd.f32 %v2779, 1.0
        %v3036 = vadd.f32 %v2780, 1.0
        %v3037 = vadd.f32 %v2781, 1.0
        %v3038 = vadd.f32 %v2782, 1.0
        %v3039 = vadd.f32 %v2783, 1.0
        %v3040 = vadd.f32 %v2784, 1.0
        %v3041 = vadd.f32 %v2785, 1.0
        %v3042 = vadd.f32 %v2786, 1.0
        %v3043 = vadd.f32 %v2787, 1.0
        %v3044 = vadd.f32 %v2788, 1.0
        %v3045 = vadd.f32 %v2789, 1.0
        %v3046 = vadd.f32 %v2790, 1.0
        %v3047 = vadd.f32 %v2791, 1.0
        %v3048 = vadd.f32 %v2792, 1.0
        %v3049 = vadd.f32 %v2793, 1.0
        %v3050 = vadd.f32 %v2794, 1.0
        %v3051 = vadd.f32 %v2795, 1.0
        %v3052 = vadd.f32 %v2796, 1.0
        %v3053 = vadd.f32 %v2797, 1.0
        %v3054 = vadd.f32 %v2798, 1.0
        %v3055 = vadd.f32 %v2799, 1.0
        %v3056 = vadd.f32 %v2800, 1.0
        %v3057 = vadd.f32 %v2801, 1.0
        %v3058 = vadd.f32 %v2802, 1.0
        %v3059 = vadd.f32 %v2803, 1.0
        %v3060 = vadd.f32 %v2804, 1.0
        %v3061 = vadd.f32 %v2805, 1.0
        %v3062 = vadd.f32 %v2806, 1.0
        %v3063 = vadd.f32 %v2807, 1.0
        %v3064 = vadd.f32 %v2808, 1.0
        %v3065 = vadd.f32 %v2809, 1.0
        %v3066 = vadd.f32 %v2810, 1.0
        %v3067 = vadd.f32 %v2811, 1.0
        %v3068 = vadd.f32 %v2812, 1.0
        %v3069 = vadd.f32 %v2813, 1.0
        %v3070 = vadd.f32 %v2814, 1.0
        %v3071 = vadd.f32 %v2815, 1.0
        %v3072 = vadd.f32 %v2816, 1.0
        %v3073 = vadd.f32 %v2817, 1.0
        %v3074 = vmul.f32 %v2818, 0.5
        %v3075 = vmul.f32 %v2819, 0.5
        %v3076 = vmul.f32 %v2820, 0.5
        %v3077 = vmul.f32 %v2821, 0.5
        %v3078 = vmul.f32 %v2822, 0.5
        %v3079 = vmul.f32 %v2823, 0.5
        %v3080 = vmul.f32 %v2824, 0.5
        %v3081 = vmul.f32 %v2825, 0.5
        %v3082 = vmul.f32 %v2826, 0.5
        %v3083 = vmul.f32 %v2827, 0.5
        %v3084 = vmul.f32 %v2828, 0.5
        %v3085 = vmul.f32 %v2829, 0.5
        %v3086 = vmul.f32 %v2830, 0.5
        %v3087 = vmul.f32 %v2831, 0.5
        %v3088 = vmul.f32 %v2832, 0.5
        %v3089 = vmul.f32 %v2833, 0.5
        %v3090 = vmul.f32 %v2834, 0.5
        %v3091 = vmul.f32 %v2835, 0.5
        %v3092 = vmul.f32 %v2836, 0.5
        %v3093 = vmul.f32 %v2837, 0.5
        %v3094 = vmul.f32 %v2838, 0.5
        %v3095 = vmul.f32 %v2839, 0.5
        %v3096 = vmul.f32 %v2840, 0.5
        %v3097 = vmul.f32 %v2841, 0.5
        %v3098 = vmul.f32 %v2842, 0.5
        %v3099 = vmul.f32 %v2843, 0.5
        %v3100 = vmul.f32 %v2844, 0.5
        %v3101 = vmul.f32 %v2845, 0.5
        %v3102 = vmul.f32 %v2846, 0.5
        %v3103 = vmul.f32 %v2847, 0.5
        %v3104 = vmul.f32 %v2848, 0.5
        %v3105 = vmul.f32 %v2849, 0.5
        %v3106 = vmul.f32 %v2850, 0.5
        %v3107 = vmul.f32 %v2851, 0.5
        %v3108 = vmul.f32 %v2852, 0.5
        %v3109 = vmul.f32 %v2853, 0.5
        %v3110 = vmul.f32 %v2854, 0.5
        %v3111 = vmul.f32 %v2855, 0.5
        %v3112 = vmul.f32 %v2856, 0.5
        %v3113 = vmul.f32 %v2857, 0.5
        %v3114 = vmul.f32 %v2858, 0.5
        %v3115 = vmul.f32 %v2859, 0.5
        %v3116 = vmul.f32 %v2860, 0.5
        %v3117 = vmul.f32 %v2861, 0.5
        %v3118 = vmul.f32 %v2862, 0.5
        %v3119 = vmul.f32 %v2863, 0.5
        %v3120 = vmul.f32 %v2864, 0.5
        %v3121 = vmul.f32 %v2865, 0.5
        %v3122 = vmul.f32 %v2866, 0.5
        %v3123 = vmul.f32 %v2867, 0.5
        %v3124 = vmul.f32 %v2868, 0.5
        %v3125 = vmul.f32 %v2869, 0.5
        %v3126 = vmul.f32 %v2870, 0.5
        %v3127 = vmul.f32 %v2871, 0.5
        %v3128 = vmul.f32 %v2872, 0.5
        %v3129 = vmul.f32 %v2873, 0.5
        %v3130 = vmul.f32 %v2874, 0.5
        %v3131 = vmul.f32 %v2875, 0.5
        %v3132 = vmul.f32 %v2876, 0.5
        %v3133 = vmul.f32 %v2877, 0.5
        %v3134 = vmul.f32 %v2878, 0.5
        %v3135 = vmul.f32 %v2879, 0.5
        %v3136 = vmul.f32 %v2880, 0.5
        %v3137 = vmul.f32 %v2881, 0.5
        %v3138 = vmul.f32 %v2882, 0.5
        %v3139 = vmul.f32 %v2883, 0.5
        %v3140 = vmul.f32 %v2884, 0.5
        %v3141 = vmul.f32 %v2885, 0.5
        %v3142 = vmul.f32 %v2886, 0.5
        %v3143 = vmul.f32 %v2887, 0.5
        %v3144 = vmul.f32 %v2888, 0.5
        %v3145 = vmul.f32 %v2889, 0.5
        %v3146 = vmul.f32 %v2890, 0.5
        %v3147 = vmul.f32 %v2891, 0.5
        %v3148 = vmul.f32 %v2892, 0.5
        %v3149 = vmul.f32 %v2893, 0.5
        %v3150 = vmul.f32 %v2894, 0.5
        %v3151 = vmul.f32 %v2895, 0.5
        %v3152 = vmul.f32 %v2896, 0.5
        %v3153 = vmul.f32 %v2897, 0.5
        %v3154 = vmul.f32 %v2898, 0.5
        %v3155 = vmul.f32 %v2899, 0.5
        %v3156 = vmul.f32 %v2900, 0.5
        %v3157 = vmul.f32 %v2901, 0.5
        %v3158 = vmul.f32 %v2902, 0.5
        %v3159 = vmul.f32 %v2903, 0.5
        %v3160 = vmul.f32 %v2904, 0.5
        %v3161 = vmul.f32 %v2905, 0.5
        %v3162 = vmul.f32 %v2906, 0.5
        %v3163 = vmul.f32 %v2907, 0.5
        %v3164 = vmul.f32 %v2908, 0.5
        %v3165 = vmul.f32 %v2909, 0.5
        %v3166 = vmul.f32 %v2910, 0.5
        %v3167 = vmul.f32 %v2911, 0.5
        %v3168 = vmul.f32 %v2912, 0.5
        %v3169 = vmul.f32 %v2913, 0.5
        %v3170 = vmul.f32 %v2914, 0.5
        %v3171 = vmul.f32 %v2915, 0.5
        %v3172 = vmul.f32 %v2916, 0.5
        %v3173 = vmul.f32 %v2917, 0.5
        %v3174 = vmul.f32 %v2918, 0.5
        %v3175 = vmul.f32 %v2919, 0.5
        %v3176 = vmul.f32 %v2920, 0.5
        %v3177 = vmul.f32 %v2921, 0.5
        %v3178 = vmul.f32 %v2922, 0.5
        %v3179 = vmul.f32 %v2923, 0.5
        %v3180 = vmul.f32 %v2924, 0.5
        %v3181 = vmul.f32 %v2925, 0.5
        %v3182 = vmul.f32 %v2926, 0.5
        %v3183 = vmul.f32 %v2927, 0.5
        %v3184 = vmul.f32 %v2928, 0.5
        %v3185 = vmul.f32 %v2929, 0.5
        %v3186 = vmul.f32 %v2930, 0.5
        %v3187 = vmul.f32 %v2931, 0.5
        %v3188 = vmul.f32 %v2932, 0.5
        %v3189 = vmul.f32 %v2933, 0.5
        %v3190 = vmul.f32 %v2934, 0.5
        %v3191 = vmul.f32 %v2935, 0.5
        %v3192 = vmul.f32 %v2936, 0.5
        %v3193 = vmul.f32 %v2937, 0.5
        %v3194 = vmul.f32 %v2938, 0.5
        %v3195 = vmul.f32 %v2939, 0.5
        %v3196 = vmul.f32 %v2940, 0.5
        %v3197 = vmul.f32 %v2941, 0.5
        %v3198 = vmul.f32 %v2942, 0.5
        %v3199 = vmul.f32 %v2943, 0.5
        %v3200 = vmul.f32 %v2944, 0.5
        %v3201 = vmul.f32 %v2945, 0.5
        %v3202 = vmul.f32 %v2946, 0.5
        %v3203 = vmul.f32 %v2947, 0.5
        %v3204 = vmul.f32 %v2948, 0.5
        %v3205 = vmul.f32 %v2949, 0.5
        %v3206 = vmul.f32 %v2950, 0.5
        %v3207 = vmul.f32 %v2951, 0.5
        %v3208 = vmul.f32 %v2952, 0.5
        %v3209 = vmul.f32 %v2953, 0.5
        %v3210 = vmul.f32 %v2954, 0.5
        %v3211 = vmul.f32 %v2955, 0.5
        %v3212 = vmul.f32 %v2956, 0.5
        %v3213 = vmul.f32 %v2957, 0.5
        %v3214 = vmul.f32 %v2958, 0.5
        %v3215 = vmul.f32 %v2959, 0.5
        %v3216 = vmul.f32 %v2960, 0.5
        %v3217 = vmul.f32 %v2961, 0.5
        %v3218 = vmul.f32 %v2962, 0.5
        %v3219 = vmul.f32 %v2963, 0.5
        %v3220 = vmul.f32 %v2964, 0.5
        %v3221 = vmul.f32 %v2965, 0.5
        %v3222 = vmul.f32 %v2966, 0.5
        %v3223 = vmul.f32 %v2967, 0.5
        %v3224 = vmul.f32 %v2968, 0.5
        %v3225 = vmul.f32 %v2969, 0.5
        %v3226 = vmul.f32 %v2970, 0.5
        %v3227 = vmul.f32 %v2971, 0.5
        %v3228 = vmul.f32 %v2972, 0.5
        %v3229 = vmul.f32 %v2973, 0.5
        %v3230 = vmul.f32 %v2974, 0.5
        %v3231 = vmul.f32 %v2975, 0.5
        %v3232 = vmul.f32 %v2976, 0.5
        %v3233 = vmul.f32 %v2977, 0.5
        %v3234 = vmul.f32 %v2978, 0.5
        %v3235 = vmul.f32 %v2979, 0.5
        %v3236 = vmul.f32 %v2980, 0.5
        %v3237 = vmul.f32 %v2981, 0.5
        %v3238 = vmul.f32 %v2982, 0.5
        %v3239 = vmul.f32 %v2983, 0.5
        %v3240 = vmul.f32 %v2984, 0.5
        %v3241 = vmul.f32 %v2985, 0.5
        %v3242 = vmul.f32 %v2986, 0.5
        %v3243 = vmul.f32 %v2987, 0.5
        %v3244 = vmul.f32 %v2988, 0.5
        %v3245 = vmul.f32 %v2989, 0.5
        %v3246 = vmul.f32 %v2990, 0.5
        %v3247 = vmul.f32 %v2991, 0.5
        %v3248 = vmul.f32 %v2992, 0.5
        %v3249 = vmul.f32 %v2993, 0.5
        %v3250 = vmul.f32 %v2994, 0.5
        %v3251 = vmul.f32 %v2995, 0.5
        %v3252 = vmul.f32 %v2996, 0.5
        %v3253 = vmul.f32 %v2997, 0.5
        %v3254 = vmul.f32 %v2998, 0.5
        %v3255 = vmul.f32 %v2999, 0.5
        %v3256 = vmul.f32 %v3000, 0.5
        %v3257 = vmul.f32 %v3001, 0.5
        %v3258 = vmul.f32 %v3002, 0.5
        %v3259 = vmul.f32 %v3003, 0.5
        %v3260 = vmul.f32 %v3004, 0.5
        %v3261 = vmul.f32 %v3005, 0.5
        %v3262 = vmul.f32 %v3006, 0.5
        %v3263 = vmul.f32 %v3007, 0.5
        %v3264 = vmul.f32 %v3008, 0.5
        %v3265 = vmul.f32 %v3009, 0.5
        %v3266 = vmul.f32 %v3010, 0.5
        %v3267 = vmul.f32 %v3011, 0.5
        %v3268 = vmul.f32 %v3012, 0.5
        %v3269 = vmul.f32 %v3013, 0.5
        %v3270 = vmul.f32 %v3014, 0.5
        %v3271 = vmul.f32 %v3015, 0.5
        %v3272 = vmul.f32 %v3016, 0.5
        %v3273 = vmul.f32 %v3017, 0.5
        %v3274 = vmul.f32 %v3018, 0.5
        %v3275 = vmul.f32 %v3019, 0.5
        %v3276 = vmul.f32 %v3020, 0.5
        %v3277 = vmul.f32 %v3021, 0.5
        %v3278 = vmul.f32 %v3022, 0.5
        %v3279 = vmul.f32 %v3023, 0.5
        %v3280 = vmul.f32 %v3024, 0.5
        %v3281 = vmul.f32 %v3025, 0.5
        %v3282 = vmul.f32 %v3026, 0.5
        %v3283 = vmul.f32 %v3027, 0.5
        %v3284 = vmul.f32 %v3028, 0.5
        %v3285 = vmul.f32 %v3029, 0.5
        %v3286 = vmul.f32 %v3030, 0.5
        %v3287 = vmul.f32 %v3031, 0.5
        %v3288 = vmul.f32 %v3032, 0.5
        %v3289 = vmul.f32 %v3033, 0.5
        %v3290 = vmul.f32 %v3034, 0.5
        %v3291 = vmul.f32 %v3035, 0.5
        %v3292 = vmul.f32 %v3036, 0.5
        %v3293 = vmul.f32 %v3037, 0.5
        %v3294 = vmul.f32 %v3038, 0.5
        %v3295 = vmul.f32 %v3039, 0.5
        %v3296 = vmul.f32 %v3040, 0.5
        %v3297 = vmul.f32 %v3041, 0.5
        %v3298 = vmul.f32 %v3042, 0.5
        %v3299 = vmul.f32 %v3043, 0.5
        %v3300 = vmul.f32 %v3044, 0.5
        %v3301 = vmul.f32 %v3045, 0.5
        %v3302 = vmul.f32 %v3046, 0.5
        %v3303 = vmul.f32 %v3047, 0.5
        %v3304 = vmul.f32 %v3048, 0.5
        %v3305 = vmul.f32 %v3049, 0.5
        %v3306 = vmul.f32 %v3050, 0.5
        %v3307 = vmul.f32 %v3051, 0.5
        %v3308 = vmul.f32 %v3052, 0.5
        %v3309 = vmul.f32 %v3053, 0.5
        %v3310 = vmul.f32 %v3054, 0.5
        %v3311 = vmul.f32 %v3055, 0.5
        %v3312 = vmul.f32 %v3056, 0.5
        %v3313 = vmul.f32 %v3057, 0.5
        %v3314 = vmul.f32 %v3058, 0.5
        %v3315 = vmul.f32 %v3059, 0.5
        %v3316 = vmul.f32 %v3060, 0.5
        %v3317 = vmul.f32 %v3061, 0.5
        %v3318 = vmul.f32 %v3062, 0.5
        %v3319 = vmul.f32 %v3063, 0.5
        %v3320 = vmul.f32 %v3064, 0.5
        %v3321 = vmul.f32 %v3065, 0.5
        %v3322 = vmul.f32 %v3066, 0.5
        %v3323 = vmul.f32 %v3067, 0.5
        %v3324 = vmul.f32 %v3068, 0.5
        %v3325 = vmul.f32 %v3069, 0.5
        %v3326 = vmul.f32 %v3070, 0.5
        %v3327 = vmul.f32 %v3071, 0.5
        %v3328 = vmul.f32 %v3072, 0.5
        %v3329 = vmul.f32 %v3073, 0.5
        %v3330 = vmul.f32 %v413, %v3074
        %v3331 = vmul.f32 %v415, %v3075
        %v3332 = vmul.f32 %v526, %v3076
        %v3333 = vmul.f32 %v528, %v3077
        %v3334 = vmul.f32 %v639, %v3078
        %v3335 = vmul.f32 %v641, %v3079
        %v3336 = vmul.f32 %v752, %v3080
        %v3337 = vmul.f32 %v754, %v3081
        %v3338 = vmul.f32 %v865, %v3082
        %v3339 = vmul.f32 %v867, %v3083
        %v3340 = vmul.f32 %v978, %v3084
        %v3341 = vmul.f32 %v980, %v3085
        %v3342 = vmul.f32 %v1091, %v3086
        %v3343 = vmul.f32 %v1093, %v3087
        %v3344 = vmul.f32 %v1204, %v3088
        %v3345 = vmul.f32 %v1206, %v3089
        %v3346 = vmul.f32 %v417, %v3090
        %v3347 = vmul.f32 %v419, %v3091
        %v3348 = vmul.f32 %v530, %v3092
        %v3349 = vmul.f32 %v532, %v3093
        %v3350 = vmul.f32 %v643, %v3094
        %v3351 = vmul.f32 %v645, %v3095
        %v3352 = vmul.f32 %v756, %v3096
        %v3353 = vmul.f32 %v758, %v3097
        %v3354 = vmul.f32 %v869, %v3098
        %v3355 = vmul.f32 %v871, %v3099
        %v3356 = vmul.f32 %v982, %v3100
        %v3357 = vmul.f32 %v984, %v3101
        %v3358 = vmul.f32 %v1095, %v3102
        %v3359 = vmul.f32 %v1097, %v3103
        %v3360 = vmul.f32 %v1208, %v3104
        %v3361 = vmul.f32 %v1210, %v3105
        %v3362 = vmul.f32 %v423, %v3106
        %v3363 = vmul.f32 %v425, %v3107
        %v3364 = vmul.f32 %v536, %v3108
        %v3365 = vmul.f32 %v538, %v3109
        %v3366 = vmul.f32 %v649, %v3110
        %v3367 = vmul.f32 %v651, %v3111
        %v3368 = vmul.f32 %v762, %v3112
        %v3369 = vmul.f32 %v764, %v3113
        %v3370 = vmul.f32 %v875, %v3114
        %v3371 = vmul.f32 %v877, %v3115
        %v3372 = vmul.f32 %v988, %v3116
        %v3373 = vmul.f32 %v990, %v3117
        %v3374 = vmul.f32 %v1101, %v3118
        %v3375 = vmul.f32 %v1103, %v3119
        %v3376 = vmul.f32 %v1214, %v3120
        %v3377 = vmul.f32 %v1216, %v3121
        %v3378 = vmul.f32 %v427, %v3122
        %v3379 = vmul.f32 %v429, %v3123
        %v3380 = vmul.f32 %v540, %v3124
        %v3381 = vmul.f32 %v542, %v3125
        %v3382 = vmul.f32 %v653, %v3126
        %v3383 = vmul.f32 %v655, %v3127
        %v3384 = vmul.f32 %v766, %v3128
        %v3385 = vmul.f32 %v768, %v3129
        %v3386 = vmul.f32 %v879, %v3130
        %v3387 = vmul.f32 %v881, %v3131
        %v3388 = vmul.f32 %v992, %v3132
        %v3389 = vmul.f32 %v994, %v3133
        %v3390 = vmul.f32 %v1105, %v3134
        %v3391 = vmul.f32 %v1107, %v3135
        %v3392 = vmul.f32 %v1218, %v3136
        %v3393 = vmul.f32 %v1220, %v3137
        %v3394 = vmul.f32 %v433, %v3138
        %v3395 = vmul.f32 %v435, %v3139
        %v3396 = vmul.f32 %v546, %v3140
        %v3397 = vmul.f32 %v548, %v3141
        %v3398 = vmul.f32 %v659, %v3142
        %v3399 = vmul.f32 %v661, %v3143
        %v3400 = vmul.f32 %v772, %v3144
        %v3401 = vmul.f32 %v774, %v3145
        %v3402 = vmul.f32 %v885, %v3146
        %v3403 = vmul.f32 %v887, %v3147
        %v3404 = vmul.f32 %v998, %v3148
        %v3405 = vmul.f32 %v1000, %v3149
        %v3406 = vmul.f32 %v1111, %v3150
        %v3407 = vmul.f32 %v1113, %v3151
        %v3408 = vmul.f32 %v1224, %v3152
        %v3409 = vmul.f32 %v1226, %v3153
        %v3410 = vmul.f32 %v437, %v3154
        %v3411 = vmul.f32 %v439, %v3155
        %v3412 = vmul.f32 %v550, %v3156
        %v3413 = vmul.f32 %v552, %v3157
        %v3414 = vmul.f32 %v663, %v3158
        %v3415 = vmul.f32 %v665, %v3159
        %v3416 = vmul.f32 %v776, %v3160
        %v3417 = vmul.f32 %v778, %v3161
        %v3418 = vmul.f32 %v889, %v3162
        %v3419 = vmul.f32 %v891, %v3163
        %v3420 = vmul.f32 %v1002, %v3164
        %v3421 = vmul.f32 %v1004, %v3165
        %v3422 = vmul.f32 %v1115, %v3166
        %v3423 = vmul.f32 %v1117, %v3167
        %v3424 = vmul.f32 %v1228, %v3168
        %v3425 = vmul.f32 %v1230, %v3169
        %v3426 = vmul.f32 %v443, %v3170
        %v3427 = vmul.f32 %v445, %v3171
        %v3428 = vmul.f32 %v556, %v3172
        %v3429 = vmul.f32 %v558, %v3173
        %v3430 = vmul.f32 %v669, %v3174
        %v3431 = vmul.f32 %v671, %v3175
        %v3432 = vmul.f32 %v782, %v3176
        %v3433 = vmul.f32 %v784, %v3177
        %v3434 = vmul.f32 %v895, %v3178
        %v3435 = vmul.f32 %v897, %v3179
        %v3436 = vmul.f32 %v1008, %v3180
        %v3437 = vmul.f32 %v1010, %v3181
        %v3438 = vmul.f32 %v1121, %v3182
        %v3439 = vmul.f32 %v1123, %v3183
        %v3440 = vmul.f32 %v1234, %v3184
        %v3441 = vmul.f32 %v1236, %v3185
        %v3442 = vmul.f32 %v447, %v3186
        %v3443 = vmul.f32 %v449, %v3187
        %v3444 = vmul.f32 %v560, %v3188
        %v3445 = vmul.f32 %v562, %v3189
        %v3446 = vmul.f32 %v673, %v3190
        %v3447 = vmul.f32 %v675, %v3191
        %v3448 = vmul.f32 %v786, %v3192
        %v3449 = vmul.f32 %v788, %v3193
        %v3450 = vmul.f32 %v899, %v3194
        %v3451 = vmul.f32 %v901, %v3195
        %v3452 = vmul.f32 %v1012, %v3196
        %v3453 = vmul.f32 %v1014, %v3197
        %v3454 = vmul.f32 %v1125, %v3198
        %v3455 = vmul.f32 %v1127, %v3199
        %v3456 = vmul.f32 %v1238, %v3200
        %v3457 = vmul.f32 %v1240, %v3201
        %v3458 = vmul.f32 %v453, %v3202
        %v3459 = vmul.f32 %v455, %v3203
        %v3460 = vmul.f32 %v566, %v3204
        %v3461 = vmul.f32 %v568, %v3205
        %v3462 = vmul.f32 %v679, %v3206
        %v3463 = vmul.f32 %v681, %v3207
        %v3464 = vmul.f32 %v792, %v3208
        %v3465 = vmul.f32 %v794, %v3209
        %v3466 = vmul.f32 %v905, %v3210
        %v3467 = vmul.f32 %v907, %v3211
        %v3468 = vmul.f32 %v1018, %v3212
        %v3469 = vmul.f32 %v1020, %v3213
        %v3470 = vmul.f32 %v1131, %v3214
        %v3471 = vmul.f32 %v1133, %v3215
        %v3472 = vmul.f32 %v1244, %v3216
        %v3473 = vmul.f32 %v1246, %v3217
        %v3474 = vmul.f32 %v457, %v3218
        %v3475 = vmul.f32 %v459, %v3219
        %v3476 = vmul.f32 %v570, %v3220
        %v3477 = vmul.f32 %v572, %v3221
        %v3478 = vmul.f32 %v683, %v3222
        %v3479 = vmul.f32 %v685, %v3223
        %v3480 = vmul.f32 %v796, %v3224
        %v3481 = vmul.f32 %v798, %v3225
        %v3482 = vmul.f32 %v909, %v3226
        %v3483 = vmul.f32 %v911, %v3227
        %v3484 = vmul.f32 %v1022, %v3228
        %v3485 = vmul.f32 %v1024, %v3229
        %v3486 = vmul.f32 %v1135, %v3230
        %v3487 = vmul.f32 %v1137, %v3231
        %v3488 = vmul.f32 %v1248, %v3232
        %v3489 = vmul.f32 %v1250, %v3233
        %v3490 = vmul.f32 %v463, %v3234
        %v3491 = vmul.f32 %v465, %v3235
        %v3492 = vmul.f32 %v576, %v3236
        %v3493 = vmul.f32 %v578, %v3237
        %v3494 = vmul.f32 %v689, %v3238
        %v3495 = vmul.f32 %v691, %v3239
        %v3496 = vmul.f32 %v802, %v3240
        %v3497 = vmul.f32 %v804, %v3241
        %v3498 = vmul.f32 %v915, %v3242
        %v3499 = vmul.f32 %v917, %v3243
        %v3500 = vmul.f32 %v1028, %v3244
        %v3501 = vmul.f32 %v1030, %v3245
        %v3502 = vmul.f32 %v1141, %v3246
        %v3503 = vmul.f32 %v1143, %v3247
        %v3504 = vmul.f32 %v1254, %v3248
        %v3505 = vmul.f32 %v1256, %v3249
        %v3506 = vmul.f32 %v467, %v3250
        %v3507 = vmul.f32 %v469, %v3251
        %v3508 = vmul.f32 %v580, %v3252
        %v3509 = vmul.f32 %v582, %v3253
        %v3510 = vmul.f32 %v693, %v3254
        %v3511 = vmul.f32 %v695, %v3255
        %v3512 = vmul.f32 %v806, %v3256
        %v3513 = vmul.f32 %v808, %v3257
        %v3514 = vmul.f32 %v919, %v3258
        %v3515 = vmul.f32 %v921, %v3259
        %v3516 = vmul.f32 %v1032, %v3260
        %v3517 = vmul.f32 %v1034, %v3261
        %v3518 = vmul.f32 %v1145, %v3262
        %v3519 = vmul.f32 %v1147, %v3263
        %v3520 = vmul.f32 %v1258, %v3264
        %v3521 = vmul.f32 %v1260, %v3265
        %v3522 = vmul.f32 %v473, %v3266
        %v3523 = vmul.f32 %v475, %v3267
        %v3524 = vmul.f32 %v586, %v3268
        %v3525 = vmul.f32 %v588, %v3269
        %v3526 = vmul.f32 %v699, %v3270
        %v3527 = vmul.f32 %v701, %v3271
        %v3528 = vmul.f32 %v812, %v3272
        %v3529 = vmul.f32 %v814, %v3273
        %v3530 = vmul.f32 %v925, %v3274
        %v3531 = vmul.f32 %v927, %v3275
        %v3532 = vmul.f32 %v1038, %v3276
        %v3533 = vmul.f32 %v1040, %v3277
        %v3534 = vmul.f32 %v1151, %v3278
        %v3535 = vmul.f32 %v1153, %v3279
        %v3536 = vmul.f32 %v1264, %v3280
        %v3537 = vmul.f32 %v1266, %v3281
        %v3538 = vmul.f32 %v477, %v3282
        %v3539 = vmul.f32 %v479, %v3283
        %v3540 = vmul.f32 %v590, %v3284
        %v3541 = vmul.f32 %v592, %v3285
        %v3542 = vmul.f32 %v703, %v3286
        %v3543 = vmul.f32 %v705, %v3287
        %v3544 = vmul.f32 %v816, %v3288
        %v3545 = vmul.f32 %v818, %v3289
        %v3546 = vmul.f32 %v929, %v3290
        %v3547 = vmul.f32 %v931, %v3291
        %v3548 = vmul.f32 %v1042, %v3292
        %v3549 = vmul.f32 %v1044, %v3293
        %v3550 = vmul.f32 %v1155, %v3294
        %v3551 = vmul.f32 %v1157, %v3295
        %v3552 = vmul.f32 %v1268, %v3296
        %v3553 = vmul.f32 %v1270, %v3297
        %v3554 = vmul.f32 %v483, %v3298
        %v3555 = vmul.f32 %v485, %v3299
        %v3556 = vmul.f32 %v596, %v3300
        %v3557 = vmul.f32 %v598, %v3301
        %v3558 = vmul.f32 %v709, %v3302
        %v3559 = vmul.f32 %v711, %v3303
        %v3560 = vmul.f32 %v822, %v3304
        %v3561 = vmul.f32 %v824, %v3305
        %v3562 = vmul.f32 %v935, %v3306
        %v3563 = vmul.f32 %v937, %v3307
        %v3564 = vmul.f32 %v1048, %v3308
        %v3565 = vmul.f32 %v1050, %v3309
        %v3566 = vmul.f32 %v1161, %v3310
        %v3567 = vmul.f32 %v1163, %v3311
        %v3568 = vmul.f32 %v1274, %v3312
        %v3569 = vmul.f32 %v1276, %v3313
        %v3570 = vmul.f32 %v487, %v3314
        %v3571 = vmul.f32 %v489, %v3315
        %v3572 = vmul.f32 %v600, %v3316
        %v3573 = vmul.f32 %v602, %v3317
        %v3574 = vmul.f32 %v713, %v3318
        %v3575 = vmul.f32 %v715, %v3319
        %v3576 = vmul.f32 %v826, %v3320
        %v3577 = vmul.f32 %v828, %v3321
        %v3578 = vmul.f32 %v939, %v3322
        %v3579 = vmul.f32 %v941, %v3323
        %v3580 = vmul.f32 %v1052, %v3324
        %v3581 = vmul.f32 %v1054, %v3325
        %v3582 = vmul.f32 %v1165, %v3326
        %v3583 = vmul.f32 %v1167, %v3327
        %v3584 = vmul.f32 %v1278, %v3328
        %v3585 = vmul.f32 %v1280, %v3329
        %v3586 = vld [vmem:[#allocation2] sm:$0xff]
        %v3587 = vld [vmem:[#allocation2 + $0x8] sm:$0xff]
        %v3588 = vld [vmem:[#allocation2 + $0x10] sm:$0xff]
        %v3589 = vld [vmem:[#allocation2 + $0x18] sm:$0xff]
        %v3590 = vld [vmem:[#allocation2 + $0x20] sm:$0xff]
        %v3591 = vld [vmem:[#allocation2 + $0x28] sm:$0xff]
        %v3592 = vld [vmem:[#allocation2 + $0x30] sm:$0xff]
        %v3593 = vld [vmem:[#allocation2 + $0x38] sm:$0xff]
        %v3594 = vld [vmem:[#allocation2 + $0x40] sm:$0xff]
        %v3595 = vld [vmem:[#allocation2 + $0x48] sm:$0xff]
        %v3596 = vld [vmem:[#allocation2 + $0x50] sm:$0xff]
        %v3597 = vld [vmem:[#allocation2 + $0x58] sm:$0xff]
        %v3598 = vld [vmem:[#allocation2 + $0x60] sm:$0xff]
        %v3599 = vld [vmem:[#allocation2 + $0x68] sm:$0xff]
        %v3600 = vld [vmem:[#allocation2 + $0x70] sm:$0xff]
        %v3601 = vld [vmem:[#allocation2 + $0x78] sm:$0xff]
        %v3602 = vcombine.low %v3330, %v3332
        %v3603 = vcombine.high %v3330, %v3332
        %v3605 = vunpack.c.l.s4 1983009808
        %v3606 = vunpack.c.0.s8 %v3605
        %v3607 = vlaneseq
        %v3608 = vshrl.u32 %v3607, 7
        %v3609 = vsub.s32 %v3606, %v3608
        %v3610 = vrot.slane %v3602, %v3609
        %v3612 = vunpack.c.l.s4 1983009808
        %v3613 = vunpack.c.0.s8 %v3612
        %v3614 = vlaneseq
        %v3615 = vshrl.u32 %v3614, 7
        %v3616 = vsub.s32 %v3613, %v3615
        %v3617 = vrot.slane %v3603, %v3616
        %v3618 = vcombine.low %v3331, %v3333
        %v3619 = vcombine.high %v3331, %v3333
        %v3621 = vunpack.c.l.s4 1983009808
        %v3622 = vunpack.c.0.s8 %v3621
        %v3623 = vlaneseq
        %v3624 = vshrl.u32 %v3623, 7
        %v3625 = vsub.s32 %v3622, %v3624
        %v3626 = vrot.slane %v3618, %v3625
        %v3628 = vunpack.c.l.s4 1983009808
        %v3629 = vunpack.c.0.s8 %v3628
        %v3630 = vlaneseq
        %v3631 = vshrl.u32 %v3630, 7
        %v3632 = vsub.s32 %v3629, %v3631
        %v3633 = vrot.slane %v3619, %v3632
        %v3634 = vcombine.low %v3334, %v3336
        %v3635 = vcombine.high %v3334, %v3336
        %v3637 = vunpack.c.l.s4 1983009808
        %v3638 = vunpack.c.0.s8 %v3637
        %v3639 = vlaneseq
        %v3640 = vshrl.u32 %v3639, 7
        %v3641 = vsub.s32 %v3638, %v3640
        %v3642 = vrot.slane %v3634, %v3641
        %v3644 = vunpack.c.l.s4 1983009808
        %v3645 = vunpack.c.0.s8 %v3644
        %v3646 = vlaneseq
        %v3647 = vshrl.u32 %v3646, 7
        %v3648 = vsub.s32 %v3645, %v3647
        %v3649 = vrot.slane %v3635, %v3648
        %v3650 = vcombine.low %v3335, %v3337
        %v3651 = vcombine.high %v3335, %v3337
        %v3653 = vunpack.c.l.s4 1983009808
        %v3654 = vunpack.c.0.s8 %v3653
        %v3655 = vlaneseq
        %v3656 = vshrl.u32 %v3655, 7
        %v3657 = vsub.s32 %v3654, %v3656
        %v3658 = vrot.slane %v3650, %v3657
        %v3660 = vunpack.c.l.s4 1983009808
        %v3661 = vunpack.c.0.s8 %v3660
        %v3662 = vlaneseq
        %v3663 = vshrl.u32 %v3662, 7
        %v3664 = vsub.s32 %v3661, %v3663
        %v3665 = vrot.slane %v3651, %v3664
        %v3666 = vcombine.low %v3610, %v3626
        %v3667 = vcombine.high %v3610, %v3626
        %v3669 = vunpack.c.l.s4 1934713408
        %v3670 = vunpack.c.0.s8 %v3669
        %v3671 = vlaneseq
        %v3672 = vshrl.u32 %v3671, 7
        %v3673 = vsub.s32 %v3670, %v3672
        %v3674 = vrot.slane %v3666, %v3673
        %v3676 = vunpack.c.l.s4 1934713408
        %v3677 = vunpack.c.0.s8 %v3676
        %v3678 = vlaneseq
        %v3679 = vshrl.u32 %v3678, 7
        %v3680 = vsub.s32 %v3677, %v3679
        %v3681 = vrot.slane %v3667, %v3680
        %v3682 = vcombine.low %v3617, %v3633
        %v3683 = vcombine.high %v3617, %v3633
        %v3685 = vunpack.c.l.s4 1934713408
        %v3686 = vunpack.c.0.s8 %v3685
        %v3687 = vlaneseq
        %v3688 = vshrl.u32 %v3687, 7
        %v3689 = vsub.s32 %v3686, %v3688
        %v3690 = vrot.slane %v3682, %v3689
        %v3692 = vunpack.c.l.s4 1934713408
        %v3693 = vunpack.c.0.s8 %v3692
        %v3694 = vlaneseq
        %v3695 = vshrl.u32 %v3694, 7
        %v3696 = vsub.s32 %v3693, %v3695
        %v3697 = vrot.slane %v3683, %v3696
        %v3698 = vcombine.low %v3642, %v3658
        %v3699 = vcombine.high %v3642, %v3658
        %v3701 = vunpack.c.l.s4 1934713408
        %v3702 = vunpack.c.0.s8 %v3701
        %v3703 = vlaneseq
        %v3704 = vshrl.u32 %v3703, 7
        %v3705 = vsub.s32 %v3702, %v3704
        %v3706 = vrot.slane %v3698, %v3705
        %v3708 = vunpack.c.l.s4 1934713408
        %v3709 = vunpack.c.0.s8 %v3708
        %v3710 = vlaneseq
        %v3711 = vshrl.u32 %v3710, 7
        %v3712 = vsub.s32 %v3709, %v3711
        %v3713 = vrot.slane %v3699, %v3712
        %v3714 = vcombine.low %v3649, %v3665
        %v3715 = vcombine.high %v3649, %v3665
        %v3717 = vunpack.c.l.s4 1934713408
        %v3718 = vunpack.c.0.s8 %v3717
        %v3719 = vlaneseq
        %v3720 = vshrl.u32 %v3719, 7
        %v3721 = vsub.s32 %v3718, %v3720
        %v3722 = vrot.slane %v3714, %v3721
        %v3724 = vunpack.c.l.s4 1934713408
        %v3725 = vunpack.c.0.s8 %v3724
        %v3726 = vlaneseq
        %v3727 = vshrl.u32 %v3726, 7
        %v3728 = vsub.s32 %v3725, %v3727
        %v3729 = vrot.slane %v3715, %v3728
        %v3730 = vcombine.low %v3674, %v3706
        %v3731 = vcombine.high %v3674, %v3706
        %v3732 = vcombine.low %v3681, %v3713
        %v3733 = vcombine.high %v3681, %v3713
        %v3734 = vcombine.low %v3690, %v3722
        %v3735 = vcombine.high %v3690, %v3722
        %v3736 = vcombine.low %v3697, %v3729
        %v3737 = vcombine.high %v3697, %v3729
        %v3738 = vcombine.low %v3338, %v3340
        %v3739 = vcombine.high %v3338, %v3340
        %v3741 = vunpack.c.l.s4 1983009808
        %v3742 = vunpack.c.0.s8 %v3741
        %v3743 = vlaneseq
        %v3744 = vshrl.u32 %v3743, 7
        %v3745 = vsub.s32 %v3742, %v3744
        %v3746 = vrot.slane %v3738, %v3745
        %v3748 = vunpack.c.l.s4 1983009808
        %v3749 = vunpack.c.0.s8 %v3748
        %v3750 = vlaneseq
        %v3751 = vshrl.u32 %v3750, 7
        %v3752 = vsub.s32 %v3749, %v3751
        %v3753 = vrot.slane %v3739, %v3752
        %v3754 = vcombine.low %v3339, %v3341
        %v3755 = vcombine.high %v3339, %v3341
        %v3757 = vunpack.c.l.s4 1983009808
        %v3758 = vunpack.c.0.s8 %v3757
        %v3759 = vlaneseq
        %v3760 = vshrl.u32 %v3759, 7
        %v3761 = vsub.s32 %v3758, %v3760
        %v3762 = vrot.slane %v3754, %v3761
        %v3764 = vunpack.c.l.s4 1983009808
        %v3765 = vunpack.c.0.s8 %v3764
        %v3766 = vlaneseq
        %v3767 = vshrl.u32 %v3766, 7
        %v3768 = vsub.s32 %v3765, %v3767
        %v3769 = vrot.slane %v3755, %v3768
        %v3770 = vcombine.low %v3342, %v3344
        %v3771 = vcombine.high %v3342, %v3344
        %v3773 = vunpack.c.l.s4 1983009808
        %v3774 = vunpack.c.0.s8 %v3773
        %v3775 = vlaneseq
        %v3776 = vshrl.u32 %v3775, 7
        %v3777 = vsub.s32 %v3774, %v3776
        %v3778 = vrot.slane %v3770, %v3777
        %v3780 = vunpack.c.l.s4 1983009808
        %v3781 = vunpack.c.0.s8 %v3780
        %v3782 = vlaneseq
        %v3783 = vshrl.u32 %v3782, 7
        %v3784 = vsub.s32 %v3781, %v3783
        %v3785 = vrot.slane %v3771, %v3784
        %v3786 = vcombine.low %v3343, %v3345
        %v3787 = vcombine.high %v3343, %v3345
        %v3789 = vunpack.c.l.s4 1983009808
        %v3790 = vunpack.c.0.s8 %v3789
        %v3791 = vlaneseq
        %v3792 = vshrl.u32 %v3791, 7
        %v3793 = vsub.s32 %v3790, %v3792
        %v3794 = vrot.slane %v3786, %v3793
        %v3796 = vunpack.c.l.s4 1983009808
        %v3797 = vunpack.c.0.s8 %v3796
        %v3798 = vlaneseq
        %v3799 = vshrl.u32 %v3798, 7
        %v3800 = vsub.s32 %v3797, %v3799
        %v3801 = vrot.slane %v3787, %v3800
        %v3802 = vcombine.low %v3746, %v3762
        %v3803 = vcombine.high %v3746, %v3762
        %v3805 = vunpack.c.l.s4 1934713408
        %v3806 = vunpack.c.0.s8 %v3805
        %v3807 = vlaneseq
        %v3808 = vshrl.u32 %v3807, 7
        %v3809 = vsub.s32 %v3806, %v3808
        %v3810 = vrot.slane %v3802, %v3809
        %v3812 = vunpack.c.l.s4 1934713408
        %v3813 = vunpack.c.0.s8 %v3812
        %v3814 = vlaneseq
        %v3815 = vshrl.u32 %v3814, 7
        %v3816 = vsub.s32 %v3813, %v3815
        %v3817 = vrot.slane %v3803, %v3816
        %v3818 = vcombine.low %v3753, %v3769
        %v3819 = vcombine.high %v3753, %v3769
        %v3821 = vunpack.c.l.s4 1934713408
        %v3822 = vunpack.c.0.s8 %v3821
        %v3823 = vlaneseq
        %v3824 = vshrl.u32 %v3823, 7
        %v3825 = vsub.s32 %v3822, %v3824
        %v3826 = vrot.slane %v3818, %v3825
        %v3828 = vunpack.c.l.s4 1934713408
        %v3829 = vunpack.c.0.s8 %v3828
        %v3830 = vlaneseq
        %v3831 = vshrl.u32 %v3830, 7
        %v3832 = vsub.s32 %v3829, %v3831
        %v3833 = vrot.slane %v3819, %v3832
        %v3834 = vcombine.low %v3778, %v3794
        %v3835 = vcombine.high %v3778, %v3794
        %v3837 = vunpack.c.l.s4 1934713408
        %v3838 = vunpack.c.0.s8 %v3837
        %v3839 = vlaneseq
        %v3840 = vshrl.u32 %v3839, 7
        %v3841 = vsub.s32 %v3838, %v3840
        %v3842 = vrot.slane %v3834, %v3841
        %v3844 = vunpack.c.l.s4 1934713408
        %v3845 = vunpack.c.0.s8 %v3844
        %v3846 = vlaneseq
        %v3847 = vshrl.u32 %v3846, 7
        %v3848 = vsub.s32 %v3845, %v3847
        %v3849 = vrot.slane %v3835, %v3848
        %v3850 = vcombine.low %v3785, %v3801
        %v3851 = vcombine.high %v3785, %v3801
        %v3853 = vunpack.c.l.s4 1934713408
        %v3854 = vunpack.c.0.s8 %v3853
        %v3855 = vlaneseq
        %v3856 = vshrl.u32 %v3855, 7
        %v3857 = vsub.s32 %v3854, %v3856
        %v3858 = vrot.slane %v3850, %v3857
        %v3860 = vunpack.c.l.s4 1934713408
        %v3861 = vunpack.c.0.s8 %v3860
        %v3862 = vlaneseq
        %v3863 = vshrl.u32 %v3862, 7
        %v3864 = vsub.s32 %v3861, %v3863
        %v3865 = vrot.slane %v3851, %v3864
        %v3866 = vcombine.low %v3810, %v3842
        %v3867 = vcombine.high %v3810, %v3842
        %v3868 = vcombine.low %v3817, %v3849
        %v3869 = vcombine.high %v3817, %v3849
        %v3870 = vcombine.low %v3826, %v3858
        %v3871 = vcombine.high %v3826, %v3858
        %v3872 = vcombine.low %v3833, %v3865
        %v3873 = vcombine.high %v3833, %v3865
        %v3874 = vcombine.low %v3346, %v3348
        %v3875 = vcombine.high %v3346, %v3348
        %v3877 = vunpack.c.l.s4 1983009808
        %v3878 = vunpack.c.0.s8 %v3877
        %v3879 = vlaneseq
        %v3880 = vshrl.u32 %v3879, 7
        %v3881 = vsub.s32 %v3878, %v3880
        %v3882 = vrot.slane %v3874, %v3881
        %v3884 = vunpack.c.l.s4 1983009808
        %v3885 = vunpack.c.0.s8 %v3884
        %v3886 = vlaneseq
        %v3887 = vshrl.u32 %v3886, 7
        %v3888 = vsub.s32 %v3885, %v3887
        %v3889 = vrot.slane %v3875, %v3888
        %v3890 = vcombine.low %v3347, %v3349
        %v3891 = vcombine.high %v3347, %v3349
        %v3893 = vunpack.c.l.s4 1983009808
        %v3894 = vunpack.c.0.s8 %v3893
        %v3895 = vlaneseq
        %v3896 = vshrl.u32 %v3895, 7
        %v3897 = vsub.s32 %v3894, %v3896
        %v3898 = vrot.slane %v3890, %v3897
        %v3900 = vunpack.c.l.s4 1983009808
        %v3901 = vunpack.c.0.s8 %v3900
        %v3902 = vlaneseq
        %v3903 = vshrl.u32 %v3902, 7
        %v3904 = vsub.s32 %v3901, %v3903
        %v3905 = vrot.slane %v3891, %v3904
        %v3906 = vcombine.low %v3350, %v3352
        %v3907 = vcombine.high %v3350, %v3352
        %v3909 = vunpack.c.l.s4 1983009808
        %v3910 = vunpack.c.0.s8 %v3909
        %v3911 = vlaneseq
        %v3912 = vshrl.u32 %v3911, 7
        %v3913 = vsub.s32 %v3910, %v3912
        %v3914 = vrot.slane %v3906, %v3913
        %v3916 = vunpack.c.l.s4 1983009808
        %v3917 = vunpack.c.0.s8 %v3916
        %v3918 = vlaneseq
        %v3919 = vshrl.u32 %v3918, 7
        %v3920 = vsub.s32 %v3917, %v3919
        %v3921 = vrot.slane %v3907, %v3920
        %v3922 = vcombine.low %v3351, %v3353
        %v3923 = vcombine.high %v3351, %v3353
        %v3925 = vunpack.c.l.s4 1983009808
        %v3926 = vunpack.c.0.s8 %v3925
        %v3927 = vlaneseq
        %v3928 = vshrl.u32 %v3927, 7
        %v3929 = vsub.s32 %v3926, %v3928
        %v3930 = vrot.slane %v3922, %v3929
        %v3932 = vunpack.c.l.s4 1983009808
        %v3933 = vunpack.c.0.s8 %v3932
        %v3934 = vlaneseq
        %v3935 = vshrl.u32 %v3934, 7
        %v3936 = vsub.s32 %v3933, %v3935
        %v3937 = vrot.slane %v3923, %v3936
        %v3938 = vcombine.low %v3882, %v3898
        %v3939 = vcombine.high %v3882, %v3898
        %v3941 = vunpack.c.l.s4 1934713408
        %v3942 = vunpack.c.0.s8 %v3941
        %v3943 = vlaneseq
        %v3944 = vshrl.u32 %v3943, 7
        %v3945 = vsub.s32 %v3942, %v3944
        %v3946 = vrot.slane %v3938, %v3945
        %v3948 = vunpack.c.l.s4 1934713408
        %v3949 = vunpack.c.0.s8 %v3948
        %v3950 = vlaneseq
        %v3951 = vshrl.u32 %v3950, 7
        %v3952 = vsub.s32 %v3949, %v3951
        %v3953 = vrot.slane %v3939, %v3952
        %v3954 = vcombine.low %v3889, %v3905
        %v3955 = vcombine.high %v3889, %v3905
        %v3957 = vunpack.c.l.s4 1934713408
        %v3958 = vunpack.c.0.s8 %v3957
        %v3959 = vlaneseq
        %v3960 = vshrl.u32 %v3959, 7
        %v3961 = vsub.s32 %v3958, %v3960
        %v3962 = vrot.slane %v3954, %v3961
        %v3964 = vunpack.c.l.s4 1934713408
        %v3965 = vunpack.c.0.s8 %v3964
        %v3966 = vlaneseq
        %v3967 = vshrl.u32 %v3966, 7
        %v3968 = vsub.s32 %v3965, %v3967
        %v3969 = vrot.slane %v3955, %v3968
        %v3970 = vcombine.low %v3914, %v3930
        %v3971 = vcombine.high %v3914, %v3930
        %v3973 = vunpack.c.l.s4 1934713408
        %v3974 = vunpack.c.0.s8 %v3973
        %v3975 = vlaneseq
        %v3976 = vshrl.u32 %v3975, 7
        %v3977 = vsub.s32 %v3974, %v3976
        %v3978 = vrot.slane %v3970, %v3977
        %v3980 = vunpack.c.l.s4 1934713408
        %v3981 = vunpack.c.0.s8 %v3980
        %v3982 = vlaneseq
        %v3983 = vshrl.u32 %v3982, 7
        %v3984 = vsub.s32 %v3981, %v3983
        %v3985 = vrot.slane %v3971, %v3984
        %v3986 = vcombine.low %v3921, %v3937
        %v3987 = vcombine.high %v3921, %v3937
        %v3989 = vunpack.c.l.s4 1934713408
        %v3990 = vunpack.c.0.s8 %v3989
        %v3991 = vlaneseq
        %v3992 = vshrl.u32 %v3991, 7
        %v3993 = vsub.s32 %v3990, %v3992
        %v3994 = vrot.slane %v3986, %v3993
        %v3996 = vunpack.c.l.s4 1934713408
        %v3997 = vunpack.c.0.s8 %v3996
        %v3998 = vlaneseq
        %v3999 = vshrl.u32 %v3998, 7
        %v4000 = vsub.s32 %v3997, %v3999
        %v4001 = vrot.slane %v3987, %v4000
        %v4002 = vcombine.low %v3946, %v3978
        %v4003 = vcombine.high %v3946, %v3978
        %v4004 = vcombine.low %v3953, %v3985
        %v4005 = vcombine.high %v3953, %v3985
        %v4006 = vcombine.low %v3962, %v3994
        %v4007 = vcombine.high %v3962, %v3994
        %v4008 = vcombine.low %v3969, %v4001
        %v4009 = vcombine.high %v3969, %v4001
        %v4010 = vcombine.low %v3354, %v3356
        %v4011 = vcombine.high %v3354, %v3356
        %v4013 = vunpack.c.l.s4 1983009808
        %v4014 = vunpack.c.0.s8 %v4013
        %v4015 = vlaneseq
        %v4016 = vshrl.u32 %v4015, 7
        %v4017 = vsub.s32 %v4014, %v4016
        %v4018 = vrot.slane %v4010, %v4017
        %v4020 = vunpack.c.l.s4 1983009808
        %v4021 = vunpack.c.0.s8 %v4020
        %v4022 = vlaneseq
        %v4023 = vshrl.u32 %v4022, 7
        %v4024 = vsub.s32 %v4021, %v4023
        %v4025 = vrot.slane %v4011, %v4024
        %v4026 = vcombine.low %v3355, %v3357
        %v4027 = vcombine.high %v3355, %v3357
        %v4029 = vunpack.c.l.s4 1983009808
        %v4030 = vunpack.c.0.s8 %v4029
        %v4031 = vlaneseq
        %v4032 = vshrl.u32 %v4031, 7
        %v4033 = vsub.s32 %v4030, %v4032
        %v4034 = vrot.slane %v4026, %v4033
        %v4036 = vunpack.c.l.s4 1983009808
        %v4037 = vunpack.c.0.s8 %v4036
        %v4038 = vlaneseq
        %v4039 = vshrl.u32 %v4038, 7
        %v4040 = vsub.s32 %v4037, %v4039
        %v4041 = vrot.slane %v4027, %v4040
        %v4042 = vcombine.low %v3358, %v3360
        %v4043 = vcombine.high %v3358, %v3360
        %v4045 = vunpack.c.l.s4 1983009808
        %v4046 = vunpack.c.0.s8 %v4045
        %v4047 = vlaneseq
        %v4048 = vshrl.u32 %v4047, 7
        %v4049 = vsub.s32 %v4046, %v4048
        %v4050 = vrot.slane %v4042, %v4049
        %v4052 = vunpack.c.l.s4 1983009808
        %v4053 = vunpack.c.0.s8 %v4052
        %v4054 = vlaneseq
        %v4055 = vshrl.u32 %v4054, 7
        %v4056 = vsub.s32 %v4053, %v4055
        %v4057 = vrot.slane %v4043, %v4056
        %v4058 = vcombine.low %v3359, %v3361
        %v4059 = vcombine.high %v3359, %v3361
        %v4061 = vunpack.c.l.s4 1983009808
        %v4062 = vunpack.c.0.s8 %v4061
        %v4063 = vlaneseq
        %v4064 = vshrl.u32 %v4063, 7
        %v4065 = vsub.s32 %v4062, %v4064
        %v4066 = vrot.slane %v4058, %v4065
        %v4068 = vunpack.c.l.s4 1983009808
        %v4069 = vunpack.c.0.s8 %v4068
        %v4070 = vlaneseq
        %v4071 = vshrl.u32 %v4070, 7
        %v4072 = vsub.s32 %v4069, %v4071
        %v4073 = vrot.slane %v4059, %v4072
        %v4074 = vcombine.low %v4018, %v4034
        %v4075 = vcombine.high %v4018, %v4034
        %v4077 = vunpack.c.l.s4 1934713408
        %v4078 = vunpack.c.0.s8 %v4077
        %v4079 = vlaneseq
        %v4080 = vshrl.u32 %v4079, 7
        %v4081 = vsub.s32 %v4078, %v4080
        %v4082 = vrot.slane %v4074, %v4081
        %v4084 = vunpack.c.l.s4 1934713408
        %v4085 = vunpack.c.0.s8 %v4084
        %v4086 = vlaneseq
        %v4087 = vshrl.u32 %v4086, 7
        %v4088 = vsub.s32 %v4085, %v4087
        %v4089 = vrot.slane %v4075, %v4088
        %v4090 = vcombine.low %v4025, %v4041
        %v4091 = vcombine.high %v4025, %v4041
        %v4093 = vunpack.c.l.s4 1934713408
        %v4094 = vunpack.c.0.s8 %v4093
        %v4095 = vlaneseq
        %v4096 = vshrl.u32 %v4095, 7
        %v4097 = vsub.s32 %v4094, %v4096
        %v4098 = vrot.slane %v4090, %v4097
        %v4100 = vunpack.c.l.s4 1934713408
        %v4101 = vunpack.c.0.s8 %v4100
        %v4102 = vlaneseq
        %v4103 = vshrl.u32 %v4102, 7
        %v4104 = vsub.s32 %v4101, %v4103
        %v4105 = vrot.slane %v4091, %v4104
        %v4106 = vcombine.low %v4050, %v4066
        %v4107 = vcombine.high %v4050, %v4066
        %v4109 = vunpack.c.l.s4 1934713408
        %v4110 = vunpack.c.0.s8 %v4109
        %v4111 = vlaneseq
        %v4112 = vshrl.u32 %v4111, 7
        %v4113 = vsub.s32 %v4110, %v4112
        %v4114 = vrot.slane %v4106, %v4113
        %v4116 = vunpack.c.l.s4 1934713408
        %v4117 = vunpack.c.0.s8 %v4116
        %v4118 = vlaneseq
        %v4119 = vshrl.u32 %v4118, 7
        %v4120 = vsub.s32 %v4117, %v4119
        %v4121 = vrot.slane %v4107, %v4120
        %v4122 = vcombine.low %v4057, %v4073
        %v4123 = vcombine.high %v4057, %v4073
        %v4125 = vunpack.c.l.s4 1934713408
        %v4126 = vunpack.c.0.s8 %v4125
        %v4127 = vlaneseq
        %v4128 = vshrl.u32 %v4127, 7
        %v4129 = vsub.s32 %v4126, %v4128
        %v4130 = vrot.slane %v4122, %v4129
        %v4132 = vunpack.c.l.s4 1934713408
        %v4133 = vunpack.c.0.s8 %v4132
        %v4134 = vlaneseq
        %v4135 = vshrl.u32 %v4134, 7
        %v4136 = vsub.s32 %v4133, %v4135
        %v4137 = vrot.slane %v4123, %v4136
        %v4138 = vcombine.low %v4082, %v4114
        %v4139 = vcombine.high %v4082, %v4114
        %v4140 = vcombine.low %v4089, %v4121
        %v4141 = vcombine.high %v4089, %v4121
        %v4142 = vcombine.low %v4098, %v4130
        %v4143 = vcombine.high %v4098, %v4130
        %v4144 = vcombine.low %v4105, %v4137
        %v4145 = vcombine.high %v4105, %v4137
        %v4146 = vcombine.low %v3362, %v3364
        %v4147 = vcombine.high %v3362, %v3364
        %v4149 = vunpack.c.l.s4 1983009808
        %v4150 = vunpack.c.0.s8 %v4149
        %v4151 = vlaneseq
        %v4152 = vshrl.u32 %v4151, 7
        %v4153 = vsub.s32 %v4150, %v4152
        %v4154 = vrot.slane %v4146, %v4153
        %v4156 = vunpack.c.l.s4 1983009808
        %v4157 = vunpack.c.0.s8 %v4156
        %v4158 = vlaneseq
        %v4159 = vshrl.u32 %v4158, 7
        %v4160 = vsub.s32 %v4157, %v4159
        %v4161 = vrot.slane %v4147, %v4160
        %v4162 = vcombine.low %v3363, %v3365
        %v4163 = vcombine.high %v3363, %v3365
        %v4165 = vunpack.c.l.s4 1983009808
        %v4166 = vunpack.c.0.s8 %v4165
        %v4167 = vlaneseq
        %v4168 = vshrl.u32 %v4167, 7
        %v4169 = vsub.s32 %v4166, %v4168
        %v4170 = vrot.slane %v4162, %v4169
        %v4172 = vunpack.c.l.s4 1983009808
        %v4173 = vunpack.c.0.s8 %v4172
        %v4174 = vlaneseq
        %v4175 = vshrl.u32 %v4174, 7
        %v4176 = vsub.s32 %v4173, %v4175
        %v4177 = vrot.slane %v4163, %v4176
        %v4178 = vcombine.low %v3366, %v3368
        %v4179 = vcombine.high %v3366, %v3368
        %v4181 = vunpack.c.l.s4 1983009808
        %v4182 = vunpack.c.0.s8 %v4181
        %v4183 = vlaneseq
        %v4184 = vshrl.u32 %v4183, 7
        %v4185 = vsub.s32 %v4182, %v4184
        %v4186 = vrot.slane %v4178, %v4185
        %v4188 = vunpack.c.l.s4 1983009808
        %v4189 = vunpack.c.0.s8 %v4188
        %v4190 = vlaneseq
        %v4191 = vshrl.u32 %v4190, 7
        %v4192 = vsub.s32 %v4189, %v4191
        %v4193 = vrot.slane %v4179, %v4192
        %v4194 = vcombine.low %v3367, %v3369
        %v4195 = vcombine.high %v3367, %v3369
        %v4197 = vunpack.c.l.s4 1983009808
        %v4198 = vunpack.c.0.s8 %v4197
        %v4199 = vlaneseq
        %v4200 = vshrl.u32 %v4199, 7
        %v4201 = vsub.s32 %v4198, %v4200
        %v4202 = vrot.slane %v4194, %v4201
        %v4204 = vunpack.c.l.s4 1983009808
        %v4205 = vunpack.c.0.s8 %v4204
        %v4206 = vlaneseq
        %v4207 = vshrl.u32 %v4206, 7
        %v4208 = vsub.s32 %v4205, %v4207
        %v4209 = vrot.slane %v4195, %v4208
        %v4210 = vcombine.low %v4154, %v4170
        %v4211 = vcombine.high %v4154, %v4170
        %v4213 = vunpack.c.l.s4 1934713408
        %v4214 = vunpack.c.0.s8 %v4213
        %v4215 = vlaneseq
        %v4216 = vshrl.u32 %v4215, 7
        %v4217 = vsub.s32 %v4214, %v4216
        %v4218 = vrot.slane %v4210, %v4217
        %v4220 = vunpack.c.l.s4 1934713408
        %v4221 = vunpack.c.0.s8 %v4220
        %v4222 = vlaneseq
        %v4223 = vshrl.u32 %v4222, 7
        %v4224 = vsub.s32 %v4221, %v4223
        %v4225 = vrot.slane %v4211, %v4224
        %v4226 = vcombine.low %v4161, %v4177
        %v4227 = vcombine.high %v4161, %v4177
        %v4229 = vunpack.c.l.s4 1934713408
        %v4230 = vunpack.c.0.s8 %v4229
        %v4231 = vlaneseq
        %v4232 = vshrl.u32 %v4231, 7
        %v4233 = vsub.s32 %v4230, %v4232
        %v4234 = vrot.slane %v4226, %v4233
        %v4236 = vunpack.c.l.s4 1934713408
        %v4237 = vunpack.c.0.s8 %v4236
        %v4238 = vlaneseq
        %v4239 = vshrl.u32 %v4238, 7
        %v4240 = vsub.s32 %v4237, %v4239
        %v4241 = vrot.slane %v4227, %v4240
        %v4242 = vcombine.low %v4186, %v4202
        %v4243 = vcombine.high %v4186, %v4202
        %v4245 = vunpack.c.l.s4 1934713408
        %v4246 = vunpack.c.0.s8 %v4245
        %v4247 = vlaneseq
        %v4248 = vshrl.u32 %v4247, 7
        %v4249 = vsub.s32 %v4246, %v4248
        %v4250 = vrot.slane %v4242, %v4249
        %v4252 = vunpack.c.l.s4 1934713408
        %v4253 = vunpack.c.0.s8 %v4252
        %v4254 = vlaneseq
        %v4255 = vshrl.u32 %v4254, 7
        %v4256 = vsub.s32 %v4253, %v4255
        %v4257 = vrot.slane %v4243, %v4256
        %v4258 = vcombine.low %v4193, %v4209
        %v4259 = vcombine.high %v4193, %v4209
        %v4261 = vunpack.c.l.s4 1934713408
        %v4262 = vunpack.c.0.s8 %v4261
        %v4263 = vlaneseq
        %v4264 = vshrl.u32 %v4263, 7
        %v4265 = vsub.s32 %v4262, %v4264
        %v4266 = vrot.slane %v4258, %v4265
        %v4268 = vunpack.c.l.s4 1934713408
        %v4269 = vunpack.c.0.s8 %v4268
        %v4270 = vlaneseq
        %v4271 = vshrl.u32 %v4270, 7
        %v4272 = vsub.s32 %v4269, %v4271
        %v4273 = vrot.slane %v4259, %v4272
        %v4274 = vcombine.low %v4218, %v4250
        %v4275 = vcombine.high %v4218, %v4250
        %v4276 = vcombine.low %v4225, %v4257
        %v4277 = vcombine.high %v4225, %v4257
        %v4278 = vcombine.low %v4234, %v4266
        %v4279 = vcombine.high %v4234, %v4266
        %v4280 = vcombine.low %v4241, %v4273
        %v4281 = vcombine.high %v4241, %v4273
        %v4282 = vcombine.low %v3370, %v3372
        %v4283 = vcombine.high %v3370, %v3372
        %v4285 = vunpack.c.l.s4 1983009808
        %v4286 = vunpack.c.0.s8 %v4285
        %v4287 = vlaneseq
        %v4288 = vshrl.u32 %v4287, 7
        %v4289 = vsub.s32 %v4286, %v4288
        %v4290 = vrot.slane %v4282, %v4289
        %v4292 = vunpack.c.l.s4 1983009808
        %v4293 = vunpack.c.0.s8 %v4292
        %v4294 = vlaneseq
        %v4295 = vshrl.u32 %v4294, 7
        %v4296 = vsub.s32 %v4293, %v4295
        %v4297 = vrot.slane %v4283, %v4296
        %v4298 = vcombine.low %v3371, %v3373
        %v4299 = vcombine.high %v3371, %v3373
        %v4301 = vunpack.c.l.s4 1983009808
        %v4302 = vunpack.c.0.s8 %v4301
        %v4303 = vlaneseq
        %v4304 = vshrl.u32 %v4303, 7
        %v4305 = vsub.s32 %v4302, %v4304
        %v4306 = vrot.slane %v4298, %v4305
        %v4308 = vunpack.c.l.s4 1983009808
        %v4309 = vunpack.c.0.s8 %v4308
        %v4310 = vlaneseq
        %v4311 = vshrl.u32 %v4310, 7
        %v4312 = vsub.s32 %v4309, %v4311
        %v4313 = vrot.slane %v4299, %v4312
        %v4314 = vcombine.low %v3374, %v3376
        %v4315 = vcombine.high %v3374, %v3376
        %v4317 = vunpack.c.l.s4 1983009808
        %v4318 = vunpack.c.0.s8 %v4317
        %v4319 = vlaneseq
        %v4320 = vshrl.u32 %v4319, 7
        %v4321 = vsub.s32 %v4318, %v4320
        %v4322 = vrot.slane %v4314, %v4321
        %v4324 = vunpack.c.l.s4 1983009808
        %v4325 = vunpack.c.0.s8 %v4324
        %v4326 = vlaneseq
        %v4327 = vshrl.u32 %v4326, 7
        %v4328 = vsub.s32 %v4325, %v4327
        %v4329 = vrot.slane %v4315, %v4328
        %v4330 = vcombine.low %v3375, %v3377
        %v4331 = vcombine.high %v3375, %v3377
        %v4333 = vunpack.c.l.s4 1983009808
        %v4334 = vunpack.c.0.s8 %v4333
        %v4335 = vlaneseq
        %v4336 = vshrl.u32 %v4335, 7
        %v4337 = vsub.s32 %v4334, %v4336
        %v4338 = vrot.slane %v4330, %v4337
        %v4340 = vunpack.c.l.s4 1983009808
        %v4341 = vunpack.c.0.s8 %v4340
        %v4342 = vlaneseq
        %v4343 = vshrl.u32 %v4342, 7
        %v4344 = vsub.s32 %v4341, %v4343
        %v4345 = vrot.slane %v4331, %v4344
        %v4346 = vcombine.low %v4290, %v4306
        %v4347 = vcombine.high %v4290, %v4306
        %v4349 = vunpack.c.l.s4 1934713408
        %v4350 = vunpack.c.0.s8 %v4349
        %v4351 = vlaneseq
        %v4352 = vshrl.u32 %v4351, 7
        %v4353 = vsub.s32 %v4350, %v4352
        %v4354 = vrot.slane %v4346, %v4353
        %v4356 = vunpack.c.l.s4 1934713408
        %v4357 = vunpack.c.0.s8 %v4356
        %v4358 = vlaneseq
        %v4359 = vshrl.u32 %v4358, 7
        %v4360 = vsub.s32 %v4357, %v4359
        %v4361 = vrot.slane %v4347, %v4360
        %v4362 = vcombine.low %v4297, %v4313
        %v4363 = vcombine.high %v4297, %v4313
        %v4365 = vunpack.c.l.s4 1934713408
        %v4366 = vunpack.c.0.s8 %v4365
        %v4367 = vlaneseq
        %v4368 = vshrl.u32 %v4367, 7
        %v4369 = vsub.s32 %v4366, %v4368
        %v4370 = vrot.slane %v4362, %v4369
        %v4372 = vunpack.c.l.s4 1934713408
        %v4373 = vunpack.c.0.s8 %v4372
        %v4374 = vlaneseq
        %v4375 = vshrl.u32 %v4374, 7
        %v4376 = vsub.s32 %v4373, %v4375
        %v4377 = vrot.slane %v4363, %v4376
        %v4378 = vcombine.low %v4322, %v4338
        %v4379 = vcombine.high %v4322, %v4338
        %v4381 = vunpack.c.l.s4 1934713408
        %v4382 = vunpack.c.0.s8 %v4381
        %v4383 = vlaneseq
        %v4384 = vshrl.u32 %v4383, 7
        %v4385 = vsub.s32 %v4382, %v4384
        %v4386 = vrot.slane %v4378, %v4385
        %v4388 = vunpack.c.l.s4 1934713408
        %v4389 = vunpack.c.0.s8 %v4388
        %v4390 = vlaneseq
        %v4391 = vshrl.u32 %v4390, 7
        %v4392 = vsub.s32 %v4389, %v4391
        %v4393 = vrot.slane %v4379, %v4392
        %v4394 = vcombine.low %v4329, %v4345
        %v4395 = vcombine.high %v4329, %v4345
        %v4397 = vunpack.c.l.s4 1934713408
        %v4398 = vunpack.c.0.s8 %v4397
        %v4399 = vlaneseq
        %v4400 = vshrl.u32 %v4399, 7
        %v4401 = vsub.s32 %v4398, %v4400
        %v4402 = vrot.slane %v4394, %v4401
        %v4404 = vunpack.c.l.s4 1934713408
        %v4405 = vunpack.c.0.s8 %v4404
        %v4406 = vlaneseq
        %v4407 = vshrl.u32 %v4406, 7
        %v4408 = vsub.s32 %v4405, %v4407
        %v4409 = vrot.slane %v4395, %v4408
        %v4410 = vcombine.low %v4354, %v4386
        %v4411 = vcombine.high %v4354, %v4386
        %v4412 = vcombine.low %v4361, %v4393
        %v4413 = vcombine.high %v4361, %v4393
        %v4414 = vcombine.low %v4370, %v4402
        %v4415 = vcombine.high %v4370, %v4402
        %v4416 = vcombine.low %v4377, %v4409
        %v4417 = vcombine.high %v4377, %v4409
        %v4418 = vcombine.low %v3378, %v3380
        %v4419 = vcombine.high %v3378, %v3380
        %v4421 = vunpack.c.l.s4 1983009808
        %v4422 = vunpack.c.0.s8 %v4421
        %v4423 = vlaneseq
        %v4424 = vshrl.u32 %v4423, 7
        %v4425 = vsub.s32 %v4422, %v4424
        %v4426 = vrot.slane %v4418, %v4425
        %v4428 = vunpack.c.l.s4 1983009808
        %v4429 = vunpack.c.0.s8 %v4428
        %v4430 = vlaneseq
        %v4431 = vshrl.u32 %v4430, 7
        %v4432 = vsub.s32 %v4429, %v4431
        %v4433 = vrot.slane %v4419, %v4432
        %v4434 = vcombine.low %v3379, %v3381
        %v4435 = vcombine.high %v3379, %v3381
        %v4437 = vunpack.c.l.s4 1983009808
        %v4438 = vunpack.c.0.s8 %v4437
        %v4439 = vlaneseq
        %v4440 = vshrl.u32 %v4439, 7
        %v4441 = vsub.s32 %v4438, %v4440
        %v4442 = vrot.slane %v4434, %v4441
        %v4444 = vunpack.c.l.s4 1983009808
        %v4445 = vunpack.c.0.s8 %v4444
        %v4446 = vlaneseq
        %v4447 = vshrl.u32 %v4446, 7
        %v4448 = vsub.s32 %v4445, %v4447
        %v4449 = vrot.slane %v4435, %v4448
        %v4450 = vcombine.low %v3382, %v3384
        %v4451 = vcombine.high %v3382, %v3384
        %v4453 = vunpack.c.l.s4 1983009808
        %v4454 = vunpack.c.0.s8 %v4453
        %v4455 = vlaneseq
        %v4456 = vshrl.u32 %v4455, 7
        %v4457 = vsub.s32 %v4454, %v4456
        %v4458 = vrot.slane %v4450, %v4457
        %v4460 = vunpack.c.l.s4 1983009808
        %v4461 = vunpack.c.0.s8 %v4460
        %v4462 = vlaneseq
        %v4463 = vshrl.u32 %v4462, 7
        %v4464 = vsub.s32 %v4461, %v4463
        %v4465 = vrot.slane %v4451, %v4464
        %v4466 = vcombine.low %v3383, %v3385
        %v4467 = vcombine.high %v3383, %v3385
        %v4469 = vunpack.c.l.s4 1983009808
        %v4470 = vunpack.c.0.s8 %v4469
        %v4471 = vlaneseq
        %v4472 = vshrl.u32 %v4471, 7
        %v4473 = vsub.s32 %v4470, %v4472
        %v4474 = vrot.slane %v4466, %v4473
        %v4476 = vunpack.c.l.s4 1983009808
        %v4477 = vunpack.c.0.s8 %v4476
        %v4478 = vlaneseq
        %v4479 = vshrl.u32 %v4478, 7
        %v4480 = vsub.s32 %v4477, %v4479
        %v4481 = vrot.slane %v4467, %v4480
        %v4482 = vcombine.low %v4426, %v4442
        %v4483 = vcombine.high %v4426, %v4442
        %v4485 = vunpack.c.l.s4 1934713408
        %v4486 = vunpack.c.0.s8 %v4485
        %v4487 = vlaneseq
        %v4488 = vshrl.u32 %v4487, 7
        %v4489 = vsub.s32 %v4486, %v4488
        %v4490 = vrot.slane %v4482, %v4489
        %v4492 = vunpack.c.l.s4 1934713408
        %v4493 = vunpack.c.0.s8 %v4492
        %v4494 = vlaneseq
        %v4495 = vshrl.u32 %v4494, 7
        %v4496 = vsub.s32 %v4493, %v4495
        %v4497 = vrot.slane %v4483, %v4496
        %v4498 = vcombine.low %v4433, %v4449
        %v4499 = vcombine.high %v4433, %v4449
        %v4501 = vunpack.c.l.s4 1934713408
        %v4502 = vunpack.c.0.s8 %v4501
        %v4503 = vlaneseq
        %v4504 = vshrl.u32 %v4503, 7
        %v4505 = vsub.s32 %v4502, %v4504
        %v4506 = vrot.slane %v4498, %v4505
        %v4508 = vunpack.c.l.s4 1934713408
        %v4509 = vunpack.c.0.s8 %v4508
        %v4510 = vlaneseq
        %v4511 = vshrl.u32 %v4510, 7
        %v4512 = vsub.s32 %v4509, %v4511
        %v4513 = vrot.slane %v4499, %v4512
        %v4514 = vcombine.low %v4458, %v4474
        %v4515 = vcombine.high %v4458, %v4474
        %v4517 = vunpack.c.l.s4 1934713408
        %v4518 = vunpack.c.0.s8 %v4517
        %v4519 = vlaneseq
        %v4520 = vshrl.u32 %v4519, 7
        %v4521 = vsub.s32 %v4518, %v4520
        %v4522 = vrot.slane %v4514, %v4521
        %v4524 = vunpack.c.l.s4 1934713408
        %v4525 = vunpack.c.0.s8 %v4524
        %v4526 = vlaneseq
        %v4527 = vshrl.u32 %v4526, 7
        %v4528 = vsub.s32 %v4525, %v4527
        %v4529 = vrot.slane %v4515, %v4528
        %v4530 = vcombine.low %v4465, %v4481
        %v4531 = vcombine.high %v4465, %v4481
        %v4533 = vunpack.c.l.s4 1934713408
        %v4534 = vunpack.c.0.s8 %v4533
        %v4535 = vlaneseq
        %v4536 = vshrl.u32 %v4535, 7
        %v4537 = vsub.s32 %v4534, %v4536
        %v4538 = vrot.slane %v4530, %v4537
        %v4540 = vunpack.c.l.s4 1934713408
        %v4541 = vunpack.c.0.s8 %v4540
        %v4542 = vlaneseq
        %v4543 = vshrl.u32 %v4542, 7
        %v4544 = vsub.s32 %v4541, %v4543
        %v4545 = vrot.slane %v4531, %v4544
        %v4546 = vcombine.low %v4490, %v4522
        %v4547 = vcombine.high %v4490, %v4522
        %v4548 = vcombine.low %v4497, %v4529
        %v4549 = vcombine.high %v4497, %v4529
        %v4550 = vcombine.low %v4506, %v4538
        %v4551 = vcombine.high %v4506, %v4538
        %v4552 = vcombine.low %v4513, %v4545
        %v4553 = vcombine.high %v4513, %v4545
        %v4554 = vcombine.low %v3386, %v3388
        %v4555 = vcombine.high %v3386, %v3388
        %v4557 = vunpack.c.l.s4 1983009808
        %v4558 = vunpack.c.0.s8 %v4557
        %v4559 = vlaneseq
        %v4560 = vshrl.u32 %v4559, 7
        %v4561 = vsub.s32 %v4558, %v4560
        %v4562 = vrot.slane %v4554, %v4561
        %v4564 = vunpack.c.l.s4 1983009808
        %v4565 = vunpack.c.0.s8 %v4564
        %v4566 = vlaneseq
        %v4567 = vshrl.u32 %v4566, 7
        %v4568 = vsub.s32 %v4565, %v4567
        %v4569 = vrot.slane %v4555, %v4568
        %v4570 = vcombine.low %v3387, %v3389
        %v4571 = vcombine.high %v3387, %v3389
        %v4573 = vunpack.c.l.s4 1983009808
        %v4574 = vunpack.c.0.s8 %v4573
        %v4575 = vlaneseq
        %v4576 = vshrl.u32 %v4575, 7
        %v4577 = vsub.s32 %v4574, %v4576
        %v4578 = vrot.slane %v4570, %v4577
        %v4580 = vunpack.c.l.s4 1983009808
        %v4581 = vunpack.c.0.s8 %v4580
        %v4582 = vlaneseq
        %v4583 = vshrl.u32 %v4582, 7
        %v4584 = vsub.s32 %v4581, %v4583
        %v4585 = vrot.slane %v4571, %v4584
        %v4586 = vcombine.low %v3390, %v3392
        %v4587 = vcombine.high %v3390, %v3392
        %v4589 = vunpack.c.l.s4 1983009808
        %v4590 = vunpack.c.0.s8 %v4589
        %v4591 = vlaneseq
        %v4592 = vshrl.u32 %v4591, 7
        %v4593 = vsub.s32 %v4590, %v4592
        %v4594 = vrot.slane %v4586, %v4593
        %v4596 = vunpack.c.l.s4 1983009808
        %v4597 = vunpack.c.0.s8 %v4596
        %v4598 = vlaneseq
        %v4599 = vshrl.u32 %v4598, 7
        %v4600 = vsub.s32 %v4597, %v4599
        %v4601 = vrot.slane %v4587, %v4600
        %v4602 = vcombine.low %v3391, %v3393
        %v4603 = vcombine.high %v3391, %v3393
        %v4605 = vunpack.c.l.s4 1983009808
        %v4606 = vunpack.c.0.s8 %v4605
        %v4607 = vlaneseq
        %v4608 = vshrl.u32 %v4607, 7
        %v4609 = vsub.s32 %v4606, %v4608
        %v4610 = vrot.slane %v4602, %v4609
        %v4612 = vunpack.c.l.s4 1983009808
        %v4613 = vunpack.c.0.s8 %v4612
        %v4614 = vlaneseq
        %v4615 = vshrl.u32 %v4614, 7
        %v4616 = vsub.s32 %v4613, %v4615
        %v4617 = vrot.slane %v4603, %v4616
        %v4618 = vcombine.low %v4562, %v4578
        %v4619 = vcombine.high %v4562, %v4578
        %v4621 = vunpack.c.l.s4 1934713408
        %v4622 = vunpack.c.0.s8 %v4621
        %v4623 = vlaneseq
        %v4624 = vshrl.u32 %v4623, 7
        %v4625 = vsub.s32 %v4622, %v4624
        %v4626 = vrot.slane %v4618, %v4625
        %v4628 = vunpack.c.l.s4 1934713408
        %v4629 = vunpack.c.0.s8 %v4628
        %v4630 = vlaneseq
        %v4631 = vshrl.u32 %v4630, 7
        %v4632 = vsub.s32 %v4629, %v4631
        %v4633 = vrot.slane %v4619, %v4632
        %v4634 = vcombine.low %v4569, %v4585
        %v4635 = vcombine.high %v4569, %v4585
        %v4637 = vunpack.c.l.s4 1934713408
        %v4638 = vunpack.c.0.s8 %v4637
        %v4639 = vlaneseq
        %v4640 = vshrl.u32 %v4639, 7
        %v4641 = vsub.s32 %v4638, %v4640
        %v4642 = vrot.slane %v4634, %v4641
        %v4644 = vunpack.c.l.s4 1934713408
        %v4645 = vunpack.c.0.s8 %v4644
        %v4646 = vlaneseq
        %v4647 = vshrl.u32 %v4646, 7
        %v4648 = vsub.s32 %v4645, %v4647
        %v4649 = vrot.slane %v4635, %v4648
        %v4650 = vcombine.low %v4594, %v4610
        %v4651 = vcombine.high %v4594, %v4610
        %v4653 = vunpack.c.l.s4 1934713408
        %v4654 = vunpack.c.0.s8 %v4653
        %v4655 = vlaneseq
        %v4656 = vshrl.u32 %v4655, 7
        %v4657 = vsub.s32 %v4654, %v4656
        %v4658 = vrot.slane %v4650, %v4657
        %v4660 = vunpack.c.l.s4 1934713408
        %v4661 = vunpack.c.0.s8 %v4660
        %v4662 = vlaneseq
        %v4663 = vshrl.u32 %v4662, 7
        %v4664 = vsub.s32 %v4661, %v4663
        %v4665 = vrot.slane %v4651, %v4664
        %v4666 = vcombine.low %v4601, %v4617
        %v4667 = vcombine.high %v4601, %v4617
        %v4669 = vunpack.c.l.s4 1934713408
        %v4670 = vunpack.c.0.s8 %v4669
        %v4671 = vlaneseq
        %v4672 = vshrl.u32 %v4671, 7
        %v4673 = vsub.s32 %v4670, %v4672
        %v4674 = vrot.slane %v4666, %v4673
        %v4676 = vunpack.c.l.s4 1934713408
        %v4677 = vunpack.c.0.s8 %v4676
        %v4678 = vlaneseq
        %v4679 = vshrl.u32 %v4678, 7
        %v4680 = vsub.s32 %v4677, %v4679
        %v4681 = vrot.slane %v4667, %v4680
        %v4682 = vcombine.low %v4626, %v4658
        %v4683 = vcombine.high %v4626, %v4658
        %v4684 = vcombine.low %v4633, %v4665
        %v4685 = vcombine.high %v4633, %v4665
        %v4686 = vcombine.low %v4642, %v4674
        %v4687 = vcombine.high %v4642, %v4674
        %v4688 = vcombine.low %v4649, %v4681
        %v4689 = vcombine.high %v4649, %v4681
        %v4690 = vcombine.low %v3394, %v3396
        %v4691 = vcombine.high %v3394, %v3396
        %v4693 = vunpack.c.l.s4 1983009808
        %v4694 = vunpack.c.0.s8 %v4693
        %v4695 = vlaneseq
        %v4696 = vshrl.u32 %v4695, 7
        %v4697 = vsub.s32 %v4694, %v4696
        %v4698 = vrot.slane %v4690, %v4697
        %v4700 = vunpack.c.l.s4 1983009808
        %v4701 = vunpack.c.0.s8 %v4700
        %v4702 = vlaneseq
        %v4703 = vshrl.u32 %v4702, 7
        %v4704 = vsub.s32 %v4701, %v4703
        %v4705 = vrot.slane %v4691, %v4704
        %v4706 = vcombine.low %v3395, %v3397
        %v4707 = vcombine.high %v3395, %v3397
        %v4709 = vunpack.c.l.s4 1983009808
        %v4710 = vunpack.c.0.s8 %v4709
        %v4711 = vlaneseq
        %v4712 = vshrl.u32 %v4711, 7
        %v4713 = vsub.s32 %v4710, %v4712
        %v4714 = vrot.slane %v4706, %v4713
        %v4716 = vunpack.c.l.s4 1983009808
        %v4717 = vunpack.c.0.s8 %v4716
        %v4718 = vlaneseq
        %v4719 = vshrl.u32 %v4718, 7
        %v4720 = vsub.s32 %v4717, %v4719
        %v4721 = vrot.slane %v4707, %v4720
        %v4722 = vcombine.low %v3398, %v3400
        %v4723 = vcombine.high %v3398, %v3400
        %v4725 = vunpack.c.l.s4 1983009808
        %v4726 = vunpack.c.0.s8 %v4725
        %v4727 = vlaneseq
        %v4728 = vshrl.u32 %v4727, 7
        %v4729 = vsub.s32 %v4726, %v4728
        %v4730 = vrot.slane %v4722, %v4729
        %v4732 = vunpack.c.l.s4 1983009808
        %v4733 = vunpack.c.0.s8 %v4732
        %v4734 = vlaneseq
        %v4735 = vshrl.u32 %v4734, 7
        %v4736 = vsub.s32 %v4733, %v4735
        %v4737 = vrot.slane %v4723, %v4736
        %v4738 = vcombine.low %v3399, %v3401
        %v4739 = vcombine.high %v3399, %v3401
        %v4741 = vunpack.c.l.s4 1983009808
        %v4742 = vunpack.c.0.s8 %v4741
        %v4743 = vlaneseq
        %v4744 = vshrl.u32 %v4743, 7
        %v4745 = vsub.s32 %v4742, %v4744
        %v4746 = vrot.slane %v4738, %v4745
        %v4748 = vunpack.c.l.s4 1983009808
        %v4749 = vunpack.c.0.s8 %v4748
        %v4750 = vlaneseq
        %v4751 = vshrl.u32 %v4750, 7
        %v4752 = vsub.s32 %v4749, %v4751
        %v4753 = vrot.slane %v4739, %v4752
        %v4754 = vcombine.low %v4698, %v4714
        %v4755 = vcombine.high %v4698, %v4714
        %v4757 = vunpack.c.l.s4 1934713408
        %v4758 = vunpack.c.0.s8 %v4757
        %v4759 = vlaneseq
        %v4760 = vshrl.u32 %v4759, 7
        %v4761 = vsub.s32 %v4758, %v4760
        %v4762 = vrot.slane %v4754, %v4761
        %v4764 = vunpack.c.l.s4 1934713408
        %v4765 = vunpack.c.0.s8 %v4764
        %v4766 = vlaneseq
        %v4767 = vshrl.u32 %v4766, 7
        %v4768 = vsub.s32 %v4765, %v4767
        %v4769 = vrot.slane %v4755, %v4768
        %v4770 = vcombine.low %v4705, %v4721
        %v4771 = vcombine.high %v4705, %v4721
        %v4773 = vunpack.c.l.s4 1934713408
        %v4774 = vunpack.c.0.s8 %v4773
        %v4775 = vlaneseq
        %v4776 = vshrl.u32 %v4775, 7
        %v4777 = vsub.s32 %v4774, %v4776
        %v4778 = vrot.slane %v4770, %v4777
        %v4780 = vunpack.c.l.s4 1934713408
        %v4781 = vunpack.c.0.s8 %v4780
        %v4782 = vlaneseq
        %v4783 = vshrl.u32 %v4782, 7
        %v4784 = vsub.s32 %v4781, %v4783
        %v4785 = vrot.slane %v4771, %v4784
        %v4786 = vcombine.low %v4730, %v4746
        %v4787 = vcombine.high %v4730, %v4746
        %v4789 = vunpack.c.l.s4 1934713408
        %v4790 = vunpack.c.0.s8 %v4789
        %v4791 = vlaneseq
        %v4792 = vshrl.u32 %v4791, 7
        %v4793 = vsub.s32 %v4790, %v4792
        %v4794 = vrot.slane %v4786, %v4793
        %v4796 = vunpack.c.l.s4 1934713408
        %v4797 = vunpack.c.0.s8 %v4796
        %v4798 = vlaneseq
        %v4799 = vshrl.u32 %v4798, 7
        %v4800 = vsub.s32 %v4797, %v4799
        %v4801 = vrot.slane %v4787, %v4800
        %v4802 = vcombine.low %v4737, %v4753
        %v4803 = vcombine.high %v4737, %v4753
        %v4805 = vunpack.c.l.s4 1934713408
        %v4806 = vunpack.c.0.s8 %v4805
        %v4807 = vlaneseq
        %v4808 = vshrl.u32 %v4807, 7
        %v4809 = vsub.s32 %v4806, %v4808
        %v4810 = vrot.slane %v4802, %v4809
        %v4812 = vunpack.c.l.s4 1934713408
        %v4813 = vunpack.c.0.s8 %v4812
        %v4814 = vlaneseq
        %v4815 = vshrl.u32 %v4814, 7
        %v4816 = vsub.s32 %v4813, %v4815
        %v4817 = vrot.slane %v4803, %v4816
        %v4818 = vcombine.low %v4762, %v4794
        %v4819 = vcombine.high %v4762, %v4794
        %v4820 = vcombine.low %v4769, %v4801
        %v4821 = vcombine.high %v4769, %v4801
        %v4822 = vcombine.low %v4778, %v4810
        %v4823 = vcombine.high %v4778, %v4810
        %v4824 = vcombine.low %v4785, %v4817
        %v4825 = vcombine.high %v4785, %v4817
        %v4826 = vcombine.low %v3402, %v3404
        %v4827 = vcombine.high %v3402, %v3404
        %v4829 = vunpack.c.l.s4 1983009808
        %v4830 = vunpack.c.0.s8 %v4829
        %v4831 = vlaneseq
        %v4832 = vshrl.u32 %v4831, 7
        %v4833 = vsub.s32 %v4830, %v4832
        %v4834 = vrot.slane %v4826, %v4833
        %v4836 = vunpack.c.l.s4 1983009808
        %v4837 = vunpack.c.0.s8 %v4836
        %v4838 = vlaneseq
        %v4839 = vshrl.u32 %v4838, 7
        %v4840 = vsub.s32 %v4837, %v4839
        %v4841 = vrot.slane %v4827, %v4840
        %v4842 = vcombine.low %v3403, %v3405
        %v4843 = vcombine.high %v3403, %v3405
        %v4845 = vunpack.c.l.s4 1983009808
        %v4846 = vunpack.c.0.s8 %v4845
        %v4847 = vlaneseq
        %v4848 = vshrl.u32 %v4847, 7
        %v4849 = vsub.s32 %v4846, %v4848
        %v4850 = vrot.slane %v4842, %v4849
        %v4852 = vunpack.c.l.s4 1983009808
        %v4853 = vunpack.c.0.s8 %v4852
        %v4854 = vlaneseq
        %v4855 = vshrl.u32 %v4854, 7
        %v4856 = vsub.s32 %v4853, %v4855
        %v4857 = vrot.slane %v4843, %v4856
        %v4858 = vcombine.low %v3406, %v3408
        %v4859 = vcombine.high %v3406, %v3408
        %v4861 = vunpack.c.l.s4 1983009808
        %v4862 = vunpack.c.0.s8 %v4861
        %v4863 = vlaneseq
        %v4864 = vshrl.u32 %v4863, 7
        %v4865 = vsub.s32 %v4862, %v4864
        %v4866 = vrot.slane %v4858, %v4865
        %v4868 = vunpack.c.l.s4 1983009808
        %v4869 = vunpack.c.0.s8 %v4868
        %v4870 = vlaneseq
        %v4871 = vshrl.u32 %v4870, 7
        %v4872 = vsub.s32 %v4869, %v4871
        %v4873 = vrot.slane %v4859, %v4872
        %v4874 = vcombine.low %v3407, %v3409
        %v4875 = vcombine.high %v3407, %v3409
        %v4877 = vunpack.c.l.s4 1983009808
        %v4878 = vunpack.c.0.s8 %v4877
        %v4879 = vlaneseq
        %v4880 = vshrl.u32 %v4879, 7
        %v4881 = vsub.s32 %v4878, %v4880
        %v4882 = vrot.slane %v4874, %v4881
        %v4884 = vunpack.c.l.s4 1983009808
        %v4885 = vunpack.c.0.s8 %v4884
        %v4886 = vlaneseq
        %v4887 = vshrl.u32 %v4886, 7
        %v4888 = vsub.s32 %v4885, %v4887
        %v4889 = vrot.slane %v4875, %v4888
        %v4890 = vcombine.low %v4834, %v4850
        %v4891 = vcombine.high %v4834, %v4850
        %v4893 = vunpack.c.l.s4 1934713408
        %v4894 = vunpack.c.0.s8 %v4893
        %v4895 = vlaneseq
        %v4896 = vshrl.u32 %v4895, 7
        %v4897 = vsub.s32 %v4894, %v4896
        %v4898 = vrot.slane %v4890, %v4897
        %v4900 = vunpack.c.l.s4 1934713408
        %v4901 = vunpack.c.0.s8 %v4900
        %v4902 = vlaneseq
        %v4903 = vshrl.u32 %v4902, 7
        %v4904 = vsub.s32 %v4901, %v4903
        %v4905 = vrot.slane %v4891, %v4904
        %v4906 = vcombine.low %v4841, %v4857
        %v4907 = vcombine.high %v4841, %v4857
        %v4909 = vunpack.c.l.s4 1934713408
        %v4910 = vunpack.c.0.s8 %v4909
        %v4911 = vlaneseq
        %v4912 = vshrl.u32 %v4911, 7
        %v4913 = vsub.s32 %v4910, %v4912
        %v4914 = vrot.slane %v4906, %v4913
        %v4916 = vunpack.c.l.s4 1934713408
        %v4917 = vunpack.c.0.s8 %v4916
        %v4918 = vlaneseq
        %v4919 = vshrl.u32 %v4918, 7
        %v4920 = vsub.s32 %v4917, %v4919
        %v4921 = vrot.slane %v4907, %v4920
        %v4922 = vcombine.low %v4866, %v4882
        %v4923 = vcombine.high %v4866, %v4882
        %v4925 = vunpack.c.l.s4 1934713408
        %v4926 = vunpack.c.0.s8 %v4925
        %v4927 = vlaneseq
        %v4928 = vshrl.u32 %v4927, 7
        %v4929 = vsub.s32 %v4926, %v4928
        %v4930 = vrot.slane %v4922, %v4929
        %v4932 = vunpack.c.l.s4 1934713408
        %v4933 = vunpack.c.0.s8 %v4932
        %v4934 = vlaneseq
        %v4935 = vshrl.u32 %v4934, 7
        %v4936 = vsub.s32 %v4933, %v4935
        %v4937 = vrot.slane %v4923, %v4936
        %v4938 = vcombine.low %v4873, %v4889
        %v4939 = vcombine.high %v4873, %v4889
        %v4941 = vunpack.c.l.s4 1934713408
        %v4942 = vunpack.c.0.s8 %v4941
        %v4943 = vlaneseq
        %v4944 = vshrl.u32 %v4943, 7
        %v4945 = vsub.s32 %v4942, %v4944
        %v4946 = vrot.slane %v4938, %v4945
        %v4948 = vunpack.c.l.s4 1934713408
        %v4949 = vunpack.c.0.s8 %v4948
        %v4950 = vlaneseq
        %v4951 = vshrl.u32 %v4950, 7
        %v4952 = vsub.s32 %v4949, %v4951
        %v4953 = vrot.slane %v4939, %v4952
        %v4954 = vcombine.low %v4898, %v4930
        %v4955 = vcombine.high %v4898, %v4930
        %v4956 = vcombine.low %v4905, %v4937
        %v4957 = vcombine.high %v4905, %v4937
        %v4958 = vcombine.low %v4914, %v4946
        %v4959 = vcombine.high %v4914, %v4946
        %v4960 = vcombine.low %v4921, %v4953
        %v4961 = vcombine.high %v4921, %v4953
        %v4962 = vcombine.low %v3410, %v3412
        %v4963 = vcombine.high %v3410, %v3412
        %v4965 = vunpack.c.l.s4 1983009808
        %v4966 = vunpack.c.0.s8 %v4965
        %v4967 = vlaneseq
        %v4968 = vshrl.u32 %v4967, 7
        %v4969 = vsub.s32 %v4966, %v4968
        %v4970 = vrot.slane %v4962, %v4969
        %v4972 = vunpack.c.l.s4 1983009808
        %v4973 = vunpack.c.0.s8 %v4972
        %v4974 = vlaneseq
        %v4975 = vshrl.u32 %v4974, 7
        %v4976 = vsub.s32 %v4973, %v4975
        %v4977 = vrot.slane %v4963, %v4976
        %v4978 = vcombine.low %v3411, %v3413
        %v4979 = vcombine.high %v3411, %v3413
        %v4981 = vunpack.c.l.s4 1983009808
        %v4982 = vunpack.c.0.s8 %v4981
        %v4983 = vlaneseq
        %v4984 = vshrl.u32 %v4983, 7
        %v4985 = vsub.s32 %v4982, %v4984
        %v4986 = vrot.slane %v4978, %v4985
        %v4988 = vunpack.c.l.s4 1983009808
        %v4989 = vunpack.c.0.s8 %v4988
        %v4990 = vlaneseq
        %v4991 = vshrl.u32 %v4990, 7
        %v4992 = vsub.s32 %v4989, %v4991
        %v4993 = vrot.slane %v4979, %v4992
        %v4994 = vcombine.low %v3414, %v3416
        %v4995 = vcombine.high %v3414, %v3416
        %v4997 = vunpack.c.l.s4 1983009808
        %v4998 = vunpack.c.0.s8 %v4997
        %v4999 = vlaneseq
        %v5000 = vshrl.u32 %v4999, 7
        %v5001 = vsub.s32 %v4998, %v5000
        %v5002 = vrot.slane %v4994, %v5001
        %v5004 = vunpack.c.l.s4 1983009808
        %v5005 = vunpack.c.0.s8 %v5004
        %v5006 = vlaneseq
        %v5007 = vshrl.u32 %v5006, 7
        %v5008 = vsub.s32 %v5005, %v5007
        %v5009 = vrot.slane %v4995, %v5008
        %v5010 = vcombine.low %v3415, %v3417
        %v5011 = vcombine.high %v3415, %v3417
        %v5013 = vunpack.c.l.s4 1983009808
        %v5014 = vunpack.c.0.s8 %v5013
        %v5015 = vlaneseq
        %v5016 = vshrl.u32 %v5015, 7
        %v5017 = vsub.s32 %v5014, %v5016
        %v5018 = vrot.slane %v5010, %v5017
        %v5020 = vunpack.c.l.s4 1983009808
        %v5021 = vunpack.c.0.s8 %v5020
        %v5022 = vlaneseq
        %v5023 = vshrl.u32 %v5022, 7
        %v5024 = vsub.s32 %v5021, %v5023
        %v5025 = vrot.slane %v5011, %v5024
        %v5026 = vcombine.low %v4970, %v4986
        %v5027 = vcombine.high %v4970, %v4986
        %v5029 = vunpack.c.l.s4 1934713408
        %v5030 = vunpack.c.0.s8 %v5029
        %v5031 = vlaneseq
        %v5032 = vshrl.u32 %v5031, 7
        %v5033 = vsub.s32 %v5030, %v5032
        %v5034 = vrot.slane %v5026, %v5033
        %v5036 = vunpack.c.l.s4 1934713408
        %v5037 = vunpack.c.0.s8 %v5036
        %v5038 = vlaneseq
        %v5039 = vshrl.u32 %v5038, 7
        %v5040 = vsub.s32 %v5037, %v5039
        %v5041 = vrot.slane %v5027, %v5040
        %v5042 = vcombine.low %v4977, %v4993
        %v5043 = vcombine.high %v4977, %v4993
        %v5045 = vunpack.c.l.s4 1934713408
        %v5046 = vunpack.c.0.s8 %v5045
        %v5047 = vlaneseq
        %v5048 = vshrl.u32 %v5047, 7
        %v5049 = vsub.s32 %v5046, %v5048
        %v5050 = vrot.slane %v5042, %v5049
        %v5052 = vunpack.c.l.s4 1934713408
        %v5053 = vunpack.c.0.s8 %v5052
        %v5054 = vlaneseq
        %v5055 = vshrl.u32 %v5054, 7
        %v5056 = vsub.s32 %v5053, %v5055
        %v5057 = vrot.slane %v5043, %v5056
        %v5058 = vcombine.low %v5002, %v5018
        %v5059 = vcombine.high %v5002, %v5018
        %v5061 = vunpack.c.l.s4 1934713408
        %v5062 = vunpack.c.0.s8 %v5061
        %v5063 = vlaneseq
        %v5064 = vshrl.u32 %v5063, 7
        %v5065 = vsub.s32 %v5062, %v5064
        %v5066 = vrot.slane %v5058, %v5065
        %v5068 = vunpack.c.l.s4 1934713408
        %v5069 = vunpack.c.0.s8 %v5068
        %v5070 = vlaneseq
        %v5071 = vshrl.u32 %v5070, 7
        %v5072 = vsub.s32 %v5069, %v5071
        %v5073 = vrot.slane %v5059, %v5072
        %v5074 = vcombine.low %v5009, %v5025
        %v5075 = vcombine.high %v5009, %v5025
        %v5077 = vunpack.c.l.s4 1934713408
        %v5078 = vunpack.c.0.s8 %v5077
        %v5079 = vlaneseq
        %v5080 = vshrl.u32 %v5079, 7
        %v5081 = vsub.s32 %v5078, %v5080
        %v5082 = vrot.slane %v5074, %v5081
        %v5084 = vunpack.c.l.s4 1934713408
        %v5085 = vunpack.c.0.s8 %v5084
        %v5086 = vlaneseq
        %v5087 = vshrl.u32 %v5086, 7
        %v5088 = vsub.s32 %v5085, %v5087
        %v5089 = vrot.slane %v5075, %v5088
        %v5090 = vcombine.low %v5034, %v5066
        %v5091 = vcombine.high %v5034, %v5066
        %v5092 = vcombine.low %v5041, %v5073
        %v5093 = vcombine.high %v5041, %v5073
        %v5094 = vcombine.low %v5050, %v5082
        %v5095 = vcombine.high %v5050, %v5082
        %v5096 = vcombine.low %v5057, %v5089
        %v5097 = vcombine.high %v5057, %v5089
        %v5098 = vcombine.low %v3418, %v3420
        %v5099 = vcombine.high %v3418, %v3420
        %v5101 = vunpack.c.l.s4 1983009808
        %v5102 = vunpack.c.0.s8 %v5101
        %v5103 = vlaneseq
        %v5104 = vshrl.u32 %v5103, 7
        %v5105 = vsub.s32 %v5102, %v5104
        %v5106 = vrot.slane %v5098, %v5105
        %v5108 = vunpack.c.l.s4 1983009808
        %v5109 = vunpack.c.0.s8 %v5108
        %v5110 = vlaneseq
        %v5111 = vshrl.u32 %v5110, 7
        %v5112 = vsub.s32 %v5109, %v5111
        %v5113 = vrot.slane %v5099, %v5112
        %v5114 = vcombine.low %v3419, %v3421
        %v5115 = vcombine.high %v3419, %v3421
        %v5117 = vunpack.c.l.s4 1983009808
        %v5118 = vunpack.c.0.s8 %v5117
        %v5119 = vlaneseq
        %v5120 = vshrl.u32 %v5119, 7
        %v5121 = vsub.s32 %v5118, %v5120
        %v5122 = vrot.slane %v5114, %v5121
        %v5124 = vunpack.c.l.s4 1983009808
        %v5125 = vunpack.c.0.s8 %v5124
        %v5126 = vlaneseq
        %v5127 = vshrl.u32 %v5126, 7
        %v5128 = vsub.s32 %v5125, %v5127
        %v5129 = vrot.slane %v5115, %v5128
        %v5130 = vcombine.low %v3422, %v3424
        %v5131 = vcombine.high %v3422, %v3424
        %v5133 = vunpack.c.l.s4 1983009808
        %v5134 = vunpack.c.0.s8 %v5133
        %v5135 = vlaneseq
        %v5136 = vshrl.u32 %v5135, 7
        %v5137 = vsub.s32 %v5134, %v5136
        %v5138 = vrot.slane %v5130, %v5137
        %v5140 = vunpack.c.l.s4 1983009808
        %v5141 = vunpack.c.0.s8 %v5140
        %v5142 = vlaneseq
        %v5143 = vshrl.u32 %v5142, 7
        %v5144 = vsub.s32 %v5141, %v5143
        %v5145 = vrot.slane %v5131, %v5144
        %v5146 = vcombine.low %v3423, %v3425
        %v5147 = vcombine.high %v3423, %v3425
        %v5149 = vunpack.c.l.s4 1983009808
        %v5150 = vunpack.c.0.s8 %v5149
        %v5151 = vlaneseq
        %v5152 = vshrl.u32 %v5151, 7
        %v5153 = vsub.s32 %v5150, %v5152
        %v5154 = vrot.slane %v5146, %v5153
        %v5156 = vunpack.c.l.s4 1983009808
        %v5157 = vunpack.c.0.s8 %v5156
        %v5158 = vlaneseq
        %v5159 = vshrl.u32 %v5158, 7
        %v5160 = vsub.s32 %v5157, %v5159
        %v5161 = vrot.slane %v5147, %v5160
        %v5162 = vcombine.low %v5106, %v5122
        %v5163 = vcombine.high %v5106, %v5122
        %v5165 = vunpack.c.l.s4 1934713408
        %v5166 = vunpack.c.0.s8 %v5165
        %v5167 = vlaneseq
        %v5168 = vshrl.u32 %v5167, 7
        %v5169 = vsub.s32 %v5166, %v5168
        %v5170 = vrot.slane %v5162, %v5169
        %v5172 = vunpack.c.l.s4 1934713408
        %v5173 = vunpack.c.0.s8 %v5172
        %v5174 = vlaneseq
        %v5175 = vshrl.u32 %v5174, 7
        %v5176 = vsub.s32 %v5173, %v5175
        %v5177 = vrot.slane %v5163, %v5176
        %v5178 = vcombine.low %v5113, %v5129
        %v5179 = vcombine.high %v5113, %v5129
        %v5181 = vunpack.c.l.s4 1934713408
        %v5182 = vunpack.c.0.s8 %v5181
        %v5183 = vlaneseq
        %v5184 = vshrl.u32 %v5183, 7
        %v5185 = vsub.s32 %v5182, %v5184
        %v5186 = vrot.slane %v5178, %v5185
        %v5188 = vunpack.c.l.s4 1934713408
        %v5189 = vunpack.c.0.s8 %v5188
        %v5190 = vlaneseq
        %v5191 = vshrl.u32 %v5190, 7
        %v5192 = vsub.s32 %v5189, %v5191
        %v5193 = vrot.slane %v5179, %v5192
        %v5194 = vcombine.low %v5138, %v5154
        %v5195 = vcombine.high %v5138, %v5154
        %v5197 = vunpack.c.l.s4 1934713408
        %v5198 = vunpack.c.0.s8 %v5197
        %v5199 = vlaneseq
        %v5200 = vshrl.u32 %v5199, 7
        %v5201 = vsub.s32 %v5198, %v5200
        %v5202 = vrot.slane %v5194, %v5201
        %v5204 = vunpack.c.l.s4 1934713408
        %v5205 = vunpack.c.0.s8 %v5204
        %v5206 = vlaneseq
        %v5207 = vshrl.u32 %v5206, 7
        %v5208 = vsub.s32 %v5205, %v5207
        %v5209 = vrot.slane %v5195, %v5208
        %v5210 = vcombine.low %v5145, %v5161
        %v5211 = vcombine.high %v5145, %v5161
        %v5213 = vunpack.c.l.s4 1934713408
        %v5214 = vunpack.c.0.s8 %v5213
        %v5215 = vlaneseq
        %v5216 = vshrl.u32 %v5215, 7
        %v5217 = vsub.s32 %v5214, %v5216
        %v5218 = vrot.slane %v5210, %v5217
        %v5220 = vunpack.c.l.s4 1934713408
        %v5221 = vunpack.c.0.s8 %v5220
        %v5222 = vlaneseq
        %v5223 = vshrl.u32 %v5222, 7
        %v5224 = vsub.s32 %v5221, %v5223
        %v5225 = vrot.slane %v5211, %v5224
        %v5226 = vcombine.low %v5170, %v5202
        %v5227 = vcombine.high %v5170, %v5202
        %v5228 = vcombine.low %v5177, %v5209
        %v5229 = vcombine.high %v5177, %v5209
        %v5230 = vcombine.low %v5186, %v5218
        %v5231 = vcombine.high %v5186, %v5218
        %v5232 = vcombine.low %v5193, %v5225
        %v5233 = vcombine.high %v5193, %v5225
        %v5234 = vcombine.low %v3426, %v3428
        %v5235 = vcombine.high %v3426, %v3428
        %v5237 = vunpack.c.l.s4 1983009808
        %v5238 = vunpack.c.0.s8 %v5237
        %v5239 = vlaneseq
        %v5240 = vshrl.u32 %v5239, 7
        %v5241 = vsub.s32 %v5238, %v5240
        %v5242 = vrot.slane %v5234, %v5241
        %v5244 = vunpack.c.l.s4 1983009808
        %v5245 = vunpack.c.0.s8 %v5244
        %v5246 = vlaneseq
        %v5247 = vshrl.u32 %v5246, 7
        %v5248 = vsub.s32 %v5245, %v5247
        %v5249 = vrot.slane %v5235, %v5248
        %v5250 = vcombine.low %v3427, %v3429
        %v5251 = vcombine.high %v3427, %v3429
        %v5253 = vunpack.c.l.s4 1983009808
        %v5254 = vunpack.c.0.s8 %v5253
        %v5255 = vlaneseq
        %v5256 = vshrl.u32 %v5255, 7
        %v5257 = vsub.s32 %v5254, %v5256
        %v5258 = vrot.slane %v5250, %v5257
        %v5260 = vunpack.c.l.s4 1983009808
        %v5261 = vunpack.c.0.s8 %v5260
        %v5262 = vlaneseq
        %v5263 = vshrl.u32 %v5262, 7
        %v5264 = vsub.s32 %v5261, %v5263
        %v5265 = vrot.slane %v5251, %v5264
        %v5266 = vcombine.low %v3430, %v3432
        %v5267 = vcombine.high %v3430, %v3432
        %v5269 = vunpack.c.l.s4 1983009808
        %v5270 = vunpack.c.0.s8 %v5269
        %v5271 = vlaneseq
        %v5272 = vshrl.u32 %v5271, 7
        %v5273 = vsub.s32 %v5270, %v5272
        %v5274 = vrot.slane %v5266, %v5273
        %v5276 = vunpack.c.l.s4 1983009808
        %v5277 = vunpack.c.0.s8 %v5276
        %v5278 = vlaneseq
        %v5279 = vshrl.u32 %v5278, 7
        %v5280 = vsub.s32 %v5277, %v5279
        %v5281 = vrot.slane %v5267, %v5280
        %v5282 = vcombine.low %v3431, %v3433
        %v5283 = vcombine.high %v3431, %v3433
        %v5285 = vunpack.c.l.s4 1983009808
        %v5286 = vunpack.c.0.s8 %v5285
        %v5287 = vlaneseq
        %v5288 = vshrl.u32 %v5287, 7
        %v5289 = vsub.s32 %v5286, %v5288
        %v5290 = vrot.slane %v5282, %v5289
        %v5292 = vunpack.c.l.s4 1983009808
        %v5293 = vunpack.c.0.s8 %v5292
        %v5294 = vlaneseq
        %v5295 = vshrl.u32 %v5294, 7
        %v5296 = vsub.s32 %v5293, %v5295
        %v5297 = vrot.slane %v5283, %v5296
        %v5298 = vcombine.low %v5242, %v5258
        %v5299 = vcombine.high %v5242, %v5258
        %v5301 = vunpack.c.l.s4 1934713408
        %v5302 = vunpack.c.0.s8 %v5301
        %v5303 = vlaneseq
        %v5304 = vshrl.u32 %v5303, 7
        %v5305 = vsub.s32 %v5302, %v5304
        %v5306 = vrot.slane %v5298, %v5305
        %v5308 = vunpack.c.l.s4 1934713408
        %v5309 = vunpack.c.0.s8 %v5308
        %v5310 = vlaneseq
        %v5311 = vshrl.u32 %v5310, 7
        %v5312 = vsub.s32 %v5309, %v5311
        %v5313 = vrot.slane %v5299, %v5312
        %v5314 = vcombine.low %v5249, %v5265
        %v5315 = vcombine.high %v5249, %v5265
        %v5317 = vunpack.c.l.s4 1934713408
        %v5318 = vunpack.c.0.s8 %v5317
        %v5319 = vlaneseq
        %v5320 = vshrl.u32 %v5319, 7
        %v5321 = vsub.s32 %v5318, %v5320
        %v5322 = vrot.slane %v5314, %v5321
        %v5324 = vunpack.c.l.s4 1934713408
        %v5325 = vunpack.c.0.s8 %v5324
        %v5326 = vlaneseq
        %v5327 = vshrl.u32 %v5326, 7
        %v5328 = vsub.s32 %v5325, %v5327
        %v5329 = vrot.slane %v5315, %v5328
        %v5330 = vcombine.low %v5274, %v5290
        %v5331 = vcombine.high %v5274, %v5290
        %v5333 = vunpack.c.l.s4 1934713408
        %v5334 = vunpack.c.0.s8 %v5333
        %v5335 = vlaneseq
        %v5336 = vshrl.u32 %v5335, 7
        %v5337 = vsub.s32 %v5334, %v5336
        %v5338 = vrot.slane %v5330, %v5337
        %v5340 = vunpack.c.l.s4 1934713408
        %v5341 = vunpack.c.0.s8 %v5340
        %v5342 = vlaneseq
        %v5343 = vshrl.u32 %v5342, 7
        %v5344 = vsub.s32 %v5341, %v5343
        %v5345 = vrot.slane %v5331, %v5344
        %v5346 = vcombine.low %v5281, %v5297
        %v5347 = vcombine.high %v5281, %v5297
        %v5349 = vunpack.c.l.s4 1934713408
        %v5350 = vunpack.c.0.s8 %v5349
        %v5351 = vlaneseq
        %v5352 = vshrl.u32 %v5351, 7
        %v5353 = vsub.s32 %v5350, %v5352
        %v5354 = vrot.slane %v5346, %v5353
        %v5356 = vunpack.c.l.s4 1934713408
        %v5357 = vunpack.c.0.s8 %v5356
        %v5358 = vlaneseq
        %v5359 = vshrl.u32 %v5358, 7
        %v5360 = vsub.s32 %v5357, %v5359
        %v5361 = vrot.slane %v5347, %v5360
        %v5362 = vcombine.low %v5306, %v5338
        %v5363 = vcombine.high %v5306, %v5338
        %v5364 = vcombine.low %v5313, %v5345
        %v5365 = vcombine.high %v5313, %v5345
        %v5366 = vcombine.low %v5322, %v5354
        %v5367 = vcombine.high %v5322, %v5354
        %v5368 = vcombine.low %v5329, %v5361
        %v5369 = vcombine.high %v5329, %v5361
        %v5370 = vcombine.low %v3434, %v3436
        %v5371 = vcombine.high %v3434, %v3436
        %v5373 = vunpack.c.l.s4 1983009808
        %v5374 = vunpack.c.0.s8 %v5373
        %v5375 = vlaneseq
        %v5376 = vshrl.u32 %v5375, 7
        %v5377 = vsub.s32 %v5374, %v5376
        %v5378 = vrot.slane %v5370, %v5377
        %v5380 = vunpack.c.l.s4 1983009808
        %v5381 = vunpack.c.0.s8 %v5380
        %v5382 = vlaneseq
        %v5383 = vshrl.u32 %v5382, 7
        %v5384 = vsub.s32 %v5381, %v5383
        %v5385 = vrot.slane %v5371, %v5384
        %v5386 = vcombine.low %v3435, %v3437
        %v5387 = vcombine.high %v3435, %v3437
        %v5389 = vunpack.c.l.s4 1983009808
        %v5390 = vunpack.c.0.s8 %v5389
        %v5391 = vlaneseq
        %v5392 = vshrl.u32 %v5391, 7
        %v5393 = vsub.s32 %v5390, %v5392
        %v5394 = vrot.slane %v5386, %v5393
        %v5396 = vunpack.c.l.s4 1983009808
        %v5397 = vunpack.c.0.s8 %v5396
        %v5398 = vlaneseq
        %v5399 = vshrl.u32 %v5398, 7
        %v5400 = vsub.s32 %v5397, %v5399
        %v5401 = vrot.slane %v5387, %v5400
        %v5402 = vcombine.low %v3438, %v3440
        %v5403 = vcombine.high %v3438, %v3440
        %v5405 = vunpack.c.l.s4 1983009808
        %v5406 = vunpack.c.0.s8 %v5405
        %v5407 = vlaneseq
        %v5408 = vshrl.u32 %v5407, 7
        %v5409 = vsub.s32 %v5406, %v5408
        %v5410 = vrot.slane %v5402, %v5409
        %v5412 = vunpack.c.l.s4 1983009808
        %v5413 = vunpack.c.0.s8 %v5412
        %v5414 = vlaneseq
        %v5415 = vshrl.u32 %v5414, 7
        %v5416 = vsub.s32 %v5413, %v5415
        %v5417 = vrot.slane %v5403, %v5416
        %v5418 = vcombine.low %v3439, %v3441
        %v5419 = vcombine.high %v3439, %v3441
        %v5421 = vunpack.c.l.s4 1983009808
        %v5422 = vunpack.c.0.s8 %v5421
        %v5423 = vlaneseq
        %v5424 = vshrl.u32 %v5423, 7
        %v5425 = vsub.s32 %v5422, %v5424
        %v5426 = vrot.slane %v5418, %v5425
        %v5428 = vunpack.c.l.s4 1983009808
        %v5429 = vunpack.c.0.s8 %v5428
        %v5430 = vlaneseq
        %v5431 = vshrl.u32 %v5430, 7
        %v5432 = vsub.s32 %v5429, %v5431
        %v5433 = vrot.slane %v5419, %v5432
        %v5434 = vcombine.low %v5378, %v5394
        %v5435 = vcombine.high %v5378, %v5394
        %v5437 = vunpack.c.l.s4 1934713408
        %v5438 = vunpack.c.0.s8 %v5437
        %v5439 = vlaneseq
        %v5440 = vshrl.u32 %v5439, 7
        %v5441 = vsub.s32 %v5438, %v5440
        %v5442 = vrot.slane %v5434, %v5441
        %v5444 = vunpack.c.l.s4 1934713408
        %v5445 = vunpack.c.0.s8 %v5444
        %v5446 = vlaneseq
        %v5447 = vshrl.u32 %v5446, 7
        %v5448 = vsub.s32 %v5445, %v5447
        %v5449 = vrot.slane %v5435, %v5448
        %v5450 = vcombine.low %v5385, %v5401
        %v5451 = vcombine.high %v5385, %v5401
        %v5453 = vunpack.c.l.s4 1934713408
        %v5454 = vunpack.c.0.s8 %v5453
        %v5455 = vlaneseq
        %v5456 = vshrl.u32 %v5455, 7
        %v5457 = vsub.s32 %v5454, %v5456
        %v5458 = vrot.slane %v5450, %v5457
        %v5460 = vunpack.c.l.s4 1934713408
        %v5461 = vunpack.c.0.s8 %v5460
        %v5462 = vlaneseq
        %v5463 = vshrl.u32 %v5462, 7
        %v5464 = vsub.s32 %v5461, %v5463
        %v5465 = vrot.slane %v5451, %v5464
        %v5466 = vcombine.low %v5410, %v5426
        %v5467 = vcombine.high %v5410, %v5426
        %v5469 = vunpack.c.l.s4 1934713408
        %v5470 = vunpack.c.0.s8 %v5469
        %v5471 = vlaneseq
        %v5472 = vshrl.u32 %v5471, 7
        %v5473 = vsub.s32 %v5470, %v5472
        %v5474 = vrot.slane %v5466, %v5473
        %v5476 = vunpack.c.l.s4 1934713408
        %v5477 = vunpack.c.0.s8 %v5476
        %v5478 = vlaneseq
        %v5479 = vshrl.u32 %v5478, 7
        %v5480 = vsub.s32 %v5477, %v5479
        %v5481 = vrot.slane %v5467, %v5480
        %v5482 = vcombine.low %v5417, %v5433
        %v5483 = vcombine.high %v5417, %v5433
        %v5485 = vunpack.c.l.s4 1934713408
        %v5486 = vunpack.c.0.s8 %v5485
        %v5487 = vlaneseq
        %v5488 = vshrl.u32 %v5487, 7
        %v5489 = vsub.s32 %v5486, %v5488
        %v5490 = vrot.slane %v5482, %v5489
        %v5492 = vunpack.c.l.s4 1934713408
        %v5493 = vunpack.c.0.s8 %v5492
        %v5494 = vlaneseq
        %v5495 = vshrl.u32 %v5494, 7
        %v5496 = vsub.s32 %v5493, %v5495
        %v5497 = vrot.slane %v5483, %v5496
        %v5498 = vcombine.low %v5442, %v5474
        %v5499 = vcombine.high %v5442, %v5474
        %v5500 = vcombine.low %v5449, %v5481
        %v5501 = vcombine.high %v5449, %v5481
        %v5502 = vcombine.low %v5458, %v5490
        %v5503 = vcombine.high %v5458, %v5490
        %v5504 = vcombine.low %v5465, %v5497
        %v5505 = vcombine.high %v5465, %v5497
        %v5506 = vcombine.low %v3442, %v3444
        %v5507 = vcombine.high %v3442, %v3444
        %v5509 = vunpack.c.l.s4 1983009808
        %v5510 = vunpack.c.0.s8 %v5509
        %v5511 = vlaneseq
        %v5512 = vshrl.u32 %v5511, 7
        %v5513 = vsub.s32 %v5510, %v5512
        %v5514 = vrot.slane %v5506, %v5513
        %v5516 = vunpack.c.l.s4 1983009808
        %v5517 = vunpack.c.0.s8 %v5516
        %v5518 = vlaneseq
        %v5519 = vshrl.u32 %v5518, 7
        %v5520 = vsub.s32 %v5517, %v5519
        %v5521 = vrot.slane %v5507, %v5520
        %v5522 = vcombine.low %v3443, %v3445
        %v5523 = vcombine.high %v3443, %v3445
        %v5525 = vunpack.c.l.s4 1983009808
        %v5526 = vunpack.c.0.s8 %v5525
        %v5527 = vlaneseq
        %v5528 = vshrl.u32 %v5527, 7
        %v5529 = vsub.s32 %v5526, %v5528
        %v5530 = vrot.slane %v5522, %v5529
        %v5532 = vunpack.c.l.s4 1983009808
        %v5533 = vunpack.c.0.s8 %v5532
        %v5534 = vlaneseq
        %v5535 = vshrl.u32 %v5534, 7
        %v5536 = vsub.s32 %v5533, %v5535
        %v5537 = vrot.slane %v5523, %v5536
        %v5538 = vcombine.low %v3446, %v3448
        %v5539 = vcombine.high %v3446, %v3448
        %v5541 = vunpack.c.l.s4 1983009808
        %v5542 = vunpack.c.0.s8 %v5541
        %v5543 = vlaneseq
        %v5544 = vshrl.u32 %v5543, 7
        %v5545 = vsub.s32 %v5542, %v5544
        %v5546 = vrot.slane %v5538, %v5545
        %v5548 = vunpack.c.l.s4 1983009808
        %v5549 = vunpack.c.0.s8 %v5548
        %v5550 = vlaneseq
        %v5551 = vshrl.u32 %v5550, 7
        %v5552 = vsub.s32 %v5549, %v5551
        %v5553 = vrot.slane %v5539, %v5552
        %v5554 = vcombine.low %v3447, %v3449
        %v5555 = vcombine.high %v3447, %v3449
        %v5557 = vunpack.c.l.s4 1983009808
        %v5558 = vunpack.c.0.s8 %v5557
        %v5559 = vlaneseq
        %v5560 = vshrl.u32 %v5559, 7
        %v5561 = vsub.s32 %v5558, %v5560
        %v5562 = vrot.slane %v5554, %v5561
        %v5564 = vunpack.c.l.s4 1983009808
        %v5565 = vunpack.c.0.s8 %v5564
        %v5566 = vlaneseq
        %v5567 = vshrl.u32 %v5566, 7
        %v5568 = vsub.s32 %v5565, %v5567
        %v5569 = vrot.slane %v5555, %v5568
        %v5570 = vcombine.low %v5514, %v5530
        %v5571 = vcombine.high %v5514, %v5530
        %v5573 = vunpack.c.l.s4 1934713408
        %v5574 = vunpack.c.0.s8 %v5573
        %v5575 = vlaneseq
        %v5576 = vshrl.u32 %v5575, 7
        %v5577 = vsub.s32 %v5574, %v5576
        %v5578 = vrot.slane %v5570, %v5577
        %v5580 = vunpack.c.l.s4 1934713408
        %v5581 = vunpack.c.0.s8 %v5580
        %v5582 = vlaneseq
        %v5583 = vshrl.u32 %v5582, 7
        %v5584 = vsub.s32 %v5581, %v5583
        %v5585 = vrot.slane %v5571, %v5584
        %v5586 = vcombine.low %v5521, %v5537
        %v5587 = vcombine.high %v5521, %v5537
        %v5589 = vunpack.c.l.s4 1934713408
        %v5590 = vunpack.c.0.s8 %v5589
        %v5591 = vlaneseq
        %v5592 = vshrl.u32 %v5591, 7
        %v5593 = vsub.s32 %v5590, %v5592
        %v5594 = vrot.slane %v5586, %v5593
        %v5596 = vunpack.c.l.s4 1934713408
        %v5597 = vunpack.c.0.s8 %v5596
        %v5598 = vlaneseq
        %v5599 = vshrl.u32 %v5598, 7
        %v5600 = vsub.s32 %v5597, %v5599
        %v5601 = vrot.slane %v5587, %v5600
        %v5602 = vcombine.low %v5546, %v5562
        %v5603 = vcombine.high %v5546, %v5562
        %v5605 = vunpack.c.l.s4 1934713408
        %v5606 = vunpack.c.0.s8 %v5605
        %v5607 = vlaneseq
        %v5608 = vshrl.u32 %v5607, 7
        %v5609 = vsub.s32 %v5606, %v5608
        %v5610 = vrot.slane %v5602, %v5609
        %v5612 = vunpack.c.l.s4 1934713408
        %v5613 = vunpack.c.0.s8 %v5612
        %v5614 = vlaneseq
        %v5615 = vshrl.u32 %v5614, 7
        %v5616 = vsub.s32 %v5613, %v5615
        %v5617 = vrot.slane %v5603, %v5616
        %v5618 = vcombine.low %v5553, %v5569
        %v5619 = vcombine.high %v5553, %v5569
        %v5621 = vunpack.c.l.s4 1934713408
        %v5622 = vunpack.c.0.s8 %v5621
        %v5623 = vlaneseq
        %v5624 = vshrl.u32 %v5623, 7
        %v5625 = vsub.s32 %v5622, %v5624
        %v5626 = vrot.slane %v5618, %v5625
        %v5628 = vunpack.c.l.s4 1934713408
        %v5629 = vunpack.c.0.s8 %v5628
        %v5630 = vlaneseq
        %v5631 = vshrl.u32 %v5630, 7
        %v5632 = vsub.s32 %v5629, %v5631
        %v5633 = vrot.slane %v5619, %v5632
        %v5634 = vcombine.low %v5578, %v5610
        %v5635 = vcombine.high %v5578, %v5610
        %v5636 = vcombine.low %v5585, %v5617
        %v5637 = vcombine.high %v5585, %v5617
        %v5638 = vcombine.low %v5594, %v5626
        %v5639 = vcombine.high %v5594, %v5626
        %v5640 = vcombine.low %v5601, %v5633
        %v5641 = vcombine.high %v5601, %v5633
        %v5642 = vcombine.low %v3450, %v3452
        %v5643 = vcombine.high %v3450, %v3452
        %v5645 = vunpack.c.l.s4 1983009808
        %v5646 = vunpack.c.0.s8 %v5645
        %v5647 = vlaneseq
        %v5648 = vshrl.u32 %v5647, 7
        %v5649 = vsub.s32 %v5646, %v5648
        %v5650 = vrot.slane %v5642, %v5649
        %v5652 = vunpack.c.l.s4 1983009808
        %v5653 = vunpack.c.0.s8 %v5652
        %v5654 = vlaneseq
        %v5655 = vshrl.u32 %v5654, 7
        %v5656 = vsub.s32 %v5653, %v5655
        %v5657 = vrot.slane %v5643, %v5656
        %v5658 = vcombine.low %v3451, %v3453
        %v5659 = vcombine.high %v3451, %v3453
        %v5661 = vunpack.c.l.s4 1983009808
        %v5662 = vunpack.c.0.s8 %v5661
        %v5663 = vlaneseq
        %v5664 = vshrl.u32 %v5663, 7
        %v5665 = vsub.s32 %v5662, %v5664
        %v5666 = vrot.slane %v5658, %v5665
        %v5668 = vunpack.c.l.s4 1983009808
        %v5669 = vunpack.c.0.s8 %v5668
        %v5670 = vlaneseq
        %v5671 = vshrl.u32 %v5670, 7
        %v5672 = vsub.s32 %v5669, %v5671
        %v5673 = vrot.slane %v5659, %v5672
        %v5674 = vcombine.low %v3454, %v3456
        %v5675 = vcombine.high %v3454, %v3456
        %v5677 = vunpack.c.l.s4 1983009808
        %v5678 = vunpack.c.0.s8 %v5677
        %v5679 = vlaneseq
        %v5680 = vshrl.u32 %v5679, 7
        %v5681 = vsub.s32 %v5678, %v5680
        %v5682 = vrot.slane %v5674, %v5681
        %v5684 = vunpack.c.l.s4 1983009808
        %v5685 = vunpack.c.0.s8 %v5684
        %v5686 = vlaneseq
        %v5687 = vshrl.u32 %v5686, 7
        %v5688 = vsub.s32 %v5685, %v5687
        %v5689 = vrot.slane %v5675, %v5688
        %v5690 = vcombine.low %v3455, %v3457
        %v5691 = vcombine.high %v3455, %v3457
        %v5693 = vunpack.c.l.s4 1983009808
        %v5694 = vunpack.c.0.s8 %v5693
        %v5695 = vlaneseq
        %v5696 = vshrl.u32 %v5695, 7
        %v5697 = vsub.s32 %v5694, %v5696
        %v5698 = vrot.slane %v5690, %v5697
        %v5700 = vunpack.c.l.s4 1983009808
        %v5701 = vunpack.c.0.s8 %v5700
        %v5702 = vlaneseq
        %v5703 = vshrl.u32 %v5702, 7
        %v5704 = vsub.s32 %v5701, %v5703
        %v5705 = vrot.slane %v5691, %v5704
        %v5706 = vcombine.low %v5650, %v5666
        %v5707 = vcombine.high %v5650, %v5666
        %v5709 = vunpack.c.l.s4 1934713408
        %v5710 = vunpack.c.0.s8 %v5709
        %v5711 = vlaneseq
        %v5712 = vshrl.u32 %v5711, 7
        %v5713 = vsub.s32 %v5710, %v5712
        %v5714 = vrot.slane %v5706, %v5713
        %v5716 = vunpack.c.l.s4 1934713408
        %v5717 = vunpack.c.0.s8 %v5716
        %v5718 = vlaneseq
        %v5719 = vshrl.u32 %v5718, 7
        %v5720 = vsub.s32 %v5717, %v5719
        %v5721 = vrot.slane %v5707, %v5720
        %v5722 = vcombine.low %v5657, %v5673
        %v5723 = vcombine.high %v5657, %v5673
        %v5725 = vunpack.c.l.s4 1934713408
        %v5726 = vunpack.c.0.s8 %v5725
        %v5727 = vlaneseq
        %v5728 = vshrl.u32 %v5727, 7
        %v5729 = vsub.s32 %v5726, %v5728
        %v5730 = vrot.slane %v5722, %v5729
        %v5732 = vunpack.c.l.s4 1934713408
        %v5733 = vunpack.c.0.s8 %v5732
        %v5734 = vlaneseq
        %v5735 = vshrl.u32 %v5734, 7
        %v5736 = vsub.s32 %v5733, %v5735
        %v5737 = vrot.slane %v5723, %v5736
        %v5738 = vcombine.low %v5682, %v5698
        %v5739 = vcombine.high %v5682, %v5698
        %v5741 = vunpack.c.l.s4 1934713408
        %v5742 = vunpack.c.0.s8 %v5741
        %v5743 = vlaneseq
        %v5744 = vshrl.u32 %v5743, 7
        %v5745 = vsub.s32 %v5742, %v5744
        %v5746 = vrot.slane %v5738, %v5745
        %v5748 = vunpack.c.l.s4 1934713408
        %v5749 = vunpack.c.0.s8 %v5748
        %v5750 = vlaneseq
        %v5751 = vshrl.u32 %v5750, 7
        %v5752 = vsub.s32 %v5749, %v5751
        %v5753 = vrot.slane %v5739, %v5752
        %v5754 = vcombine.low %v5689, %v5705
        %v5755 = vcombine.high %v5689, %v5705
        %v5757 = vunpack.c.l.s4 1934713408
        %v5758 = vunpack.c.0.s8 %v5757
        %v5759 = vlaneseq
        %v5760 = vshrl.u32 %v5759, 7
        %v5761 = vsub.s32 %v5758, %v5760
        %v5762 = vrot.slane %v5754, %v5761
        %v5764 = vunpack.c.l.s4 1934713408
        %v5765 = vunpack.c.0.s8 %v5764
        %v5766 = vlaneseq
        %v5767 = vshrl.u32 %v5766, 7
        %v5768 = vsub.s32 %v5765, %v5767
        %v5769 = vrot.slane %v5755, %v5768
        %v5770 = vcombine.low %v5714, %v5746
        %v5771 = vcombine.high %v5714, %v5746
        %v5772 = vcombine.low %v5721, %v5753
        %v5773 = vcombine.high %v5721, %v5753
        %v5774 = vcombine.low %v5730, %v5762
        %v5775 = vcombine.high %v5730, %v5762
        %v5776 = vcombine.low %v5737, %v5769
        %v5777 = vcombine.high %v5737, %v5769
        %v5778 = vcombine.low %v3458, %v3460
        %v5779 = vcombine.high %v3458, %v3460
        %v5781 = vunpack.c.l.s4 1983009808
        %v5782 = vunpack.c.0.s8 %v5781
        %v5783 = vlaneseq
        %v5784 = vshrl.u32 %v5783, 7
        %v5785 = vsub.s32 %v5782, %v5784
        %v5786 = vrot.slane %v5778, %v5785
        %v5788 = vunpack.c.l.s4 1983009808
        %v5789 = vunpack.c.0.s8 %v5788
        %v5790 = vlaneseq
        %v5791 = vshrl.u32 %v5790, 7
        %v5792 = vsub.s32 %v5789, %v5791
        %v5793 = vrot.slane %v5779, %v5792
        %v5794 = vcombine.low %v3459, %v3461
        %v5795 = vcombine.high %v3459, %v3461
        %v5797 = vunpack.c.l.s4 1983009808
        %v5798 = vunpack.c.0.s8 %v5797
        %v5799 = vlaneseq
        %v5800 = vshrl.u32 %v5799, 7
        %v5801 = vsub.s32 %v5798, %v5800
        %v5802 = vrot.slane %v5794, %v5801
        %v5804 = vunpack.c.l.s4 1983009808
        %v5805 = vunpack.c.0.s8 %v5804
        %v5806 = vlaneseq
        %v5807 = vshrl.u32 %v5806, 7
        %v5808 = vsub.s32 %v5805, %v5807
        %v5809 = vrot.slane %v5795, %v5808
        %v5810 = vcombine.low %v3462, %v3464
        %v5811 = vcombine.high %v3462, %v3464
        %v5813 = vunpack.c.l.s4 1983009808
        %v5814 = vunpack.c.0.s8 %v5813
        %v5815 = vlaneseq
        %v5816 = vshrl.u32 %v5815, 7
        %v5817 = vsub.s32 %v5814, %v5816
        %v5818 = vrot.slane %v5810, %v5817
        %v5820 = vunpack.c.l.s4 1983009808
        %v5821 = vunpack.c.0.s8 %v5820
        %v5822 = vlaneseq
        %v5823 = vshrl.u32 %v5822, 7
        %v5824 = vsub.s32 %v5821, %v5823
        %v5825 = vrot.slane %v5811, %v5824
        %v5826 = vcombine.low %v3463, %v3465
        %v5827 = vcombine.high %v3463, %v3465
        %v5829 = vunpack.c.l.s4 1983009808
        %v5830 = vunpack.c.0.s8 %v5829
        %v5831 = vlaneseq
        %v5832 = vshrl.u32 %v5831, 7
        %v5833 = vsub.s32 %v5830, %v5832
        %v5834 = vrot.slane %v5826, %v5833
        %v5836 = vunpack.c.l.s4 1983009808
        %v5837 = vunpack.c.0.s8 %v5836
        %v5838 = vlaneseq
        %v5839 = vshrl.u32 %v5838, 7
        %v5840 = vsub.s32 %v5837, %v5839
        %v5841 = vrot.slane %v5827, %v5840
        %v5842 = vcombine.low %v5786, %v5802
        %v5843 = vcombine.high %v5786, %v5802
        %v5845 = vunpack.c.l.s4 1934713408
        %v5846 = vunpack.c.0.s8 %v5845
        %v5847 = vlaneseq
        %v5848 = vshrl.u32 %v5847, 7
        %v5849 = vsub.s32 %v5846, %v5848
        %v5850 = vrot.slane %v5842, %v5849
        %v5852 = vunpack.c.l.s4 1934713408
        %v5853 = vunpack.c.0.s8 %v5852
        %v5854 = vlaneseq
        %v5855 = vshrl.u32 %v5854, 7
        %v5856 = vsub.s32 %v5853, %v5855
        %v5857 = vrot.slane %v5843, %v5856
        %v5858 = vcombine.low %v5793, %v5809
        %v5859 = vcombine.high %v5793, %v5809
        %v5861 = vunpack.c.l.s4 1934713408
        %v5862 = vunpack.c.0.s8 %v5861
        %v5863 = vlaneseq
        %v5864 = vshrl.u32 %v5863, 7
        %v5865 = vsub.s32 %v5862, %v5864
        %v5866 = vrot.slane %v5858, %v5865
        %v5868 = vunpack.c.l.s4 1934713408
        %v5869 = vunpack.c.0.s8 %v5868
        %v5870 = vlaneseq
        %v5871 = vshrl.u32 %v5870, 7
        %v5872 = vsub.s32 %v5869, %v5871
        %v5873 = vrot.slane %v5859, %v5872
        %v5874 = vcombine.low %v5818, %v5834
        %v5875 = vcombine.high %v5818, %v5834
        %v5877 = vunpack.c.l.s4 1934713408
        %v5878 = vunpack.c.0.s8 %v5877
        %v5879 = vlaneseq
        %v5880 = vshrl.u32 %v5879, 7
        %v5881 = vsub.s32 %v5878, %v5880
        %v5882 = vrot.slane %v5874, %v5881
        %v5884 = vunpack.c.l.s4 1934713408
        %v5885 = vunpack.c.0.s8 %v5884
        %v5886 = vlaneseq
        %v5887 = vshrl.u32 %v5886, 7
        %v5888 = vsub.s32 %v5885, %v5887
        %v5889 = vrot.slane %v5875, %v5888
        %v5890 = vcombine.low %v5825, %v5841
        %v5891 = vcombine.high %v5825, %v5841
        %v5893 = vunpack.c.l.s4 1934713408
        %v5894 = vunpack.c.0.s8 %v5893
        %v5895 = vlaneseq
        %v5896 = vshrl.u32 %v5895, 7
        %v5897 = vsub.s32 %v5894, %v5896
        %v5898 = vrot.slane %v5890, %v5897
        %v5900 = vunpack.c.l.s4 1934713408
        %v5901 = vunpack.c.0.s8 %v5900
        %v5902 = vlaneseq
        %v5903 = vshrl.u32 %v5902, 7
        %v5904 = vsub.s32 %v5901, %v5903
        %v5905 = vrot.slane %v5891, %v5904
        %v5906 = vcombine.low %v5850, %v5882
        %v5907 = vcombine.high %v5850, %v5882
        %v5908 = vcombine.low %v5857, %v5889
        %v5909 = vcombine.high %v5857, %v5889
        %v5910 = vcombine.low %v5866, %v5898
        %v5911 = vcombine.high %v5866, %v5898
        %v5912 = vcombine.low %v5873, %v5905
        %v5913 = vcombine.high %v5873, %v5905
        %v5914 = vcombine.low %v3466, %v3468
        %v5915 = vcombine.high %v3466, %v3468
        %v5917 = vunpack.c.l.s4 1983009808
        %v5918 = vunpack.c.0.s8 %v5917
        %v5919 = vlaneseq
        %v5920 = vshrl.u32 %v5919, 7
        %v5921 = vsub.s32 %v5918, %v5920
        %v5922 = vrot.slane %v5914, %v5921
        %v5924 = vunpack.c.l.s4 1983009808
        %v5925 = vunpack.c.0.s8 %v5924
        %v5926 = vlaneseq
        %v5927 = vshrl.u32 %v5926, 7
        %v5928 = vsub.s32 %v5925, %v5927
        %v5929 = vrot.slane %v5915, %v5928
        %v5930 = vcombine.low %v3467, %v3469
        %v5931 = vcombine.high %v3467, %v3469
        %v5933 = vunpack.c.l.s4 1983009808
        %v5934 = vunpack.c.0.s8 %v5933
        %v5935 = vlaneseq
        %v5936 = vshrl.u32 %v5935, 7
        %v5937 = vsub.s32 %v5934, %v5936
        %v5938 = vrot.slane %v5930, %v5937
        %v5940 = vunpack.c.l.s4 1983009808
        %v5941 = vunpack.c.0.s8 %v5940
        %v5942 = vlaneseq
        %v5943 = vshrl.u32 %v5942, 7
        %v5944 = vsub.s32 %v5941, %v5943
        %v5945 = vrot.slane %v5931, %v5944
        %v5946 = vcombine.low %v3470, %v3472
        %v5947 = vcombine.high %v3470, %v3472
        %v5949 = vunpack.c.l.s4 1983009808
        %v5950 = vunpack.c.0.s8 %v5949
        %v5951 = vlaneseq
        %v5952 = vshrl.u32 %v5951, 7
        %v5953 = vsub.s32 %v5950, %v5952
        %v5954 = vrot.slane %v5946, %v5953
        %v5956 = vunpack.c.l.s4 1983009808
        %v5957 = vunpack.c.0.s8 %v5956
        %v5958 = vlaneseq
        %v5959 = vshrl.u32 %v5958, 7
        %v5960 = vsub.s32 %v5957, %v5959
        %v5961 = vrot.slane %v5947, %v5960
        %v5962 = vcombine.low %v3471, %v3473
        %v5963 = vcombine.high %v3471, %v3473
        %v5965 = vunpack.c.l.s4 1983009808
        %v5966 = vunpack.c.0.s8 %v5965
        %v5967 = vlaneseq
        %v5968 = vshrl.u32 %v5967, 7
        %v5969 = vsub.s32 %v5966, %v5968
        %v5970 = vrot.slane %v5962, %v5969
        %v5972 = vunpack.c.l.s4 1983009808
        %v5973 = vunpack.c.0.s8 %v5972
        %v5974 = vlaneseq
        %v5975 = vshrl.u32 %v5974, 7
        %v5976 = vsub.s32 %v5973, %v5975
        %v5977 = vrot.slane %v5963, %v5976
        %v5978 = vcombine.low %v5922, %v5938
        %v5979 = vcombine.high %v5922, %v5938
        %v5981 = vunpack.c.l.s4 1934713408
        %v5982 = vunpack.c.0.s8 %v5981
        %v5983 = vlaneseq
        %v5984 = vshrl.u32 %v5983, 7
        %v5985 = vsub.s32 %v5982, %v5984
        %v5986 = vrot.slane %v5978, %v5985
        %v5988 = vunpack.c.l.s4 1934713408
        %v5989 = vunpack.c.0.s8 %v5988
        %v5990 = vlaneseq
        %v5991 = vshrl.u32 %v5990, 7
        %v5992 = vsub.s32 %v5989, %v5991
        %v5993 = vrot.slane %v5979, %v5992
        %v5994 = vcombine.low %v5929, %v5945
        %v5995 = vcombine.high %v5929, %v5945
        %v5997 = vunpack.c.l.s4 1934713408
        %v5998 = vunpack.c.0.s8 %v5997
        %v5999 = vlaneseq
        %v6000 = vshrl.u32 %v5999, 7
        %v6001 = vsub.s32 %v5998, %v6000
        %v6002 = vrot.slane %v5994, %v6001
        %v6004 = vunpack.c.l.s4 1934713408
        %v6005 = vunpack.c.0.s8 %v6004
        %v6006 = vlaneseq
        %v6007 = vshrl.u32 %v6006, 7
        %v6008 = vsub.s32 %v6005, %v6007
        %v6009 = vrot.slane %v5995, %v6008
        %v6010 = vcombine.low %v5954, %v5970
        %v6011 = vcombine.high %v5954, %v5970
        %v6013 = vunpack.c.l.s4 1934713408
        %v6014 = vunpack.c.0.s8 %v6013
        %v6015 = vlaneseq
        %v6016 = vshrl.u32 %v6015, 7
        %v6017 = vsub.s32 %v6014, %v6016
        %v6018 = vrot.slane %v6010, %v6017
        %v6020 = vunpack.c.l.s4 1934713408
        %v6021 = vunpack.c.0.s8 %v6020
        %v6022 = vlaneseq
        %v6023 = vshrl.u32 %v6022, 7
        %v6024 = vsub.s32 %v6021, %v6023
        %v6025 = vrot.slane %v6011, %v6024
        %v6026 = vcombine.low %v5961, %v5977
        %v6027 = vcombine.high %v5961, %v5977
        %v6029 = vunpack.c.l.s4 1934713408
        %v6030 = vunpack.c.0.s8 %v6029
        %v6031 = vlaneseq
        %v6032 = vshrl.u32 %v6031, 7
        %v6033 = vsub.s32 %v6030, %v6032
        %v6034 = vrot.slane %v6026, %v6033
        %v6036 = vunpack.c.l.s4 1934713408
        %v6037 = vunpack.c.0.s8 %v6036
        %v6038 = vlaneseq
        %v6039 = vshrl.u32 %v6038, 7
        %v6040 = vsub.s32 %v6037, %v6039
        %v6041 = vrot.slane %v6027, %v6040
        %v6042 = vcombine.low %v5986, %v6018
        %v6043 = vcombine.high %v5986, %v6018
        %v6044 = vcombine.low %v5993, %v6025
        %v6045 = vcombine.high %v5993, %v6025
        %v6046 = vcombine.low %v6002, %v6034
        %v6047 = vcombine.high %v6002, %v6034
        %v6048 = vcombine.low %v6009, %v6041
        %v6049 = vcombine.high %v6009, %v6041
        %v6050 = vcombine.low %v3474, %v3476
        %v6051 = vcombine.high %v3474, %v3476
        %v6053 = vunpack.c.l.s4 1983009808
        %v6054 = vunpack.c.0.s8 %v6053
        %v6055 = vlaneseq
        %v6056 = vshrl.u32 %v6055, 7
        %v6057 = vsub.s32 %v6054, %v6056
        %v6058 = vrot.slane %v6050, %v6057
        %v6060 = vunpack.c.l.s4 1983009808
        %v6061 = vunpack.c.0.s8 %v6060
        %v6062 = vlaneseq
        %v6063 = vshrl.u32 %v6062, 7
        %v6064 = vsub.s32 %v6061, %v6063
        %v6065 = vrot.slane %v6051, %v6064
        %v6066 = vcombine.low %v3475, %v3477
        %v6067 = vcombine.high %v3475, %v3477
        %v6069 = vunpack.c.l.s4 1983009808
        %v6070 = vunpack.c.0.s8 %v6069
        %v6071 = vlaneseq
        %v6072 = vshrl.u32 %v6071, 7
        %v6073 = vsub.s32 %v6070, %v6072
        %v6074 = vrot.slane %v6066, %v6073
        %v6076 = vunpack.c.l.s4 1983009808
        %v6077 = vunpack.c.0.s8 %v6076
        %v6078 = vlaneseq
        %v6079 = vshrl.u32 %v6078, 7
        %v6080 = vsub.s32 %v6077, %v6079
        %v6081 = vrot.slane %v6067, %v6080
        %v6082 = vcombine.low %v3478, %v3480
        %v6083 = vcombine.high %v3478, %v3480
        %v6085 = vunpack.c.l.s4 1983009808
        %v6086 = vunpack.c.0.s8 %v6085
        %v6087 = vlaneseq
        %v6088 = vshrl.u32 %v6087, 7
        %v6089 = vsub.s32 %v6086, %v6088
        %v6090 = vrot.slane %v6082, %v6089
        %v6092 = vunpack.c.l.s4 1983009808
        %v6093 = vunpack.c.0.s8 %v6092
        %v6094 = vlaneseq
        %v6095 = vshrl.u32 %v6094, 7
        %v6096 = vsub.s32 %v6093, %v6095
        %v6097 = vrot.slane %v6083, %v6096
        %v6098 = vcombine.low %v3479, %v3481
        %v6099 = vcombine.high %v3479, %v3481
        %v6101 = vunpack.c.l.s4 1983009808
        %v6102 = vunpack.c.0.s8 %v6101
        %v6103 = vlaneseq
        %v6104 = vshrl.u32 %v6103, 7
        %v6105 = vsub.s32 %v6102, %v6104
        %v6106 = vrot.slane %v6098, %v6105
        %v6108 = vunpack.c.l.s4 1983009808
        %v6109 = vunpack.c.0.s8 %v6108
        %v6110 = vlaneseq
        %v6111 = vshrl.u32 %v6110, 7
        %v6112 = vsub.s32 %v6109, %v6111
        %v6113 = vrot.slane %v6099, %v6112
        %v6114 = vcombine.low %v6058, %v6074
        %v6115 = vcombine.high %v6058, %v6074
        %v6117 = vunpack.c.l.s4 1934713408
        %v6118 = vunpack.c.0.s8 %v6117
        %v6119 = vlaneseq
        %v6120 = vshrl.u32 %v6119, 7
        %v6121 = vsub.s32 %v6118, %v6120
        %v6122 = vrot.slane %v6114, %v6121
        %v6124 = vunpack.c.l.s4 1934713408
        %v6125 = vunpack.c.0.s8 %v6124
        %v6126 = vlaneseq
        %v6127 = vshrl.u32 %v6126, 7
        %v6128 = vsub.s32 %v6125, %v6127
        %v6129 = vrot.slane %v6115, %v6128
        %v6130 = vcombine.low %v6065, %v6081
        %v6131 = vcombine.high %v6065, %v6081
        %v6133 = vunpack.c.l.s4 1934713408
        %v6134 = vunpack.c.0.s8 %v6133
        %v6135 = vlaneseq
        %v6136 = vshrl.u32 %v6135, 7
        %v6137 = vsub.s32 %v6134, %v6136
        %v6138 = vrot.slane %v6130, %v6137
        %v6140 = vunpack.c.l.s4 1934713408
        %v6141 = vunpack.c.0.s8 %v6140
        %v6142 = vlaneseq
        %v6143 = vshrl.u32 %v6142, 7
        %v6144 = vsub.s32 %v6141, %v6143
        %v6145 = vrot.slane %v6131, %v6144
        %v6146 = vcombine.low %v6090, %v6106
        %v6147 = vcombine.high %v6090, %v6106
        %v6149 = vunpack.c.l.s4 1934713408
        %v6150 = vunpack.c.0.s8 %v6149
        %v6151 = vlaneseq
        %v6152 = vshrl.u32 %v6151, 7
        %v6153 = vsub.s32 %v6150, %v6152
        %v6154 = vrot.slane %v6146, %v6153
        %v6156 = vunpack.c.l.s4 1934713408
        %v6157 = vunpack.c.0.s8 %v6156
        %v6158 = vlaneseq
        %v6159 = vshrl.u32 %v6158, 7
        %v6160 = vsub.s32 %v6157, %v6159
        %v6161 = vrot.slane %v6147, %v6160
        %v6162 = vcombine.low %v6097, %v6113
        %v6163 = vcombine.high %v6097, %v6113
        %v6165 = vunpack.c.l.s4 1934713408
        %v6166 = vunpack.c.0.s8 %v6165
        %v6167 = vlaneseq
        %v6168 = vshrl.u32 %v6167, 7
        %v6169 = vsub.s32 %v6166, %v6168
        %v6170 = vrot.slane %v6162, %v6169
        %v6172 = vunpack.c.l.s4 1934713408
        %v6173 = vunpack.c.0.s8 %v6172
        %v6174 = vlaneseq
        %v6175 = vshrl.u32 %v6174, 7
        %v6176 = vsub.s32 %v6173, %v6175
        %v6177 = vrot.slane %v6163, %v6176
        %v6178 = vcombine.low %v6122, %v6154
        %v6179 = vcombine.high %v6122, %v6154
        %v6180 = vcombine.low %v6129, %v6161
        %v6181 = vcombine.high %v6129, %v6161
        %v6182 = vcombine.low %v6138, %v6170
        %v6183 = vcombine.high %v6138, %v6170
        %v6184 = vcombine.low %v6145, %v6177
        %v6185 = vcombine.high %v6145, %v6177
        %v6186 = vcombine.low %v3482, %v3484
        %v6187 = vcombine.high %v3482, %v3484
        %v6189 = vunpack.c.l.s4 1983009808
        %v6190 = vunpack.c.0.s8 %v6189
        %v6191 = vlaneseq
        %v6192 = vshrl.u32 %v6191, 7
        %v6193 = vsub.s32 %v6190, %v6192
        %v6194 = vrot.slane %v6186, %v6193
        %v6196 = vunpack.c.l.s4 1983009808
        %v6197 = vunpack.c.0.s8 %v6196
        %v6198 = vlaneseq
        %v6199 = vshrl.u32 %v6198, 7
        %v6200 = vsub.s32 %v6197, %v6199
        %v6201 = vrot.slane %v6187, %v6200
        %v6202 = vcombine.low %v3483, %v3485
        %v6203 = vcombine.high %v3483, %v3485
        %v6205 = vunpack.c.l.s4 1983009808
        %v6206 = vunpack.c.0.s8 %v6205
        %v6207 = vlaneseq
        %v6208 = vshrl.u32 %v6207, 7
        %v6209 = vsub.s32 %v6206, %v6208
        %v6210 = vrot.slane %v6202, %v6209
        %v6212 = vunpack.c.l.s4 1983009808
        %v6213 = vunpack.c.0.s8 %v6212
        %v6214 = vlaneseq
        %v6215 = vshrl.u32 %v6214, 7
        %v6216 = vsub.s32 %v6213, %v6215
        %v6217 = vrot.slane %v6203, %v6216
        %v6218 = vcombine.low %v3486, %v3488
        %v6219 = vcombine.high %v3486, %v3488
        %v6221 = vunpack.c.l.s4 1983009808
        %v6222 = vunpack.c.0.s8 %v6221
        %v6223 = vlaneseq
        %v6224 = vshrl.u32 %v6223, 7
        %v6225 = vsub.s32 %v6222, %v6224
        %v6226 = vrot.slane %v6218, %v6225
        %v6228 = vunpack.c.l.s4 1983009808
        %v6229 = vunpack.c.0.s8 %v6228
        %v6230 = vlaneseq
        %v6231 = vshrl.u32 %v6230, 7
        %v6232 = vsub.s32 %v6229, %v6231
        %v6233 = vrot.slane %v6219, %v6232
        %v6234 = vcombine.low %v3487, %v3489
        %v6235 = vcombine.high %v3487, %v3489
        %v6237 = vunpack.c.l.s4 1983009808
        %v6238 = vunpack.c.0.s8 %v6237
        %v6239 = vlaneseq
        %v6240 = vshrl.u32 %v6239, 7
        %v6241 = vsub.s32 %v6238, %v6240
        %v6242 = vrot.slane %v6234, %v6241
        %v6244 = vunpack.c.l.s4 1983009808
        %v6245 = vunpack.c.0.s8 %v6244
        %v6246 = vlaneseq
        %v6247 = vshrl.u32 %v6246, 7
        %v6248 = vsub.s32 %v6245, %v6247
        %v6249 = vrot.slane %v6235, %v6248
        %v6250 = vcombine.low %v6194, %v6210
        %v6251 = vcombine.high %v6194, %v6210
        %v6253 = vunpack.c.l.s4 1934713408
        %v6254 = vunpack.c.0.s8 %v6253
        %v6255 = vlaneseq
        %v6256 = vshrl.u32 %v6255, 7
        %v6257 = vsub.s32 %v6254, %v6256
        %v6258 = vrot.slane %v6250, %v6257
        %v6260 = vunpack.c.l.s4 1934713408
        %v6261 = vunpack.c.0.s8 %v6260
        %v6262 = vlaneseq
        %v6263 = vshrl.u32 %v6262, 7
        %v6264 = vsub.s32 %v6261, %v6263
        %v6265 = vrot.slane %v6251, %v6264
        %v6266 = vcombine.low %v6201, %v6217
        %v6267 = vcombine.high %v6201, %v6217
        %v6269 = vunpack.c.l.s4 1934713408
        %v6270 = vunpack.c.0.s8 %v6269
        %v6271 = vlaneseq
        %v6272 = vshrl.u32 %v6271, 7
        %v6273 = vsub.s32 %v6270, %v6272
        %v6274 = vrot.slane %v6266, %v6273
        %v6276 = vunpack.c.l.s4 1934713408
        %v6277 = vunpack.c.0.s8 %v6276
        %v6278 = vlaneseq
        %v6279 = vshrl.u32 %v6278, 7
        %v6280 = vsub.s32 %v6277, %v6279
        %v6281 = vrot.slane %v6267, %v6280
        %v6282 = vcombine.low %v6226, %v6242
        %v6283 = vcombine.high %v6226, %v6242
        %v6285 = vunpack.c.l.s4 1934713408
        %v6286 = vunpack.c.0.s8 %v6285
        %v6287 = vlaneseq
        %v6288 = vshrl.u32 %v6287, 7
        %v6289 = vsub.s32 %v6286, %v6288
        %v6290 = vrot.slane %v6282, %v6289
        %v6292 = vunpack.c.l.s4 1934713408
        %v6293 = vunpack.c.0.s8 %v6292
        %v6294 = vlaneseq
        %v6295 = vshrl.u32 %v6294, 7
        %v6296 = vsub.s32 %v6293, %v6295
        %v6297 = vrot.slane %v6283, %v6296
        %v6298 = vcombine.low %v6233, %v6249
        %v6299 = vcombine.high %v6233, %v6249
        %v6301 = vunpack.c.l.s4 1934713408
        %v6302 = vunpack.c.0.s8 %v6301
        %v6303 = vlaneseq
        %v6304 = vshrl.u32 %v6303, 7
        %v6305 = vsub.s32 %v6302, %v6304
        %v6306 = vrot.slane %v6298, %v6305
        %v6308 = vunpack.c.l.s4 1934713408
        %v6309 = vunpack.c.0.s8 %v6308
        %v6310 = vlaneseq
        %v6311 = vshrl.u32 %v6310, 7
        %v6312 = vsub.s32 %v6309, %v6311
        %v6313 = vrot.slane %v6299, %v6312
        %v6314 = vcombine.low %v6258, %v6290
        %v6315 = vcombine.high %v6258, %v6290
        %v6316 = vcombine.low %v6265, %v6297
        %v6317 = vcombine.high %v6265, %v6297
        %v6318 = vcombine.low %v6274, %v6306
        %v6319 = vcombine.high %v6274, %v6306
        %v6320 = vcombine.low %v6281, %v6313
        %v6321 = vcombine.high %v6281, %v6313
        %v6322 = vcombine.low %v3490, %v3492
        %v6323 = vcombine.high %v3490, %v3492
        %v6325 = vunpack.c.l.s4 1983009808
        %v6326 = vunpack.c.0.s8 %v6325
        %v6327 = vlaneseq
        %v6328 = vshrl.u32 %v6327, 7
        %v6329 = vsub.s32 %v6326, %v6328
        %v6330 = vrot.slane %v6322, %v6329
        %v6332 = vunpack.c.l.s4 1983009808
        %v6333 = vunpack.c.0.s8 %v6332
        %v6334 = vlaneseq
        %v6335 = vshrl.u32 %v6334, 7
        %v6336 = vsub.s32 %v6333, %v6335
        %v6337 = vrot.slane %v6323, %v6336
        %v6338 = vcombine.low %v3491, %v3493
        %v6339 = vcombine.high %v3491, %v3493
        %v6341 = vunpack.c.l.s4 1983009808
        %v6342 = vunpack.c.0.s8 %v6341
        %v6343 = vlaneseq
        %v6344 = vshrl.u32 %v6343, 7
        %v6345 = vsub.s32 %v6342, %v6344
        %v6346 = vrot.slane %v6338, %v6345
        %v6348 = vunpack.c.l.s4 1983009808
        %v6349 = vunpack.c.0.s8 %v6348
        %v6350 = vlaneseq
        %v6351 = vshrl.u32 %v6350, 7
        %v6352 = vsub.s32 %v6349, %v6351
        %v6353 = vrot.slane %v6339, %v6352
        %v6354 = vcombine.low %v3494, %v3496
        %v6355 = vcombine.high %v3494, %v3496
        %v6357 = vunpack.c.l.s4 1983009808
        %v6358 = vunpack.c.0.s8 %v6357
        %v6359 = vlaneseq
        %v6360 = vshrl.u32 %v6359, 7
        %v6361 = vsub.s32 %v6358, %v6360
        %v6362 = vrot.slane %v6354, %v6361
        %v6364 = vunpack.c.l.s4 1983009808
        %v6365 = vunpack.c.0.s8 %v6364
        %v6366 = vlaneseq
        %v6367 = vshrl.u32 %v6366, 7
        %v6368 = vsub.s32 %v6365, %v6367
        %v6369 = vrot.slane %v6355, %v6368
        %v6370 = vcombine.low %v3495, %v3497
        %v6371 = vcombine.high %v3495, %v3497
        %v6373 = vunpack.c.l.s4 1983009808
        %v6374 = vunpack.c.0.s8 %v6373
        %v6375 = vlaneseq
        %v6376 = vshrl.u32 %v6375, 7
        %v6377 = vsub.s32 %v6374, %v6376
        %v6378 = vrot.slane %v6370, %v6377
        %v6380 = vunpack.c.l.s4 1983009808
        %v6381 = vunpack.c.0.s8 %v6380
        %v6382 = vlaneseq
        %v6383 = vshrl.u32 %v6382, 7
        %v6384 = vsub.s32 %v6381, %v6383
        %v6385 = vrot.slane %v6371, %v6384
        %v6386 = vcombine.low %v6330, %v6346
        %v6387 = vcombine.high %v6330, %v6346
        %v6389 = vunpack.c.l.s4 1934713408
        %v6390 = vunpack.c.0.s8 %v6389
        %v6391 = vlaneseq
        %v6392 = vshrl.u32 %v6391, 7
        %v6393 = vsub.s32 %v6390, %v6392
        %v6394 = vrot.slane %v6386, %v6393
        %v6396 = vunpack.c.l.s4 1934713408
        %v6397 = vunpack.c.0.s8 %v6396
        %v6398 = vlaneseq
        %v6399 = vshrl.u32 %v6398, 7
        %v6400 = vsub.s32 %v6397, %v6399
        %v6401 = vrot.slane %v6387, %v6400
        %v6402 = vcombine.low %v6337, %v6353
        %v6403 = vcombine.high %v6337, %v6353
        %v6405 = vunpack.c.l.s4 1934713408
        %v6406 = vunpack.c.0.s8 %v6405
        %v6407 = vlaneseq
        %v6408 = vshrl.u32 %v6407, 7
        %v6409 = vsub.s32 %v6406, %v6408
        %v6410 = vrot.slane %v6402, %v6409
        %v6412 = vunpack.c.l.s4 1934713408
        %v6413 = vunpack.c.0.s8 %v6412
        %v6414 = vlaneseq
        %v6415 = vshrl.u32 %v6414, 7
        %v6416 = vsub.s32 %v6413, %v6415
        %v6417 = vrot.slane %v6403, %v6416
        %v6418 = vcombine.low %v6362, %v6378
        %v6419 = vcombine.high %v6362, %v6378
        %v6421 = vunpack.c.l.s4 1934713408
        %v6422 = vunpack.c.0.s8 %v6421
        %v6423 = vlaneseq
        %v6424 = vshrl.u32 %v6423, 7
        %v6425 = vsub.s32 %v6422, %v6424
        %v6426 = vrot.slane %v6418, %v6425
        %v6428 = vunpack.c.l.s4 1934713408
        %v6429 = vunpack.c.0.s8 %v6428
        %v6430 = vlaneseq
        %v6431 = vshrl.u32 %v6430, 7
        %v6432 = vsub.s32 %v6429, %v6431
        %v6433 = vrot.slane %v6419, %v6432
        %v6434 = vcombine.low %v6369, %v6385
        %v6435 = vcombine.high %v6369, %v6385
        %v6437 = vunpack.c.l.s4 1934713408
        %v6438 = vunpack.c.0.s8 %v6437
        %v6439 = vlaneseq
        %v6440 = vshrl.u32 %v6439, 7
        %v6441 = vsub.s32 %v6438, %v6440
        %v6442 = vrot.slane %v6434, %v6441
        %v6444 = vunpack.c.l.s4 1934713408
        %v6445 = vunpack.c.0.s8 %v6444
        %v6446 = vlaneseq
        %v6447 = vshrl.u32 %v6446, 7
        %v6448 = vsub.s32 %v6445, %v6447
        %v6449 = vrot.slane %v6435, %v6448
        %v6450 = vcombine.low %v6394, %v6426
        %v6451 = vcombine.high %v6394, %v6426
        %v6452 = vcombine.low %v6401, %v6433
        %v6453 = vcombine.high %v6401, %v6433
        %v6454 = vcombine.low %v6410, %v6442
        %v6455 = vcombine.high %v6410, %v6442
        %v6456 = vcombine.low %v6417, %v6449
        %v6457 = vcombine.high %v6417, %v6449
        %v6458 = vcombine.low %v3498, %v3500
        %v6459 = vcombine.high %v3498, %v3500
        %v6461 = vunpack.c.l.s4 1983009808
        %v6462 = vunpack.c.0.s8 %v6461
        %v6463 = vlaneseq
        %v6464 = vshrl.u32 %v6463, 7
        %v6465 = vsub.s32 %v6462, %v6464
        %v6466 = vrot.slane %v6458, %v6465
        %v6468 = vunpack.c.l.s4 1983009808
        %v6469 = vunpack.c.0.s8 %v6468
        %v6470 = vlaneseq
        %v6471 = vshrl.u32 %v6470, 7
        %v6472 = vsub.s32 %v6469, %v6471
        %v6473 = vrot.slane %v6459, %v6472
        %v6474 = vcombine.low %v3499, %v3501
        %v6475 = vcombine.high %v3499, %v3501
        %v6477 = vunpack.c.l.s4 1983009808
        %v6478 = vunpack.c.0.s8 %v6477
        %v6479 = vlaneseq
        %v6480 = vshrl.u32 %v6479, 7
        %v6481 = vsub.s32 %v6478, %v6480
        %v6482 = vrot.slane %v6474, %v6481
        %v6484 = vunpack.c.l.s4 1983009808
        %v6485 = vunpack.c.0.s8 %v6484
        %v6486 = vlaneseq
        %v6487 = vshrl.u32 %v6486, 7
        %v6488 = vsub.s32 %v6485, %v6487
        %v6489 = vrot.slane %v6475, %v6488
        %v6490 = vcombine.low %v3502, %v3504
        %v6491 = vcombine.high %v3502, %v3504
        %v6493 = vunpack.c.l.s4 1983009808
        %v6494 = vunpack.c.0.s8 %v6493
        %v6495 = vlaneseq
        %v6496 = vshrl.u32 %v6495, 7
        %v6497 = vsub.s32 %v6494, %v6496
        %v6498 = vrot.slane %v6490, %v6497
        %v6500 = vunpack.c.l.s4 1983009808
        %v6501 = vunpack.c.0.s8 %v6500
        %v6502 = vlaneseq
        %v6503 = vshrl.u32 %v6502, 7
        %v6504 = vsub.s32 %v6501, %v6503
        %v6505 = vrot.slane %v6491, %v6504
        %v6506 = vcombine.low %v3503, %v3505
        %v6507 = vcombine.high %v3503, %v3505
        %v6509 = vunpack.c.l.s4 1983009808
        %v6510 = vunpack.c.0.s8 %v6509
        %v6511 = vlaneseq
        %v6512 = vshrl.u32 %v6511, 7
        %v6513 = vsub.s32 %v6510, %v6512
        %v6514 = vrot.slane %v6506, %v6513
        %v6516 = vunpack.c.l.s4 1983009808
        %v6517 = vunpack.c.0.s8 %v6516
        %v6518 = vlaneseq
        %v6519 = vshrl.u32 %v6518, 7
        %v6520 = vsub.s32 %v6517, %v6519
        %v6521 = vrot.slane %v6507, %v6520
        %v6522 = vcombine.low %v6466, %v6482
        %v6523 = vcombine.high %v6466, %v6482
        %v6525 = vunpack.c.l.s4 1934713408
        %v6526 = vunpack.c.0.s8 %v6525
        %v6527 = vlaneseq
        %v6528 = vshrl.u32 %v6527, 7
        %v6529 = vsub.s32 %v6526, %v6528
        %v6530 = vrot.slane %v6522, %v6529
        %v6532 = vunpack.c.l.s4 1934713408
        %v6533 = vunpack.c.0.s8 %v6532
        %v6534 = vlaneseq
        %v6535 = vshrl.u32 %v6534, 7
        %v6536 = vsub.s32 %v6533, %v6535
        %v6537 = vrot.slane %v6523, %v6536
        %v6538 = vcombine.low %v6473, %v6489
        %v6539 = vcombine.high %v6473, %v6489
        %v6541 = vunpack.c.l.s4 1934713408
        %v6542 = vunpack.c.0.s8 %v6541
        %v6543 = vlaneseq
        %v6544 = vshrl.u32 %v6543, 7
        %v6545 = vsub.s32 %v6542, %v6544
        %v6546 = vrot.slane %v6538, %v6545
        %v6548 = vunpack.c.l.s4 1934713408
        %v6549 = vunpack.c.0.s8 %v6548
        %v6550 = vlaneseq
        %v6551 = vshrl.u32 %v6550, 7
        %v6552 = vsub.s32 %v6549, %v6551
        %v6553 = vrot.slane %v6539, %v6552
        %v6554 = vcombine.low %v6498, %v6514
        %v6555 = vcombine.high %v6498, %v6514
        %v6557 = vunpack.c.l.s4 1934713408
        %v6558 = vunpack.c.0.s8 %v6557
        %v6559 = vlaneseq
        %v6560 = vshrl.u32 %v6559, 7
        %v6561 = vsub.s32 %v6558, %v6560
        %v6562 = vrot.slane %v6554, %v6561
        %v6564 = vunpack.c.l.s4 1934713408
        %v6565 = vunpack.c.0.s8 %v6564
        %v6566 = vlaneseq
        %v6567 = vshrl.u32 %v6566, 7
        %v6568 = vsub.s32 %v6565, %v6567
        %v6569 = vrot.slane %v6555, %v6568
        %v6570 = vcombine.low %v6505, %v6521
        %v6571 = vcombine.high %v6505, %v6521
        %v6573 = vunpack.c.l.s4 1934713408
        %v6574 = vunpack.c.0.s8 %v6573
        %v6575 = vlaneseq
        %v6576 = vshrl.u32 %v6575, 7
        %v6577 = vsub.s32 %v6574, %v6576
        %v6578 = vrot.slane %v6570, %v6577
        %v6580 = vunpack.c.l.s4 1934713408
        %v6581 = vunpack.c.0.s8 %v6580
        %v6582 = vlaneseq
        %v6583 = vshrl.u32 %v6582, 7
        %v6584 = vsub.s32 %v6581, %v6583
        %v6585 = vrot.slane %v6571, %v6584
        %v6586 = vcombine.low %v6530, %v6562
        %v6587 = vcombine.high %v6530, %v6562
        %v6588 = vcombine.low %v6537, %v6569
        %v6589 = vcombine.high %v6537, %v6569
        %v6590 = vcombine.low %v6546, %v6578
        %v6591 = vcombine.high %v6546, %v6578
        %v6592 = vcombine.low %v6553, %v6585
        %v6593 = vcombine.high %v6553, %v6585
        %v6594 = vcombine.low %v3506, %v3508
        %v6595 = vcombine.high %v3506, %v3508
        %v6597 = vunpack.c.l.s4 1983009808
        %v6598 = vunpack.c.0.s8 %v6597
        %v6599 = vlaneseq
        %v6600 = vshrl.u32 %v6599, 7
        %v6601 = vsub.s32 %v6598, %v6600
        %v6602 = vrot.slane %v6594, %v6601
        %v6604 = vunpack.c.l.s4 1983009808
        %v6605 = vunpack.c.0.s8 %v6604
        %v6606 = vlaneseq
        %v6607 = vshrl.u32 %v6606, 7
        %v6608 = vsub.s32 %v6605, %v6607
        %v6609 = vrot.slane %v6595, %v6608
        %v6610 = vcombine.low %v3507, %v3509
        %v6611 = vcombine.high %v3507, %v3509
        %v6613 = vunpack.c.l.s4 1983009808
        %v6614 = vunpack.c.0.s8 %v6613
        %v6615 = vlaneseq
        %v6616 = vshrl.u32 %v6615, 7
        %v6617 = vsub.s32 %v6614, %v6616
        %v6618 = vrot.slane %v6610, %v6617
        %v6620 = vunpack.c.l.s4 1983009808
        %v6621 = vunpack.c.0.s8 %v6620
        %v6622 = vlaneseq
        %v6623 = vshrl.u32 %v6622, 7
        %v6624 = vsub.s32 %v6621, %v6623
        %v6625 = vrot.slane %v6611, %v6624
        %v6626 = vcombine.low %v3510, %v3512
        %v6627 = vcombine.high %v3510, %v3512
        %v6629 = vunpack.c.l.s4 1983009808
        %v6630 = vunpack.c.0.s8 %v6629
        %v6631 = vlaneseq
        %v6632 = vshrl.u32 %v6631, 7
        %v6633 = vsub.s32 %v6630, %v6632
        %v6634 = vrot.slane %v6626, %v6633
        %v6636 = vunpack.c.l.s4 1983009808
        %v6637 = vunpack.c.0.s8 %v6636
        %v6638 = vlaneseq
        %v6639 = vshrl.u32 %v6638, 7
        %v6640 = vsub.s32 %v6637, %v6639
        %v6641 = vrot.slane %v6627, %v6640
        %v6642 = vcombine.low %v3511, %v3513
        %v6643 = vcombine.high %v3511, %v3513
        %v6645 = vunpack.c.l.s4 1983009808
        %v6646 = vunpack.c.0.s8 %v6645
        %v6647 = vlaneseq
        %v6648 = vshrl.u32 %v6647, 7
        %v6649 = vsub.s32 %v6646, %v6648
        %v6650 = vrot.slane %v6642, %v6649
        %v6652 = vunpack.c.l.s4 1983009808
        %v6653 = vunpack.c.0.s8 %v6652
        %v6654 = vlaneseq
        %v6655 = vshrl.u32 %v6654, 7
        %v6656 = vsub.s32 %v6653, %v6655
        %v6657 = vrot.slane %v6643, %v6656
        %v6658 = vcombine.low %v6602, %v6618
        %v6659 = vcombine.high %v6602, %v6618
        %v6661 = vunpack.c.l.s4 1934713408
        %v6662 = vunpack.c.0.s8 %v6661
        %v6663 = vlaneseq
        %v6664 = vshrl.u32 %v6663, 7
        %v6665 = vsub.s32 %v6662, %v6664
        %v6666 = vrot.slane %v6658, %v6665
        %v6668 = vunpack.c.l.s4 1934713408
        %v6669 = vunpack.c.0.s8 %v6668
        %v6670 = vlaneseq
        %v6671 = vshrl.u32 %v6670, 7
        %v6672 = vsub.s32 %v6669, %v6671
        %v6673 = vrot.slane %v6659, %v6672
        %v6674 = vcombine.low %v6609, %v6625
        %v6675 = vcombine.high %v6609, %v6625
        %v6677 = vunpack.c.l.s4 1934713408
        %v6678 = vunpack.c.0.s8 %v6677
        %v6679 = vlaneseq
        %v6680 = vshrl.u32 %v6679, 7
        %v6681 = vsub.s32 %v6678, %v6680
        %v6682 = vrot.slane %v6674, %v6681
        %v6684 = vunpack.c.l.s4 1934713408
        %v6685 = vunpack.c.0.s8 %v6684
        %v6686 = vlaneseq
        %v6687 = vshrl.u32 %v6686, 7
        %v6688 = vsub.s32 %v6685, %v6687
        %v6689 = vrot.slane %v6675, %v6688
        %v6690 = vcombine.low %v6634, %v6650
        %v6691 = vcombine.high %v6634, %v6650
        %v6693 = vunpack.c.l.s4 1934713408
        %v6694 = vunpack.c.0.s8 %v6693
        %v6695 = vlaneseq
        %v6696 = vshrl.u32 %v6695, 7
        %v6697 = vsub.s32 %v6694, %v6696
        %v6698 = vrot.slane %v6690, %v6697
        %v6700 = vunpack.c.l.s4 1934713408
        %v6701 = vunpack.c.0.s8 %v6700
        %v6702 = vlaneseq
        %v6703 = vshrl.u32 %v6702, 7
        %v6704 = vsub.s32 %v6701, %v6703
        %v6705 = vrot.slane %v6691, %v6704
        %v6706 = vcombine.low %v6641, %v6657
        %v6707 = vcombine.high %v6641, %v6657
        %v6709 = vunpack.c.l.s4 1934713408
        %v6710 = vunpack.c.0.s8 %v6709
        %v6711 = vlaneseq
        %v6712 = vshrl.u32 %v6711, 7
        %v6713 = vsub.s32 %v6710, %v6712
        %v6714 = vrot.slane %v6706, %v6713
        %v6716 = vunpack.c.l.s4 1934713408
        %v6717 = vunpack.c.0.s8 %v6716
        %v6718 = vlaneseq
        %v6719 = vshrl.u32 %v6718, 7
        %v6720 = vsub.s32 %v6717, %v6719
        %v6721 = vrot.slane %v6707, %v6720
        %v6722 = vcombine.low %v6666, %v6698
        %v6723 = vcombine.high %v6666, %v6698
        %v6724 = vcombine.low %v6673, %v6705
        %v6725 = vcombine.high %v6673, %v6705
        %v6726 = vcombine.low %v6682, %v6714
        %v6727 = vcombine.high %v6682, %v6714
        %v6728 = vcombine.low %v6689, %v6721
        %v6729 = vcombine.high %v6689, %v6721
        %v6730 = vcombine.low %v3514, %v3516
        %v6731 = vcombine.high %v3514, %v3516
        %v6733 = vunpack.c.l.s4 1983009808
        %v6734 = vunpack.c.0.s8 %v6733
        %v6735 = vlaneseq
        %v6736 = vshrl.u32 %v6735, 7
        %v6737 = vsub.s32 %v6734, %v6736
        %v6738 = vrot.slane %v6730, %v6737
        %v6740 = vunpack.c.l.s4 1983009808
        %v6741 = vunpack.c.0.s8 %v6740
        %v6742 = vlaneseq
        %v6743 = vshrl.u32 %v6742, 7
        %v6744 = vsub.s32 %v6741, %v6743
        %v6745 = vrot.slane %v6731, %v6744
        %v6746 = vcombine.low %v3515, %v3517
        %v6747 = vcombine.high %v3515, %v3517
        %v6749 = vunpack.c.l.s4 1983009808
        %v6750 = vunpack.c.0.s8 %v6749
        %v6751 = vlaneseq
        %v6752 = vshrl.u32 %v6751, 7
        %v6753 = vsub.s32 %v6750, %v6752
        %v6754 = vrot.slane %v6746, %v6753
        %v6756 = vunpack.c.l.s4 1983009808
        %v6757 = vunpack.c.0.s8 %v6756
        %v6758 = vlaneseq
        %v6759 = vshrl.u32 %v6758, 7
        %v6760 = vsub.s32 %v6757, %v6759
        %v6761 = vrot.slane %v6747, %v6760
        %v6762 = vcombine.low %v3518, %v3520
        %v6763 = vcombine.high %v3518, %v3520
        %v6765 = vunpack.c.l.s4 1983009808
        %v6766 = vunpack.c.0.s8 %v6765
        %v6767 = vlaneseq
        %v6768 = vshrl.u32 %v6767, 7
        %v6769 = vsub.s32 %v6766, %v6768
        %v6770 = vrot.slane %v6762, %v6769
        %v6772 = vunpack.c.l.s4 1983009808
        %v6773 = vunpack.c.0.s8 %v6772
        %v6774 = vlaneseq
        %v6775 = vshrl.u32 %v6774, 7
        %v6776 = vsub.s32 %v6773, %v6775
        %v6777 = vrot.slane %v6763, %v6776
        %v6778 = vcombine.low %v3519, %v3521
        %v6779 = vcombine.high %v3519, %v3521
        %v6781 = vunpack.c.l.s4 1983009808
        %v6782 = vunpack.c.0.s8 %v6781
        %v6783 = vlaneseq
        %v6784 = vshrl.u32 %v6783, 7
        %v6785 = vsub.s32 %v6782, %v6784
        %v6786 = vrot.slane %v6778, %v6785
        %v6788 = vunpack.c.l.s4 1983009808
        %v6789 = vunpack.c.0.s8 %v6788
        %v6790 = vlaneseq
        %v6791 = vshrl.u32 %v6790, 7
        %v6792 = vsub.s32 %v6789, %v6791
        %v6793 = vrot.slane %v6779, %v6792
        %v6794 = vcombine.low %v6738, %v6754
        %v6795 = vcombine.high %v6738, %v6754
        %v6797 = vunpack.c.l.s4 1934713408
        %v6798 = vunpack.c.0.s8 %v6797
        %v6799 = vlaneseq
        %v6800 = vshrl.u32 %v6799, 7
        %v6801 = vsub.s32 %v6798, %v6800
        %v6802 = vrot.slane %v6794, %v6801
        %v6804 = vunpack.c.l.s4 1934713408
        %v6805 = vunpack.c.0.s8 %v6804
        %v6806 = vlaneseq
        %v6807 = vshrl.u32 %v6806, 7
        %v6808 = vsub.s32 %v6805, %v6807
        %v6809 = vrot.slane %v6795, %v6808
        %v6810 = vcombine.low %v6745, %v6761
        %v6811 = vcombine.high %v6745, %v6761
        %v6813 = vunpack.c.l.s4 1934713408
        %v6814 = vunpack.c.0.s8 %v6813
        %v6815 = vlaneseq
        %v6816 = vshrl.u32 %v6815, 7
        %v6817 = vsub.s32 %v6814, %v6816
        %v6818 = vrot.slane %v6810, %v6817
        %v6820 = vunpack.c.l.s4 1934713408
        %v6821 = vunpack.c.0.s8 %v6820
        %v6822 = vlaneseq
        %v6823 = vshrl.u32 %v6822, 7
        %v6824 = vsub.s32 %v6821, %v6823
        %v6825 = vrot.slane %v6811, %v6824
        %v6826 = vcombine.low %v6770, %v6786
        %v6827 = vcombine.high %v6770, %v6786
        %v6829 = vunpack.c.l.s4 1934713408
        %v6830 = vunpack.c.0.s8 %v6829
        %v6831 = vlaneseq
        %v6832 = vshrl.u32 %v6831, 7
        %v6833 = vsub.s32 %v6830, %v6832
        %v6834 = vrot.slane %v6826, %v6833
        %v6836 = vunpack.c.l.s4 1934713408
        %v6837 = vunpack.c.0.s8 %v6836
        %v6838 = vlaneseq
        %v6839 = vshrl.u32 %v6838, 7
        %v6840 = vsub.s32 %v6837, %v6839
        %v6841 = vrot.slane %v6827, %v6840
        %v6842 = vcombine.low %v6777, %v6793
        %v6843 = vcombine.high %v6777, %v6793
        %v6845 = vunpack.c.l.s4 1934713408
        %v6846 = vunpack.c.0.s8 %v6845
        %v6847 = vlaneseq
        %v6848 = vshrl.u32 %v6847, 7
        %v6849 = vsub.s32 %v6846, %v6848
        %v6850 = vrot.slane %v6842, %v6849
        %v6852 = vunpack.c.l.s4 1934713408
        %v6853 = vunpack.c.0.s8 %v6852
        %v6854 = vlaneseq
        %v6855 = vshrl.u32 %v6854, 7
        %v6856 = vsub.s32 %v6853, %v6855
        %v6857 = vrot.slane %v6843, %v6856
        %v6858 = vcombine.low %v6802, %v6834
        %v6859 = vcombine.high %v6802, %v6834
        %v6860 = vcombine.low %v6809, %v6841
        %v6861 = vcombine.high %v6809, %v6841
        %v6862 = vcombine.low %v6818, %v6850
        %v6863 = vcombine.high %v6818, %v6850
        %v6864 = vcombine.low %v6825, %v6857
        %v6865 = vcombine.high %v6825, %v6857
        %v6866 = vcombine.low %v3522, %v3524
        %v6867 = vcombine.high %v3522, %v3524
        %v6869 = vunpack.c.l.s4 1983009808
        %v6870 = vunpack.c.0.s8 %v6869
        %v6871 = vlaneseq
        %v6872 = vshrl.u32 %v6871, 7
        %v6873 = vsub.s32 %v6870, %v6872
        %v6874 = vrot.slane %v6866, %v6873
        %v6876 = vunpack.c.l.s4 1983009808
        %v6877 = vunpack.c.0.s8 %v6876
        %v6878 = vlaneseq
        %v6879 = vshrl.u32 %v6878, 7
        %v6880 = vsub.s32 %v6877, %v6879
        %v6881 = vrot.slane %v6867, %v6880
        %v6882 = vcombine.low %v3523, %v3525
        %v6883 = vcombine.high %v3523, %v3525
        %v6885 = vunpack.c.l.s4 1983009808
        %v6886 = vunpack.c.0.s8 %v6885
        %v6887 = vlaneseq
        %v6888 = vshrl.u32 %v6887, 7
        %v6889 = vsub.s32 %v6886, %v6888
        %v6890 = vrot.slane %v6882, %v6889
        %v6892 = vunpack.c.l.s4 1983009808
        %v6893 = vunpack.c.0.s8 %v6892
        %v6894 = vlaneseq
        %v6895 = vshrl.u32 %v6894, 7
        %v6896 = vsub.s32 %v6893, %v6895
        %v6897 = vrot.slane %v6883, %v6896
        %v6898 = vcombine.low %v3526, %v3528
        %v6899 = vcombine.high %v3526, %v3528
        %v6901 = vunpack.c.l.s4 1983009808
        %v6902 = vunpack.c.0.s8 %v6901
        %v6903 = vlaneseq
        %v6904 = vshrl.u32 %v6903, 7
        %v6905 = vsub.s32 %v6902, %v6904
        %v6906 = vrot.slane %v6898, %v6905
        %v6908 = vunpack.c.l.s4 1983009808
        %v6909 = vunpack.c.0.s8 %v6908
        %v6910 = vlaneseq
        %v6911 = vshrl.u32 %v6910, 7
        %v6912 = vsub.s32 %v6909, %v6911
        %v6913 = vrot.slane %v6899, %v6912
        %v6914 = vcombine.low %v3527, %v3529
        %v6915 = vcombine.high %v3527, %v3529
        %v6917 = vunpack.c.l.s4 1983009808
        %v6918 = vunpack.c.0.s8 %v6917
        %v6919 = vlaneseq
        %v6920 = vshrl.u32 %v6919, 7
        %v6921 = vsub.s32 %v6918, %v6920
        %v6922 = vrot.slane %v6914, %v6921
        %v6924 = vunpack.c.l.s4 1983009808
        %v6925 = vunpack.c.0.s8 %v6924
        %v6926 = vlaneseq
        %v6927 = vshrl.u32 %v6926, 7
        %v6928 = vsub.s32 %v6925, %v6927
        %v6929 = vrot.slane %v6915, %v6928
        %v6930 = vcombine.low %v6874, %v6890
        %v6931 = vcombine.high %v6874, %v6890
        %v6933 = vunpack.c.l.s4 1934713408
        %v6934 = vunpack.c.0.s8 %v6933
        %v6935 = vlaneseq
        %v6936 = vshrl.u32 %v6935, 7
        %v6937 = vsub.s32 %v6934, %v6936
        %v6938 = vrot.slane %v6930, %v6937
        %v6940 = vunpack.c.l.s4 1934713408
        %v6941 = vunpack.c.0.s8 %v6940
        %v6942 = vlaneseq
        %v6943 = vshrl.u32 %v6942, 7
        %v6944 = vsub.s32 %v6941, %v6943
        %v6945 = vrot.slane %v6931, %v6944
        %v6946 = vcombine.low %v6881, %v6897
        %v6947 = vcombine.high %v6881, %v6897
        %v6949 = vunpack.c.l.s4 1934713408
        %v6950 = vunpack.c.0.s8 %v6949
        %v6951 = vlaneseq
        %v6952 = vshrl.u32 %v6951, 7
        %v6953 = vsub.s32 %v6950, %v6952
        %v6954 = vrot.slane %v6946, %v6953
        %v6956 = vunpack.c.l.s4 1934713408
        %v6957 = vunpack.c.0.s8 %v6956
        %v6958 = vlaneseq
        %v6959 = vshrl.u32 %v6958, 7
        %v6960 = vsub.s32 %v6957, %v6959
        %v6961 = vrot.slane %v6947, %v6960
        %v6962 = vcombine.low %v6906, %v6922
        %v6963 = vcombine.high %v6906, %v6922
        %v6965 = vunpack.c.l.s4 1934713408
        %v6966 = vunpack.c.0.s8 %v6965
        %v6967 = vlaneseq
        %v6968 = vshrl.u32 %v6967, 7
        %v6969 = vsub.s32 %v6966, %v6968
        %v6970 = vrot.slane %v6962, %v6969
        %v6972 = vunpack.c.l.s4 1934713408
        %v6973 = vunpack.c.0.s8 %v6972
        %v6974 = vlaneseq
        %v6975 = vshrl.u32 %v6974, 7
        %v6976 = vsub.s32 %v6973, %v6975
        %v6977 = vrot.slane %v6963, %v6976
        %v6978 = vcombine.low %v6913, %v6929
        %v6979 = vcombine.high %v6913, %v6929
        %v6981 = vunpack.c.l.s4 1934713408
        %v6982 = vunpack.c.0.s8 %v6981
        %v6983 = vlaneseq
        %v6984 = vshrl.u32 %v6983, 7
        %v6985 = vsub.s32 %v6982, %v6984
        %v6986 = vrot.slane %v6978, %v6985
        %v6988 = vunpack.c.l.s4 1934713408
        %v6989 = vunpack.c.0.s8 %v6988
        %v6990 = vlaneseq
        %v6991 = vshrl.u32 %v6990, 7
        %v6992 = vsub.s32 %v6989, %v6991
        %v6993 = vrot.slane %v6979, %v6992
        %v6994 = vcombine.low %v6938, %v6970
        %v6995 = vcombine.high %v6938, %v6970
        %v6996 = vcombine.low %v6945, %v6977
        %v6997 = vcombine.high %v6945, %v6977
        %v6998 = vcombine.low %v6954, %v6986
        %v6999 = vcombine.high %v6954, %v6986
        %v7000 = vcombine.low %v6961, %v6993
        %v7001 = vcombine.high %v6961, %v6993
        %v7002 = vcombine.low %v3530, %v3532
        %v7003 = vcombine.high %v3530, %v3532
        %v7005 = vunpack.c.l.s4 1983009808
        %v7006 = vunpack.c.0.s8 %v7005
        %v7007 = vlaneseq
        %v7008 = vshrl.u32 %v7007, 7
        %v7009 = vsub.s32 %v7006, %v7008
        %v7010 = vrot.slane %v7002, %v7009
        %v7012 = vunpack.c.l.s4 1983009808
        %v7013 = vunpack.c.0.s8 %v7012
        %v7014 = vlaneseq
        %v7015 = vshrl.u32 %v7014, 7
        %v7016 = vsub.s32 %v7013, %v7015
        %v7017 = vrot.slane %v7003, %v7016
        %v7018 = vcombine.low %v3531, %v3533
        %v7019 = vcombine.high %v3531, %v3533
        %v7021 = vunpack.c.l.s4 1983009808
        %v7022 = vunpack.c.0.s8 %v7021
        %v7023 = vlaneseq
        %v7024 = vshrl.u32 %v7023, 7
        %v7025 = vsub.s32 %v7022, %v7024
        %v7026 = vrot.slane %v7018, %v7025
        %v7028 = vunpack.c.l.s4 1983009808
        %v7029 = vunpack.c.0.s8 %v7028
        %v7030 = vlaneseq
        %v7031 = vshrl.u32 %v7030, 7
        %v7032 = vsub.s32 %v7029, %v7031
        %v7033 = vrot.slane %v7019, %v7032
        %v7034 = vcombine.low %v3534, %v3536
        %v7035 = vcombine.high %v3534, %v3536
        %v7037 = vunpack.c.l.s4 1983009808
        %v7038 = vunpack.c.0.s8 %v7037
        %v7039 = vlaneseq
        %v7040 = vshrl.u32 %v7039, 7
        %v7041 = vsub.s32 %v7038, %v7040
        %v7042 = vrot.slane %v7034, %v7041
        %v7044 = vunpack.c.l.s4 1983009808
        %v7045 = vunpack.c.0.s8 %v7044
        %v7046 = vlaneseq
        %v7047 = vshrl.u32 %v7046, 7
        %v7048 = vsub.s32 %v7045, %v7047
        %v7049 = vrot.slane %v7035, %v7048
        %v7050 = vcombine.low %v3535, %v3537
        %v7051 = vcombine.high %v3535, %v3537
        %v7053 = vunpack.c.l.s4 1983009808
        %v7054 = vunpack.c.0.s8 %v7053
        %v7055 = vlaneseq
        %v7056 = vshrl.u32 %v7055, 7
        %v7057 = vsub.s32 %v7054, %v7056
        %v7058 = vrot.slane %v7050, %v7057
        %v7060 = vunpack.c.l.s4 1983009808
        %v7061 = vunpack.c.0.s8 %v7060
        %v7062 = vlaneseq
        %v7063 = vshrl.u32 %v7062, 7
        %v7064 = vsub.s32 %v7061, %v7063
        %v7065 = vrot.slane %v7051, %v7064
        %v7066 = vcombine.low %v7010, %v7026
        %v7067 = vcombine.high %v7010, %v7026
        %v7069 = vunpack.c.l.s4 1934713408
        %v7070 = vunpack.c.0.s8 %v7069
        %v7071 = vlaneseq
        %v7072 = vshrl.u32 %v7071, 7
        %v7073 = vsub.s32 %v7070, %v7072
        %v7074 = vrot.slane %v7066, %v7073
        %v7076 = vunpack.c.l.s4 1934713408
        %v7077 = vunpack.c.0.s8 %v7076
        %v7078 = vlaneseq
        %v7079 = vshrl.u32 %v7078, 7
        %v7080 = vsub.s32 %v7077, %v7079
        %v7081 = vrot.slane %v7067, %v7080
        %v7082 = vcombine.low %v7017, %v7033
        %v7083 = vcombine.high %v7017, %v7033
        %v7085 = vunpack.c.l.s4 1934713408
        %v7086 = vunpack.c.0.s8 %v7085
        %v7087 = vlaneseq
        %v7088 = vshrl.u32 %v7087, 7
        %v7089 = vsub.s32 %v7086, %v7088
        %v7090 = vrot.slane %v7082, %v7089
        %v7092 = vunpack.c.l.s4 1934713408
        %v7093 = vunpack.c.0.s8 %v7092
        %v7094 = vlaneseq
        %v7095 = vshrl.u32 %v7094, 7
        %v7096 = vsub.s32 %v7093, %v7095
        %v7097 = vrot.slane %v7083, %v7096
        %v7098 = vcombine.low %v7042, %v7058
        %v7099 = vcombine.high %v7042, %v7058
        %v7101 = vunpack.c.l.s4 1934713408
        %v7102 = vunpack.c.0.s8 %v7101
        %v7103 = vlaneseq
        %v7104 = vshrl.u32 %v7103, 7
        %v7105 = vsub.s32 %v7102, %v7104
        %v7106 = vrot.slane %v7098, %v7105
        %v7108 = vunpack.c.l.s4 1934713408
        %v7109 = vunpack.c.0.s8 %v7108
        %v7110 = vlaneseq
        %v7111 = vshrl.u32 %v7110, 7
        %v7112 = vsub.s32 %v7109, %v7111
        %v7113 = vrot.slane %v7099, %v7112
        %v7114 = vcombine.low %v7049, %v7065
        %v7115 = vcombine.high %v7049, %v7065
        %v7117 = vunpack.c.l.s4 1934713408
        %v7118 = vunpack.c.0.s8 %v7117
        %v7119 = vlaneseq
        %v7120 = vshrl.u32 %v7119, 7
        %v7121 = vsub.s32 %v7118, %v7120
        %v7122 = vrot.slane %v7114, %v7121
        %v7124 = vunpack.c.l.s4 1934713408
        %v7125 = vunpack.c.0.s8 %v7124
        %v7126 = vlaneseq
        %v7127 = vshrl.u32 %v7126, 7
        %v7128 = vsub.s32 %v7125, %v7127
        %v7129 = vrot.slane %v7115, %v7128
        %v7130 = vcombine.low %v7074, %v7106
        %v7131 = vcombine.high %v7074, %v7106
        %v7132 = vcombine.low %v7081, %v7113
        %v7133 = vcombine.high %v7081, %v7113
        %v7134 = vcombine.low %v7090, %v7122
        %v7135 = vcombine.high %v7090, %v7122
        %v7136 = vcombine.low %v7097, %v7129
        %v7137 = vcombine.high %v7097, %v7129
        %v7138 = vcombine.low %v3538, %v3540
        %v7139 = vcombine.high %v3538, %v3540
        %v7141 = vunpack.c.l.s4 1983009808
        %v7142 = vunpack.c.0.s8 %v7141
        %v7143 = vlaneseq
        %v7144 = vshrl.u32 %v7143, 7
        %v7145 = vsub.s32 %v7142, %v7144
        %v7146 = vrot.slane %v7138, %v7145
        %v7148 = vunpack.c.l.s4 1983009808
        %v7149 = vunpack.c.0.s8 %v7148
        %v7150 = vlaneseq
        %v7151 = vshrl.u32 %v7150, 7
        %v7152 = vsub.s32 %v7149, %v7151
        %v7153 = vrot.slane %v7139, %v7152
        %v7154 = vcombine.low %v3539, %v3541
        %v7155 = vcombine.high %v3539, %v3541
        %v7157 = vunpack.c.l.s4 1983009808
        %v7158 = vunpack.c.0.s8 %v7157
        %v7159 = vlaneseq
        %v7160 = vshrl.u32 %v7159, 7
        %v7161 = vsub.s32 %v7158, %v7160
        %v7162 = vrot.slane %v7154, %v7161
        %v7164 = vunpack.c.l.s4 1983009808
        %v7165 = vunpack.c.0.s8 %v7164
        %v7166 = vlaneseq
        %v7167 = vshrl.u32 %v7166, 7
        %v7168 = vsub.s32 %v7165, %v7167
        %v7169 = vrot.slane %v7155, %v7168
        %v7170 = vcombine.low %v3542, %v3544
        %v7171 = vcombine.high %v3542, %v3544
        %v7173 = vunpack.c.l.s4 1983009808
        %v7174 = vunpack.c.0.s8 %v7173
        %v7175 = vlaneseq
        %v7176 = vshrl.u32 %v7175, 7
        %v7177 = vsub.s32 %v7174, %v7176
        %v7178 = vrot.slane %v7170, %v7177
        %v7180 = vunpack.c.l.s4 1983009808
        %v7181 = vunpack.c.0.s8 %v7180
        %v7182 = vlaneseq
        %v7183 = vshrl.u32 %v7182, 7
        %v7184 = vsub.s32 %v7181, %v7183
        %v7185 = vrot.slane %v7171, %v7184
        %v7186 = vcombine.low %v3543, %v3545
        %v7187 = vcombine.high %v3543, %v3545
        %v7189 = vunpack.c.l.s4 1983009808
        %v7190 = vunpack.c.0.s8 %v7189
        %v7191 = vlaneseq
        %v7192 = vshrl.u32 %v7191, 7
        %v7193 = vsub.s32 %v7190, %v7192
        %v7194 = vrot.slane %v7186, %v7193
        %v7196 = vunpack.c.l.s4 1983009808
        %v7197 = vunpack.c.0.s8 %v7196
        %v7198 = vlaneseq
        %v7199 = vshrl.u32 %v7198, 7
        %v7200 = vsub.s32 %v7197, %v7199
        %v7201 = vrot.slane %v7187, %v7200
        %v7202 = vcombine.low %v7146, %v7162
        %v7203 = vcombine.high %v7146, %v7162
        %v7205 = vunpack.c.l.s4 1934713408
        %v7206 = vunpack.c.0.s8 %v7205
        %v7207 = vlaneseq
        %v7208 = vshrl.u32 %v7207, 7
        %v7209 = vsub.s32 %v7206, %v7208
        %v7210 = vrot.slane %v7202, %v7209
        %v7212 = vunpack.c.l.s4 1934713408
        %v7213 = vunpack.c.0.s8 %v7212
        %v7214 = vlaneseq
        %v7215 = vshrl.u32 %v7214, 7
        %v7216 = vsub.s32 %v7213, %v7215
        %v7217 = vrot.slane %v7203, %v7216
        %v7218 = vcombine.low %v7153, %v7169
        %v7219 = vcombine.high %v7153, %v7169
        %v7221 = vunpack.c.l.s4 1934713408
        %v7222 = vunpack.c.0.s8 %v7221
        %v7223 = vlaneseq
        %v7224 = vshrl.u32 %v7223, 7
        %v7225 = vsub.s32 %v7222, %v7224
        %v7226 = vrot.slane %v7218, %v7225
        %v7228 = vunpack.c.l.s4 1934713408
        %v7229 = vunpack.c.0.s8 %v7228
        %v7230 = vlaneseq
        %v7231 = vshrl.u32 %v7230, 7
        %v7232 = vsub.s32 %v7229, %v7231
        %v7233 = vrot.slane %v7219, %v7232
        %v7234 = vcombine.low %v7178, %v7194
        %v7235 = vcombine.high %v7178, %v7194
        %v7237 = vunpack.c.l.s4 1934713408
        %v7238 = vunpack.c.0.s8 %v7237
        %v7239 = vlaneseq
        %v7240 = vshrl.u32 %v7239, 7
        %v7241 = vsub.s32 %v7238, %v7240
        %v7242 = vrot.slane %v7234, %v7241
        %v7244 = vunpack.c.l.s4 1934713408
        %v7245 = vunpack.c.0.s8 %v7244
        %v7246 = vlaneseq
        %v7247 = vshrl.u32 %v7246, 7
        %v7248 = vsub.s32 %v7245, %v7247
        %v7249 = vrot.slane %v7235, %v7248
        %v7250 = vcombine.low %v7185, %v7201
        %v7251 = vcombine.high %v7185, %v7201
        %v7253 = vunpack.c.l.s4 1934713408
        %v7254 = vunpack.c.0.s8 %v7253
        %v7255 = vlaneseq
        %v7256 = vshrl.u32 %v7255, 7
        %v7257 = vsub.s32 %v7254, %v7256
        %v7258 = vrot.slane %v7250, %v7257
        %v7260 = vunpack.c.l.s4 1934713408
        %v7261 = vunpack.c.0.s8 %v7260
        %v7262 = vlaneseq
        %v7263 = vshrl.u32 %v7262, 7
        %v7264 = vsub.s32 %v7261, %v7263
        %v7265 = vrot.slane %v7251, %v7264
        %v7266 = vcombine.low %v7210, %v7242
        %v7267 = vcombine.high %v7210, %v7242
        %v7268 = vcombine.low %v7217, %v7249
        %v7269 = vcombine.high %v7217, %v7249
        %v7270 = vcombine.low %v7226, %v7258
        %v7271 = vcombine.high %v7226, %v7258
        %v7272 = vcombine.low %v7233, %v7265
        %v7273 = vcombine.high %v7233, %v7265
        %v7274 = vcombine.low %v3546, %v3548
        %v7275 = vcombine.high %v3546, %v3548
        %v7277 = vunpack.c.l.s4 1983009808
        %v7278 = vunpack.c.0.s8 %v7277
        %v7279 = vlaneseq
        %v7280 = vshrl.u32 %v7279, 7
        %v7281 = vsub.s32 %v7278, %v7280
        %v7282 = vrot.slane %v7274, %v7281
        %v7284 = vunpack.c.l.s4 1983009808
        %v7285 = vunpack.c.0.s8 %v7284
        %v7286 = vlaneseq
        %v7287 = vshrl.u32 %v7286, 7
        %v7288 = vsub.s32 %v7285, %v7287
        %v7289 = vrot.slane %v7275, %v7288
        %v7290 = vcombine.low %v3547, %v3549
        %v7291 = vcombine.high %v3547, %v3549
        %v7293 = vunpack.c.l.s4 1983009808
        %v7294 = vunpack.c.0.s8 %v7293
        %v7295 = vlaneseq
        %v7296 = vshrl.u32 %v7295, 7
        %v7297 = vsub.s32 %v7294, %v7296
        %v7298 = vrot.slane %v7290, %v7297
        %v7300 = vunpack.c.l.s4 1983009808
        %v7301 = vunpack.c.0.s8 %v7300
        %v7302 = vlaneseq
        %v7303 = vshrl.u32 %v7302, 7
        %v7304 = vsub.s32 %v7301, %v7303
        %v7305 = vrot.slane %v7291, %v7304
        %v7306 = vcombine.low %v3550, %v3552
        %v7307 = vcombine.high %v3550, %v3552
        %v7309 = vunpack.c.l.s4 1983009808
        %v7310 = vunpack.c.0.s8 %v7309
        %v7311 = vlaneseq
        %v7312 = vshrl.u32 %v7311, 7
        %v7313 = vsub.s32 %v7310, %v7312
        %v7314 = vrot.slane %v7306, %v7313
        %v7316 = vunpack.c.l.s4 1983009808
        %v7317 = vunpack.c.0.s8 %v7316
        %v7318 = vlaneseq
        %v7319 = vshrl.u32 %v7318, 7
        %v7320 = vsub.s32 %v7317, %v7319
        %v7321 = vrot.slane %v7307, %v7320
        %v7322 = vcombine.low %v3551, %v3553
        %v7323 = vcombine.high %v3551, %v3553
        %v7325 = vunpack.c.l.s4 1983009808
        %v7326 = vunpack.c.0.s8 %v7325
        %v7327 = vlaneseq
        %v7328 = vshrl.u32 %v7327, 7
        %v7329 = vsub.s32 %v7326, %v7328
        %v7330 = vrot.slane %v7322, %v7329
        %v7332 = vunpack.c.l.s4 1983009808
        %v7333 = vunpack.c.0.s8 %v7332
        %v7334 = vlaneseq
        %v7335 = vshrl.u32 %v7334, 7
        %v7336 = vsub.s32 %v7333, %v7335
        %v7337 = vrot.slane %v7323, %v7336
        %v7338 = vcombine.low %v7282, %v7298
        %v7339 = vcombine.high %v7282, %v7298
        %v7341 = vunpack.c.l.s4 1934713408
        %v7342 = vunpack.c.0.s8 %v7341
        %v7343 = vlaneseq
        %v7344 = vshrl.u32 %v7343, 7
        %v7345 = vsub.s32 %v7342, %v7344
        %v7346 = vrot.slane %v7338, %v7345
        %v7348 = vunpack.c.l.s4 1934713408
        %v7349 = vunpack.c.0.s8 %v7348
        %v7350 = vlaneseq
        %v7351 = vshrl.u32 %v7350, 7
        %v7352 = vsub.s32 %v7349, %v7351
        %v7353 = vrot.slane %v7339, %v7352
        %v7354 = vcombine.low %v7289, %v7305
        %v7355 = vcombine.high %v7289, %v7305
        %v7357 = vunpack.c.l.s4 1934713408
        %v7358 = vunpack.c.0.s8 %v7357
        %v7359 = vlaneseq
        %v7360 = vshrl.u32 %v7359, 7
        %v7361 = vsub.s32 %v7358, %v7360
        %v7362 = vrot.slane %v7354, %v7361
        %v7364 = vunpack.c.l.s4 1934713408
        %v7365 = vunpack.c.0.s8 %v7364
        %v7366 = vlaneseq
        %v7367 = vshrl.u32 %v7366, 7
        %v7368 = vsub.s32 %v7365, %v7367
        %v7369 = vrot.slane %v7355, %v7368
        %v7370 = vcombine.low %v7314, %v7330
        %v7371 = vcombine.high %v7314, %v7330
        %v7373 = vunpack.c.l.s4 1934713408
        %v7374 = vunpack.c.0.s8 %v7373
        %v7375 = vlaneseq
        %v7376 = vshrl.u32 %v7375, 7
        %v7377 = vsub.s32 %v7374, %v7376
        %v7378 = vrot.slane %v7370, %v7377
        %v7380 = vunpack.c.l.s4 1934713408
        %v7381 = vunpack.c.0.s8 %v7380
        %v7382 = vlaneseq
        %v7383 = vshrl.u32 %v7382, 7
        %v7384 = vsub.s32 %v7381, %v7383
        %v7385 = vrot.slane %v7371, %v7384
        %v7386 = vcombine.low %v7321, %v7337
        %v7387 = vcombine.high %v7321, %v7337
        %v7389 = vunpack.c.l.s4 1934713408
        %v7390 = vunpack.c.0.s8 %v7389
        %v7391 = vlaneseq
        %v7392 = vshrl.u32 %v7391, 7
        %v7393 = vsub.s32 %v7390, %v7392
        %v7394 = vrot.slane %v7386, %v7393
        %v7396 = vunpack.c.l.s4 1934713408
        %v7397 = vunpack.c.0.s8 %v7396
        %v7398 = vlaneseq
        %v7399 = vshrl.u32 %v7398, 7
        %v7400 = vsub.s32 %v7397, %v7399
        %v7401 = vrot.slane %v7387, %v7400
        %v7402 = vcombine.low %v7346, %v7378
        %v7403 = vcombine.high %v7346, %v7378
        %v7404 = vcombine.low %v7353, %v7385
        %v7405 = vcombine.high %v7353, %v7385
        %v7406 = vcombine.low %v7362, %v7394
        %v7407 = vcombine.high %v7362, %v7394
        %v7408 = vcombine.low %v7369, %v7401
        %v7409 = vcombine.high %v7369, %v7401
        %v7410 = vcombine.low %v3554, %v3556
        %v7411 = vcombine.high %v3554, %v3556
        %v7413 = vunpack.c.l.s4 1983009808
        %v7414 = vunpack.c.0.s8 %v7413
        %v7415 = vlaneseq
        %v7416 = vshrl.u32 %v7415, 7
        %v7417 = vsub.s32 %v7414, %v7416
        %v7418 = vrot.slane %v7410, %v7417
        %v7420 = vunpack.c.l.s4 1983009808
        %v7421 = vunpack.c.0.s8 %v7420
        %v7422 = vlaneseq
        %v7423 = vshrl.u32 %v7422, 7
        %v7424 = vsub.s32 %v7421, %v7423
        %v7425 = vrot.slane %v7411, %v7424
        %v7426 = vcombine.low %v3555, %v3557
        %v7427 = vcombine.high %v3555, %v3557
        %v7429 = vunpack.c.l.s4 1983009808
        %v7430 = vunpack.c.0.s8 %v7429
        %v7431 = vlaneseq
        %v7432 = vshrl.u32 %v7431, 7
        %v7433 = vsub.s32 %v7430, %v7432
        %v7434 = vrot.slane %v7426, %v7433
        %v7436 = vunpack.c.l.s4 1983009808
        %v7437 = vunpack.c.0.s8 %v7436
        %v7438 = vlaneseq
        %v7439 = vshrl.u32 %v7438, 7
        %v7440 = vsub.s32 %v7437, %v7439
        %v7441 = vrot.slane %v7427, %v7440
        %v7442 = vcombine.low %v3558, %v3560
        %v7443 = vcombine.high %v3558, %v3560
        %v7445 = vunpack.c.l.s4 1983009808
        %v7446 = vunpack.c.0.s8 %v7445
        %v7447 = vlaneseq
        %v7448 = vshrl.u32 %v7447, 7
        %v7449 = vsub.s32 %v7446, %v7448
        %v7450 = vrot.slane %v7442, %v7449
        %v7452 = vunpack.c.l.s4 1983009808
        %v7453 = vunpack.c.0.s8 %v7452
        %v7454 = vlaneseq
        %v7455 = vshrl.u32 %v7454, 7
        %v7456 = vsub.s32 %v7453, %v7455
        %v7457 = vrot.slane %v7443, %v7456
        %v7458 = vcombine.low %v3559, %v3561
        %v7459 = vcombine.high %v3559, %v3561
        %v7461 = vunpack.c.l.s4 1983009808
        %v7462 = vunpack.c.0.s8 %v7461
        %v7463 = vlaneseq
        %v7464 = vshrl.u32 %v7463, 7
        %v7465 = vsub.s32 %v7462, %v7464
        %v7466 = vrot.slane %v7458, %v7465
        %v7468 = vunpack.c.l.s4 1983009808
        %v7469 = vunpack.c.0.s8 %v7468
        %v7470 = vlaneseq
        %v7471 = vshrl.u32 %v7470, 7
        %v7472 = vsub.s32 %v7469, %v7471
        %v7473 = vrot.slane %v7459, %v7472
        %v7474 = vcombine.low %v7418, %v7434
        %v7475 = vcombine.high %v7418, %v7434
        %v7477 = vunpack.c.l.s4 1934713408
        %v7478 = vunpack.c.0.s8 %v7477
        %v7479 = vlaneseq
        %v7480 = vshrl.u32 %v7479, 7
        %v7481 = vsub.s32 %v7478, %v7480
        %v7482 = vrot.slane %v7474, %v7481
        %v7484 = vunpack.c.l.s4 1934713408
        %v7485 = vunpack.c.0.s8 %v7484
        %v7486 = vlaneseq
        %v7487 = vshrl.u32 %v7486, 7
        %v7488 = vsub.s32 %v7485, %v7487
        %v7489 = vrot.slane %v7475, %v7488
        %v7490 = vcombine.low %v7425, %v7441
        %v7491 = vcombine.high %v7425, %v7441
        %v7493 = vunpack.c.l.s4 1934713408
        %v7494 = vunpack.c.0.s8 %v7493
        %v7495 = vlaneseq
        %v7496 = vshrl.u32 %v7495, 7
        %v7497 = vsub.s32 %v7494, %v7496
        %v7498 = vrot.slane %v7490, %v7497
        %v7500 = vunpack.c.l.s4 1934713408
        %v7501 = vunpack.c.0.s8 %v7500
        %v7502 = vlaneseq
        %v7503 = vshrl.u32 %v7502, 7
        %v7504 = vsub.s32 %v7501, %v7503
        %v7505 = vrot.slane %v7491, %v7504
        %v7506 = vcombine.low %v7450, %v7466
        %v7507 = vcombine.high %v7450, %v7466
        %v7509 = vunpack.c.l.s4 1934713408
        %v7510 = vunpack.c.0.s8 %v7509
        %v7511 = vlaneseq
        %v7512 = vshrl.u32 %v7511, 7
        %v7513 = vsub.s32 %v7510, %v7512
        %v7514 = vrot.slane %v7506, %v7513
        %v7516 = vunpack.c.l.s4 1934713408
        %v7517 = vunpack.c.0.s8 %v7516
        %v7518 = vlaneseq
        %v7519 = vshrl.u32 %v7518, 7
        %v7520 = vsub.s32 %v7517, %v7519
        %v7521 = vrot.slane %v7507, %v7520
        %v7522 = vcombine.low %v7457, %v7473
        %v7523 = vcombine.high %v7457, %v7473
        %v7525 = vunpack.c.l.s4 1934713408
        %v7526 = vunpack.c.0.s8 %v7525
        %v7527 = vlaneseq
        %v7528 = vshrl.u32 %v7527, 7
        %v7529 = vsub.s32 %v7526, %v7528
        %v7530 = vrot.slane %v7522, %v7529
        %v7532 = vunpack.c.l.s4 1934713408
        %v7533 = vunpack.c.0.s8 %v7532
        %v7534 = vlaneseq
        %v7535 = vshrl.u32 %v7534, 7
        %v7536 = vsub.s32 %v7533, %v7535
        %v7537 = vrot.slane %v7523, %v7536
        %v7538 = vcombine.low %v7482, %v7514
        %v7539 = vcombine.high %v7482, %v7514
        %v7540 = vcombine.low %v7489, %v7521
        %v7541 = vcombine.high %v7489, %v7521
        %v7542 = vcombine.low %v7498, %v7530
        %v7543 = vcombine.high %v7498, %v7530
        %v7544 = vcombine.low %v7505, %v7537
        %v7545 = vcombine.high %v7505, %v7537
        %v7546 = vcombine.low %v3562, %v3564
        %v7547 = vcombine.high %v3562, %v3564
        %v7549 = vunpack.c.l.s4 1983009808
        %v7550 = vunpack.c.0.s8 %v7549
        %v7551 = vlaneseq
        %v7552 = vshrl.u32 %v7551, 7
        %v7553 = vsub.s32 %v7550, %v7552
        %v7554 = vrot.slane %v7546, %v7553
        %v7556 = vunpack.c.l.s4 1983009808
        %v7557 = vunpack.c.0.s8 %v7556
        %v7558 = vlaneseq
        %v7559 = vshrl.u32 %v7558, 7
        %v7560 = vsub.s32 %v7557, %v7559
        %v7561 = vrot.slane %v7547, %v7560
        %v7562 = vcombine.low %v3563, %v3565
        %v7563 = vcombine.high %v3563, %v3565
        %v7565 = vunpack.c.l.s4 1983009808
        %v7566 = vunpack.c.0.s8 %v7565
        %v7567 = vlaneseq
        %v7568 = vshrl.u32 %v7567, 7
        %v7569 = vsub.s32 %v7566, %v7568
        %v7570 = vrot.slane %v7562, %v7569
        %v7572 = vunpack.c.l.s4 1983009808
        %v7573 = vunpack.c.0.s8 %v7572
        %v7574 = vlaneseq
        %v7575 = vshrl.u32 %v7574, 7
        %v7576 = vsub.s32 %v7573, %v7575
        %v7577 = vrot.slane %v7563, %v7576
        %v7578 = vcombine.low %v3566, %v3568
        %v7579 = vcombine.high %v3566, %v3568
        %v7581 = vunpack.c.l.s4 1983009808
        %v7582 = vunpack.c.0.s8 %v7581
        %v7583 = vlaneseq
        %v7584 = vshrl.u32 %v7583, 7
        %v7585 = vsub.s32 %v7582, %v7584
        %v7586 = vrot.slane %v7578, %v7585
        %v7588 = vunpack.c.l.s4 1983009808
        %v7589 = vunpack.c.0.s8 %v7588
        %v7590 = vlaneseq
        %v7591 = vshrl.u32 %v7590, 7
        %v7592 = vsub.s32 %v7589, %v7591
        %v7593 = vrot.slane %v7579, %v7592
        %v7594 = vcombine.low %v3567, %v3569
        %v7595 = vcombine.high %v3567, %v3569
        %v7597 = vunpack.c.l.s4 1983009808
        %v7598 = vunpack.c.0.s8 %v7597
        %v7599 = vlaneseq
        %v7600 = vshrl.u32 %v7599, 7
        %v7601 = vsub.s32 %v7598, %v7600
        %v7602 = vrot.slane %v7594, %v7601
        %v7604 = vunpack.c.l.s4 1983009808
        %v7605 = vunpack.c.0.s8 %v7604
        %v7606 = vlaneseq
        %v7607 = vshrl.u32 %v7606, 7
        %v7608 = vsub.s32 %v7605, %v7607
        %v7609 = vrot.slane %v7595, %v7608
        %v7610 = vcombine.low %v7554, %v7570
        %v7611 = vcombine.high %v7554, %v7570
        %v7613 = vunpack.c.l.s4 1934713408
        %v7614 = vunpack.c.0.s8 %v7613
        %v7615 = vlaneseq
        %v7616 = vshrl.u32 %v7615, 7
        %v7617 = vsub.s32 %v7614, %v7616
        %v7618 = vrot.slane %v7610, %v7617
        %v7620 = vunpack.c.l.s4 1934713408
        %v7621 = vunpack.c.0.s8 %v7620
        %v7622 = vlaneseq
        %v7623 = vshrl.u32 %v7622, 7
        %v7624 = vsub.s32 %v7621, %v7623
        %v7625 = vrot.slane %v7611, %v7624
        %v7626 = vcombine.low %v7561, %v7577
        %v7627 = vcombine.high %v7561, %v7577
        %v7629 = vunpack.c.l.s4 1934713408
        %v7630 = vunpack.c.0.s8 %v7629
        %v7631 = vlaneseq
        %v7632 = vshrl.u32 %v7631, 7
        %v7633 = vsub.s32 %v7630, %v7632
        %v7634 = vrot.slane %v7626, %v7633
        %v7636 = vunpack.c.l.s4 1934713408
        %v7637 = vunpack.c.0.s8 %v7636
        %v7638 = vlaneseq
        %v7639 = vshrl.u32 %v7638, 7
        %v7640 = vsub.s32 %v7637, %v7639
        %v7641 = vrot.slane %v7627, %v7640
        %v7642 = vcombine.low %v7586, %v7602
        %v7643 = vcombine.high %v7586, %v7602
        %v7645 = vunpack.c.l.s4 1934713408
        %v7646 = vunpack.c.0.s8 %v7645
        %v7647 = vlaneseq
        %v7648 = vshrl.u32 %v7647, 7
        %v7649 = vsub.s32 %v7646, %v7648
        %v7650 = vrot.slane %v7642, %v7649
        %v7652 = vunpack.c.l.s4 1934713408
        %v7653 = vunpack.c.0.s8 %v7652
        %v7654 = vlaneseq
        %v7655 = vshrl.u32 %v7654, 7
        %v7656 = vsub.s32 %v7653, %v7655
        %v7657 = vrot.slane %v7643, %v7656
        %v7658 = vcombine.low %v7593, %v7609
        %v7659 = vcombine.high %v7593, %v7609
        %v7661 = vunpack.c.l.s4 1934713408
        %v7662 = vunpack.c.0.s8 %v7661
        %v7663 = vlaneseq
        %v7664 = vshrl.u32 %v7663, 7
        %v7665 = vsub.s32 %v7662, %v7664
        %v7666 = vrot.slane %v7658, %v7665
        %v7668 = vunpack.c.l.s4 1934713408
        %v7669 = vunpack.c.0.s8 %v7668
        %v7670 = vlaneseq
        %v7671 = vshrl.u32 %v7670, 7
        %v7672 = vsub.s32 %v7669, %v7671
        %v7673 = vrot.slane %v7659, %v7672
        %v7674 = vcombine.low %v7618, %v7650
        %v7675 = vcombine.high %v7618, %v7650
        %v7676 = vcombine.low %v7625, %v7657
        %v7677 = vcombine.high %v7625, %v7657
        %v7678 = vcombine.low %v7634, %v7666
        %v7679 = vcombine.high %v7634, %v7666
        %v7680 = vcombine.low %v7641, %v7673
        %v7681 = vcombine.high %v7641, %v7673
        %v7682 = vcombine.low %v3570, %v3572
        %v7683 = vcombine.high %v3570, %v3572
        %v7685 = vunpack.c.l.s4 1983009808
        %v7686 = vunpack.c.0.s8 %v7685
        %v7687 = vlaneseq
        %v7688 = vshrl.u32 %v7687, 7
        %v7689 = vsub.s32 %v7686, %v7688
        %v7690 = vrot.slane %v7682, %v7689
        %v7692 = vunpack.c.l.s4 1983009808
        %v7693 = vunpack.c.0.s8 %v7692
        %v7694 = vlaneseq
        %v7695 = vshrl.u32 %v7694, 7
        %v7696 = vsub.s32 %v7693, %v7695
        %v7697 = vrot.slane %v7683, %v7696
        %v7698 = vcombine.low %v3571, %v3573
        %v7699 = vcombine.high %v3571, %v3573
        %v7701 = vunpack.c.l.s4 1983009808
        %v7702 = vunpack.c.0.s8 %v7701
        %v7703 = vlaneseq
        %v7704 = vshrl.u32 %v7703, 7
        %v7705 = vsub.s32 %v7702, %v7704
        %v7706 = vrot.slane %v7698, %v7705
        %v7708 = vunpack.c.l.s4 1983009808
        %v7709 = vunpack.c.0.s8 %v7708
        %v7710 = vlaneseq
        %v7711 = vshrl.u32 %v7710, 7
        %v7712 = vsub.s32 %v7709, %v7711
        %v7713 = vrot.slane %v7699, %v7712
        %v7714 = vcombine.low %v3574, %v3576
        %v7715 = vcombine.high %v3574, %v3576
        %v7717 = vunpack.c.l.s4 1983009808
        %v7718 = vunpack.c.0.s8 %v7717
        %v7719 = vlaneseq
        %v7720 = vshrl.u32 %v7719, 7
        %v7721 = vsub.s32 %v7718, %v7720
        %v7722 = vrot.slane %v7714, %v7721
        %v7724 = vunpack.c.l.s4 1983009808
        %v7725 = vunpack.c.0.s8 %v7724
        %v7726 = vlaneseq
        %v7727 = vshrl.u32 %v7726, 7
        %v7728 = vsub.s32 %v7725, %v7727
        %v7729 = vrot.slane %v7715, %v7728
        %v7730 = vcombine.low %v3575, %v3577
        %v7731 = vcombine.high %v3575, %v3577
        %v7733 = vunpack.c.l.s4 1983009808
        %v7734 = vunpack.c.0.s8 %v7733
        %v7735 = vlaneseq
        %v7736 = vshrl.u32 %v7735, 7
        %v7737 = vsub.s32 %v7734, %v7736
        %v7738 = vrot.slane %v7730, %v7737
        %v7740 = vunpack.c.l.s4 1983009808
        %v7741 = vunpack.c.0.s8 %v7740
        %v7742 = vlaneseq
        %v7743 = vshrl.u32 %v7742, 7
        %v7744 = vsub.s32 %v7741, %v7743
        %v7745 = vrot.slane %v7731, %v7744
        %v7746 = vcombine.low %v7690, %v7706
        %v7747 = vcombine.high %v7690, %v7706
        %v7749 = vunpack.c.l.s4 1934713408
        %v7750 = vunpack.c.0.s8 %v7749
        %v7751 = vlaneseq
        %v7752 = vshrl.u32 %v7751, 7
        %v7753 = vsub.s32 %v7750, %v7752
        %v7754 = vrot.slane %v7746, %v7753
        %v7756 = vunpack.c.l.s4 1934713408
        %v7757 = vunpack.c.0.s8 %v7756
        %v7758 = vlaneseq
        %v7759 = vshrl.u32 %v7758, 7
        %v7760 = vsub.s32 %v7757, %v7759
        %v7761 = vrot.slane %v7747, %v7760
        %v7762 = vcombine.low %v7697, %v7713
        %v7763 = vcombine.high %v7697, %v7713
        %v7765 = vunpack.c.l.s4 1934713408
        %v7766 = vunpack.c.0.s8 %v7765
        %v7767 = vlaneseq
        %v7768 = vshrl.u32 %v7767, 7
        %v7769 = vsub.s32 %v7766, %v7768
        %v7770 = vrot.slane %v7762, %v7769
        %v7772 = vunpack.c.l.s4 1934713408
        %v7773 = vunpack.c.0.s8 %v7772
        %v7774 = vlaneseq
        %v7775 = vshrl.u32 %v7774, 7
        %v7776 = vsub.s32 %v7773, %v7775
        %v7777 = vrot.slane %v7763, %v7776
        %v7778 = vcombine.low %v7722, %v7738
        %v7779 = vcombine.high %v7722, %v7738
        %v7781 = vunpack.c.l.s4 1934713408
        %v7782 = vunpack.c.0.s8 %v7781
        %v7783 = vlaneseq
        %v7784 = vshrl.u32 %v7783, 7
        %v7785 = vsub.s32 %v7782, %v7784
        %v7786 = vrot.slane %v7778, %v7785
        %v7788 = vunpack.c.l.s4 1934713408
        %v7789 = vunpack.c.0.s8 %v7788
        %v7790 = vlaneseq
        %v7791 = vshrl.u32 %v7790, 7
        %v7792 = vsub.s32 %v7789, %v7791
        %v7793 = vrot.slane %v7779, %v7792
        %v7794 = vcombine.low %v7729, %v7745
        %v7795 = vcombine.high %v7729, %v7745
        %v7797 = vunpack.c.l.s4 1934713408
        %v7798 = vunpack.c.0.s8 %v7797
        %v7799 = vlaneseq
        %v7800 = vshrl.u32 %v7799, 7
        %v7801 = vsub.s32 %v7798, %v7800
        %v7802 = vrot.slane %v7794, %v7801
        %v7804 = vunpack.c.l.s4 1934713408
        %v7805 = vunpack.c.0.s8 %v7804
        %v7806 = vlaneseq
        %v7807 = vshrl.u32 %v7806, 7
        %v7808 = vsub.s32 %v7805, %v7807
        %v7809 = vrot.slane %v7795, %v7808
        %v7810 = vcombine.low %v7754, %v7786
        %v7811 = vcombine.high %v7754, %v7786
        %v7812 = vcombine.low %v7761, %v7793
        %v7813 = vcombine.high %v7761, %v7793
        %v7814 = vcombine.low %v7770, %v7802
        %v7815 = vcombine.high %v7770, %v7802
        %v7816 = vcombine.low %v7777, %v7809
        %v7817 = vcombine.high %v7777, %v7809
        %v7818 = vcombine.low %v3578, %v3580
        %v7819 = vcombine.high %v3578, %v3580
        %v7821 = vunpack.c.l.s4 1983009808
        %v7822 = vunpack.c.0.s8 %v7821
        %v7823 = vlaneseq
        %v7824 = vshrl.u32 %v7823, 7
        %v7825 = vsub.s32 %v7822, %v7824
        %v7826 = vrot.slane %v7818, %v7825
        %v7828 = vunpack.c.l.s4 1983009808
        %v7829 = vunpack.c.0.s8 %v7828
        %v7830 = vlaneseq
        %v7831 = vshrl.u32 %v7830, 7
        %v7832 = vsub.s32 %v7829, %v7831
        %v7833 = vrot.slane %v7819, %v7832
        %v7834 = vcombine.low %v3579, %v3581
        %v7835 = vcombine.high %v3579, %v3581
        %v7837 = vunpack.c.l.s4 1983009808
        %v7838 = vunpack.c.0.s8 %v7837
        %v7839 = vlaneseq
        %v7840 = vshrl.u32 %v7839, 7
        %v7841 = vsub.s32 %v7838, %v7840
        %v7842 = vrot.slane %v7834, %v7841
        %v7844 = vunpack.c.l.s4 1983009808
        %v7845 = vunpack.c.0.s8 %v7844
        %v7846 = vlaneseq
        %v7847 = vshrl.u32 %v7846, 7
        %v7848 = vsub.s32 %v7845, %v7847
        %v7849 = vrot.slane %v7835, %v7848
        %v7850 = vcombine.low %v3582, %v3584
        %v7851 = vcombine.high %v3582, %v3584
        %v7853 = vunpack.c.l.s4 1983009808
        %v7854 = vunpack.c.0.s8 %v7853
        %v7855 = vlaneseq
        %v7856 = vshrl.u32 %v7855, 7
        %v7857 = vsub.s32 %v7854, %v7856
        %v7858 = vrot.slane %v7850, %v7857
        %v7860 = vunpack.c.l.s4 1983009808
        %v7861 = vunpack.c.0.s8 %v7860
        %v7862 = vlaneseq
        %v7863 = vshrl.u32 %v7862, 7
        %v7864 = vsub.s32 %v7861, %v7863
        %v7865 = vrot.slane %v7851, %v7864
        %v7866 = vcombine.low %v3583, %v3585
        %v7867 = vcombine.high %v3583, %v3585
        %v7869 = vunpack.c.l.s4 1983009808
        %v7870 = vunpack.c.0.s8 %v7869
        %v7871 = vlaneseq
        %v7872 = vshrl.u32 %v7871, 7
        %v7873 = vsub.s32 %v7870, %v7872
        %v7874 = vrot.slane %v7866, %v7873
        %v7876 = vunpack.c.l.s4 1983009808
        %v7877 = vunpack.c.0.s8 %v7876
        %v7878 = vlaneseq
        %v7879 = vshrl.u32 %v7878, 7
        %v7880 = vsub.s32 %v7877, %v7879
        %v7881 = vrot.slane %v7867, %v7880
        %v7882 = vcombine.low %v7826, %v7842
        %v7883 = vcombine.high %v7826, %v7842
        %v7885 = vunpack.c.l.s4 1934713408
        %v7886 = vunpack.c.0.s8 %v7885
        %v7887 = vlaneseq
        %v7888 = vshrl.u32 %v7887, 7
        %v7889 = vsub.s32 %v7886, %v7888
        %v7890 = vrot.slane %v7882, %v7889
        %v7892 = vunpack.c.l.s4 1934713408
        %v7893 = vunpack.c.0.s8 %v7892
        %v7894 = vlaneseq
        %v7895 = vshrl.u32 %v7894, 7
        %v7896 = vsub.s32 %v7893, %v7895
        %v7897 = vrot.slane %v7883, %v7896
        %v7898 = vcombine.low %v7833, %v7849
        %v7899 = vcombine.high %v7833, %v7849
        %v7901 = vunpack.c.l.s4 1934713408
        %v7902 = vunpack.c.0.s8 %v7901
        %v7903 = vlaneseq
        %v7904 = vshrl.u32 %v7903, 7
        %v7905 = vsub.s32 %v7902, %v7904
        %v7906 = vrot.slane %v7898, %v7905
        %v7908 = vunpack.c.l.s4 1934713408
        %v7909 = vunpack.c.0.s8 %v7908
        %v7910 = vlaneseq
        %v7911 = vshrl.u32 %v7910, 7
        %v7912 = vsub.s32 %v7909, %v7911
        %v7913 = vrot.slane %v7899, %v7912
        %v7914 = vcombine.low %v7858, %v7874
        %v7915 = vcombine.high %v7858, %v7874
        %v7917 = vunpack.c.l.s4 1934713408
        %v7918 = vunpack.c.0.s8 %v7917
        %v7919 = vlaneseq
        %v7920 = vshrl.u32 %v7919, 7
        %v7921 = vsub.s32 %v7918, %v7920
        %v7922 = vrot.slane %v7914, %v7921
        %v7924 = vunpack.c.l.s4 1934713408
        %v7925 = vunpack.c.0.s8 %v7924
        %v7926 = vlaneseq
        %v7927 = vshrl.u32 %v7926, 7
        %v7928 = vsub.s32 %v7925, %v7927
        %v7929 = vrot.slane %v7915, %v7928
        %v7930 = vcombine.low %v7865, %v7881
        %v7931 = vcombine.high %v7865, %v7881
        %v7933 = vunpack.c.l.s4 1934713408
        %v7934 = vunpack.c.0.s8 %v7933
        %v7935 = vlaneseq
        %v7936 = vshrl.u32 %v7935, 7
        %v7937 = vsub.s32 %v7934, %v7936
        %v7938 = vrot.slane %v7930, %v7937
        %v7940 = vunpack.c.l.s4 1934713408
        %v7941 = vunpack.c.0.s8 %v7940
        %v7942 = vlaneseq
        %v7943 = vshrl.u32 %v7942, 7
        %v7944 = vsub.s32 %v7941, %v7943
        %v7945 = vrot.slane %v7931, %v7944
        %v7946 = vcombine.low %v7890, %v7922
        %v7947 = vcombine.high %v7890, %v7922
        %v7948 = vcombine.low %v7897, %v7929
        %v7949 = vcombine.high %v7897, %v7929
        %v7950 = vcombine.low %v7906, %v7938
        %v7951 = vcombine.high %v7906, %v7938
        %v7952 = vcombine.low %v7913, %v7945
        %v7953 = vcombine.high %v7913, %v7945
        %v7954 = vadd.f32 %v3730, %v3866
        %v7955 = vrot.slane %v7954, 4
        %v7956 = vadd.f32 %v7954, %v7955
        %v7957 = vrot.slane %v7956, 2
        %v7958 = vadd.f32 %v7956, %v7957
        %v7959 = vrot.slane %v7958, 1
        %v7960 = vadd.f32 %v7958, %v7959
        %v7961 = vadd.f32 %v3731, %v3867
        %v7962 = vrot.slane %v7961, 4
        %v7963 = vadd.f32 %v7961, %v7962
        %v7964 = vrot.slane %v7963, 2
        %v7965 = vadd.f32 %v7963, %v7964
        %v7966 = vrot.slane %v7965, 1
        %v7967 = vadd.f32 %v7965, %v7966
        %v7968 = vadd.f32 %v3732, %v3868
        %v7969 = vrot.slane %v7968, 4
        %v7970 = vadd.f32 %v7968, %v7969
        %v7971 = vrot.slane %v7970, 2
        %v7972 = vadd.f32 %v7970, %v7971
        %v7973 = vrot.slane %v7972, 1
        %v7974 = vadd.f32 %v7972, %v7973
        %v7975 = vadd.f32 %v3733, %v3869
        %v7976 = vrot.slane %v7975, 4
        %v7977 = vadd.f32 %v7975, %v7976
        %v7978 = vrot.slane %v7977, 2
        %v7979 = vadd.f32 %v7977, %v7978
        %v7980 = vrot.slane %v7979, 1
        %v7981 = vadd.f32 %v7979, %v7980
        %v7982 = vadd.f32 %v3734, %v3870
        %v7983 = vrot.slane %v7982, 4
        %v7984 = vadd.f32 %v7982, %v7983
        %v7985 = vrot.slane %v7984, 2
        %v7986 = vadd.f32 %v7984, %v7985
        %v7987 = vrot.slane %v7986, 1
        %v7988 = vadd.f32 %v7986, %v7987
        %v7989 = vadd.f32 %v3735, %v3871
        %v7990 = vrot.slane %v7989, 4
        %v7991 = vadd.f32 %v7989, %v7990
        %v7992 = vrot.slane %v7991, 2
        %v7993 = vadd.f32 %v7991, %v7992
        %v7994 = vrot.slane %v7993, 1
        %v7995 = vadd.f32 %v7993, %v7994
        %v7996 = vadd.f32 %v3736, %v3872
        %v7997 = vrot.slane %v7996, 4
        %v7998 = vadd.f32 %v7996, %v7997
        %v7999 = vrot.slane %v7998, 2
        %v8000 = vadd.f32 %v7998, %v7999
        %v8001 = vrot.slane %v8000, 1
        %v8002 = vadd.f32 %v8000, %v8001
        %v8003 = vadd.f32 %v3737, %v3873
        %v8004 = vrot.slane %v8003, 4
        %v8005 = vadd.f32 %v8003, %v8004
        %v8006 = vrot.slane %v8005, 2
        %v8007 = vadd.f32 %v8005, %v8006
        %v8008 = vrot.slane %v8007, 1
        %v8009 = vadd.f32 %v8007, %v8008
        %v8010 = vadd.f32 %v4002, %v4138
        %v8011 = vrot.slane %v8010, 4
        %v8012 = vadd.f32 %v8010, %v8011
        %v8013 = vrot.slane %v8012, 2
        %v8014 = vadd.f32 %v8012, %v8013
        %v8015 = vrot.slane %v8014, 1
        %v8016 = vadd.f32 %v8014, %v8015
        %v8017 = vadd.f32 %v4003, %v4139
        %v8018 = vrot.slane %v8017, 4
        %v8019 = vadd.f32 %v8017, %v8018
        %v8020 = vrot.slane %v8019, 2
        %v8021 = vadd.f32 %v8019, %v8020
        %v8022 = vrot.slane %v8021, 1
        %v8023 = vadd.f32 %v8021, %v8022
        %v8024 = vadd.f32 %v4004, %v4140
        %v8025 = vrot.slane %v8024, 4
        %v8026 = vadd.f32 %v8024, %v8025
        %v8027 = vrot.slane %v8026, 2
        %v8028 = vadd.f32 %v8026, %v8027
        %v8029 = vrot.slane %v8028, 1
        %v8030 = vadd.f32 %v8028, %v8029
        %v8031 = vadd.f32 %v4005, %v4141
        %v8032 = vrot.slane %v8031, 4
        %v8033 = vadd.f32 %v8031, %v8032
        %v8034 = vrot.slane %v8033, 2
        %v8035 = vadd.f32 %v8033, %v8034
        %v8036 = vrot.slane %v8035, 1
        %v8037 = vadd.f32 %v8035, %v8036
        %v8038 = vadd.f32 %v4006, %v4142
        %v8039 = vrot.slane %v8038, 4
        %v8040 = vadd.f32 %v8038, %v8039
        %v8041 = vrot.slane %v8040, 2
        %v8042 = vadd.f32 %v8040, %v8041
        %v8043 = vrot.slane %v8042, 1
        %v8044 = vadd.f32 %v8042, %v8043
        %v8045 = vadd.f32 %v4007, %v4143
        %v8046 = vrot.slane %v8045, 4
        %v8047 = vadd.f32 %v8045, %v8046
        %v8048 = vrot.slane %v8047, 2
        %v8049 = vadd.f32 %v8047, %v8048
        %v8050 = vrot.slane %v8049, 1
        %v8051 = vadd.f32 %v8049, %v8050
        %v8052 = vadd.f32 %v4008, %v4144
        %v8053 = vrot.slane %v8052, 4
        %v8054 = vadd.f32 %v8052, %v8053
        %v8055 = vrot.slane %v8054, 2
        %v8056 = vadd.f32 %v8054, %v8055
        %v8057 = vrot.slane %v8056, 1
        %v8058 = vadd.f32 %v8056, %v8057
        %v8059 = vadd.f32 %v4009, %v4145
        %v8060 = vrot.slane %v8059, 4
        %v8061 = vadd.f32 %v8059, %v8060
        %v8062 = vrot.slane %v8061, 2
        %v8063 = vadd.f32 %v8061, %v8062
        %v8064 = vrot.slane %v8063, 1
        %v8065 = vadd.f32 %v8063, %v8064
        %v8066 = vadd.f32 %v4274, %v4410
        %v8067 = vrot.slane %v8066, 4
        %v8068 = vadd.f32 %v8066, %v8067
        %v8069 = vrot.slane %v8068, 2
        %v8070 = vadd.f32 %v8068, %v8069
        %v8071 = vrot.slane %v8070, 1
        %v8072 = vadd.f32 %v8070, %v8071
        %v8073 = vadd.f32 %v4275, %v4411
        %v8074 = vrot.slane %v8073, 4
        %v8075 = vadd.f32 %v8073, %v8074
        %v8076 = vrot.slane %v8075, 2
        %v8077 = vadd.f32 %v8075, %v8076
        %v8078 = vrot.slane %v8077, 1
        %v8079 = vadd.f32 %v8077, %v8078
        %v8080 = vadd.f32 %v4276, %v4412
        %v8081 = vrot.slane %v8080, 4
        %v8082 = vadd.f32 %v8080, %v8081
        %v8083 = vrot.slane %v8082, 2
        %v8084 = vadd.f32 %v8082, %v8083
        %v8085 = vrot.slane %v8084, 1
        %v8086 = vadd.f32 %v8084, %v8085
        %v8087 = vadd.f32 %v4277, %v4413
        %v8088 = vrot.slane %v8087, 4
        %v8089 = vadd.f32 %v8087, %v8088
        %v8090 = vrot.slane %v8089, 2
        %v8091 = vadd.f32 %v8089, %v8090
        %v8092 = vrot.slane %v8091, 1
        %v8093 = vadd.f32 %v8091, %v8092
        %v8094 = vadd.f32 %v4278, %v4414
        %v8095 = vrot.slane %v8094, 4
        %v8096 = vadd.f32 %v8094, %v8095
        %v8097 = vrot.slane %v8096, 2
        %v8098 = vadd.f32 %v8096, %v8097
        %v8099 = vrot.slane %v8098, 1
        %v8100 = vadd.f32 %v8098, %v8099
        %v8101 = vadd.f32 %v4279, %v4415
        %v8102 = vrot.slane %v8101, 4
        %v8103 = vadd.f32 %v8101, %v8102
        %v8104 = vrot.slane %v8103, 2
        %v8105 = vadd.f32 %v8103, %v8104
        %v8106 = vrot.slane %v8105, 1
        %v8107 = vadd.f32 %v8105, %v8106
        %v8108 = vadd.f32 %v4280, %v4416
        %v8109 = vrot.slane %v8108, 4
        %v8110 = vadd.f32 %v8108, %v8109
        %v8111 = vrot.slane %v8110, 2
        %v8112 = vadd.f32 %v8110, %v8111
        %v8113 = vrot.slane %v8112, 1
        %v8114 = vadd.f32 %v8112, %v8113
        %v8115 = vadd.f32 %v4281, %v4417
        %v8116 = vrot.slane %v8115, 4
        %v8117 = vadd.f32 %v8115, %v8116
        %v8118 = vrot.slane %v8117, 2
        %v8119 = vadd.f32 %v8117, %v8118
        %v8120 = vrot.slane %v8119, 1
        %v8121 = vadd.f32 %v8119, %v8120
        %v8122 = vadd.f32 %v4546, %v4682
        %v8123 = vrot.slane %v8122, 4
        %v8124 = vadd.f32 %v8122, %v8123
        %v8125 = vrot.slane %v8124, 2
        %v8126 = vadd.f32 %v8124, %v8125
        %v8127 = vrot.slane %v8126, 1
        %v8128 = vadd.f32 %v8126, %v8127
        %v8129 = vadd.f32 %v4547, %v4683
        %v8130 = vrot.slane %v8129, 4
        %v8131 = vadd.f32 %v8129, %v8130
        %v8132 = vrot.slane %v8131, 2
        %v8133 = vadd.f32 %v8131, %v8132
        %v8134 = vrot.slane %v8133, 1
        %v8135 = vadd.f32 %v8133, %v8134
        %v8136 = vadd.f32 %v4548, %v4684
        %v8137 = vrot.slane %v8136, 4
        %v8138 = vadd.f32 %v8136, %v8137
        %v8139 = vrot.slane %v8138, 2
        %v8140 = vadd.f32 %v8138, %v8139
        %v8141 = vrot.slane %v8140, 1
        %v8142 = vadd.f32 %v8140, %v8141
        %v8143 = vadd.f32 %v4549, %v4685
        %v8144 = vrot.slane %v8143, 4
        %v8145 = vadd.f32 %v8143, %v8144
        %v8146 = vrot.slane %v8145, 2
        %v8147 = vadd.f32 %v8145, %v8146
        %v8148 = vrot.slane %v8147, 1
        %v8149 = vadd.f32 %v8147, %v8148
        %v8150 = vadd.f32 %v4550, %v4686
        %v8151 = vrot.slane %v8150, 4
        %v8152 = vadd.f32 %v8150, %v8151
        %v8153 = vrot.slane %v8152, 2
        %v8154 = vadd.f32 %v8152, %v8153
        %v8155 = vrot.slane %v8154, 1
        %v8156 = vadd.f32 %v8154, %v8155
        %v8157 = vadd.f32 %v4551, %v4687
        %v8158 = vrot.slane %v8157, 4
        %v8159 = vadd.f32 %v8157, %v8158
        %v8160 = vrot.slane %v8159, 2
        %v8161 = vadd.f32 %v8159, %v8160
        %v8162 = vrot.slane %v8161, 1
        %v8163 = vadd.f32 %v8161, %v8162
        %v8164 = vadd.f32 %v4552, %v4688
        %v8165 = vrot.slane %v8164, 4
        %v8166 = vadd.f32 %v8164, %v8165
        %v8167 = vrot.slane %v8166, 2
        %v8168 = vadd.f32 %v8166, %v8167
        %v8169 = vrot.slane %v8168, 1
        %v8170 = vadd.f32 %v8168, %v8169
        %v8171 = vadd.f32 %v4553, %v4689
        %v8172 = vrot.slane %v8171, 4
        %v8173 = vadd.f32 %v8171, %v8172
        %v8174 = vrot.slane %v8173, 2
        %v8175 = vadd.f32 %v8173, %v8174
        %v8176 = vrot.slane %v8175, 1
        %v8177 = vadd.f32 %v8175, %v8176
        %v8178 = vadd.f32 %v4818, %v4954
        %v8179 = vrot.slane %v8178, 4
        %v8180 = vadd.f32 %v8178, %v8179
        %v8181 = vrot.slane %v8180, 2
        %v8182 = vadd.f32 %v8180, %v8181
        %v8183 = vrot.slane %v8182, 1
        %v8184 = vadd.f32 %v8182, %v8183
        %v8185 = vadd.f32 %v4819, %v4955
        %v8186 = vrot.slane %v8185, 4
        %v8187 = vadd.f32 %v8185, %v8186
        %v8188 = vrot.slane %v8187, 2
        %v8189 = vadd.f32 %v8187, %v8188
        %v8190 = vrot.slane %v8189, 1
        %v8191 = vadd.f32 %v8189, %v8190
        %v8192 = vadd.f32 %v4820, %v4956
        %v8193 = vrot.slane %v8192, 4
        %v8194 = vadd.f32 %v8192, %v8193
        %v8195 = vrot.slane %v8194, 2
        %v8196 = vadd.f32 %v8194, %v8195
        %v8197 = vrot.slane %v8196, 1
        %v8198 = vadd.f32 %v8196, %v8197
        %v8199 = vadd.f32 %v4821, %v4957
        %v8200 = vrot.slane %v8199, 4
        %v8201 = vadd.f32 %v8199, %v8200
        %v8202 = vrot.slane %v8201, 2
        %v8203 = vadd.f32 %v8201, %v8202
        %v8204 = vrot.slane %v8203, 1
        %v8205 = vadd.f32 %v8203, %v8204
        %v8206 = vadd.f32 %v4822, %v4958
        %v8207 = vrot.slane %v8206, 4
        %v8208 = vadd.f32 %v8206, %v8207
        %v8209 = vrot.slane %v8208, 2
        %v8210 = vadd.f32 %v8208, %v8209
        %v8211 = vrot.slane %v8210, 1
        %v8212 = vadd.f32 %v8210, %v8211
        %v8213 = vadd.f32 %v4823, %v4959
        %v8214 = vrot.slane %v8213, 4
        %v8215 = vadd.f32 %v8213, %v8214
        %v8216 = vrot.slane %v8215, 2
        %v8217 = vadd.f32 %v8215, %v8216
        %v8218 = vrot.slane %v8217, 1
        %v8219 = vadd.f32 %v8217, %v8218
        %v8220 = vadd.f32 %v4824, %v4960
        %v8221 = vrot.slane %v8220, 4
        %v8222 = vadd.f32 %v8220, %v8221
        %v8223 = vrot.slane %v8222, 2
        %v8224 = vadd.f32 %v8222, %v8223
        %v8225 = vrot.slane %v8224, 1
        %v8226 = vadd.f32 %v8224, %v8225
        %v8227 = vadd.f32 %v4825, %v4961
        %v8228 = vrot.slane %v8227, 4
        %v8229 = vadd.f32 %v8227, %v8228
        %v8230 = vrot.slane %v8229, 2
        %v8231 = vadd.f32 %v8229, %v8230
        %v8232 = vrot.slane %v8231, 1
        %v8233 = vadd.f32 %v8231, %v8232
        %v8234 = vadd.f32 %v5090, %v5226
        %v8235 = vrot.slane %v8234, 4
        %v8236 = vadd.f32 %v8234, %v8235
        %v8237 = vrot.slane %v8236, 2
        %v8238 = vadd.f32 %v8236, %v8237
        %v8239 = vrot.slane %v8238, 1
        %v8240 = vadd.f32 %v8238, %v8239
        %v8241 = vadd.f32 %v5091, %v5227
        %v8242 = vrot.slane %v8241, 4
        %v8243 = vadd.f32 %v8241, %v8242
        %v8244 = vrot.slane %v8243, 2
        %v8245 = vadd.f32 %v8243, %v8244
        %v8246 = vrot.slane %v8245, 1
        %v8247 = vadd.f32 %v8245, %v8246
        %v8248 = vadd.f32 %v5092, %v5228
        %v8249 = vrot.slane %v8248, 4
        %v8250 = vadd.f32 %v8248, %v8249
        %v8251 = vrot.slane %v8250, 2
        %v8252 = vadd.f32 %v8250, %v8251
        %v8253 = vrot.slane %v8252, 1
        %v8254 = vadd.f32 %v8252, %v8253
        %v8255 = vadd.f32 %v5093, %v5229
        %v8256 = vrot.slane %v8255, 4
        %v8257 = vadd.f32 %v8255, %v8256
        %v8258 = vrot.slane %v8257, 2
        %v8259 = vadd.f32 %v8257, %v8258
        %v8260 = vrot.slane %v8259, 1
        %v8261 = vadd.f32 %v8259, %v8260
        %v8262 = vadd.f32 %v5094, %v5230
        %v8263 = vrot.slane %v8262, 4
        %v8264 = vadd.f32 %v8262, %v8263
        %v8265 = vrot.slane %v8264, 2
        %v8266 = vadd.f32 %v8264, %v8265
        %v8267 = vrot.slane %v8266, 1
        %v8268 = vadd.f32 %v8266, %v8267
        %v8269 = vadd.f32 %v5095, %v5231
        %v8270 = vrot.slane %v8269, 4
        %v8271 = vadd.f32 %v8269, %v8270
        %v8272 = vrot.slane %v8271, 2
        %v8273 = vadd.f32 %v8271, %v8272
        %v8274 = vrot.slane %v8273, 1
        %v8275 = vadd.f32 %v8273, %v8274
        %v8276 = vadd.f32 %v5096, %v5232
        %v8277 = vrot.slane %v8276, 4
        %v8278 = vadd.f32 %v8276, %v8277
        %v8279 = vrot.slane %v8278, 2
        %v8280 = vadd.f32 %v8278, %v8279
        %v8281 = vrot.slane %v8280, 1
        %v8282 = vadd.f32 %v8280, %v8281
        %v8283 = vadd.f32 %v5097, %v5233
        %v8284 = vrot.slane %v8283, 4
        %v8285 = vadd.f32 %v8283, %v8284
        %v8286 = vrot.slane %v8285, 2
        %v8287 = vadd.f32 %v8285, %v8286
        %v8288 = vrot.slane %v8287, 1
        %v8289 = vadd.f32 %v8287, %v8288
        %v8290 = vadd.f32 %v5362, %v5498
        %v8291 = vrot.slane %v8290, 4
        %v8292 = vadd.f32 %v8290, %v8291
        %v8293 = vrot.slane %v8292, 2
        %v8294 = vadd.f32 %v8292, %v8293
        %v8295 = vrot.slane %v8294, 1
        %v8296 = vadd.f32 %v8294, %v8295
        %v8297 = vadd.f32 %v5363, %v5499
        %v8298 = vrot.slane %v8297, 4
        %v8299 = vadd.f32 %v8297, %v8298
        %v8300 = vrot.slane %v8299, 2
        %v8301 = vadd.f32 %v8299, %v8300
        %v8302 = vrot.slane %v8301, 1
        %v8303 = vadd.f32 %v8301, %v8302
        %v8304 = vadd.f32 %v5364, %v5500
        %v8305 = vrot.slane %v8304, 4
        %v8306 = vadd.f32 %v8304, %v8305
        %v8307 = vrot.slane %v8306, 2
        %v8308 = vadd.f32 %v8306, %v8307
        %v8309 = vrot.slane %v8308, 1
        %v8310 = vadd.f32 %v8308, %v8309
        %v8311 = vadd.f32 %v5365, %v5501
        %v8312 = vrot.slane %v8311, 4
        %v8313 = vadd.f32 %v8311, %v8312
        %v8314 = vrot.slane %v8313, 2
        %v8315 = vadd.f32 %v8313, %v8314
        %v8316 = vrot.slane %v8315, 1
        %v8317 = vadd.f32 %v8315, %v8316
        %v8318 = vadd.f32 %v5366, %v5502
        %v8319 = vrot.slane %v8318, 4
        %v8320 = vadd.f32 %v8318, %v8319
        %v8321 = vrot.slane %v8320, 2
        %v8322 = vadd.f32 %v8320, %v8321
        %v8323 = vrot.slane %v8322, 1
        %v8324 = vadd.f32 %v8322, %v8323
        %v8325 = vadd.f32 %v5367, %v5503
        %v8326 = vrot.slane %v8325, 4
        %v8327 = vadd.f32 %v8325, %v8326
        %v8328 = vrot.slane %v8327, 2
        %v8329 = vadd.f32 %v8327, %v8328
        %v8330 = vrot.slane %v8329, 1
        %v8331 = vadd.f32 %v8329, %v8330
        %v8332 = vadd.f32 %v5368, %v5504
        %v8333 = vrot.slane %v8332, 4
        %v8334 = vadd.f32 %v8332, %v8333
        %v8335 = vrot.slane %v8334, 2
        %v8336 = vadd.f32 %v8334, %v8335
        %v8337 = vrot.slane %v8336, 1
        %v8338 = vadd.f32 %v8336, %v8337
        %v8339 = vadd.f32 %v5369, %v5505
        %v8340 = vrot.slane %v8339, 4
        %v8341 = vadd.f32 %v8339, %v8340
        %v8342 = vrot.slane %v8341, 2
        %v8343 = vadd.f32 %v8341, %v8342
        %v8344 = vrot.slane %v8343, 1
        %v8345 = vadd.f32 %v8343, %v8344
        %v8346 = vadd.f32 %v5634, %v5770
        %v8347 = vrot.slane %v8346, 4
        %v8348 = vadd.f32 %v8346, %v8347
        %v8349 = vrot.slane %v8348, 2
        %v8350 = vadd.f32 %v8348, %v8349
        %v8351 = vrot.slane %v8350, 1
        %v8352 = vadd.f32 %v8350, %v8351
        %v8353 = vadd.f32 %v5635, %v5771
        %v8354 = vrot.slane %v8353, 4
        %v8355 = vadd.f32 %v8353, %v8354
        %v8356 = vrot.slane %v8355, 2
        %v8357 = vadd.f32 %v8355, %v8356
        %v8358 = vrot.slane %v8357, 1
        %v8359 = vadd.f32 %v8357, %v8358
        %v8360 = vadd.f32 %v5636, %v5772
        %v8361 = vrot.slane %v8360, 4
        %v8362 = vadd.f32 %v8360, %v8361
        %v8363 = vrot.slane %v8362, 2
        %v8364 = vadd.f32 %v8362, %v8363
        %v8365 = vrot.slane %v8364, 1
        %v8366 = vadd.f32 %v8364, %v8365
        %v8367 = vadd.f32 %v5637, %v5773
        %v8368 = vrot.slane %v8367, 4
        %v8369 = vadd.f32 %v8367, %v8368
        %v8370 = vrot.slane %v8369, 2
        %v8371 = vadd.f32 %v8369, %v8370
        %v8372 = vrot.slane %v8371, 1
        %v8373 = vadd.f32 %v8371, %v8372
        %v8374 = vadd.f32 %v5638, %v5774
        %v8375 = vrot.slane %v8374, 4
        %v8376 = vadd.f32 %v8374, %v8375
        %v8377 = vrot.slane %v8376, 2
        %v8378 = vadd.f32 %v8376, %v8377
        %v8379 = vrot.slane %v8378, 1
        %v8380 = vadd.f32 %v8378, %v8379
        %v8381 = vadd.f32 %v5639, %v5775
        %v8382 = vrot.slane %v8381, 4
        %v8383 = vadd.f32 %v8381, %v8382
        %v8384 = vrot.slane %v8383, 2
        %v8385 = vadd.f32 %v8383, %v8384
        %v8386 = vrot.slane %v8385, 1
        %v8387 = vadd.f32 %v8385, %v8386
        %v8388 = vadd.f32 %v5640, %v5776
        %v8389 = vrot.slane %v8388, 4
        %v8390 = vadd.f32 %v8388, %v8389
        %v8391 = vrot.slane %v8390, 2
        %v8392 = vadd.f32 %v8390, %v8391
        %v8393 = vrot.slane %v8392, 1
        %v8394 = vadd.f32 %v8392, %v8393
        %v8395 = vadd.f32 %v5641, %v5777
        %v8396 = vrot.slane %v8395, 4
        %v8397 = vadd.f32 %v8395, %v8396
        %v8398 = vrot.slane %v8397, 2
        %v8399 = vadd.f32 %v8397, %v8398
        %v8400 = vrot.slane %v8399, 1
        %v8401 = vadd.f32 %v8399, %v8400
        %v8402 = vadd.f32 %v5906, %v6042
        %v8403 = vrot.slane %v8402, 4
        %v8404 = vadd.f32 %v8402, %v8403
        %v8405 = vrot.slane %v8404, 2
        %v8406 = vadd.f32 %v8404, %v8405
        %v8407 = vrot.slane %v8406, 1
        %v8408 = vadd.f32 %v8406, %v8407
        %v8409 = vadd.f32 %v5907, %v6043
        %v8410 = vrot.slane %v8409, 4
        %v8411 = vadd.f32 %v8409, %v8410
        %v8412 = vrot.slane %v8411, 2
        %v8413 = vadd.f32 %v8411, %v8412
        %v8414 = vrot.slane %v8413, 1
        %v8415 = vadd.f32 %v8413, %v8414
        %v8416 = vadd.f32 %v5908, %v6044
        %v8417 = vrot.slane %v8416, 4
        %v8418 = vadd.f32 %v8416, %v8417
        %v8419 = vrot.slane %v8418, 2
        %v8420 = vadd.f32 %v8418, %v8419
        %v8421 = vrot.slane %v8420, 1
        %v8422 = vadd.f32 %v8420, %v8421
        %v8423 = vadd.f32 %v5909, %v6045
        %v8424 = vrot.slane %v8423, 4
        %v8425 = vadd.f32 %v8423, %v8424
        %v8426 = vrot.slane %v8425, 2
        %v8427 = vadd.f32 %v8425, %v8426
        %v8428 = vrot.slane %v8427, 1
        %v8429 = vadd.f32 %v8427, %v8428
        %v8430 = vadd.f32 %v5910, %v6046
        %v8431 = vrot.slane %v8430, 4
        %v8432 = vadd.f32 %v8430, %v8431
        %v8433 = vrot.slane %v8432, 2
        %v8434 = vadd.f32 %v8432, %v8433
        %v8435 = vrot.slane %v8434, 1
        %v8436 = vadd.f32 %v8434, %v8435
        %v8437 = vadd.f32 %v5911, %v6047
        %v8438 = vrot.slane %v8437, 4
        %v8439 = vadd.f32 %v8437, %v8438
        %v8440 = vrot.slane %v8439, 2
        %v8441 = vadd.f32 %v8439, %v8440
        %v8442 = vrot.slane %v8441, 1
        %v8443 = vadd.f32 %v8441, %v8442
        %v8444 = vadd.f32 %v5912, %v6048
        %v8445 = vrot.slane %v8444, 4
        %v8446 = vadd.f32 %v8444, %v8445
        %v8447 = vrot.slane %v8446, 2
        %v8448 = vadd.f32 %v8446, %v8447
        %v8449 = vrot.slane %v8448, 1
        %v8450 = vadd.f32 %v8448, %v8449
        %v8451 = vadd.f32 %v5913, %v6049
        %v8452 = vrot.slane %v8451, 4
        %v8453 = vadd.f32 %v8451, %v8452
        %v8454 = vrot.slane %v8453, 2
        %v8455 = vadd.f32 %v8453, %v8454
        %v8456 = vrot.slane %v8455, 1
        %v8457 = vadd.f32 %v8455, %v8456
        %v8458 = vadd.f32 %v6178, %v6314
        %v8459 = vrot.slane %v8458, 4
        %v8460 = vadd.f32 %v8458, %v8459
        %v8461 = vrot.slane %v8460, 2
        %v8462 = vadd.f32 %v8460, %v8461
        %v8463 = vrot.slane %v8462, 1
        %v8464 = vadd.f32 %v8462, %v8463
        %v8465 = vadd.f32 %v6179, %v6315
        %v8466 = vrot.slane %v8465, 4
        %v8467 = vadd.f32 %v8465, %v8466
        %v8468 = vrot.slane %v8467, 2
        %v8469 = vadd.f32 %v8467, %v8468
        %v8470 = vrot.slane %v8469, 1
        %v8471 = vadd.f32 %v8469, %v8470
        %v8472 = vadd.f32 %v6180, %v6316
        %v8473 = vrot.slane %v8472, 4
        %v8474 = vadd.f32 %v8472, %v8473
        %v8475 = vrot.slane %v8474, 2
        %v8476 = vadd.f32 %v8474, %v8475
        %v8477 = vrot.slane %v8476, 1
        %v8478 = vadd.f32 %v8476, %v8477
        %v8479 = vadd.f32 %v6181, %v6317
        %v8480 = vrot.slane %v8479, 4
        %v8481 = vadd.f32 %v8479, %v8480
        %v8482 = vrot.slane %v8481, 2
        %v8483 = vadd.f32 %v8481, %v8482
        %v8484 = vrot.slane %v8483, 1
        %v8485 = vadd.f32 %v8483, %v8484
        %v8486 = vadd.f32 %v6182, %v6318
        %v8487 = vrot.slane %v8486, 4
        %v8488 = vadd.f32 %v8486, %v8487
        %v8489 = vrot.slane %v8488, 2
        %v8490 = vadd.f32 %v8488, %v8489
        %v8491 = vrot.slane %v8490, 1
        %v8492 = vadd.f32 %v8490, %v8491
        %v8493 = vadd.f32 %v6183, %v6319
        %v8494 = vrot.slane %v8493, 4
        %v8495 = vadd.f32 %v8493, %v8494
        %v8496 = vrot.slane %v8495, 2
        %v8497 = vadd.f32 %v8495, %v8496
        %v8498 = vrot.slane %v8497, 1
        %v8499 = vadd.f32 %v8497, %v8498
        %v8500 = vadd.f32 %v6184, %v6320
        %v8501 = vrot.slane %v8500, 4
        %v8502 = vadd.f32 %v8500, %v8501
        %v8503 = vrot.slane %v8502, 2
        %v8504 = vadd.f32 %v8502, %v8503
        %v8505 = vrot.slane %v8504, 1
        %v8506 = vadd.f32 %v8504, %v8505
        %v8507 = vadd.f32 %v6185, %v6321
        %v8508 = vrot.slane %v8507, 4
        %v8509 = vadd.f32 %v8507, %v8508
        %v8510 = vrot.slane %v8509, 2
        %v8511 = vadd.f32 %v8509, %v8510
        %v8512 = vrot.slane %v8511, 1
        %v8513 = vadd.f32 %v8511, %v8512
        %v8514 = vadd.f32 %v6450, %v6586
        %v8515 = vrot.slane %v8514, 4
        %v8516 = vadd.f32 %v8514, %v8515
        %v8517 = vrot.slane %v8516, 2
        %v8518 = vadd.f32 %v8516, %v8517
        %v8519 = vrot.slane %v8518, 1
        %v8520 = vadd.f32 %v8518, %v8519
        %v8521 = vadd.f32 %v6451, %v6587
        %v8522 = vrot.slane %v8521, 4
        %v8523 = vadd.f32 %v8521, %v8522
        %v8524 = vrot.slane %v8523, 2
        %v8525 = vadd.f32 %v8523, %v8524
        %v8526 = vrot.slane %v8525, 1
        %v8527 = vadd.f32 %v8525, %v8526
        %v8528 = vadd.f32 %v6452, %v6588
        %v8529 = vrot.slane %v8528, 4
        %v8530 = vadd.f32 %v8528, %v8529
        %v8531 = vrot.slane %v8530, 2
        %v8532 = vadd.f32 %v8530, %v8531
        %v8533 = vrot.slane %v8532, 1
        %v8534 = vadd.f32 %v8532, %v8533
        %v8535 = vadd.f32 %v6453, %v6589
        %v8536 = vrot.slane %v8535, 4
        %v8537 = vadd.f32 %v8535, %v8536
        %v8538 = vrot.slane %v8537, 2
        %v8539 = vadd.f32 %v8537, %v8538
        %v8540 = vrot.slane %v8539, 1
        %v8541 = vadd.f32 %v8539, %v8540
        %v8542 = vadd.f32 %v6454, %v6590
        %v8543 = vrot.slane %v8542, 4
        %v8544 = vadd.f32 %v8542, %v8543
        %v8545 = vrot.slane %v8544, 2
        %v8546 = vadd.f32 %v8544, %v8545
        %v8547 = vrot.slane %v8546, 1
        %v8548 = vadd.f32 %v8546, %v8547
        %v8549 = vadd.f32 %v6455, %v6591
        %v8550 = vrot.slane %v8549, 4
        %v8551 = vadd.f32 %v8549, %v8550
        %v8552 = vrot.slane %v8551, 2
        %v8553 = vadd.f32 %v8551, %v8552
        %v8554 = vrot.slane %v8553, 1
        %v8555 = vadd.f32 %v8553, %v8554
        %v8556 = vadd.f32 %v6456, %v6592
        %v8557 = vrot.slane %v8556, 4
        %v8558 = vadd.f32 %v8556, %v8557
        %v8559 = vrot.slane %v8558, 2
        %v8560 = vadd.f32 %v8558, %v8559
        %v8561 = vrot.slane %v8560, 1
        %v8562 = vadd.f32 %v8560, %v8561
        %v8563 = vadd.f32 %v6457, %v6593
        %v8564 = vrot.slane %v8563, 4
        %v8565 = vadd.f32 %v8563, %v8564
        %v8566 = vrot.slane %v8565, 2
        %v8567 = vadd.f32 %v8565, %v8566
        %v8568 = vrot.slane %v8567, 1
        %v8569 = vadd.f32 %v8567, %v8568
        %v8570 = vadd.f32 %v6722, %v6858
        %v8571 = vrot.slane %v8570, 4
        %v8572 = vadd.f32 %v8570, %v8571
        %v8573 = vrot.slane %v8572, 2
        %v8574 = vadd.f32 %v8572, %v8573
        %v8575 = vrot.slane %v8574, 1
        %v8576 = vadd.f32 %v8574, %v8575
        %v8577 = vadd.f32 %v6723, %v6859
        %v8578 = vrot.slane %v8577, 4
        %v8579 = vadd.f32 %v8577, %v8578
        %v8580 = vrot.slane %v8579, 2
        %v8581 = vadd.f32 %v8579, %v8580
        %v8582 = vrot.slane %v8581, 1
        %v8583 = vadd.f32 %v8581, %v8582
        %v8584 = vadd.f32 %v6724, %v6860
        %v8585 = vrot.slane %v8584, 4
        %v8586 = vadd.f32 %v8584, %v8585
        %v8587 = vrot.slane %v8586, 2
        %v8588 = vadd.f32 %v8586, %v8587
        %v8589 = vrot.slane %v8588, 1
        %v8590 = vadd.f32 %v8588, %v8589
        %v8591 = vadd.f32 %v6725, %v6861
        %v8592 = vrot.slane %v8591, 4
        %v8593 = vadd.f32 %v8591, %v8592
        %v8594 = vrot.slane %v8593, 2
        %v8595 = vadd.f32 %v8593, %v8594
        %v8596 = vrot.slane %v8595, 1
        %v8597 = vadd.f32 %v8595, %v8596
        %v8598 = vadd.f32 %v6726, %v6862
        %v8599 = vrot.slane %v8598, 4
        %v8600 = vadd.f32 %v8598, %v8599
        %v8601 = vrot.slane %v8600, 2
        %v8602 = vadd.f32 %v8600, %v8601
        %v8603 = vrot.slane %v8602, 1
        %v8604 = vadd.f32 %v8602, %v8603
        %v8605 = vadd.f32 %v6727, %v6863
        %v8606 = vrot.slane %v8605, 4
        %v8607 = vadd.f32 %v8605, %v8606
        %v8608 = vrot.slane %v8607, 2
        %v8609 = vadd.f32 %v8607, %v8608
        %v8610 = vrot.slane %v8609, 1
        %v8611 = vadd.f32 %v8609, %v8610
        %v8612 = vadd.f32 %v6728, %v6864
        %v8613 = vrot.slane %v8612, 4
        %v8614 = vadd.f32 %v8612, %v8613
        %v8615 = vrot.slane %v8614, 2
        %v8616 = vadd.f32 %v8614, %v8615
        %v8617 = vrot.slane %v8616, 1
        %v8618 = vadd.f32 %v8616, %v8617
        %v8619 = vadd.f32 %v6729, %v6865
        %v8620 = vrot.slane %v8619, 4
        %v8621 = vadd.f32 %v8619, %v8620
        %v8622 = vrot.slane %v8621, 2
        %v8623 = vadd.f32 %v8621, %v8622
        %v8624 = vrot.slane %v8623, 1
        %v8625 = vadd.f32 %v8623, %v8624
        %v8626 = vadd.f32 %v6994, %v7130
        %v8627 = vrot.slane %v8626, 4
        %v8628 = vadd.f32 %v8626, %v8627
        %v8629 = vrot.slane %v8628, 2
        %v8630 = vadd.f32 %v8628, %v8629
        %v8631 = vrot.slane %v8630, 1
        %v8632 = vadd.f32 %v8630, %v8631
        %v8633 = vadd.f32 %v6995, %v7131
        %v8634 = vrot.slane %v8633, 4
        %v8635 = vadd.f32 %v8633, %v8634
        %v8636 = vrot.slane %v8635, 2
        %v8637 = vadd.f32 %v8635, %v8636
        %v8638 = vrot.slane %v8637, 1
        %v8639 = vadd.f32 %v8637, %v8638
        %v8640 = vadd.f32 %v6996, %v7132
        %v8641 = vrot.slane %v8640, 4
        %v8642 = vadd.f32 %v8640, %v8641
        %v8643 = vrot.slane %v8642, 2
        %v8644 = vadd.f32 %v8642, %v8643
        %v8645 = vrot.slane %v8644, 1
        %v8646 = vadd.f32 %v8644, %v8645
        %v8647 = vadd.f32 %v6997, %v7133
        %v8648 = vrot.slane %v8647, 4
        %v8649 = vadd.f32 %v8647, %v8648
        %v8650 = vrot.slane %v8649, 2
        %v8651 = vadd.f32 %v8649, %v8650
        %v8652 = vrot.slane %v8651, 1
        %v8653 = vadd.f32 %v8651, %v8652
        %v8654 = vadd.f32 %v6998, %v7134
        %v8655 = vrot.slane %v8654, 4
        %v8656 = vadd.f32 %v8654, %v8655
        %v8657 = vrot.slane %v8656, 2
        %v8658 = vadd.f32 %v8656, %v8657
        %v8659 = vrot.slane %v8658, 1
        %v8660 = vadd.f32 %v8658, %v8659
        %v8661 = vadd.f32 %v6999, %v7135
        %v8662 = vrot.slane %v8661, 4
        %v8663 = vadd.f32 %v8661, %v8662
        %v8664 = vrot.slane %v8663, 2
        %v8665 = vadd.f32 %v8663, %v8664
        %v8666 = vrot.slane %v8665, 1
        %v8667 = vadd.f32 %v8665, %v8666
        %v8668 = vadd.f32 %v7000, %v7136
        %v8669 = vrot.slane %v8668, 4
        %v8670 = vadd.f32 %v8668, %v8669
        %v8671 = vrot.slane %v8670, 2
        %v8672 = vadd.f32 %v8670, %v8671
        %v8673 = vrot.slane %v8672, 1
        %v8674 = vadd.f32 %v8672, %v8673
        %v8675 = vadd.f32 %v7001, %v7137
        %v8676 = vrot.slane %v8675, 4
        %v8677 = vadd.f32 %v8675, %v8676
        %v8678 = vrot.slane %v8677, 2
        %v8679 = vadd.f32 %v8677, %v8678
        %v8680 = vrot.slane %v8679, 1
        %v8681 = vadd.f32 %v8679, %v8680
        %v8682 = vadd.f32 %v7266, %v7402
        %v8683 = vrot.slane %v8682, 4
        %v8684 = vadd.f32 %v8682, %v8683
        %v8685 = vrot.slane %v8684, 2
        %v8686 = vadd.f32 %v8684, %v8685
        %v8687 = vrot.slane %v8686, 1
        %v8688 = vadd.f32 %v8686, %v8687
        %v8689 = vadd.f32 %v7267, %v7403
        %v8690 = vrot.slane %v8689, 4
        %v8691 = vadd.f32 %v8689, %v8690
        %v8692 = vrot.slane %v8691, 2
        %v8693 = vadd.f32 %v8691, %v8692
        %v8694 = vrot.slane %v8693, 1
        %v8695 = vadd.f32 %v8693, %v8694
        %v8696 = vadd.f32 %v7268, %v7404
        %v8697 = vrot.slane %v8696, 4
        %v8698 = vadd.f32 %v8696, %v8697
        %v8699 = vrot.slane %v8698, 2
        %v8700 = vadd.f32 %v8698, %v8699
        %v8701 = vrot.slane %v8700, 1
        %v8702 = vadd.f32 %v8700, %v8701
        %v8703 = vadd.f32 %v7269, %v7405
        %v8704 = vrot.slane %v8703, 4
        %v8705 = vadd.f32 %v8703, %v8704
        %v8706 = vrot.slane %v8705, 2
        %v8707 = vadd.f32 %v8705, %v8706
        %v8708 = vrot.slane %v8707, 1
        %v8709 = vadd.f32 %v8707, %v8708
        %v8710 = vadd.f32 %v7270, %v7406
        %v8711 = vrot.slane %v8710, 4
        %v8712 = vadd.f32 %v8710, %v8711
        %v8713 = vrot.slane %v8712, 2
        %v8714 = vadd.f32 %v8712, %v8713
        %v8715 = vrot.slane %v8714, 1
        %v8716 = vadd.f32 %v8714, %v8715
        %v8717 = vadd.f32 %v7271, %v7407
        %v8718 = vrot.slane %v8717, 4
        %v8719 = vadd.f32 %v8717, %v8718
        %v8720 = vrot.slane %v8719, 2
        %v8721 = vadd.f32 %v8719, %v8720
        %v8722 = vrot.slane %v8721, 1
        %v8723 = vadd.f32 %v8721, %v8722
        %v8724 = vadd.f32 %v7272, %v7408
        %v8725 = vrot.slane %v8724, 4
        %v8726 = vadd.f32 %v8724, %v8725
        %v8727 = vrot.slane %v8726, 2
        %v8728 = vadd.f32 %v8726, %v8727
        %v8729 = vrot.slane %v8728, 1
        %v8730 = vadd.f32 %v8728, %v8729
        %v8731 = vadd.f32 %v7273, %v7409
        %v8732 = vrot.slane %v8731, 4
        %v8733 = vadd.f32 %v8731, %v8732
        %v8734 = vrot.slane %v8733, 2
        %v8735 = vadd.f32 %v8733, %v8734
        %v8736 = vrot.slane %v8735, 1
        %v8737 = vadd.f32 %v8735, %v8736
        %v8738 = vadd.f32 %v7538, %v7674
        %v8739 = vrot.slane %v8738, 4
        %v8740 = vadd.f32 %v8738, %v8739
        %v8741 = vrot.slane %v8740, 2
        %v8742 = vadd.f32 %v8740, %v8741
        %v8743 = vrot.slane %v8742, 1
        %v8744 = vadd.f32 %v8742, %v8743
        %v8745 = vadd.f32 %v7539, %v7675
        %v8746 = vrot.slane %v8745, 4
        %v8747 = vadd.f32 %v8745, %v8746
        %v8748 = vrot.slane %v8747, 2
        %v8749 = vadd.f32 %v8747, %v8748
        %v8750 = vrot.slane %v8749, 1
        %v8751 = vadd.f32 %v8749, %v8750
        %v8752 = vadd.f32 %v7540, %v7676
        %v8753 = vrot.slane %v8752, 4
        %v8754 = vadd.f32 %v8752, %v8753
        %v8755 = vrot.slane %v8754, 2
        %v8756 = vadd.f32 %v8754, %v8755
        %v8757 = vrot.slane %v8756, 1
        %v8758 = vadd.f32 %v8756, %v8757
        %v8759 = vadd.f32 %v7541, %v7677
        %v8760 = vrot.slane %v8759, 4
        %v8761 = vadd.f32 %v8759, %v8760
        %v8762 = vrot.slane %v8761, 2
        %v8763 = vadd.f32 %v8761, %v8762
        %v8764 = vrot.slane %v8763, 1
        %v8765 = vadd.f32 %v8763, %v8764
        %v8766 = vadd.f32 %v7542, %v7678
        %v8767 = vrot.slane %v8766, 4
        %v8768 = vadd.f32 %v8766, %v8767
        %v8769 = vrot.slane %v8768, 2
        %v8770 = vadd.f32 %v8768, %v8769
        %v8771 = vrot.slane %v8770, 1
        %v8772 = vadd.f32 %v8770, %v8771
        %v8773 = vadd.f32 %v7543, %v7679
        %v8774 = vrot.slane %v8773, 4
        %v8775 = vadd.f32 %v8773, %v8774
        %v8776 = vrot.slane %v8775, 2
        %v8777 = vadd.f32 %v8775, %v8776
        %v8778 = vrot.slane %v8777, 1
        %v8779 = vadd.f32 %v8777, %v8778
        %v8780 = vadd.f32 %v7544, %v7680
        %v8781 = vrot.slane %v8780, 4
        %v8782 = vadd.f32 %v8780, %v8781
        %v8783 = vrot.slane %v8782, 2
        %v8784 = vadd.f32 %v8782, %v8783
        %v8785 = vrot.slane %v8784, 1
        %v8786 = vadd.f32 %v8784, %v8785
        %v8787 = vadd.f32 %v7545, %v7681
        %v8788 = vrot.slane %v8787, 4
        %v8789 = vadd.f32 %v8787, %v8788
        %v8790 = vrot.slane %v8789, 2
        %v8791 = vadd.f32 %v8789, %v8790
        %v8792 = vrot.slane %v8791, 1
        %v8793 = vadd.f32 %v8791, %v8792
        %v8794 = vadd.f32 %v7810, %v7946
        %v8795 = vrot.slane %v8794, 4
        %v8796 = vadd.f32 %v8794, %v8795
        %v8797 = vrot.slane %v8796, 2
        %v8798 = vadd.f32 %v8796, %v8797
        %v8799 = vrot.slane %v8798, 1
        %v8800 = vadd.f32 %v8798, %v8799
        %v8801 = vadd.f32 %v7811, %v7947
        %v8802 = vrot.slane %v8801, 4
        %v8803 = vadd.f32 %v8801, %v8802
        %v8804 = vrot.slane %v8803, 2
        %v8805 = vadd.f32 %v8803, %v8804
        %v8806 = vrot.slane %v8805, 1
        %v8807 = vadd.f32 %v8805, %v8806
        %v8808 = vadd.f32 %v7812, %v7948
        %v8809 = vrot.slane %v8808, 4
        %v8810 = vadd.f32 %v8808, %v8809
        %v8811 = vrot.slane %v8810, 2
        %v8812 = vadd.f32 %v8810, %v8811
        %v8813 = vrot.slane %v8812, 1
        %v8814 = vadd.f32 %v8812, %v8813
        %v8815 = vadd.f32 %v7813, %v7949
        %v8816 = vrot.slane %v8815, 4
        %v8817 = vadd.f32 %v8815, %v8816
        %v8818 = vrot.slane %v8817, 2
        %v8819 = vadd.f32 %v8817, %v8818
        %v8820 = vrot.slane %v8819, 1
        %v8821 = vadd.f32 %v8819, %v8820
        %v8822 = vadd.f32 %v7814, %v7950
        %v8823 = vrot.slane %v8822, 4
        %v8824 = vadd.f32 %v8822, %v8823
        %v8825 = vrot.slane %v8824, 2
        %v8826 = vadd.f32 %v8824, %v8825
        %v8827 = vrot.slane %v8826, 1
        %v8828 = vadd.f32 %v8826, %v8827
        %v8829 = vadd.f32 %v7815, %v7951
        %v8830 = vrot.slane %v8829, 4
        %v8831 = vadd.f32 %v8829, %v8830
        %v8832 = vrot.slane %v8831, 2
        %v8833 = vadd.f32 %v8831, %v8832
        %v8834 = vrot.slane %v8833, 1
        %v8835 = vadd.f32 %v8833, %v8834
        %v8836 = vadd.f32 %v7816, %v7952
        %v8837 = vrot.slane %v8836, 4
        %v8838 = vadd.f32 %v8836, %v8837
        %v8839 = vrot.slane %v8838, 2
        %v8840 = vadd.f32 %v8838, %v8839
        %v8841 = vrot.slane %v8840, 1
        %v8842 = vadd.f32 %v8840, %v8841
        %v8843 = vadd.f32 %v7817, %v7953
        %v8844 = vrot.slane %v8843, 4
        %v8845 = vadd.f32 %v8843, %v8844
        %v8846 = vrot.slane %v8845, 2
        %v8847 = vadd.f32 %v8845, %v8846
        %v8848 = vrot.slane %v8847, 1
        %v8849 = vadd.f32 %v8847, %v8848
        %vm8978 = vcmask 1041409
        %v8979 = vsel %vm8978, %v7967, %v7960
        %vm8980 = vcmask 1042434
        %v8981 = vsel %vm8980, %v7974, %v8979
        %vm8982 = vcmask 1043459
        %v8983 = vsel %vm8982, %v7981, %v8981
        %vm8984 = vcmask 1044484
        %v8985 = vsel %vm8984, %v7988, %v8983
        %vm8986 = vcmask 1045509
        %v8987 = vsel %vm8986, %v7995, %v8985
        %vm8988 = vcmask 1046534
        %v8989 = vsel %vm8988, %v8002, %v8987
        %vm8990 = vcmask 1047559
        %v8991 = vsel %vm8990, %v8009, %v8989
        %v8992 = vsel %vm8978, %v8023, %v8016
        %v8993 = vsel %vm8980, %v8030, %v8992
        %v8994 = vsel %vm8982, %v8037, %v8993
        %v8995 = vsel %vm8984, %v8044, %v8994
        %v8996 = vsel %vm8986, %v8051, %v8995
        %v8997 = vsel %vm8988, %v8058, %v8996
        %v8998 = vsel %vm8990, %v8065, %v8997
        %v8999 = vsel %vm8978, %v8079, %v8072
        %v9000 = vsel %vm8980, %v8086, %v8999
        %v9001 = vsel %vm8982, %v8093, %v9000
        %v9002 = vsel %vm8984, %v8100, %v9001
        %v9003 = vsel %vm8986, %v8107, %v9002
        %v9004 = vsel %vm8988, %v8114, %v9003
        %v9005 = vsel %vm8990, %v8121, %v9004
        %v9006 = vsel %vm8978, %v8135, %v8128
        %v9007 = vsel %vm8980, %v8142, %v9006
        %v9008 = vsel %vm8982, %v8149, %v9007
        %v9009 = vsel %vm8984, %v8156, %v9008
        %v9010 = vsel %vm8986, %v8163, %v9009
        %v9011 = vsel %vm8988, %v8170, %v9010
        %v9012 = vsel %vm8990, %v8177, %v9011
        %v9013 = vsel %vm8978, %v8191, %v8184
        %v9014 = vsel %vm8980, %v8198, %v9013
        %v9015 = vsel %vm8982, %v8205, %v9014
        %v9016 = vsel %vm8984, %v8212, %v9015
        %v9017 = vsel %vm8986, %v8219, %v9016
        %v9018 = vsel %vm8988, %v8226, %v9017
        %v9019 = vsel %vm8990, %v8233, %v9018
        %v9020 = vsel %vm8978, %v8247, %v8240
        %v9021 = vsel %vm8980, %v8254, %v9020
        %v9022 = vsel %vm8982, %v8261, %v9021
        %v9023 = vsel %vm8984, %v8268, %v9022
        %v9024 = vsel %vm8986, %v8275, %v9023
        %v9025 = vsel %vm8988, %v8282, %v9024
        %v9026 = vsel %vm8990, %v8289, %v9025
        %v9027 = vsel %vm8978, %v8303, %v8296
        %v9028 = vsel %vm8980, %v8310, %v9027
        %v9029 = vsel %vm8982, %v8317, %v9028
        %v9030 = vsel %vm8984, %v8324, %v9029
        %v9031 = vsel %vm8986, %v8331, %v9030
        %v9032 = vsel %vm8988, %v8338, %v9031
        %v9033 = vsel %vm8990, %v8345, %v9032
        %v9034 = vsel %vm8978, %v8359, %v8352
        %v9035 = vsel %vm8980, %v8366, %v9034
        %v9036 = vsel %vm8982, %v8373, %v9035
        %v9037 = vsel %vm8984, %v8380, %v9036
        %v9038 = vsel %vm8986, %v8387, %v9037
        %v9039 = vsel %vm8988, %v8394, %v9038
        %v9040 = vsel %vm8990, %v8401, %v9039
        %v9041 = vsel %vm8978, %v8415, %v8408
        %v9042 = vsel %vm8980, %v8422, %v9041
        %v9043 = vsel %vm8982, %v8429, %v9042
        %v9044 = vsel %vm8984, %v8436, %v9043
        %v9045 = vsel %vm8986, %v8443, %v9044
        %v9046 = vsel %vm8988, %v8450, %v9045
        %v9047 = vsel %vm8990, %v8457, %v9046
        %v9048 = vsel %vm8978, %v8471, %v8464
        %v9049 = vsel %vm8980, %v8478, %v9048
        %v9050 = vsel %vm8982, %v8485, %v9049
        %v9051 = vsel %vm8984, %v8492, %v9050
        %v9052 = vsel %vm8986, %v8499, %v9051
        %v9053 = vsel %vm8988, %v8506, %v9052
        %v9054 = vsel %vm8990, %v8513, %v9053
        %v9055 = vsel %vm8978, %v8527, %v8520
        %v9056 = vsel %vm8980, %v8534, %v9055
        %v9057 = vsel %vm8982, %v8541, %v9056
        %v9058 = vsel %vm8984, %v8548, %v9057
        %v9059 = vsel %vm8986, %v8555, %v9058
        %v9060 = vsel %vm8988, %v8562, %v9059
        %v9061 = vsel %vm8990, %v8569, %v9060
        %v9062 = vsel %vm8978, %v8583, %v8576
        %v9063 = vsel %vm8980, %v8590, %v9062
        %v9064 = vsel %vm8982, %v8597, %v9063
        %v9065 = vsel %vm8984, %v8604, %v9064
        %v9066 = vsel %vm8986, %v8611, %v9065
        %v9067 = vsel %vm8988, %v8618, %v9066
        %v9068 = vsel %vm8990, %v8625, %v9067
        %v9069 = vsel %vm8978, %v8639, %v8632
        %v9070 = vsel %vm8980, %v8646, %v9069
        %v9071 = vsel %vm8982, %v8653, %v9070
        %v9072 = vsel %vm8984, %v8660, %v9071
        %v9073 = vsel %vm8986, %v8667, %v9072
        %v9074 = vsel %vm8988, %v8674, %v9073
        %v9075 = vsel %vm8990, %v8681, %v9074
        %v9076 = vsel %vm8978, %v8695, %v8688
        %v9077 = vsel %vm8980, %v8702, %v9076
        %v9078 = vsel %vm8982, %v8709, %v9077
        %v9079 = vsel %vm8984, %v8716, %v9078
        %v9080 = vsel %vm8986, %v8723, %v9079
        %v9081 = vsel %vm8988, %v8730, %v9080
        %v9082 = vsel %vm8990, %v8737, %v9081
        %v9083 = vsel %vm8978, %v8751, %v8744
        %v9084 = vsel %vm8980, %v8758, %v9083
        %v9085 = vsel %vm8982, %v8765, %v9084
        %v9086 = vsel %vm8984, %v8772, %v9085
        %v9087 = vsel %vm8986, %v8779, %v9086
        %v9088 = vsel %vm8988, %v8786, %v9087
        %v9089 = vsel %vm8990, %v8793, %v9088
        %v9090 = vsel %vm8978, %v8807, %v8800
        %v9091 = vsel %vm8980, %v8814, %v9090
        %v9092 = vsel %vm8982, %v8821, %v9091
        %v9093 = vsel %vm8984, %v8828, %v9092
        %v9094 = vsel %vm8986, %v8835, %v9093
        %v9095 = vsel %vm8988, %v8842, %v9094
        %v9096 = vsel %vm8990, %v8849, %v9095
        %v9113 = vadd.f32 %v3586, %v8991
        %v9114 = vadd.f32 %v3587, %v8998
        %v9115 = vadd.f32 %v3588, %v9005
        %v9116 = vadd.f32 %v3589, %v9012
        %v9117 = vadd.f32 %v3590, %v9019
        %v9118 = vadd.f32 %v3591, %v9026
        %v9119 = vadd.f32 %v3592, %v9033
        %v9120 = vadd.f32 %v3593, %v9040
        %v9121 = vadd.f32 %v3594, %v9047
        %v9122 = vadd.f32 %v3595, %v9054
        %v9123 = vadd.f32 %v3596, %v9061
        %v9124 = vadd.f32 %v3597, %v9068
        %v9125 = vadd.f32 %v3598, %v9075
        %v9126 = vadd.f32 %v3599, %v9082
        %v9127 = vadd.f32 %v3600, %v9089
        %v9128 = vadd.f32 %v3601, %v9096
        %9129 = vst [vmem:[#allocation2] sm:$0xff] %v9113
        %9130 = vst [vmem:[#allocation2 + $0x8] sm:$0xff] %v9114
        %9131 = vst [vmem:[#allocation2 + $0x10] sm:$0xff] %v9115
        %9132 = vst [vmem:[#allocation2 + $0x18] sm:$0xff] %v9116
        %9133 = vst [vmem:[#allocation2 + $0x20] sm:$0xff] %v9117
        %9134 = vst [vmem:[#allocation2 + $0x28] sm:$0xff] %v9118
        %9135 = vst [vmem:[#allocation2 + $0x30] sm:$0xff] %v9119
        %9136 = vst [vmem:[#allocation2 + $0x38] sm:$0xff] %v9120
        %9137 = vst [vmem:[#allocation2 + $0x40] sm:$0xff] %v9121
        %9138 = vst [vmem:[#allocation2 + $0x48] sm:$0xff] %v9122
        %9139 = vst [vmem:[#allocation2 + $0x50] sm:$0xff] %v9123
        %9140 = vst [vmem:[#allocation2 + $0x58] sm:$0xff] %v9124
        %9141 = vst [vmem:[#allocation2 + $0x60] sm:$0xff] %v9125
        %9142 = vst [vmem:[#allocation2 + $0x68] sm:$0xff] %v9126
        %9143 = vst [vmem:[#allocation2 + $0x70] sm:$0xff] %v9127
        %9144 = vst [vmem:[#allocation2 + $0x78] sm:$0xff] %v9128
        %p9145 = scmp.eq.s32.totalorder %s21, 1
        // Predicated region
        $region37: #{tpu_custom_call.1} parent=27 // pred_check
          %p9146 = pneg %p9145
        $region38: #{tpu_custom_call.1} parent=27 // pred_check_branch
          %9148 = sbr.rel (%p9146) target = $region40
        $region39: #{tpu_custom_call.1} parent=27 // pred_region
          %v9149 = vld [vmem:[#allocation2] sm:$0xff]
          %v9150 = vld [vmem:[#allocation2 + $0x8] sm:$0xff]
          %v9151 = vld [vmem:[#allocation2 + $0x10] sm:$0xff]
          %v9152 = vld [vmem:[#allocation2 + $0x18] sm:$0xff]
          %v9153 = vld [vmem:[#allocation2 + $0x20] sm:$0xff]
          %v9154 = vld [vmem:[#allocation2 + $0x28] sm:$0xff]
          %v9155 = vld [vmem:[#allocation2 + $0x30] sm:$0xff]
          %v9156 = vld [vmem:[#allocation2 + $0x38] sm:$0xff]
          %v9157 = vld [vmem:[#allocation2 + $0x40] sm:$0xff]
          %v9158 = vld [vmem:[#allocation2 + $0x48] sm:$0xff]
          %v9159 = vld [vmem:[#allocation2 + $0x50] sm:$0xff]
          %v9160 = vld [vmem:[#allocation2 + $0x58] sm:$0xff]
          %v9161 = vld [vmem:[#allocation2 + $0x60] sm:$0xff]
          %v9162 = vld [vmem:[#allocation2 + $0x68] sm:$0xff]
          %v9163 = vld [vmem:[#allocation2 + $0x70] sm:$0xff]
          %v9164 = vld [vmem:[#allocation2 + $0x78] sm:$0xff]
          %9165 = vadd.xlane.f32.xlu0 %v9149
          %v9166 = vpop.xlane.xlu0 %9165
          %9167 = vadd.xlane.f32.xlu0 %v9150
          %v9168 = vpop.xlane.xlu0 %9167
          %9169 = vadd.xlane.f32.xlu0 %v9151
          %v9170 = vpop.xlane.xlu0 %9169
          %9171 = vadd.xlane.f32.xlu0 %v9152
          %v9172 = vpop.xlane.xlu0 %9171
          %9173 = vadd.xlane.f32.xlu0 %v9153
          %v9174 = vpop.xlane.xlu0 %9173
          %9175 = vadd.xlane.f32.xlu0 %v9154
          %v9176 = vpop.xlane.xlu0 %9175
          %9177 = vadd.xlane.f32.xlu0 %v9155
          %v9178 = vpop.xlane.xlu0 %9177
          %9179 = vadd.xlane.f32.xlu0 %v9156
          %v9180 = vpop.xlane.xlu0 %9179
          %9181 = vadd.xlane.f32.xlu0 %v9157
          %v9182 = vpop.xlane.xlu0 %9181
          %9183 = vadd.xlane.f32.xlu0 %v9158
          %v9184 = vpop.xlane.xlu0 %9183
          %9185 = vadd.xlane.f32.xlu0 %v9159
          %v9186 = vpop.xlane.xlu0 %9185
          %9187 = vadd.xlane.f32.xlu0 %v9160
          %v9188 = vpop.xlane.xlu0 %9187
          %9189 = vadd.xlane.f32.xlu0 %v9161
          %v9190 = vpop.xlane.xlu0 %9189
          %9191 = vadd.xlane.f32.xlu0 %v9162
          %v9192 = vpop.xlane.xlu0 %9191
          %9193 = vadd.xlane.f32.xlu0 %v9163
          %v9194 = vpop.xlane.xlu0 %9193
          %9195 = vadd.xlane.f32.xlu0 %v9164
          %v9196 = vpop.xlane.xlu0 %9195
          %vm9197 = vcmask 7168
          %9198 = vst.msk [vmem:[%s178] sm:$0xff] %vm9197, %v9166
          %9199 = vst.msk [vmem:[%s178 + $0x8] sm:$0xff] %vm9197, %v9168
          %9200 = vst.msk [vmem:[%s178 + $0x10] sm:$0xff] %vm9197, %v9170
          %9201 = vst.msk [vmem:[%s178 + $0x18] sm:$0xff] %vm9197, %v9172
          %9202 = vst.msk [vmem:[%s178 + $0x20] sm:$0xff] %vm9197, %v9174
          %9203 = vst.msk [vmem:[%s178 + $0x28] sm:$0xff] %vm9197, %v9176
          %9204 = vst.msk [vmem:[%s178 + $0x30] sm:$0xff] %vm9197, %v9178
          %9205 = vst.msk [vmem:[%s178 + $0x38] sm:$0xff] %vm9197, %v9180
          %9206 = vst.msk [vmem:[%s178 + $0x40] sm:$0xff] %vm9197, %v9182
          %9207 = vst.msk [vmem:[%s178 + $0x48] sm:$0xff] %vm9197, %v9184
          %9208 = vst.msk [vmem:[%s178 + $0x50] sm:$0xff] %vm9197, %v9186
          %9209 = vst.msk [vmem:[%s178 + $0x58] sm:$0xff] %vm9197, %v9188
          %9210 = vst.msk [vmem:[%s178 + $0x60] sm:$0xff] %vm9197, %v9190
          %9211 = vst.msk [vmem:[%s178 + $0x68] sm:$0xff] %vm9197, %v9192
          %9212 = vst.msk [vmem:[%s178 + $0x70] sm:$0xff] %vm9197, %v9194
          %9213 = vst.msk [vmem:[%s178 + $0x78] sm:$0xff] %vm9197, %v9196
        $region40: #{tpu_custom_call.1} parent=27 // pred_fallthru
          _
        %p9214 = scmp.lt.s32.totalorder %s20, 1
        %s9215 = scalar_select %p9214, %s20, 1
        %s9216 = smul.addr %s9215, 16
        %s9217 = smul.addr %s9216, 8
        %s9218 = scalar_lea.vmem %s2, %s9217
        // Predicated region
        $region41: #{tpu_custom_call.1} parent=27 // pred_check
          %p9219 = pneg %p95
        $region42: #{tpu_custom_call.1} parent=27 // pred_check_branch
          %9221 = sbr.rel (%p9219) target = $region44
        $region43: #{tpu_custom_call.1} parent=27 // pred_region
          _
        $region44: #{tpu_custom_call.1} parent=27 // pred_fallthru
          _
      $region28: #{tpu_custom_call.1} parent=5 // pred_fallthru
        _
      %p9222 = scmp.le.s32.totalorder 2, %s11
      // Predicated region
      $region45: #{tpu_custom_call.1} parent=5 // pred_check
        %p9223 = pneg %p9222
      $region46: #{tpu_custom_call.1} parent=5 // pred_check_branch
        %9225 = sbr.rel (%p9223) target = $region48
      $region47: #{tpu_custom_call.1} parent=5 // pred_region
        %s9226 = ssub.s32 %s11, 2
        // Predicated region
        $region49: #{tpu_custom_call.1} parent=47 // pred_check
          %p9227 = pneg %p101
        $region50: #{tpu_custom_call.1} parent=47 // pred_check_branch
          %9229 = sbr.rel (%p9227) target = $region52
        $region51: #{tpu_custom_call.1} parent=47 // pred_region
          %p9230 = scmp.lt.s32.totalorder %s22, 1
          %s9231 = scalar_select %p9230, %s22, 1
          %s9232 = smul.addr %s9231, 16
          %s9233 = smul.addr %s9232, 8
          %s9234 = scalar_lea.vmem %s2, %s9233
        $region52: #{tpu_custom_call.1} parent=47 // pred_fallthru
          _
      $region48: #{tpu_custom_call.1} parent=5 // pred_fallthru
        _
    $region6: #{tpu_custom_call.1} parent=1 // loop_footer
      %s15 = sadd.s32 1, %s11
    $region7: #{tpu_custom_call.1} parent=1 // loop_footer_branch
      %10 = sbr.rel target = $region3
    $region8: #{tpu_custom_call.1} parent=1 // loop_exit
      _
    %9235 = vsyncpa [#allocation4], 1
    %s9236 = scalar_lea.sflag [#allocation4], 1
    %9237 = vsyncpa %s9236, 1

</llo_original>
